<compile_context>
chip_gen: v7x
topology: tpu7x:2x2x1
jax: 0.10.0
libtpu: 0.0.40
codegen_flags: <defaults>
</compile_context>

<pallas_src>
import functools

import numpy as np
import jax
import jax.numpy as jnp
from jax.experimental import pallas as pl
from jax.experimental.pallas import tpu as pltpu


# ============================ model configuration ============================

INP_DIM = 32                 # regressor input dim
POWERS = [16, 32, 64]        # progressive code sizes
LATENT_SIZE = POWERS[-1]     # 64
MILESTONES = [0, 5, 10]      # cur_milestone = 0 -> only powers[0]=16 active -> mask path taken
N_UNITS, N_LAYERS = 64, 2    # TODO(synk): N_UNITS/N_LAYERS constants for create_mlp not given in source; assumed 64/2.

N_FEATURES = 32
IMG_SIZE = 16
OUT_DIM = 3
MIN_FEATURES = 8
N_BLOCKS = 4                 # log2(16); feat_h = feat_w = 1 so n_flat_features == N_FEATURES

# ProgressiveGiraffeGenerator.set_milestones(MILESTONES) with cur_milestone = 0
_N_ACT = sum(m <= 0 for m in MILESTONES)
ACT_IDX = _N_ACT
APPLY_MASK = ACT_IDX < len(POWERS)
CURRENT_CODE_SIZE = POWERS[ACT_IDX - 1] if ACT_IDX > 0 else 0
CODE_SIZE = CURRENT_CODE_SIZE if APPLY_MASK else LATENT_SIZE
# GiraffeGenerator milestones=None -> all inner blocks active
GEN_ACTIVATIONS = [True] * N_BLOCKS


def _n_ch(i):
    return max(N_FEATURES // 2 ** i, MIN_FEATURES)


CONV_CH = [(N_FEATURES, _n_ch(1))] + [(_n_ch(i + 1), _n_ch(i + 2)) for i in range(N_BLOCKS - 1)]
RGB_CH = [(N_FEATURES, OUT_DIM)] + [(_n_ch(i + 1), OUT_DIM) for i in range(N_BLOCKS)]

_HALO = 128                  # lane offset of the live image region inside the conv halo scratch


# ===================== constant 2x upsampling operators =====================
# The per-image operator acts on the flattened (h, w) index so up-sampling is a
# single MXU matmul per image:  x_up (C, 4n^2) = x (C, n^2) @ OpT (n^2, 4n^2).

def _nn_op_1d(n):
    op = np.zeros((2 * n, n), np.float32)
    for j in range(n):
        op[2 * j, j] = 1.0
        op[2 * j + 1, j] = 1.0
    return op


def _bilinear_op_1d(n):
    # PyTorch bilinear, scale 2, align_corners=False:
    #   out[2j]   = 0.75*in[j] + 0.25*in[max(j-1,0)]
    #   out[2j+1] = 0.75*in[j] + 0.25*in[min(j+1,n-1)]
    op = np.zeros((2 * n, n), np.float32)
    for j in range(n):
        op[2 * j, j] += 0.75
        op[2 * j, max(j - 1, 0)] += 0.25
        op[2 * j + 1, j] += 0.75
        op[2 * j + 1, min(j + 1, n - 1)] += 0.25
    return op


def _spatial_opT(op1d_fn, n):
    """(n^2, 4n^2) transposed per-image operator, row = hi*n+wi, col = ho*2n+wo."""
    k = np.kron(op1d_fn(n), op1d_fn(n))                  # (4n^2, n^2)
    return np.ascontiguousarray(k.T).astype(np.float32)


# ============================== parameter init ==============================

def init_params(key):
    keys = iter(jax.random.split(key, 32))

    def lin_init(k, fan_in, fan_out):
        kw, kb = jax.random.split(k)
        std = (2.0 / fan_in) ** 0.5
        return (jax.random.normal(kw, (fan_in, fan_out), jnp.float32) * std,
                jax.random.normal(kb, (1, fan_out), jnp.float32) * 0.01)

    def conv_init(k, cin, cout):
        kw, kb = jax.random.split(k)
        std = (2.0 / (cin * 9)) ** 0.5
        return (jax.random.normal(kw, (3, 3, cin, cout), jnp.float32) * std,
                jax.random.normal(kb, (1, cout), jnp.float32) * 0.01)

    params = {}
    # regressor MLP: Linear(INP,NU)+ReLU, (N_LAYERS-1)x[Linear(NU,NU)+ReLU], Linear(NU,LATENT)
    # (zero_last_init replaced with small random init so the synthetic run is non-trivial)
    reg_dims = [INP_DIM] + [N_UNITS] * N_LAYERS + [LATENT_SIZE]
    params['reg'] = [lin_init(next(keys), reg_dims[i], reg_dims[i + 1])
                     for i in range(len(reg_dims) - 1)]
    # conv_in: 1x1 conv LATENT_SIZE -> N_FEATURES on 1x1 spatial == dense layer
    params['conv_in'] = lin_init(next(keys), LATENT_SIZE, N_FEATURES)
    params['conv_layers'] = [conv_init(next(keys), ci, co) for ci, co in CONV_CH]
    params['conv_rgb'] = [conv_init(next(keys), ci, co) for ci, co in RGB_CH]
    return params


# ========================= parameter / operator packing =====================

class _Packer:
    """Packs small matrices into one 2-D blob; 8-row-aligned static offsets."""

    def __init__(self, width):
        self.width = width
        self.blocks = []
        self.off = 0
        self.index = {}

    def add(self, name, mat):
        mat = np.asarray(mat, np.float32)
        r, c = mat.shape
        assert c <= self.width, (name, mat.shape)
        rp = ((r + 7) // 8) * 8
        blk = np.zeros((rp, self.width), np.float32)
        blk[:r, :c] = mat
        self.blocks.append(blk)
        self.index[name] = (self.off, r, c)
        self.off += rp

    def finalize(self):
        return np.concatenate(self.blocks, axis=0)


def _conv_block(w, b, cout_pad):
    """(3,3,cin,cout) conv weight + (1,cout) bias -> (9*cout_pad, cin+1) block:
    tap t (row-major dy,dx) at rows [t*cout_pad, t*cout_pad+cout) cols [0,cin),
    bias at rows [0,cout) col cin (weights stored transposed: (cout, cin))."""
    w = np.asarray(w, np.float32)
    b = np.asarray(b, np.float32)
    cin, cout = w.shape[2], w.shape[3]
    blk = np.zeros((9 * cout_pad, cin + 1), np.float32)
    t = 0
    for dy in range(3):
        for dx in range(3):
            blk[t * cout_pad:t * cout_pad + cout, :cin] = w[dy, dx].T
            t += 1
    blk[:cout, cin] = b[0]
    return blk


def pack_params(params):
    """All weights/biases -> one (R,128) blob; all up-sample operators -> one
    (R,256) blob.  The kernel then needs 3 input DMAs instead of 36."""
    wp = _Packer(128)
    for i, (w, b) in enumerate(params['reg']):
        wp.add("reg%d" % i,
               np.concatenate([np.asarray(w).T, np.asarray(b).reshape(-1, 1)], axis=1))
    w_in, b_in = params['conv_in']
    wp.add("conv_in",
           np.concatenate([np.asarray(w_in)[:CODE_SIZE, :].T,
                           np.asarray(b_in).reshape(-1, 1)], axis=1))
    w0, b0 = params['conv_rgb'][0]                  # at 1x1 only the center tap matters
    wp.add("rgb0",
           np.concatenate([np.asarray(w0)[1, 1].T, np.asarray(b0).reshape(-1, 1)], axis=1))
    for i, (w, b) in enumerate(params['conv_layers']):
        cout = w.shape[3]
        wp.add("conv%d" % i, _conv_block(w, b, ((cout + 7) // 8) * 8))
    for i, (w, b) in enumerate(params['conv_rgb'][1:]):
        wp.add("rgb%d" % (i + 1), _conv_block(w, b, 8))
    wblob = jnp.asarray(wp.finalize())
    # TODO(synk): wblob/opblob could be stored in bfloat16 (halves constant DMA bytes);
    #             kept float32 here so the check vs the f32 reference stays tight.

    op = _Packer(256)
    for k in range(N_BLOCKS):
        n = 2 ** k
        op.add("nn%d" % k, _spatial_opT(_nn_op_1d, n))
        op.add("bl%d" % k, _spatial_opT(_bilinear_op_1d, n))
    opblob = jnp.asarray(op.finalize())
    return wblob, opblob, wp.index, op.index


# ============================== fused kernel ================================

def _make_kernel(batch, widx, opidx):
    f32 = jnp.float32
    HW = IMG_SIZE * IMG_SIZE

    def kernel(x_ref, w_ref, op_ref, o_ref, scr_ref):
        # zero the conv halo scratch once (halo hygiene; boundary masks also cover it)
        scr_ref[...] = jnp.zeros_like(scr_ref)

        def dense(h, name, relu=False):
            off, out_d, cols = widx[name]
            in_d = cols - 1
            w = w_ref[off:off + out_d, 0:in_d]
            b = w_ref[off:off + out_d, in_d:in_d + 1]
            y = jnp.dot(w, h, preferred_element_type=f32) + b
            return jnp.maximum(y, 0.0) if relu else y

        def edge_masks(wimg, m):
            """8 boundary masks (1, m), shared by every conv at this resolution."""
            col = jax.lax.broadcasted_iota(jnp.int32, (1, m), 1)
            shift = wimg.bit_length() - 1                 # log2(wimg); powers of two
            wp = col & (wimg - 1)                         # w coordinate
            hp = (col >> shift) & (wimg - 1)              # h coordinate
            l = wp >= 1
            r = wp <= wimg - 2
            u = hp >= 1
            d = hp <= wimg - 2
            f = lambda c: c.astype(f32)
            return {(-1, -1): f(u & l), (-1, 0): f(u), (-1, 1): f(u & r),
                    (0, -1): f(l), (0, 1): f(r),
                    (1, -1): f(d & l), (1, 0): f(d), (1, 1): f(d & r)}

        def conv3x3(x, name, cin, cout, wimg, masks, relu=False):
            """3x3 / stride 1 / pad 1 conv in (C, B*H*W) layout: 9 accumulating
            K=cin MXU matmuls over lane-shifted views of the halo scratch."""
            off, rows, _ = widx[name]
            cpad = rows // 9
            m = batch * wimg * wimg
            scr_ref[0:cin, _HALO:_HALO + m] = x
            bias = w_ref[off:off + cout, cin:cin + 1]
            acc = jnp.zeros((cout, m), f32) + bias
            t = 0
            for dy in (-1, 0, 1):
                for dx in (-1, 0, 1):
                    s = dy * wimg + dx
                    wt = w_ref[off + t * cpad:off + t * cpad + cout, 0:cin]
                    tap = scr_ref[0:cin, _HALO + s:_HALO + s + m]
                    if (dy, dx) != (0, 0):
                        tap = tap * masks[(dy, dx)]       # zero-padding semantics
                    acc = acc + jnp.dot(wt, tap, preferred_element_type=f32)
                    t += 1
            return jnp.maximum(acc, 0.0) if relu else acc

        def upsample2x(x, name, n_in):
            """(C, B*n_in) -> (C, B*4*n_in): per-image operator, no kron(eye(B))."""
            off = opidx[name][0]
            if n_in == 1:
                row = op_ref[off:off + 1, 0:4]                         # (1, 4)
                chunks = [x[:, b:b + 1] * row for b in range(batch)]
            else:
                op = op_ref[off:off + n_in, 0:4 * n_in]                # (n_in, 4*n_in)
                chunks = [jnp.dot(x[:, b * n_in:(b + 1) * n_in], op,
                                  preferred_element_type=f32)
                          for b in range(batch)]
            return chunks[0] if batch == 1 else jnp.concatenate(chunks, axis=1)

        # ---- regressor MLP, channels-first (feat, B) ----
        h = x_ref[...]
        h = dense(h, "reg0", relu=True)
        h = dense(h, "reg1", relu=True)
        lat = dense(h, "reg2")                           # (LATENT_SIZE, B)
        lat = lat[0:CODE_SIZE, :]                        # progressive code mask == row slice

        # ---- conv_in: 1x1 conv on 1x1 spatial == dense ----
        net = dense(lat, "conv_in")                      # (N_FEATURES, B)

        # ---- rgb head at 1x1: 3x3 conv with pad 1 on 1x1 == center tap only ----
        rgb = dense(net, "rgb0")                         # (3, B)
        rgb = upsample2x(rgb, "bl0", 1)                  # bilinear 1 -> 2

        # ---- progressive blocks ----
        for idx in range(N_BLOCKS):
            s_o = 2 ** (idx + 1)
            n_in = (2 ** idx) ** 2
            cin, cout = CONV_CH[idx]
            net = upsample2x(net, "nn%d" % idx, n_in)             # nearest 2x
            masks = edge_masks(s_o, batch * s_o * s_o)            # hoisted, shared
            net = conv3x3(net, "conv%d" % idx, cin, cout, s_o, masks, relu=True)
            if GEN_ACTIVATIONS[idx]:
                rgb = rgb + conv3x3(net, "rgb%d" % (idx + 1), cout, OUT_DIM, s_o, masks)
            if idx < N_BLOCKS - 1:
                rgb = upsample2x(rgb, "bl%d" % (idx + 1), s_o * s_o)   # bilinear 2x

        # ---- fused sigmoid (EUP exp + approx reciprocal) + lane-dense store ----
        out = pl.reciprocal(1.0 + jnp.exp(-rgb), approx=True)     # (3, B*HW)
        for b in range(batch):
            o_ref[b * OUT_DIM:(b + 1) * OUT_DIM, :] = out[:, b * HW:(b + 1) * HW]

    return kernel


# ================================= forward ==================================

def _flops_estimate(batch):
    fl = 0
    dims = [INP_DIM, N_UNITS, N_UNITS, LATENT_SIZE]
    for i in range(len(dims) - 1):
        fl += 2 * dims[i] * dims[i + 1] * batch
    fl += 2 * CODE_SIZE * N_FEATURES * batch
    fl += 2 * N_FEATURES * OUT_DIM * batch
    fl += 2 * OUT_DIM * 4 * batch                                 # bilinear 1->2
    for idx in range(N_BLOCKS):
        s_o = 2 ** (idx + 1)
        m = batch * s_o * s_o
        n_in = (2 ** idx) ** 2
        cin, cout = CONV_CH[idx]
        fl += 2 * cin * n_in * 4 * n_in * batch                   # nearest up
        fl += 2 * 9 * cin * cout * m                              # feature conv
        fl += 2 * 9 * cout * OUT_DIM * m                          # rgb conv
        if idx < N_BLOCKS - 1:
            fl += 2 * OUT_DIM * (s_o * s_o) * (4 * s_o * s_o) * batch
    return fl


def build_forward(params, batch):
    wblob, opblob, widx, opidx = pack_params(params)
    hw = IMG_SIZE * IMG_SIZE
    scr_lanes = ((_HALO + batch * hw + IMG_SIZE + 1 + 127) // 128) * 128
    kernel = _make_kernel(batch, widx, opidx)

    bytes_accessed = int(wblob.size + opblob.size + INP_DIM * batch
                         + batch * OUT_DIM * hw) * 4
    cost = pl.CostEstimate(flops=_flops_estimate(batch),
                           transcendentals=batch * OUT_DIM * hw,
                           bytes_accessed=bytes_accessed)

    call = pl.pallas_call(
        kernel,
        out_shape=jax.ShapeDtypeStruct((batch * OUT_DIM, hw), jnp.float32),
        scratch_shapes=[pltpu.VMEM((N_FEATURES, scr_lanes), jnp.float32)],
        cost_estimate=cost,
    )
    # TODO(synk): on v7x the batch could be split across the 2 TensorCores with a
    #             grid + dimension_semantics=("parallel",); single-core launch kept here.

    @jax.jit
    def fwd(wb, ob, x):
        out_flat = call(x.T, wb, ob)                    # (B*3, H*W), lane-dense output
        return out_flat.reshape(batch, OUT_DIM, IMG_SIZE, IMG_SIZE)   # NCHW, no transpose

    return functools.partial(fwd, wblob, opblob)


# ====================== pure-JAX reference (for checking) ===================

def _reference_forward(params, x):
    def lin(h, w, b, relu=False):
        y = h @ w + b
        return jnp.maximum(y, 0.0) if relu else y

    h = x
    n = len(params['reg'])
    for i, (w, b) in enumerate(params['reg']):
        h = lin(h, w, b, relu=(i < n - 1))
    lat = h
    if APPLY_MASK:
        msk = (jnp.arange(LATENT_SIZE) < CURRENT_CODE_SIZE).astype(lat.dtype)
        lat = lat * msk[None, :]
    w_in, b_in = params['conv_in']
    net = lin(lat, w_in, b_in)[:, None, None, :]            # NHWC (B,1,1,32)

    def conv3x3_ref(z, w, b, relu=False):
        B_, H, W, Cin = z.shape
        Cout = w.shape[-1]
        zp = jnp.pad(z, ((0, 0), (1, 1), (1, 1), (0, 0)))
        acc = jnp.zeros((B_, H, W, Cout), jnp.float32) + b.reshape(1, 1, 1, Cout)
        for dy in range(3):
            for dx in range(3):
                acc = acc + zp[:, dy:dy + H, dx:dx + W, :] @ w[dy, dx]
        return jnp.maximum(acc, 0.0) if relu else acc

    def up_nn(z):
        return jnp.repeat(jnp.repeat(z, 2, axis=1), 2, axis=2)

    def up_bl_axis(z, axis):
        nn_ = z.shape[axis]
        idx = jnp.arange(nn_)
        left = jnp.take(z, jnp.maximum(idx - 1, 0), axis=axis)
        right = jnp.take(z, jnp.minimum(idx + 1, nn_ - 1), axis=axis)
        even = 0.75 * z + 0.25 * left
        odd = 0.75 * z + 0.25 * right
        st = jnp.stack([even, odd], axis=axis + 1)
        shp = list(z.shape)
        shp[axis] = 2 * nn_
        return st.reshape(shp)

    def up_bl(z):
        return up_bl_axis(up_bl_axis(z, 1), 2)

    w0, b0 = params['conv_rgb'][0]
    rgb = up_bl(conv3x3_ref(net, w0, b0))
    for idx in range(N_BLOCKS):
        wc, bc = params['conv_layers'][idx]
        net = conv3x3_ref(up_nn(net), wc, bc, relu=True)
        wr, br = params['conv_rgb'][idx + 1]
        if GEN_ACTIVATIONS[idx]:
            rgb = rgb + conv3x3_ref(net, wr, br)
        if idx < N_BLOCKS - 1:
            rgb = up_bl(rgb)
    out = jax.nn.sigmoid(rgb)
    return jnp.transpose(out, (0, 3, 1, 2))


# =================================== main ===================================

if __name__ == "__main__":
    key = jax.random.PRNGKey(0)
    kp, kx = jax.random.split(key)
    params = init_params(kp)
    x = jax.random.normal(kx, (2, INP_DIM), jnp.float32)

    fwd = build_forward(params, batch=2)
    out = jax.block_until_ready(fwd(x))

    ref = jax.block_until_ready(jax.jit(_reference_forward)(params, x))

    assert out.shape == (2, OUT_DIM, IMG_SIZE, IMG_SIZE), out.shape
    assert out.dtype == jnp.float32
    assert bool(jnp.all(jnp.isfinite(out)))
    assert bool(jnp.all((out >= 0.0) & (out <= 1.0)))       # sigmoid output range
    max_diff = float(jnp.max(jnp.abs(out - ref)))
    assert max_diff < 1e-2, "mismatch vs pure-JAX reference: %g" % max_diff
    print("KERNEL_OK")
</pallas_src>

<mosaic_0001>
module attributes {stable_mosaic.version = 11 : i64} {
  func.func @kernel(%arg0: memref<32x2xf32, #tpu.memory_space<vmem>>, %arg1: memref<880x128xf32, #tpu.memory_space<vmem>>, %arg2: memref<192x256xf32, #tpu.memory_space<vmem>>, %arg3: memref<6x256xf32, #tpu.memory_space<vmem>>, %arg4: memref<32x768xf32, #tpu.memory_space<vmem>>) attributes {dimension_semantics = [], scalar_prefetch = 0 : i64, scratch_operands = 1 : i64, tpu.core_type = #tpu.core_type<tc>} {
    %cst = arith.constant 0.000000e+00 : f32
    %0 = vector.broadcast %cst : f32 to vector<32x768xf32>
    %c0 = arith.constant 0 : index
    %c0_0 = arith.constant 0 : index
    %1 = vector.load %arg4[%c0, %c0_0] : memref<32x768xf32, #tpu.memory_space<vmem>>, vector<32x768xf32>
    tpu.vector_store %arg4[%c0, %c0_0], %0 {strides = array<i32>} : memref<32x768xf32, #tpu.memory_space<vmem>>, vector<32x768xf32>,
    %c0_1 = arith.constant 0 : index
    %c0_2 = arith.constant 0 : index
    %2 = vector.load %arg0[%c0_1, %c0_2] : memref<32x2xf32, #tpu.memory_space<vmem>>, vector<32x2xf32>
    %c0_3 = arith.constant 0 : index
    %c0_4 = arith.constant 0 : index
    %3 = vector.load %arg1[%c0_3, %c0_4] : memref<880x128xf32, #tpu.memory_space<vmem>>, vector<64x32xf32>
    %c0_5 = arith.constant 0 : index
    %c32 = arith.constant 32 : index
    %4 = vector.load %arg1[%c0_5, %c32] : memref<880x128xf32, #tpu.memory_space<vmem>>, vector<64x1xf32>
    %cst_6 = arith.constant dense<0.000000e+00> : vector<64x2xf32>
    %5 = tpu.matmul %3, %2, %cst_6 {dimension_numbers = #tpu.dot_dimension_numbers<[1], [0], [0], [1], [0, 0, 1, 1], [], []>} : vector<64x32xf32>, vector<32x2xf32>, vector<64x2xf32> -> vector<64x2xf32>
    %6 = vector.broadcast %4 : vector<64x1xf32> to vector<64x2xf32>
    %7 = arith.addf %5, %6 : vector<64x2xf32>
    %cst_7 = arith.constant 0.000000e+00 : f32
    %8 = vector.broadcast %cst_7 : f32 to vector<64x2xf32>
    %9 = arith.maximumf %7, %8 : vector<64x2xf32>
    %c64 = arith.constant 64 : index
    %c0_8 = arith.constant 0 : index
    %10 = vector.load %arg1[%c64, %c0_8] : memref<880x128xf32, #tpu.memory_space<vmem>>, vector<64x64xf32>
    %c64_9 = arith.constant 64 : index
    %c64_10 = arith.constant 64 : index
    %11 = vector.load %arg1[%c64_9, %c64_10] : memref<880x128xf32, #tpu.memory_space<vmem>>, vector<64x1xf32>
    %cst_11 = arith.constant dense<0.000000e+00> : vector<64x2xf32>
    %12 = tpu.matmul %10, %9, %cst_11 {dimension_numbers = #tpu.dot_dimension_numbers<[1], [0], [0], [1], [0, 0, 1, 1], [], []>} : vector<64x64xf32>, vector<64x2xf32>, vector<64x2xf32> -> vector<64x2xf32>
    %13 = vector.broadcast %11 : vector<64x1xf32> to vector<64x2xf32>
    %14 = arith.addf %12, %13 : vector<64x2xf32>
    %cst_12 = arith.constant 0.000000e+00 : f32
    %15 = vector.broadcast %cst_12 : f32 to vector<64x2xf32>
    %16 = arith.maximumf %14, %15 : vector<64x2xf32>
    %c128 = arith.constant 128 : index
    %c0_13 = arith.constant 0 : index
    %17 = vector.load %arg1[%c128, %c0_13] : memref<880x128xf32, #tpu.memory_space<vmem>>, vector<64x64xf32>
    %c128_14 = arith.constant 128 : index
    %c64_15 = arith.constant 64 : index
    %18 = vector.load %arg1[%c128_14, %c64_15] : memref<880x128xf32, #tpu.memory_space<vmem>>, vector<64x1xf32>
    %cst_16 = arith.constant dense<0.000000e+00> : vector<64x2xf32>
    %19 = tpu.matmul %17, %16, %cst_16 {dimension_numbers = #tpu.dot_dimension_numbers<[1], [0], [0], [1], [0, 0, 1, 1], [], []>} : vector<64x64xf32>, vector<64x2xf32>, vector<64x2xf32> -> vector<64x2xf32>
    %20 = vector.broadcast %18 : vector<64x1xf32> to vector<64x2xf32>
    %21 = arith.addf %19, %20 : vector<64x2xf32>
    %22 = vector.extract_strided_slice %21 {offsets = [0, 0], sizes = [16, 2], strides = [1, 1]} : vector<64x2xf32> to vector<16x2xf32>
    %c192 = arith.constant 192 : index
    %c0_17 = arith.constant 0 : index
    %23 = vector.load %arg1[%c192, %c0_17] : memref<880x128xf32, #tpu.memory_space<vmem>>, vector<32x16xf32>
    %c192_18 = arith.constant 192 : index
    %c16 = arith.constant 16 : index
    %24 = vector.load %arg1[%c192_18, %c16] : memref<880x128xf32, #tpu.memory_space<vmem>>, vector<32x1xf32>
    %cst_19 = arith.constant dense<0.000000e+00> : vector<32x2xf32>
    %25 = tpu.matmul %23, %22, %cst_19 {dimension_numbers = #tpu.dot_dimension_numbers<[1], [0], [0], [1], [0, 0, 1, 1], [], []>} : vector<32x16xf32>, vector<16x2xf32>, vector<32x2xf32> -> vector<32x2xf32>
    %26 = vector.broadcast %24 : vector<32x1xf32> to vector<32x2xf32>
    %27 = arith.addf %25, %26 : vector<32x2xf32>
    %c224 = arith.constant 224 : index
    %c0_20 = arith.constant 0 : index
    %28 = vector.load %arg1[%c224, %c0_20] : memref<880x128xf32, #tpu.memory_space<vmem>>, vector<3x32xf32>
    %c224_21 = arith.constant 224 : index
    %c32_22 = arith.constant 32 : index
    %29 = vector.load %arg1[%c224_21, %c32_22] : memref<880x128xf32, #tpu.memory_space<vmem>>, vector<3x1xf32>
    %cst_23 = arith.constant dense<0.000000e+00> : vector<3x2xf32>
    %30 = tpu.matmul %28, %27, %cst_23 {dimension_numbers = #tpu.dot_dimension_numbers<[1], [0], [0], [1], [0, 0, 1, 1], [], []>} : vector<3x32xf32>, vector<32x2xf32>, vector<3x2xf32> -> vector<3x2xf32>
    %31 = vector.broadcast %29 : vector<3x1xf32> to vector<3x2xf32>
    %32 = arith.addf %30, %31 : vector<3x2xf32>
    %c8 = arith.constant 8 : index
    %c0_24 = arith.constant 0 : index
    %33 = vector.load %arg2[%c8, %c0_24] : memref<192x256xf32, #tpu.memory_space<vmem>>, vector<1x4xf32>
    %34 = vector.extract_strided_slice %32 {offsets = [0, 0], sizes = [3, 1], strides = [1, 1]} : vector<3x2xf32> to vector<3x1xf32>
    %35 = vector.broadcast %34 : vector<3x1xf32> to vector<3x4xf32>
    %36 = vector.broadcast %33 : vector<1x4xf32> to vector<3x4xf32>
    %37 = arith.mulf %35, %36 : vector<3x4xf32>
    %38 = vector.extract_strided_slice %32 {offsets = [0, 1], sizes = [3, 1], strides = [1, 1]} : vector<3x2xf32> to vector<3x1xf32>
    %39 = vector.broadcast %38 : vector<3x1xf32> to vector<3x4xf32>
    %40 = vector.broadcast %33 : vector<1x4xf32> to vector<3x4xf32>
    %41 = arith.mulf %39, %40 : vector<3x4xf32>
    %42 = tpu.concatenate %37, %41 in 1 : vector<3x4xf32>, vector<3x4xf32> -> vector<3x8xf32>
    %c0_25 = arith.constant 0 : index
    %c0_26 = arith.constant 0 : index
    %43 = vector.load %arg2[%c0_25, %c0_26] : memref<192x256xf32, #tpu.memory_space<vmem>>, vector<1x4xf32>
    %44 = vector.extract_strided_slice %27 {offsets = [0, 0], sizes = [32, 1], strides = [1, 1]} : vector<32x2xf32> to vector<32x1xf32>
    %45 = vector.broadcast %44 : vector<32x1xf32> to vector<32x4xf32>
    %46 = vector.broadcast %43 : vector<1x4xf32> to vector<32x4xf32>
    %47 = arith.mulf %45, %46 : vector<32x4xf32>
    %48 = vector.extract_strided_slice %27 {offsets = [0, 1], sizes = [32, 1], strides = [1, 1]} : vector<32x2xf32> to vector<32x1xf32>
    %49 = vector.broadcast %48 : vector<32x1xf32> to vector<32x4xf32>
    %50 = vector.broadcast %43 : vector<1x4xf32> to vector<32x4xf32>
    %51 = arith.mulf %49, %50 : vector<32x4xf32>
    %52 = tpu.concatenate %47, %51 in 1 : vector<32x4xf32>, vector<32x4xf32> -> vector<32x8xf32>
    %53 = tpu.iota {dimensions = array<i32: 1>} : vector<1x8xi32>
    %c1_i32 = arith.constant 1 : i32
    %54 = vector.broadcast %c1_i32 : i32 to vector<1x8xi32>
    %55 = arith.andi %53, %54 : vector<1x8xi32>
    %c1_i32_27 = arith.constant 1 : i32
    %56 = vector.broadcast %c1_i32_27 : i32 to vector<1x8xi32>
    %57 = arith.shrsi %53, %56 : vector<1x8xi32>
    %c1_i32_28 = arith.constant 1 : i32
    %58 = vector.broadcast %c1_i32_28 : i32 to vector<1x8xi32>
    %59 = arith.andi %57, %58 : vector<1x8xi32>
    %c1_i32_29 = arith.constant 1 : i32
    %60 = vector.broadcast %c1_i32_29 : i32 to vector<1x8xi32>
    %61 = arith.cmpi sge, %55, %60 : vector<1x8xi32>
    %c0_i32 = arith.constant 0 : i32
    %62 = vector.broadcast %c0_i32 : i32 to vector<1x8xi32>
    %63 = arith.cmpi sle, %55, %62 : vector<1x8xi32>
    %c1_i32_30 = arith.constant 1 : i32
    %64 = vector.broadcast %c1_i32_30 : i32 to vector<1x8xi32>
    %65 = arith.cmpi sge, %59, %64 : vector<1x8xi32>
    %c0_i32_31 = arith.constant 0 : i32
    %66 = vector.broadcast %c0_i32_31 : i32 to vector<1x8xi32>
    %67 = arith.cmpi sle, %59, %66 : vector<1x8xi32>
    %68 = arith.andi %65, %61 : vector<1x8xi1>
    %69 = arith.extui %68 : vector<1x8xi1> to vector<1x8xi32>
    %70 = arith.sitofp %69 : vector<1x8xi32> to vector<1x8xf32>
    %71 = arith.extui %65 : vector<1x8xi1> to vector<1x8xi32>
    %72 = arith.sitofp %71 : vector<1x8xi32> to vector<1x8xf32>
    %73 = arith.andi %65, %63 : vector<1x8xi1>
    %74 = arith.extui %73 : vector<1x8xi1> to vector<1x8xi32>
    %75 = arith.sitofp %74 : vector<1x8xi32> to vector<1x8xf32>
    %76 = arith.extui %61 : vector<1x8xi1> to vector<1x8xi32>
    %77 = arith.sitofp %76 : vector<1x8xi32> to vector<1x8xf32>
    %78 = arith.extui %63 : vector<1x8xi1> to vector<1x8xi32>
    %79 = arith.sitofp %78 : vector<1x8xi32> to vector<1x8xf32>
    %80 = arith.andi %67, %61 : vector<1x8xi1>
    %81 = arith.extui %80 : vector<1x8xi1> to vector<1x8xi32>
    %82 = arith.sitofp %81 : vector<1x8xi32> to vector<1x8xf32>
    %83 = arith.extui %67 : vector<1x8xi1> to vector<1x8xi32>
    %84 = arith.sitofp %83 : vector<1x8xi32> to vector<1x8xf32>
    %85 = arith.andi %67, %63 : vector<1x8xi1>
    %86 = arith.extui %85 : vector<1x8xi1> to vector<1x8xi32>
    %87 = arith.sitofp %86 : vector<1x8xi32> to vector<1x8xf32>
    %c0_32 = arith.constant 0 : index
    %c128_33 = arith.constant 128 : index
    %88 = vector.load %arg4[%c0_32, %c128_33] : memref<32x768xf32, #tpu.memory_space<vmem>>, vector<32x8xf32>
    tpu.vector_store %arg4[%c0_32, %c128_33], %52 {strides = array<i32>} : memref<32x768xf32, #tpu.memory_space<vmem>>, vector<32x8xf32>,
    %c232 = arith.constant 232 : index
    %c32_34 = arith.constant 32 : index
    %89 = vector.load %arg1[%c232, %c32_34] : memref<880x128xf32, #tpu.memory_space<vmem>>, vector<16x1xf32>
    %cst_35 = arith.constant 0.000000e+00 : f32
    %90 = vector.broadcast %cst_35 : f32 to vector<16x8xf32>
    %91 = vector.broadcast %89 : vector<16x1xf32> to vector<16x8xf32>
    %92 = arith.addf %90, %91 : vector<16x8xf32>
    %c232_36 = arith.constant 232 : index
    %c0_37 = arith.constant 0 : index
    %93 = vector.load %arg1[%c232_36, %c0_37] : memref<880x128xf32, #tpu.memory_space<vmem>>, vector<16x32xf32>
    %c0_38 = arith.constant 0 : index
    %c125 = arith.constant 125 : index
    %94 = vector.load %arg4[%c0_38, %c125] : memref<32x768xf32, #tpu.memory_space<vmem>>, vector<32x8xf32>
    %95 = vector.broadcast %70 : vector<1x8xf32> to vector<32x8xf32>
    %96 = arith.mulf %94, %95 : vector<32x8xf32>
    %cst_39 = arith.constant dense<0.000000e+00> : vector<16x8xf32>
    %97 = tpu.matmul %93, %96, %cst_39 {dimension_numbers = #tpu.dot_dimension_numbers<[1], [0], [0], [1], [0, 0, 1, 1], [], []>} : vector<16x32xf32>, vector<32x8xf32>, vector<16x8xf32> -> vector<16x8xf32>
    %98 = arith.addf %92, %97 : vector<16x8xf32>
    %c248 = arith.constant 248 : index
    %c0_40 = arith.constant 0 : index
    %99 = vector.load %arg1[%c248, %c0_40] : memref<880x128xf32, #tpu.memory_space<vmem>>, vector<16x32xf32>
    %c0_41 = arith.constant 0 : index
    %c126 = arith.constant 126 : index
    %100 = vector.load %arg4[%c0_41, %c126] : memref<32x768xf32, #tpu.memory_space<vmem>>, vector<32x8xf32>
    %101 = vector.broadcast %72 : vector<1x8xf32> to vector<32x8xf32>
    %102 = arith.mulf %100, %101 : vector<32x8xf32>
    %cst_42 = arith.constant dense<0.000000e+00> : vector<16x8xf32>
    %103 = tpu.matmul %99, %102, %cst_42 {dimension_numbers = #tpu.dot_dimension_numbers<[1], [0], [0], [1], [0, 0, 1, 1], [], []>} : vector<16x32xf32>, vector<32x8xf32>, vector<16x8xf32> -> vector<16x8xf32>
    %104 = arith.addf %98, %103 : vector<16x8xf32>
    %c264 = arith.constant 264 : index
    %c0_43 = arith.constant 0 : index
    %105 = vector.load %arg1[%c264, %c0_43] : memref<880x128xf32, #tpu.memory_space<vmem>>, vector<16x32xf32>
    %c0_44 = arith.constant 0 : index
    %c127 = arith.constant 127 : index
    %106 = vector.load %arg4[%c0_44, %c127] : memref<32x768xf32, #tpu.memory_space<vmem>>, vector<32x8xf32>
    %107 = vector.broadcast %75 : vector<1x8xf32> to vector<32x8xf32>
    %108 = arith.mulf %106, %107 : vector<32x8xf32>
    %cst_45 = arith.constant dense<0.000000e+00> : vector<16x8xf32>
    %109 = tpu.matmul %105, %108, %cst_45 {dimension_numbers = #tpu.dot_dimension_numbers<[1], [0], [0], [1], [0, 0, 1, 1], [], []>} : vector<16x32xf32>, vector<32x8xf32>, vector<16x8xf32> -> vector<16x8xf32>
    %110 = arith.addf %104, %109 : vector<16x8xf32>
    %c280 = arith.constant 280 : index
    %c0_46 = arith.constant 0 : index
    %111 = vector.load %arg1[%c280, %c0_46] : memref<880x128xf32, #tpu.memory_space<vmem>>, vector<16x32xf32>
    %c0_47 = arith.constant 0 : index
    %c127_48 = arith.constant 127 : index
    %112 = vector.load %arg4[%c0_47, %c127_48] : memref<32x768xf32, #tpu.memory_space<vmem>>, vector<32x8xf32>
    %113 = vector.broadcast %77 : vector<1x8xf32> to vector<32x8xf32>
    %114 = arith.mulf %112, %113 : vector<32x8xf32>
    %cst_49 = arith.constant dense<0.000000e+00> : vector<16x8xf32>
    %115 = tpu.matmul %111, %114, %cst_49 {dimension_numbers = #tpu.dot_dimension_numbers<[1], [0], [0], [1], [0, 0, 1, 1], [], []>} : vector<16x32xf32>, vector<32x8xf32>, vector<16x8xf32> -> vector<16x8xf32>
    %116 = arith.addf %110, %115 : vector<16x8xf32>
    %c296 = arith.constant 296 : index
    %c0_50 = arith.constant 0 : index
    %117 = vector.load %arg1[%c296, %c0_50] : memref<880x128xf32, #tpu.memory_space<vmem>>, vector<16x32xf32>
    %c0_51 = arith.constant 0 : index
    %c128_52 = arith.constant 128 : index
    %118 = vector.load %arg4[%c0_51, %c128_52] : memref<32x768xf32, #tpu.memory_space<vmem>>, vector<32x8xf32>
    %cst_53 = arith.constant dense<0.000000e+00> : vector<16x8xf32>
    %119 = tpu.matmul %117, %118, %cst_53 {dimension_numbers = #tpu.dot_dimension_numbers<[1], [0], [0], [1], [0, 0, 1, 1], [], []>} : vector<16x32xf32>, vector<32x8xf32>, vector<16x8xf32> -> vector<16x8xf32>
    %120 = arith.addf %116, %119 : vector<16x8xf32>
    %c312 = arith.constant 312 : index
    %c0_54 = arith.constant 0 : index
    %121 = vector.load %arg1[%c312, %c0_54] : memref<880x128xf32, #tpu.memory_space<vmem>>, vector<16x32xf32>
    %c0_55 = arith.constant 0 : index
    %c129 = arith.constant 129 : index
    %122 = vector.load %arg4[%c0_55, %c129] : memref<32x768xf32, #tpu.memory_space<vmem>>, vector<32x8xf32>
    %123 = vector.broadcast %79 : vector<1x8xf32> to vector<32x8xf32>
    %124 = arith.mulf %122, %123 : vector<32x8xf32>
    %cst_56 = arith.constant dense<0.000000e+00> : vector<16x8xf32>
    %125 = tpu.matmul %121, %124, %cst_56 {dimension_numbers = #tpu.dot_dimension_numbers<[1], [0], [0], [1], [0, 0, 1, 1], [], []>} : vector<16x32xf32>, vector<32x8xf32>, vector<16x8xf32> -> vector<16x8xf32>
    %126 = arith.addf %120, %125 : vector<16x8xf32>
    %c328 = arith.constant 328 : index
    %c0_57 = arith.constant 0 : index
    %127 = vector.load %arg1[%c328, %c0_57] : memref<880x128xf32, #tpu.memory_space<vmem>>, vector<16x32xf32>
    %c0_58 = arith.constant 0 : index
    %c129_59 = arith.constant 129 : index
    %128 = vector.load %arg4[%c0_58, %c129_59] : memref<32x768xf32, #tpu.memory_space<vmem>>, vector<32x8xf32>
    %129 = vector.broadcast %82 : vector<1x8xf32> to vector<32x8xf32>
    %130 = arith.mulf %128, %129 : vector<32x8xf32>
    %cst_60 = arith.constant dense<0.000000e+00> : vector<16x8xf32>
    %131 = tpu.matmul %127, %130, %cst_60 {dimension_numbers = #tpu.dot_dimension_numbers<[1], [0], [0], [1], [0, 0, 1, 1], [], []>} : vector<16x32xf32>, vector<32x8xf32>, vector<16x8xf32> -> vector<16x8xf32>
    %132 = arith.addf %126, %131 : vector<16x8xf32>
    %c344 = arith.constant 344 : index
    %c0_61 = arith.constant 0 : index
    %133 = vector.load %arg1[%c344, %c0_61] : memref<880x128xf32, #tpu.memory_space<vmem>>, vector<16x32xf32>
    %c0_62 = arith.constant 0 : index
    %c130 = arith.constant 130 : index
    %134 = vector.load %arg4[%c0_62, %c130] : memref<32x768xf32, #tpu.memory_space<vmem>>, vector<32x8xf32>
    %135 = vector.broadcast %84 : vector<1x8xf32> to vector<32x8xf32>
    %136 = arith.mulf %134, %135 : vector<32x8xf32>
    %cst_63 = arith.constant dense<0.000000e+00> : vector<16x8xf32>
    %137 = tpu.matmul %133, %136, %cst_63 {dimension_numbers = #tpu.dot_dimension_numbers<[1], [0], [0], [1], [0, 0, 1, 1], [], []>} : vector<16x32xf32>, vector<32x8xf32>, vector<16x8xf32> -> vector<16x8xf32>
    %138 = arith.addf %132, %137 : vector<16x8xf32>
    %c360 = arith.constant 360 : index
    %c0_64 = arith.constant 0 : index
    %139 = vector.load %arg1[%c360, %c0_64] : memref<880x128xf32, #tpu.memory_space<vmem>>, vector<16x32xf32>
    %c0_65 = arith.constant 0 : index
    %c131 = arith.constant 131 : index
    %140 = vector.load %arg4[%c0_65, %c131] : memref<32x768xf32, #tpu.memory_space<vmem>>, vector<32x8xf32>
    %141 = vector.broadcast %87 : vector<1x8xf32> to vector<32x8xf32>
    %142 = arith.mulf %140, %141 : vector<32x8xf32>
    %cst_66 = arith.constant dense<0.000000e+00> : vector<16x8xf32>
    %143 = tpu.matmul %139, %142, %cst_66 {dimension_numbers = #tpu.dot_dimension_numbers<[1], [0], [0], [1], [0, 0, 1, 1], [], []>} : vector<16x32xf32>, vector<32x8xf32>, vector<16x8xf32> -> vector<16x8xf32>
    %144 = arith.addf %138, %143 : vector<16x8xf32>
    %cst_67 = arith.constant 0.000000e+00 : f32
    %145 = vector.broadcast %cst_67 : f32 to vector<16x8xf32>
    %146 = arith.maximumf %144, %145 : vector<16x8xf32>
    %c0_68 = arith.constant 0 : index
    %c128_69 = arith.constant 128 : index
    %147 = vector.load %arg4[%c0_68, %c128_69] : memref<32x768xf32, #tpu.memory_space<vmem>>, vector<16x8xf32>
    tpu.vector_store %arg4[%c0_68, %c128_69], %146 {strides = array<i32>} : memref<32x768xf32, #tpu.memory_space<vmem>>, vector<16x8xf32>,
    %c592 = arith.constant 592 : index
    %c16_70 = arith.constant 16 : index
    %148 = vector.load %arg1[%c592, %c16_70] : memref<880x128xf32, #tpu.memory_space<vmem>>, vector<3x1xf32>
    %cst_71 = arith.constant 0.000000e+00 : f32
    %149 = vector.broadcast %cst_71 : f32 to vector<3x8xf32>
    %150 = vector.broadcast %148 : vector<3x1xf32> to vector<3x8xf32>
    %151 = arith.addf %149, %150 : vector<3x8xf32>
    %c592_72 = arith.constant 592 : index
    %c0_73 = arith.constant 0 : index
    %152 = vector.load %arg1[%c592_72, %c0_73] : memref<880x128xf32, #tpu.memory_space<vmem>>, vector<3x16xf32>
    %c0_74 = arith.constant 0 : index
    %c125_75 = arith.constant 125 : index
    %153 = vector.load %arg4[%c0_74, %c125_75] : memref<32x768xf32, #tpu.memory_space<vmem>>, vector<16x8xf32>
    %154 = vector.broadcast %70 : vector<1x8xf32> to vector<16x8xf32>
    %155 = arith.mulf %153, %154 : vector<16x8xf32>
    %cst_76 = arith.constant dense<0.000000e+00> : vector<3x8xf32>
    %156 = tpu.matmul %152, %155, %cst_76 {dimension_numbers = #tpu.dot_dimension_numbers<[1], [0], [0], [1], [0, 0, 1, 1], [], []>} : vector<3x16xf32>, vector<16x8xf32>, vector<3x8xf32> -> vector<3x8xf32>
    %157 = arith.addf %151, %156 : vector<3x8xf32>
    %c600 = arith.constant 600 : index
    %c0_77 = arith.constant 0 : index
    %158 = vector.load %arg1[%c600, %c0_77] : memref<880x128xf32, #tpu.memory_space<vmem>>, vector<3x16xf32>
    %c0_78 = arith.constant 0 : index
    %c126_79 = arith.constant 126 : index
    %159 = vector.load %arg4[%c0_78, %c126_79] : memref<32x768xf32, #tpu.memory_space<vmem>>, vector<16x8xf32>
    %160 = vector.broadcast %72 : vector<1x8xf32> to vector<16x8xf32>
    %161 = arith.mulf %159, %160 : vector<16x8xf32>
    %cst_80 = arith.constant dense<0.000000e+00> : vector<3x8xf32>
    %162 = tpu.matmul %158, %161, %cst_80 {dimension_numbers = #tpu.dot_dimension_numbers<[1], [0], [0], [1], [0, 0, 1, 1], [], []>} : vector<3x16xf32>, vector<16x8xf32>, vector<3x8xf32> -> vector<3x8xf32>
    %163 = arith.addf %157, %162 : vector<3x8xf32>
    %c608 = arith.constant 608 : index
    %c0_81 = arith.constant 0 : index
    %164 = vector.load %arg1[%c608, %c0_81] : memref<880x128xf32, #tpu.memory_space<vmem>>, vector<3x16xf32>
    %c0_82 = arith.constant 0 : index
    %c127_83 = arith.constant 127 : index
    %165 = vector.load %arg4[%c0_82, %c127_83] : memref<32x768xf32, #tpu.memory_space<vmem>>, vector<16x8xf32>
    %166 = vector.broadcast %75 : vector<1x8xf32> to vector<16x8xf32>
    %167 = arith.mulf %165, %166 : vector<16x8xf32>
    %cst_84 = arith.constant dense<0.000000e+00> : vector<3x8xf32>
    %168 = tpu.matmul %164, %167, %cst_84 {dimension_numbers = #tpu.dot_dimension_numbers<[1], [0], [0], [1], [0, 0, 1, 1], [], []>} : vector<3x16xf32>, vector<16x8xf32>, vector<3x8xf32> -> vector<3x8xf32>
    %169 = arith.addf %163, %168 : vector<3x8xf32>
    %c616 = arith.constant 616 : index
    %c0_85 = arith.constant 0 : index
    %170 = vector.load %arg1[%c616, %c0_85] : memref<880x128xf32, #tpu.memory_space<vmem>>, vector<3x16xf32>
    %c0_86 = arith.constant 0 : index
    %c127_87 = arith.constant 127 : index
    %171 = vector.load %arg4[%c0_86, %c127_87] : memref<32x768xf32, #tpu.memory_space<vmem>>, vector<16x8xf32>
    %172 = vector.broadcast %77 : vector<1x8xf32> to vector<16x8xf32>
    %173 = arith.mulf %171, %172 : vector<16x8xf32>
    %cst_88 = arith.constant dense<0.000000e+00> : vector<3x8xf32>
    %174 = tpu.matmul %170, %173, %cst_88 {dimension_numbers = #tpu.dot_dimension_numbers<[1], [0], [0], [1], [0, 0, 1, 1], [], []>} : vector<3x16xf32>, vector<16x8xf32>, vector<3x8xf32> -> vector<3x8xf32>
    %175 = arith.addf %169, %174 : vector<3x8xf32>
    %c624 = arith.constant 624 : index
    %c0_89 = arith.constant 0 : index
    %176 = vector.load %arg1[%c624, %c0_89] : memref<880x128xf32, #tpu.memory_space<vmem>>, vector<3x16xf32>
    %c0_90 = arith.constant 0 : index
    %c128_91 = arith.constant 128 : index
    %177 = vector.load %arg4[%c0_90, %c128_91] : memref<32x768xf32, #tpu.memory_space<vmem>>, vector<16x8xf32>
    %cst_92 = arith.constant dense<0.000000e+00> : vector<3x8xf32>
    %178 = tpu.matmul %176, %177, %cst_92 {dimension_numbers = #tpu.dot_dimension_numbers<[1], [0], [0], [1], [0, 0, 1, 1], [], []>} : vector<3x16xf32>, vector<16x8xf32>, vector<3x8xf32> -> vector<3x8xf32>
    %179 = arith.addf %175, %178 : vector<3x8xf32>
    %c632 = arith.constant 632 : index
    %c0_93 = arith.constant 0 : index
    %180 = vector.load %arg1[%c632, %c0_93] : memref<880x128xf32, #tpu.memory_space<vmem>>, vector<3x16xf32>
    %c0_94 = arith.constant 0 : index
    %c129_95 = arith.constant 129 : index
    %181 = vector.load %arg4[%c0_94, %c129_95] : memref<32x768xf32, #tpu.memory_space<vmem>>, vector<16x8xf32>
    %182 = vector.broadcast %79 : vector<1x8xf32> to vector<16x8xf32>
    %183 = arith.mulf %181, %182 : vector<16x8xf32>
    %cst_96 = arith.constant dense<0.000000e+00> : vector<3x8xf32>
    %184 = tpu.matmul %180, %183, %cst_96 {dimension_numbers = #tpu.dot_dimension_numbers<[1], [0], [0], [1], [0, 0, 1, 1], [], []>} : vector<3x16xf32>, vector<16x8xf32>, vector<3x8xf32> -> vector<3x8xf32>
    %185 = arith.addf %179, %184 : vector<3x8xf32>
    %c640 = arith.constant 640 : index
    %c0_97 = arith.constant 0 : index
    %186 = vector.load %arg1[%c640, %c0_97] : memref<880x128xf32, #tpu.memory_space<vmem>>, vector<3x16xf32>
    %c0_98 = arith.constant 0 : index
    %c129_99 = arith.constant 129 : index
    %187 = vector.load %arg4[%c0_98, %c129_99] : memref<32x768xf32, #tpu.memory_space<vmem>>, vector<16x8xf32>
    %188 = vector.broadcast %82 : vector<1x8xf32> to vector<16x8xf32>
    %189 = arith.mulf %187, %188 : vector<16x8xf32>
    %cst_100 = arith.constant dense<0.000000e+00> : vector<3x8xf32>
    %190 = tpu.matmul %186, %189, %cst_100 {dimension_numbers = #tpu.dot_dimension_numbers<[1], [0], [0], [1], [0, 0, 1, 1], [], []>} : vector<3x16xf32>, vector<16x8xf32>, vector<3x8xf32> -> vector<3x8xf32>
    %191 = arith.addf %185, %190 : vector<3x8xf32>
    %c648 = arith.constant 648 : index
    %c0_101 = arith.constant 0 : index
    %192 = vector.load %arg1[%c648, %c0_101] : memref<880x128xf32, #tpu.memory_space<vmem>>, vector<3x16xf32>
    %c0_102 = arith.constant 0 : index
    %c130_103 = arith.constant 130 : index
    %193 = vector.load %arg4[%c0_102, %c130_103] : memref<32x768xf32, #tpu.memory_space<vmem>>, vector<16x8xf32>
    %194 = vector.broadcast %84 : vector<1x8xf32> to vector<16x8xf32>
    %195 = arith.mulf %193, %194 : vector<16x8xf32>
    %cst_104 = arith.constant dense<0.000000e+00> : vector<3x8xf32>
    %196 = tpu.matmul %192, %195, %cst_104 {dimension_numbers = #tpu.dot_dimension_numbers<[1], [0], [0], [1], [0, 0, 1, 1], [], []>} : vector<3x16xf32>, vector<16x8xf32>, vector<3x8xf32> -> vector<3x8xf32>
    %197 = arith.addf %191, %196 : vector<3x8xf32>
    %c656 = arith.constant 656 : index
    %c0_105 = arith.constant 0 : index
    %198 = vector.load %arg1[%c656, %c0_105] : memref<880x128xf32, #tpu.memory_space<vmem>>, vector<3x16xf32>
    %c0_106 = arith.constant 0 : index
    %c131_107 = arith.constant 131 : index
    %199 = vector.load %arg4[%c0_106, %c131_107] : memref<32x768xf32, #tpu.memory_space<vmem>>, vector<16x8xf32>
    %200 = vector.broadcast %87 : vector<1x8xf32> to vector<16x8xf32>
    %201 = arith.mulf %199, %200 : vector<16x8xf32>
    %cst_108 = arith.constant dense<0.000000e+00> : vector<3x8xf32>
    %202 = tpu.matmul %198, %201, %cst_108 {dimension_numbers = #tpu.dot_dimension_numbers<[1], [0], [0], [1], [0, 0, 1, 1], [], []>} : vector<3x16xf32>, vector<16x8xf32>, vector<3x8xf32> -> vector<3x8xf32>
    %203 = arith.addf %197, %202 : vector<3x8xf32>
    %204 = arith.addf %42, %203 : vector<3x8xf32>
    %c24 = arith.constant 24 : index
    %c0_109 = arith.constant 0 : index
    %205 = vector.load %arg2[%c24, %c0_109] : memref<192x256xf32, #tpu.memory_space<vmem>>, vector<4x16xf32>
    %206 = vector.extract_strided_slice %204 {offsets = [0, 0], sizes = [3, 4], strides = [1, 1]} : vector<3x8xf32> to vector<3x4xf32>
    %cst_110 = arith.constant dense<0.000000e+00> : vector<3x16xf32>
    %207 = tpu.matmul %206, %205, %cst_110 {dimension_numbers = #tpu.dot_dimension_numbers<[1], [0], [0], [1], [0, 0, 1, 1], [], []>} : vector<3x4xf32>, vector<4x16xf32>, vector<3x16xf32> -> vector<3x16xf32>
    %208 = vector.extract_strided_slice %204 {offsets = [0, 4], sizes = [3, 4], strides = [1, 1]} : vector<3x8xf32> to vector<3x4xf32>
    %cst_111 = arith.constant dense<0.000000e+00> : vector<3x16xf32>
    %209 = tpu.matmul %208, %205, %cst_111 {dimension_numbers = #tpu.dot_dimension_numbers<[1], [0], [0], [1], [0, 0, 1, 1], [], []>} : vector<3x4xf32>, vector<4x16xf32>, vector<3x16xf32> -> vector<3x16xf32>
    %210 = tpu.concatenate %207, %209 in 1 : vector<3x16xf32>, vector<3x16xf32> -> vector<3x32xf32>
    %c16_112 = arith.constant 16 : index
    %c0_113 = arith.constant 0 : index
    %211 = vector.load %arg2[%c16_112, %c0_113] : memref<192x256xf32, #tpu.memory_space<vmem>>, vector<4x16xf32>
    %212 = vector.extract_strided_slice %146 {offsets = [0, 0], sizes = [16, 4], strides = [1, 1]} : vector<16x8xf32> to vector<16x4xf32>
    %cst_114 = arith.constant dense<0.000000e+00> : vector<16x16xf32>
    %213 = tpu.matmul %212, %211, %cst_114 {dimension_numbers = #tpu.dot_dimension_numbers<[1], [0], [0], [1], [0, 0, 1, 1], [], []>} : vector<16x4xf32>, vector<4x16xf32>, vector<16x16xf32> -> vector<16x16xf32>
    %214 = vector.extract_strided_slice %146 {offsets = [0, 4], sizes = [16, 4], strides = [1, 1]} : vector<16x8xf32> to vector<16x4xf32>
    %cst_115 = arith.constant dense<0.000000e+00> : vector<16x16xf32>
    %215 = tpu.matmul %214, %211, %cst_115 {dimension_numbers = #tpu.dot_dimension_numbers<[1], [0], [0], [1], [0, 0, 1, 1], [], []>} : vector<16x4xf32>, vector<4x16xf32>, vector<16x16xf32> -> vector<16x16xf32>
    %216 = tpu.concatenate %213, %215 in 1 : vector<16x16xf32>, vector<16x16xf32> -> vector<16x32xf32>
    %217 = tpu.iota {dimensions = array<i32: 1>} : vector<1x32xi32>
    %c3_i32 = arith.constant 3 : i32
    %218 = vector.broadcast %c3_i32 : i32 to vector<1x32xi32>
    %219 = arith.andi %217, %218 : vector<1x32xi32>
    %c2_i32 = arith.constant 2 : i32
    %220 = vector.broadcast %c2_i32 : i32 to vector<1x32xi32>
    %221 = arith.shrsi %217, %220 : vector<1x32xi32>
    %c3_i32_116 = arith.constant 3 : i32
    %222 = vector.broadcast %c3_i32_116 : i32 to vector<1x32xi32>
    %223 = arith.andi %221, %222 : vector<1x32xi32>
    %c1_i32_117 = arith.constant 1 : i32
    %224 = vector.broadcast %c1_i32_117 : i32 to vector<1x32xi32>
    %225 = arith.cmpi sge, %219, %224 : vector<1x32xi32>
    %c2_i32_118 = arith.constant 2 : i32
    %226 = vector.broadcast %c2_i32_118 : i32 to vector<1x32xi32>
    %227 = arith.cmpi sle, %219, %226 : vector<1x32xi32>
    %c1_i32_119 = arith.constant 1 : i32
    %228 = vector.broadcast %c1_i32_119 : i32 to vector<1x32xi32>
    %229 = arith.cmpi sge, %223, %228 : vector<1x32xi32>
    %c2_i32_120 = arith.constant 2 : i32
    %230 = vector.broadcast %c2_i32_120 : i32 to vector<1x32xi32>
    %231 = arith.cmpi sle, %223, %230 : vector<1x32xi32>
    %232 = arith.andi %229, %225 : vector<1x32xi1>
    %233 = arith.extui %232 : vector<1x32xi1> to vector<1x32xi32>
    %234 = arith.sitofp %233 : vector<1x32xi32> to vector<1x32xf32>
    %235 = arith.extui %229 : vector<1x32xi1> to vector<1x32xi32>
    %236 = arith.sitofp %235 : vector<1x32xi32> to vector<1x32xf32>
    %237 = arith.andi %229, %227 : vector<1x32xi1>
    %238 = arith.extui %237 : vector<1x32xi1> to vector<1x32xi32>
    %239 = arith.sitofp %238 : vector<1x32xi32> to vector<1x32xf32>
    %240 = arith.extui %225 : vector<1x32xi1> to vector<1x32xi32>
    %241 = arith.sitofp %240 : vector<1x32xi32> to vector<1x32xf32>
    %242 = arith.extui %227 : vector<1x32xi1> to vector<1x32xi32>
    %243 = arith.sitofp %242 : vector<1x32xi32> to vector<1x32xf32>
    %244 = arith.andi %231, %225 : vector<1x32xi1>
    %245 = arith.extui %244 : vector<1x32xi1> to vector<1x32xi32>
    %246 = arith.sitofp %245 : vector<1x32xi32> to vector<1x32xf32>
    %247 = arith.extui %231 : vector<1x32xi1> to vector<1x32xi32>
    %248 = arith.sitofp %247 : vector<1x32xi32> to vector<1x32xf32>
    %249 = arith.andi %231, %227 : vector<1x32xi1>
    %250 = arith.extui %249 : vector<1x32xi1> to vector<1x32xi32>
    %251 = arith.sitofp %250 : vector<1x32xi32> to vector<1x32xf32>
    %c0_121 = arith.constant 0 : index
    %c128_122 = arith.constant 128 : index
    %252 = vector.load %arg4[%c0_121, %c128_122] : memref<32x768xf32, #tpu.memory_space<vmem>>, vector<16x32xf32>
    tpu.vector_store %arg4[%c0_121, %c128_122], %216 {strides = array<i32>} : memref<32x768xf32, #tpu.memory_space<vmem>>, vector<16x32xf32>,
    %c376 = arith.constant 376 : index
    %c16_123 = arith.constant 16 : index
    %253 = vector.load %arg1[%c376, %c16_123] : memref<880x128xf32, #tpu.memory_space<vmem>>, vector<8x1xf32>
    %cst_124 = arith.constant 0.000000e+00 : f32
    %254 = vector.broadcast %cst_124 : f32 to vector<8x32xf32>
    %255 = vector.broadcast %253 : vector<8x1xf32> to vector<8x32xf32>
    %256 = arith.addf %254, %255 : vector<8x32xf32>
    %c376_125 = arith.constant 376 : index
    %c0_126 = arith.constant 0 : index
    %257 = vector.load %arg1[%c376_125, %c0_126] : memref<880x128xf32, #tpu.memory_space<vmem>>, vector<8x16xf32>
    %c0_127 = arith.constant 0 : index
    %c123 = arith.constant 123 : index
    %258 = vector.load %arg4[%c0_127, %c123] : memref<32x768xf32, #tpu.memory_space<vmem>>, vector<16x32xf32>
    %259 = vector.broadcast %234 : vector<1x32xf32> to vector<16x32xf32>
    %260 = arith.mulf %258, %259 : vector<16x32xf32>
    %cst_128 = arith.constant dense<0.000000e+00> : vector<8x32xf32>
    %261 = tpu.matmul %257, %260, %cst_128 {dimension_numbers = #tpu.dot_dimension_numbers<[1], [0], [0], [1], [0, 0, 1, 1], [], []>} : vector<8x16xf32>, vector<16x32xf32>, vector<8x32xf32> -> vector<8x32xf32>
    %262 = arith.addf %256, %261 : vector<8x32xf32>
    %c384 = arith.constant 384 : index
    %c0_129 = arith.constant 0 : index
    %263 = vector.load %arg1[%c384, %c0_129] : memref<880x128xf32, #tpu.memory_space<vmem>>, vector<8x16xf32>
    %c0_130 = arith.constant 0 : index
    %c124 = arith.constant 124 : index
    %264 = vector.load %arg4[%c0_130, %c124] : memref<32x768xf32, #tpu.memory_space<vmem>>, vector<16x32xf32>
    %265 = vector.broadcast %236 : vector<1x32xf32> to vector<16x32xf32>
    %266 = arith.mulf %264, %265 : vector<16x32xf32>
    %cst_131 = arith.constant dense<0.000000e+00> : vector<8x32xf32>
    %267 = tpu.matmul %263, %266, %cst_131 {dimension_numbers = #tpu.dot_dimension_numbers<[1], [0], [0], [1], [0, 0, 1, 1], [], []>} : vector<8x16xf32>, vector<16x32xf32>, vector<8x32xf32> -> vector<8x32xf32>
    %268 = arith.addf %262, %267 : vector<8x32xf32>
    %c392 = arith.constant 392 : index
    %c0_132 = arith.constant 0 : index
    %269 = vector.load %arg1[%c392, %c0_132] : memref<880x128xf32, #tpu.memory_space<vmem>>, vector<8x16xf32>
    %c0_133 = arith.constant 0 : index
    %c125_134 = arith.constant 125 : index
    %270 = vector.load %arg4[%c0_133, %c125_134] : memref<32x768xf32, #tpu.memory_space<vmem>>, vector<16x32xf32>
    %271 = vector.broadcast %239 : vector<1x32xf32> to vector<16x32xf32>
    %272 = arith.mulf %270, %271 : vector<16x32xf32>
    %cst_135 = arith.constant dense<0.000000e+00> : vector<8x32xf32>
    %273 = tpu.matmul %269, %272, %cst_135 {dimension_numbers = #tpu.dot_dimension_numbers<[1], [0], [0], [1], [0, 0, 1, 1], [], []>} : vector<8x16xf32>, vector<16x32xf32>, vector<8x32xf32> -> vector<8x32xf32>
    %274 = arith.addf %268, %273 : vector<8x32xf32>
    %c400 = arith.constant 400 : index
    %c0_136 = arith.constant 0 : index
    %275 = vector.load %arg1[%c400, %c0_136] : memref<880x128xf32, #tpu.memory_space<vmem>>, vector<8x16xf32>
    %c0_137 = arith.constant 0 : index
    %c127_138 = arith.constant 127 : index
    %276 = vector.load %arg4[%c0_137, %c127_138] : memref<32x768xf32, #tpu.memory_space<vmem>>, vector<16x32xf32>
    %277 = vector.broadcast %241 : vector<1x32xf32> to vector<16x32xf32>
    %278 = arith.mulf %276, %277 : vector<16x32xf32>
    %cst_139 = arith.constant dense<0.000000e+00> : vector<8x32xf32>
    %279 = tpu.matmul %275, %278, %cst_139 {dimension_numbers = #tpu.dot_dimension_numbers<[1], [0], [0], [1], [0, 0, 1, 1], [], []>} : vector<8x16xf32>, vector<16x32xf32>, vector<8x32xf32> -> vector<8x32xf32>
    %280 = arith.addf %274, %279 : vector<8x32xf32>
    %c408 = arith.constant 408 : index
    %c0_140 = arith.constant 0 : index
    %281 = vector.load %arg1[%c408, %c0_140] : memref<880x128xf32, #tpu.memory_space<vmem>>, vector<8x16xf32>
    %c0_141 = arith.constant 0 : index
    %c128_142 = arith.constant 128 : index
    %282 = vector.load %arg4[%c0_141, %c128_142] : memref<32x768xf32, #tpu.memory_space<vmem>>, vector<16x32xf32>
    %cst_143 = arith.constant dense<0.000000e+00> : vector<8x32xf32>
    %283 = tpu.matmul %281, %282, %cst_143 {dimension_numbers = #tpu.dot_dimension_numbers<[1], [0], [0], [1], [0, 0, 1, 1], [], []>} : vector<8x16xf32>, vector<16x32xf32>, vector<8x32xf32> -> vector<8x32xf32>
    %284 = arith.addf %280, %283 : vector<8x32xf32>
    %c416 = arith.constant 416 : index
    %c0_144 = arith.constant 0 : index
    %285 = vector.load %arg1[%c416, %c0_144] : memref<880x128xf32, #tpu.memory_space<vmem>>, vector<8x16xf32>
    %c0_145 = arith.constant 0 : index
    %c129_146 = arith.constant 129 : index
    %286 = vector.load %arg4[%c0_145, %c129_146] : memref<32x768xf32, #tpu.memory_space<vmem>>, vector<16x32xf32>
    %287 = vector.broadcast %243 : vector<1x32xf32> to vector<16x32xf32>
    %288 = arith.mulf %286, %287 : vector<16x32xf32>
    %cst_147 = arith.constant dense<0.000000e+00> : vector<8x32xf32>
    %289 = tpu.matmul %285, %288, %cst_147 {dimension_numbers = #tpu.dot_dimension_numbers<[1], [0], [0], [1], [0, 0, 1, 1], [], []>} : vector<8x16xf32>, vector<16x32xf32>, vector<8x32xf32> -> vector<8x32xf32>
    %290 = arith.addf %284, %289 : vector<8x32xf32>
    %c424 = arith.constant 424 : index
    %c0_148 = arith.constant 0 : index
    %291 = vector.load %arg1[%c424, %c0_148] : memref<880x128xf32, #tpu.memory_space<vmem>>, vector<8x16xf32>
    %c0_149 = arith.constant 0 : index
    %c131_150 = arith.constant 131 : index
    %292 = vector.load %arg4[%c0_149, %c131_150] : memref<32x768xf32, #tpu.memory_space<vmem>>, vector<16x32xf32>
    %293 = vector.broadcast %246 : vector<1x32xf32> to vector<16x32xf32>
    %294 = arith.mulf %292, %293 : vector<16x32xf32>
    %cst_151 = arith.constant dense<0.000000e+00> : vector<8x32xf32>
    %295 = tpu.matmul %291, %294, %cst_151 {dimension_numbers = #tpu.dot_dimension_numbers<[1], [0], [0], [1], [0, 0, 1, 1], [], []>} : vector<8x16xf32>, vector<16x32xf32>, vector<8x32xf32> -> vector<8x32xf32>
    %296 = arith.addf %290, %295 : vector<8x32xf32>
    %c432 = arith.constant 432 : index
    %c0_152 = arith.constant 0 : index
    %297 = vector.load %arg1[%c432, %c0_152] : memref<880x128xf32, #tpu.memory_space<vmem>>, vector<8x16xf32>
    %c0_153 = arith.constant 0 : index
    %c132 = arith.constant 132 : index
    %298 = vector.load %arg4[%c0_153, %c132] : memref<32x768xf32, #tpu.memory_space<vmem>>, vector<16x32xf32>
    %299 = vector.broadcast %248 : vector<1x32xf32> to vector<16x32xf32>
    %300 = arith.mulf %298, %299 : vector<16x32xf32>
    %cst_154 = arith.constant dense<0.000000e+00> : vector<8x32xf32>
    %301 = tpu.matmul %297, %300, %cst_154 {dimension_numbers = #tpu.dot_dimension_numbers<[1], [0], [0], [1], [0, 0, 1, 1], [], []>} : vector<8x16xf32>, vector<16x32xf32>, vector<8x32xf32> -> vector<8x32xf32>
    %302 = arith.addf %296, %301 : vector<8x32xf32>
    %c440 = arith.constant 440 : index
    %c0_155 = arith.constant 0 : index
    %303 = vector.load %arg1[%c440, %c0_155] : memref<880x128xf32, #tpu.memory_space<vmem>>, vector<8x16xf32>
    %c0_156 = arith.constant 0 : index
    %c133 = arith.constant 133 : index
    %304 = vector.load %arg4[%c0_156, %c133] : memref<32x768xf32, #tpu.memory_space<vmem>>, vector<16x32xf32>
    %305 = vector.broadcast %251 : vector<1x32xf32> to vector<16x32xf32>
    %306 = arith.mulf %304, %305 : vector<16x32xf32>
    %cst_157 = arith.constant dense<0.000000e+00> : vector<8x32xf32>
    %307 = tpu.matmul %303, %306, %cst_157 {dimension_numbers = #tpu.dot_dimension_numbers<[1], [0], [0], [1], [0, 0, 1, 1], [], []>} : vector<8x16xf32>, vector<16x32xf32>, vector<8x32xf32> -> vector<8x32xf32>
    %308 = arith.addf %302, %307 : vector<8x32xf32>
    %cst_158 = arith.constant 0.000000e+00 : f32
    %309 = vector.broadcast %cst_158 : f32 to vector<8x32xf32>
    %310 = arith.maximumf %308, %309 : vector<8x32xf32>
    %c0_159 = arith.constant 0 : index
    %c128_160 = arith.constant 128 : index
    %311 = vector.load %arg4[%c0_159, %c128_160] : memref<32x768xf32, #tpu.memory_space<vmem>>, vector<8x32xf32>
    tpu.vector_store %arg4[%c0_159, %c128_160], %310 {strides = array<i32>} : memref<32x768xf32, #tpu.memory_space<vmem>>, vector<8x32xf32>,
    %c664 = arith.constant 664 : index
    %c8_161 = arith.constant 8 : index
    %312 = vector.load %arg1[%c664, %c8_161] : memref<880x128xf32, #tpu.memory_space<vmem>>, vector<3x1xf32>
    %cst_162 = arith.constant 0.000000e+00 : f32
    %313 = vector.broadcast %cst_162 : f32 to vector<3x32xf32>
    %314 = vector.broadcast %312 : vector<3x1xf32> to vector<3x32xf32>
    %315 = arith.addf %313, %314 : vector<3x32xf32>
    %c664_163 = arith.constant 664 : index
    %c0_164 = arith.constant 0 : index
    %316 = vector.load %arg1[%c664_163, %c0_164] : memref<880x128xf32, #tpu.memory_space<vmem>>, vector<3x8xf32>
    %c0_165 = arith.constant 0 : index
    %c123_166 = arith.constant 123 : index
    %317 = vector.load %arg4[%c0_165, %c123_166] : memref<32x768xf32, #tpu.memory_space<vmem>>, vector<8x32xf32>
    %318 = vector.broadcast %234 : vector<1x32xf32> to vector<8x32xf32>
    %319 = arith.mulf %317, %318 : vector<8x32xf32>
    %cst_167 = arith.constant dense<0.000000e+00> : vector<3x32xf32>
    %320 = tpu.matmul %316, %319, %cst_167 {dimension_numbers = #tpu.dot_dimension_numbers<[1], [0], [0], [1], [0, 0, 1, 1], [], []>} : vector<3x8xf32>, vector<8x32xf32>, vector<3x32xf32> -> vector<3x32xf32>
    %321 = arith.addf %315, %320 : vector<3x32xf32>
    %c672 = arith.constant 672 : index
    %c0_168 = arith.constant 0 : index
    %322 = vector.load %arg1[%c672, %c0_168] : memref<880x128xf32, #tpu.memory_space<vmem>>, vector<3x8xf32>
    %c0_169 = arith.constant 0 : index
    %c124_170 = arith.constant 124 : index
    %323 = vector.load %arg4[%c0_169, %c124_170] : memref<32x768xf32, #tpu.memory_space<vmem>>, vector<8x32xf32>
    %324 = vector.broadcast %236 : vector<1x32xf32> to vector<8x32xf32>
    %325 = arith.mulf %323, %324 : vector<8x32xf32>
    %cst_171 = arith.constant dense<0.000000e+00> : vector<3x32xf32>
    %326 = tpu.matmul %322, %325, %cst_171 {dimension_numbers = #tpu.dot_dimension_numbers<[1], [0], [0], [1], [0, 0, 1, 1], [], []>} : vector<3x8xf32>, vector<8x32xf32>, vector<3x32xf32> -> vector<3x32xf32>
    %327 = arith.addf %321, %326 : vector<3x32xf32>
    %c680 = arith.constant 680 : index
    %c0_172 = arith.constant 0 : index
    %328 = vector.load %arg1[%c680, %c0_172] : memref<880x128xf32, #tpu.memory_space<vmem>>, vector<3x8xf32>
    %c0_173 = arith.constant 0 : index
    %c125_174 = arith.constant 125 : index
    %329 = vector.load %arg4[%c0_173, %c125_174] : memref<32x768xf32, #tpu.memory_space<vmem>>, vector<8x32xf32>
    %330 = vector.broadcast %239 : vector<1x32xf32> to vector<8x32xf32>
    %331 = arith.mulf %329, %330 : vector<8x32xf32>
    %cst_175 = arith.constant dense<0.000000e+00> : vector<3x32xf32>
    %332 = tpu.matmul %328, %331, %cst_175 {dimension_numbers = #tpu.dot_dimension_numbers<[1], [0], [0], [1], [0, 0, 1, 1], [], []>} : vector<3x8xf32>, vector<8x32xf32>, vector<3x32xf32> -> vector<3x32xf32>
    %333 = arith.addf %327, %332 : vector<3x32xf32>
    %c688 = arith.constant 688 : index
    %c0_176 = arith.constant 0 : index
    %334 = vector.load %arg1[%c688, %c0_176] : memref<880x128xf32, #tpu.memory_space<vmem>>, vector<3x8xf32>
    %c0_177 = arith.constant 0 : index
    %c127_178 = arith.constant 127 : index
    %335 = vector.load %arg4[%c0_177, %c127_178] : memref<32x768xf32, #tpu.memory_space<vmem>>, vector<8x32xf32>
    %336 = vector.broadcast %241 : vector<1x32xf32> to vector<8x32xf32>
    %337 = arith.mulf %335, %336 : vector<8x32xf32>
    %cst_179 = arith.constant dense<0.000000e+00> : vector<3x32xf32>
    %338 = tpu.matmul %334, %337, %cst_179 {dimension_numbers = #tpu.dot_dimension_numbers<[1], [0], [0], [1], [0, 0, 1, 1], [], []>} : vector<3x8xf32>, vector<8x32xf32>, vector<3x32xf32> -> vector<3x32xf32>
    %339 = arith.addf %333, %338 : vector<3x32xf32>
    %c696 = arith.constant 696 : index
    %c0_180 = arith.constant 0 : index
    %340 = vector.load %arg1[%c696, %c0_180] : memref<880x128xf32, #tpu.memory_space<vmem>>, vector<3x8xf32>
    %c0_181 = arith.constant 0 : index
    %c128_182 = arith.constant 128 : index
    %341 = vector.load %arg4[%c0_181, %c128_182] : memref<32x768xf32, #tpu.memory_space<vmem>>, vector<8x32xf32>
    %cst_183 = arith.constant dense<0.000000e+00> : vector<3x32xf32>
    %342 = tpu.matmul %340, %341, %cst_183 {dimension_numbers = #tpu.dot_dimension_numbers<[1], [0], [0], [1], [0, 0, 1, 1], [], []>} : vector<3x8xf32>, vector<8x32xf32>, vector<3x32xf32> -> vector<3x32xf32>
    %343 = arith.addf %339, %342 : vector<3x32xf32>
    %c704 = arith.constant 704 : index
    %c0_184 = arith.constant 0 : index
    %344 = vector.load %arg1[%c704, %c0_184] : memref<880x128xf32, #tpu.memory_space<vmem>>, vector<3x8xf32>
    %c0_185 = arith.constant 0 : index
    %c129_186 = arith.constant 129 : index
    %345 = vector.load %arg4[%c0_185, %c129_186] : memref<32x768xf32, #tpu.memory_space<vmem>>, vector<8x32xf32>
    %346 = vector.broadcast %243 : vector<1x32xf32> to vector<8x32xf32>
    %347 = arith.mulf %345, %346 : vector<8x32xf32>
    %cst_187 = arith.constant dense<0.000000e+00> : vector<3x32xf32>
    %348 = tpu.matmul %344, %347, %cst_187 {dimension_numbers = #tpu.dot_dimension_numbers<[1], [0], [0], [1], [0, 0, 1, 1], [], []>} : vector<3x8xf32>, vector<8x32xf32>, vector<3x32xf32> -> vector<3x32xf32>
    %349 = arith.addf %343, %348 : vector<3x32xf32>
    %c712 = arith.constant 712 : index
    %c0_188 = arith.constant 0 : index
    %350 = vector.load %arg1[%c712, %c0_188] : memref<880x128xf32, #tpu.memory_space<vmem>>, vector<3x8xf32>
    %c0_189 = arith.constant 0 : index
    %c131_190 = arith.constant 131 : index
    %351 = vector.load %arg4[%c0_189, %c131_190] : memref<32x768xf32, #tpu.memory_space<vmem>>, vector<8x32xf32>
    %352 = vector.broadcast %246 : vector<1x32xf32> to vector<8x32xf32>
    %353 = arith.mulf %351, %352 : vector<8x32xf32>
    %cst_191 = arith.constant dense<0.000000e+00> : vector<3x32xf32>
    %354 = tpu.matmul %350, %353, %cst_191 {dimension_numbers = #tpu.dot_dimension_numbers<[1], [0], [0], [1], [0, 0, 1, 1], [], []>} : vector<3x8xf32>, vector<8x32xf32>, vector<3x32xf32> -> vector<3x32xf32>
    %355 = arith.addf %349, %354 : vector<3x32xf32>
    %c720 = arith.constant 720 : index
    %c0_192 = arith.constant 0 : index
    %356 = vector.load %arg1[%c720, %c0_192] : memref<880x128xf32, #tpu.memory_space<vmem>>, vector<3x8xf32>
    %c0_193 = arith.constant 0 : index
    %c132_194 = arith.constant 132 : index
    %357 = vector.load %arg4[%c0_193, %c132_194] : memref<32x768xf32, #tpu.memory_space<vmem>>, vector<8x32xf32>
    %358 = vector.broadcast %248 : vector<1x32xf32> to vector<8x32xf32>
    %359 = arith.mulf %357, %358 : vector<8x32xf32>
    %cst_195 = arith.constant dense<0.000000e+00> : vector<3x32xf32>
    %360 = tpu.matmul %356, %359, %cst_195 {dimension_numbers = #tpu.dot_dimension_numbers<[1], [0], [0], [1], [0, 0, 1, 1], [], []>} : vector<3x8xf32>, vector<8x32xf32>, vector<3x32xf32> -> vector<3x32xf32>
    %361 = arith.addf %355, %360 : vector<3x32xf32>
    %c728 = arith.constant 728 : index
    %c0_196 = arith.constant 0 : index
    %362 = vector.load %arg1[%c728, %c0_196] : memref<880x128xf32, #tpu.memory_space<vmem>>, vector<3x8xf32>
    %c0_197 = arith.constant 0 : index
    %c133_198 = arith.constant 133 : index
    %363 = vector.load %arg4[%c0_197, %c133_198] : memref<32x768xf32, #tpu.memory_space<vmem>>, vector<8x32xf32>
    %364 = vector.broadcast %251 : vector<1x32xf32> to vector<8x32xf32>
    %365 = arith.mulf %363, %364 : vector<8x32xf32>
    %cst_199 = arith.constant dense<0.000000e+00> : vector<3x32xf32>
    %366 = tpu.matmul %362, %365, %cst_199 {dimension_numbers = #tpu.dot_dimension_numbers<[1], [0], [0], [1], [0, 0, 1, 1], [], []>} : vector<3x8xf32>, vector<8x32xf32>, vector<3x32xf32> -> vector<3x32xf32>
    %367 = arith.addf %361, %366 : vector<3x32xf32>
    %368 = arith.addf %210, %367 : vector<3x32xf32>
    %c48 = arith.constant 48 : index
    %c0_200 = arith.constant 0 : index
    %369 = vector.load %arg2[%c48, %c0_200] : memref<192x256xf32, #tpu.memory_space<vmem>>, vector<16x64xf32>
    %370 = vector.extract_strided_slice %368 {offsets = [0, 0], sizes = [3, 16], strides = [1, 1]} : vector<3x32xf32> to vector<3x16xf32>
    %cst_201 = arith.constant dense<0.000000e+00> : vector<3x64xf32>
    %371 = tpu.matmul %370, %369, %cst_201 {dimension_numbers = #tpu.dot_dimension_numbers<[1], [0], [0], [1], [0, 0, 1, 1], [], []>} : vector<3x16xf32>, vector<16x64xf32>, vector<3x64xf32> -> vector<3x64xf32>
    %372 = vector.extract_strided_slice %368 {offsets = [0, 16], sizes = [3, 16], strides = [1, 1]} : vector<3x32xf32> to vector<3x16xf32>
    %cst_202 = arith.constant dense<0.000000e+00> : vector<3x64xf32>
    %373 = tpu.matmul %372, %369, %cst_202 {dimension_numbers = #tpu.dot_dimension_numbers<[1], [0], [0], [1], [0, 0, 1, 1], [], []>} : vector<3x16xf32>, vector<16x64xf32>, vector<3x64xf32> -> vector<3x64xf32>
    %374 = tpu.concatenate %371, %373 in 1 : vector<3x64xf32>, vector<3x64xf32> -> vector<3x128xf32>
    %c32_203 = arith.constant 32 : index
    %c0_204 = arith.constant 0 : index
    %375 = vector.load %arg2[%c32_203, %c0_204] : memref<192x256xf32, #tpu.memory_space<vmem>>, vector<16x64xf32>
    %376 = vector.extract_strided_slice %310 {offsets = [0, 0], sizes = [8, 16], strides = [1, 1]} : vector<8x32xf32> to vector<8x16xf32>
    %cst_205 = arith.constant dense<0.000000e+00> : vector<8x64xf32>
    %377 = tpu.matmul %376, %375, %cst_205 {dimension_numbers = #tpu.dot_dimension_numbers<[1], [0], [0], [1], [0, 0, 1, 1], [], []>} : vector<8x16xf32>, vector<16x64xf32>, vector<8x64xf32> -> vector<8x64xf32>
    %378 = vector.extract_strided_slice %310 {offsets = [0, 16], sizes = [8, 16], strides = [1, 1]} : vector<8x32xf32> to vector<8x16xf32>
    %cst_206 = arith.constant dense<0.000000e+00> : vector<8x64xf32>
    %379 = tpu.matmul %378, %375, %cst_206 {dimension_numbers = #tpu.dot_dimension_numbers<[1], [0], [0], [1], [0, 0, 1, 1], [], []>} : vector<8x16xf32>, vector<16x64xf32>, vector<8x64xf32> -> vector<8x64xf32>
    %380 = tpu.concatenate %377, %379 in 1 : vector<8x64xf32>, vector<8x64xf32> -> vector<8x128xf32>
    %381 = tpu.iota {dimensions = array<i32: 1>} : vector<1x128xi32>
    %c7_i32 = arith.constant 7 : i32
    %382 = vector.broadcast %c7_i32 : i32 to vector<1x128xi32>
    %383 = arith.andi %381, %382 : vector<1x128xi32>
    %c3_i32_207 = arith.constant 3 : i32
    %384 = vector.broadcast %c3_i32_207 : i32 to vector<1x128xi32>
    %385 = arith.shrsi %381, %384 : vector<1x128xi32>
    %c7_i32_208 = arith.constant 7 : i32
    %386 = vector.broadcast %c7_i32_208 : i32 to vector<1x128xi32>
    %387 = arith.andi %385, %386 : vector<1x128xi32>
    %c1_i32_209 = arith.constant 1 : i32
    %388 = vector.broadcast %c1_i32_209 : i32 to vector<1x128xi32>
    %389 = arith.cmpi sge, %383, %388 : vector<1x128xi32>
    %c6_i32 = arith.constant 6 : i32
    %390 = vector.broadcast %c6_i32 : i32 to vector<1x128xi32>
    %391 = arith.cmpi sle, %383, %390 : vector<1x128xi32>
    %c1_i32_210 = arith.constant 1 : i32
    %392 = vector.broadcast %c1_i32_210 : i32 to vector<1x128xi32>
    %393 = arith.cmpi sge, %387, %392 : vector<1x128xi32>
    %c6_i32_211 = arith.constant 6 : i32
    %394 = vector.broadcast %c6_i32_211 : i32 to vector<1x128xi32>
    %395 = arith.cmpi sle, %387, %394 : vector<1x128xi32>
    %396 = arith.andi %393, %389 : vector<1x128xi1>
    %397 = arith.extui %396 : vector<1x128xi1> to vector<1x128xi32>
    %398 = arith.sitofp %397 : vector<1x128xi32> to vector<1x128xf32>
    %399 = arith.extui %393 : vector<1x128xi1> to vector<1x128xi32>
    %400 = arith.sitofp %399 : vector<1x128xi32> to vector<1x128xf32>
    %401 = arith.andi %393, %391 : vector<1x128xi1>
    %402 = arith.extui %401 : vector<1x128xi1> to vector<1x128xi32>
    %403 = arith.sitofp %402 : vector<1x128xi32> to vector<1x128xf32>
    %404 = arith.extui %389 : vector<1x128xi1> to vector<1x128xi32>
    %405 = arith.sitofp %404 : vector<1x128xi32> to vector<1x128xf32>
    %406 = arith.extui %391 : vector<1x128xi1> to vector<1x128xi32>
    %407 = arith.sitofp %406 : vector<1x128xi32> to vector<1x128xf32>
    %408 = arith.andi %395, %389 : vector<1x128xi1>
    %409 = arith.extui %408 : vector<1x128xi1> to vector<1x128xi32>
    %410 = arith.sitofp %409 : vector<1x128xi32> to vector<1x128xf32>
    %411 = arith.extui %395 : vector<1x128xi1> to vector<1x128xi32>
    %412 = arith.sitofp %411 : vector<1x128xi32> to vector<1x128xf32>
    %413 = arith.andi %395, %391 : vector<1x128xi1>
    %414 = arith.extui %413 : vector<1x128xi1> to vector<1x128xi32>
    %415 = arith.sitofp %414 : vector<1x128xi32> to vector<1x128xf32>
    %c0_212 = arith.constant 0 : index
    %c128_213 = arith.constant 128 : index
    %416 = vector.load %arg4[%c0_212, %c128_213] : memref<32x768xf32, #tpu.memory_space<vmem>>, vector<8x128xf32>
    tpu.vector_store %arg4[%c0_212, %c128_213], %380 {strides = array<i32>} : memref<32x768xf32, #tpu.memory_space<vmem>>, vector<8x128xf32>,
    %c448 = arith.constant 448 : index
    %c8_214 = arith.constant 8 : index
    %417 = vector.load %arg1[%c448, %c8_214] : memref<880x128xf32, #tpu.memory_space<vmem>>, vector<8x1xf32>
    %cst_215 = arith.constant 0.000000e+00 : f32
    %418 = vector.broadcast %cst_215 : f32 to vector<8x128xf32>
    %419 = vector.broadcast %417 : vector<8x1xf32> to vector<8x128xf32>
    %420 = arith.addf %418, %419 : vector<8x128xf32>
    %c448_216 = arith.constant 448 : index
    %c0_217 = arith.constant 0 : index
    %421 = vector.load %arg1[%c448_216, %c0_217] : memref<880x128xf32, #tpu.memory_space<vmem>>, vector<8x8xf32>
    %c0_218 = arith.constant 0 : index
    %c119 = arith.constant 119 : index
    %422 = vector.load %arg4[%c0_218, %c119] : memref<32x768xf32, #tpu.memory_space<vmem>>, vector<8x128xf32>
    %423 = vector.broadcast %398 : vector<1x128xf32> to vector<8x128xf32>
    %424 = arith.mulf %422, %423 : vector<8x128xf32>
    %cst_219 = arith.constant dense<0.000000e+00> : vector<8x128xf32>
    %425 = tpu.matmul %421, %424, %cst_219 {dimension_numbers = #tpu.dot_dimension_numbers<[1], [0], [0], [1], [0, 0, 1, 1], [], []>} : vector<8x8xf32>, vector<8x128xf32>, vector<8x128xf32> -> vector<8x128xf32>
    %426 = arith.addf %420, %425 : vector<8x128xf32>
    %c456 = arith.constant 456 : index
    %c0_220 = arith.constant 0 : index
    %427 = vector.load %arg1[%c456, %c0_220] : memref<880x128xf32, #tpu.memory_space<vmem>>, vector<8x8xf32>
    %c0_221 = arith.constant 0 : index
    %c120 = arith.constant 120 : index
    %428 = vector.load %arg4[%c0_221, %c120] : memref<32x768xf32, #tpu.memory_space<vmem>>, vector<8x128xf32>
    %429 = vector.broadcast %400 : vector<1x128xf32> to vector<8x128xf32>
    %430 = arith.mulf %428, %429 : vector<8x128xf32>
    %cst_222 = arith.constant dense<0.000000e+00> : vector<8x128xf32>
    %431 = tpu.matmul %427, %430, %cst_222 {dimension_numbers = #tpu.dot_dimension_numbers<[1], [0], [0], [1], [0, 0, 1, 1], [], []>} : vector<8x8xf32>, vector<8x128xf32>, vector<8x128xf32> -> vector<8x128xf32>
    %432 = arith.addf %426, %431 : vector<8x128xf32>
    %c464 = arith.constant 464 : index
    %c0_223 = arith.constant 0 : index
    %433 = vector.load %arg1[%c464, %c0_223] : memref<880x128xf32, #tpu.memory_space<vmem>>, vector<8x8xf32>
    %c0_224 = arith.constant 0 : index
    %c121 = arith.constant 121 : index
    %434 = vector.load %arg4[%c0_224, %c121] : memref<32x768xf32, #tpu.memory_space<vmem>>, vector<8x128xf32>
    %435 = vector.broadcast %403 : vector<1x128xf32> to vector<8x128xf32>
    %436 = arith.mulf %434, %435 : vector<8x128xf32>
    %cst_225 = arith.constant dense<0.000000e+00> : vector<8x128xf32>
    %437 = tpu.matmul %433, %436, %cst_225 {dimension_numbers = #tpu.dot_dimension_numbers<[1], [0], [0], [1], [0, 0, 1, 1], [], []>} : vector<8x8xf32>, vector<8x128xf32>, vector<8x128xf32> -> vector<8x128xf32>
    %438 = arith.addf %432, %437 : vector<8x128xf32>
    %c472 = arith.constant 472 : index
    %c0_226 = arith.constant 0 : index
    %439 = vector.load %arg1[%c472, %c0_226] : memref<880x128xf32, #tpu.memory_space<vmem>>, vector<8x8xf32>
    %c0_227 = arith.constant 0 : index
    %c127_228 = arith.constant 127 : index
    %440 = vector.load %arg4[%c0_227, %c127_228] : memref<32x768xf32, #tpu.memory_space<vmem>>, vector<8x128xf32>
    %441 = vector.broadcast %405 : vector<1x128xf32> to vector<8x128xf32>
    %442 = arith.mulf %440, %441 : vector<8x128xf32>
    %cst_229 = arith.constant dense<0.000000e+00> : vector<8x128xf32>
    %443 = tpu.matmul %439, %442, %cst_229 {dimension_numbers = #tpu.dot_dimension_numbers<[1], [0], [0], [1], [0, 0, 1, 1], [], []>} : vector<8x8xf32>, vector<8x128xf32>, vector<8x128xf32> -> vector<8x128xf32>
    %444 = arith.addf %438, %443 : vector<8x128xf32>
    %c480 = arith.constant 480 : index
    %c0_230 = arith.constant 0 : index
    %445 = vector.load %arg1[%c480, %c0_230] : memref<880x128xf32, #tpu.memory_space<vmem>>, vector<8x8xf32>
    %c0_231 = arith.constant 0 : index
    %c128_232 = arith.constant 128 : index
    %446 = vector.load %arg4[%c0_231, %c128_232] : memref<32x768xf32, #tpu.memory_space<vmem>>, vector<8x128xf32>
    %cst_233 = arith.constant dense<0.000000e+00> : vector<8x128xf32>
    %447 = tpu.matmul %445, %446, %cst_233 {dimension_numbers = #tpu.dot_dimension_numbers<[1], [0], [0], [1], [0, 0, 1, 1], [], []>} : vector<8x8xf32>, vector<8x128xf32>, vector<8x128xf32> -> vector<8x128xf32>
    %448 = arith.addf %444, %447 : vector<8x128xf32>
    %c488 = arith.constant 488 : index
    %c0_234 = arith.constant 0 : index
    %449 = vector.load %arg1[%c488, %c0_234] : memref<880x128xf32, #tpu.memory_space<vmem>>, vector<8x8xf32>
    %c0_235 = arith.constant 0 : index
    %c129_236 = arith.constant 129 : index
    %450 = vector.load %arg4[%c0_235, %c129_236] : memref<32x768xf32, #tpu.memory_space<vmem>>, vector<8x128xf32>
    %451 = vector.broadcast %407 : vector<1x128xf32> to vector<8x128xf32>
    %452 = arith.mulf %450, %451 : vector<8x128xf32>
    %cst_237 = arith.constant dense<0.000000e+00> : vector<8x128xf32>
    %453 = tpu.matmul %449, %452, %cst_237 {dimension_numbers = #tpu.dot_dimension_numbers<[1], [0], [0], [1], [0, 0, 1, 1], [], []>} : vector<8x8xf32>, vector<8x128xf32>, vector<8x128xf32> -> vector<8x128xf32>
    %454 = arith.addf %448, %453 : vector<8x128xf32>
    %c496 = arith.constant 496 : index
    %c0_238 = arith.constant 0 : index
    %455 = vector.load %arg1[%c496, %c0_238] : memref<880x128xf32, #tpu.memory_space<vmem>>, vector<8x8xf32>
    %c0_239 = arith.constant 0 : index
    %c135 = arith.constant 135 : index
    %456 = vector.load %arg4[%c0_239, %c135] : memref<32x768xf32, #tpu.memory_space<vmem>>, vector<8x128xf32>
    %457 = vector.broadcast %410 : vector<1x128xf32> to vector<8x128xf32>
    %458 = arith.mulf %456, %457 : vector<8x128xf32>
    %cst_240 = arith.constant dense<0.000000e+00> : vector<8x128xf32>
    %459 = tpu.matmul %455, %458, %cst_240 {dimension_numbers = #tpu.dot_dimension_numbers<[1], [0], [0], [1], [0, 0, 1, 1], [], []>} : vector<8x8xf32>, vector<8x128xf32>, vector<8x128xf32> -> vector<8x128xf32>
    %460 = arith.addf %454, %459 : vector<8x128xf32>
    %c504 = arith.constant 504 : index
    %c0_241 = arith.constant 0 : index
    %461 = vector.load %arg1[%c504, %c0_241] : memref<880x128xf32, #tpu.memory_space<vmem>>, vector<8x8xf32>
    %c0_242 = arith.constant 0 : index
    %c136 = arith.constant 136 : index
    %462 = vector.load %arg4[%c0_242, %c136] : memref<32x768xf32, #tpu.memory_space<vmem>>, vector<8x128xf32>
    %463 = vector.broadcast %412 : vector<1x128xf32> to vector<8x128xf32>
    %464 = arith.mulf %462, %463 : vector<8x128xf32>
    %cst_243 = arith.constant dense<0.000000e+00> : vector<8x128xf32>
    %465 = tpu.matmul %461, %464, %cst_243 {dimension_numbers = #tpu.dot_dimension_numbers<[1], [0], [0], [1], [0, 0, 1, 1], [], []>} : vector<8x8xf32>, vector<8x128xf32>, vector<8x128xf32> -> vector<8x128xf32>
    %466 = arith.addf %460, %465 : vector<8x128xf32>
    %c512 = arith.constant 512 : index
    %c0_244 = arith.constant 0 : index
    %467 = vector.load %arg1[%c512, %c0_244] : memref<880x128xf32, #tpu.memory_space<vmem>>, vector<8x8xf32>
    %c0_245 = arith.constant 0 : index
    %c137 = arith.constant 137 : index
    %468 = vector.load %arg4[%c0_245, %c137] : memref<32x768xf32, #tpu.memory_space<vmem>>, vector<8x128xf32>
    %469 = vector.broadcast %415 : vector<1x128xf32> to vector<8x128xf32>
    %470 = arith.mulf %468, %469 : vector<8x128xf32>
    %cst_246 = arith.constant dense<0.000000e+00> : vector<8x128xf32>
    %471 = tpu.matmul %467, %470, %cst_246 {dimension_numbers = #tpu.dot_dimension_numbers<[1], [0], [0], [1], [0, 0, 1, 1], [], []>} : vector<8x8xf32>, vector<8x128xf32>, vector<8x128xf32> -> vector<8x128xf32>
    %472 = arith.addf %466, %471 : vector<8x128xf32>
    %cst_247 = arith.constant 0.000000e+00 : f32
    %473 = vector.broadcast %cst_247 : f32 to vector<8x128xf32>
    %474 = arith.maximumf %472, %473 : vector<8x128xf32>
    %c0_248 = arith.constant 0 : index
    %c128_249 = arith.constant 128 : index
    %475 = vector.load %arg4[%c0_248, %c128_249] : memref<32x768xf32, #tpu.memory_space<vmem>>, vector<8x128xf32>
    tpu.vector_store %arg4[%c0_248, %c128_249], %474 {strides = array<i32>} : memref<32x768xf32, #tpu.memory_space<vmem>>, vector<8x128xf32>,
    %c736 = arith.constant 736 : index
    %c8_250 = arith.constant 8 : index
    %476 = vector.load %arg1[%c736, %c8_250] : memref<880x128xf32, #tpu.memory_space<vmem>>, vector<3x1xf32>
    %cst_251 = arith.constant 0.000000e+00 : f32
    %477 = vector.broadcast %cst_251 : f32 to vector<3x128xf32>
    %478 = vector.broadcast %476 : vector<3x1xf32> to vector<3x128xf32>
    %479 = arith.addf %477, %478 : vector<3x128xf32>
    %c736_252 = arith.constant 736 : index
    %c0_253 = arith.constant 0 : index
    %480 = vector.load %arg1[%c736_252, %c0_253] : memref<880x128xf32, #tpu.memory_space<vmem>>, vector<3x8xf32>
    %c0_254 = arith.constant 0 : index
    %c119_255 = arith.constant 119 : index
    %481 = vector.load %arg4[%c0_254, %c119_255] : memref<32x768xf32, #tpu.memory_space<vmem>>, vector<8x128xf32>
    %482 = vector.broadcast %398 : vector<1x128xf32> to vector<8x128xf32>
    %483 = arith.mulf %481, %482 : vector<8x128xf32>
    %cst_256 = arith.constant dense<0.000000e+00> : vector<3x128xf32>
    %484 = tpu.matmul %480, %483, %cst_256 {dimension_numbers = #tpu.dot_dimension_numbers<[1], [0], [0], [1], [0, 0, 1, 1], [], []>} : vector<3x8xf32>, vector<8x128xf32>, vector<3x128xf32> -> vector<3x128xf32>
    %485 = arith.addf %479, %484 : vector<3x128xf32>
    %c744 = arith.constant 744 : index
    %c0_257 = arith.constant 0 : index
    %486 = vector.load %arg1[%c744, %c0_257] : memref<880x128xf32, #tpu.memory_space<vmem>>, vector<3x8xf32>
    %c0_258 = arith.constant 0 : index
    %c120_259 = arith.constant 120 : index
    %487 = vector.load %arg4[%c0_258, %c120_259] : memref<32x768xf32, #tpu.memory_space<vmem>>, vector<8x128xf32>
    %488 = vector.broadcast %400 : vector<1x128xf32> to vector<8x128xf32>
    %489 = arith.mulf %487, %488 : vector<8x128xf32>
    %cst_260 = arith.constant dense<0.000000e+00> : vector<3x128xf32>
    %490 = tpu.matmul %486, %489, %cst_260 {dimension_numbers = #tpu.dot_dimension_numbers<[1], [0], [0], [1], [0, 0, 1, 1], [], []>} : vector<3x8xf32>, vector<8x128xf32>, vector<3x128xf32> -> vector<3x128xf32>
    %491 = arith.addf %485, %490 : vector<3x128xf32>
    %c752 = arith.constant 752 : index
    %c0_261 = arith.constant 0 : index
    %492 = vector.load %arg1[%c752, %c0_261] : memref<880x128xf32, #tpu.memory_space<vmem>>, vector<3x8xf32>
    %c0_262 = arith.constant 0 : index
    %c121_263 = arith.constant 121 : index
    %493 = vector.load %arg4[%c0_262, %c121_263] : memref<32x768xf32, #tpu.memory_space<vmem>>, vector<8x128xf32>
    %494 = vector.broadcast %403 : vector<1x128xf32> to vector<8x128xf32>
    %495 = arith.mulf %493, %494 : vector<8x128xf32>
    %cst_264 = arith.constant dense<0.000000e+00> : vector<3x128xf32>
    %496 = tpu.matmul %492, %495, %cst_264 {dimension_numbers = #tpu.dot_dimension_numbers<[1], [0], [0], [1], [0, 0, 1, 1], [], []>} : vector<3x8xf32>, vector<8x128xf32>, vector<3x128xf32> -> vector<3x128xf32>
    %497 = arith.addf %491, %496 : vector<3x128xf32>
    %c760 = arith.constant 760 : index
    %c0_265 = arith.constant 0 : index
    %498 = vector.load %arg1[%c760, %c0_265] : memref<880x128xf32, #tpu.memory_space<vmem>>, vector<3x8xf32>
    %c0_266 = arith.constant 0 : index
    %c127_267 = arith.constant 127 : index
    %499 = vector.load %arg4[%c0_266, %c127_267] : memref<32x768xf32, #tpu.memory_space<vmem>>, vector<8x128xf32>
    %500 = vector.broadcast %405 : vector<1x128xf32> to vector<8x128xf32>
    %501 = arith.mulf %499, %500 : vector<8x128xf32>
    %cst_268 = arith.constant dense<0.000000e+00> : vector<3x128xf32>
    %502 = tpu.matmul %498, %501, %cst_268 {dimension_numbers = #tpu.dot_dimension_numbers<[1], [0], [0], [1], [0, 0, 1, 1], [], []>} : vector<3x8xf32>, vector<8x128xf32>, vector<3x128xf32> -> vector<3x128xf32>
    %503 = arith.addf %497, %502 : vector<3x128xf32>
    %c768 = arith.constant 768 : index
    %c0_269 = arith.constant 0 : index
    %504 = vector.load %arg1[%c768, %c0_269] : memref<880x128xf32, #tpu.memory_space<vmem>>, vector<3x8xf32>
    %c0_270 = arith.constant 0 : index
    %c128_271 = arith.constant 128 : index
    %505 = vector.load %arg4[%c0_270, %c128_271] : memref<32x768xf32, #tpu.memory_space<vmem>>, vector<8x128xf32>
    %cst_272 = arith.constant dense<0.000000e+00> : vector<3x128xf32>
    %506 = tpu.matmul %504, %505, %cst_272 {dimension_numbers = #tpu.dot_dimension_numbers<[1], [0], [0], [1], [0, 0, 1, 1], [], []>} : vector<3x8xf32>, vector<8x128xf32>, vector<3x128xf32> -> vector<3x128xf32>
    %507 = arith.addf %503, %506 : vector<3x128xf32>
    %c776 = arith.constant 776 : index
    %c0_273 = arith.constant 0 : index
    %508 = vector.load %arg1[%c776, %c0_273] : memref<880x128xf32, #tpu.memory_space<vmem>>, vector<3x8xf32>
    %c0_274 = arith.constant 0 : index
    %c129_275 = arith.constant 129 : index
    %509 = vector.load %arg4[%c0_274, %c129_275] : memref<32x768xf32, #tpu.memory_space<vmem>>, vector<8x128xf32>
    %510 = vector.broadcast %407 : vector<1x128xf32> to vector<8x128xf32>
    %511 = arith.mulf %509, %510 : vector<8x128xf32>
    %cst_276 = arith.constant dense<0.000000e+00> : vector<3x128xf32>
    %512 = tpu.matmul %508, %511, %cst_276 {dimension_numbers = #tpu.dot_dimension_numbers<[1], [0], [0], [1], [0, 0, 1, 1], [], []>} : vector<3x8xf32>, vector<8x128xf32>, vector<3x128xf32> -> vector<3x128xf32>
    %513 = arith.addf %507, %512 : vector<3x128xf32>
    %c784 = arith.constant 784 : index
    %c0_277 = arith.constant 0 : index
    %514 = vector.load %arg1[%c784, %c0_277] : memref<880x128xf32, #tpu.memory_space<vmem>>, vector<3x8xf32>
    %c0_278 = arith.constant 0 : index
    %c135_279 = arith.constant 135 : index
    %515 = vector.load %arg4[%c0_278, %c135_279] : memref<32x768xf32, #tpu.memory_space<vmem>>, vector<8x128xf32>
    %516 = vector.broadcast %410 : vector<1x128xf32> to vector<8x128xf32>
    %517 = arith.mulf %515, %516 : vector<8x128xf32>
    %cst_280 = arith.constant dense<0.000000e+00> : vector<3x128xf32>
    %518 = tpu.matmul %514, %517, %cst_280 {dimension_numbers = #tpu.dot_dimension_numbers<[1], [0], [0], [1], [0, 0, 1, 1], [], []>} : vector<3x8xf32>, vector<8x128xf32>, vector<3x128xf32> -> vector<3x128xf32>
    %519 = arith.addf %513, %518 : vector<3x128xf32>
    %c792 = arith.constant 792 : index
    %c0_281 = arith.constant 0 : index
    %520 = vector.load %arg1[%c792, %c0_281] : memref<880x128xf32, #tpu.memory_space<vmem>>, vector<3x8xf32>
    %c0_282 = arith.constant 0 : index
    %c136_283 = arith.constant 136 : index
    %521 = vector.load %arg4[%c0_282, %c136_283] : memref<32x768xf32, #tpu.memory_space<vmem>>, vector<8x128xf32>
    %522 = vector.broadcast %412 : vector<1x128xf32> to vector<8x128xf32>
    %523 = arith.mulf %521, %522 : vector<8x128xf32>
    %cst_284 = arith.constant dense<0.000000e+00> : vector<3x128xf32>
    %524 = tpu.matmul %520, %523, %cst_284 {dimension_numbers = #tpu.dot_dimension_numbers<[1], [0], [0], [1], [0, 0, 1, 1], [], []>} : vector<3x8xf32>, vector<8x128xf32>, vector<3x128xf32> -> vector<3x128xf32>
    %525 = arith.addf %519, %524 : vector<3x128xf32>
    %c800 = arith.constant 800 : index
    %c0_285 = arith.constant 0 : index
    %526 = vector.load %arg1[%c800, %c0_285] : memref<880x128xf32, #tpu.memory_space<vmem>>, vector<3x8xf32>
    %c0_286 = arith.constant 0 : index
    %c137_287 = arith.constant 137 : index
    %527 = vector.load %arg4[%c0_286, %c137_287] : memref<32x768xf32, #tpu.memory_space<vmem>>, vector<8x128xf32>
    %528 = vector.broadcast %415 : vector<1x128xf32> to vector<8x128xf32>
    %529 = arith.mulf %527, %528 : vector<8x128xf32>
    %cst_288 = arith.constant dense<0.000000e+00> : vector<3x128xf32>
    %530 = tpu.matmul %526, %529, %cst_288 {dimension_numbers = #tpu.dot_dimension_numbers<[1], [0], [0], [1], [0, 0, 1, 1], [], []>} : vector<3x8xf32>, vector<8x128xf32>, vector<3x128xf32> -> vector<3x128xf32>
    %531 = arith.addf %525, %530 : vector<3x128xf32>
    %532 = arith.addf %374, %531 : vector<3x128xf32>
    %c128_289 = arith.constant 128 : index
    %c0_290 = arith.constant 0 : index
    %533 = vector.load %arg2[%c128_289, %c0_290] : memref<192x256xf32, #tpu.memory_space<vmem>>, vector<64x256xf32>
    %534 = vector.extract_strided_slice %532 {offsets = [0, 0], sizes = [3, 64], strides = [1, 1]} : vector<3x128xf32> to vector<3x64xf32>
    %cst_291 = arith.constant dense<0.000000e+00> : vector<3x256xf32>
    %535 = tpu.matmul %534, %533, %cst_291 {dimension_numbers = #tpu.dot_dimension_numbers<[1], [0], [0], [1], [0, 0, 1, 1], [], []>} : vector<3x64xf32>, vector<64x256xf32>, vector<3x256xf32> -> vector<3x256xf32>
    %536 = vector.extract_strided_slice %532 {offsets = [0, 64], sizes = [3, 64], strides = [1, 1]} : vector<3x128xf32> to vector<3x64xf32>
    %cst_292 = arith.constant dense<0.000000e+00> : vector<3x256xf32>
    %537 = tpu.matmul %536, %533, %cst_292 {dimension_numbers = #tpu.dot_dimension_numbers<[1], [0], [0], [1], [0, 0, 1, 1], [], []>} : vector<3x64xf32>, vector<64x256xf32>, vector<3x256xf32> -> vector<3x256xf32>
    %538 = tpu.concatenate %535, %537 in 1 : vector<3x256xf32>, vector<3x256xf32> -> vector<3x512xf32>
    %c64_293 = arith.constant 64 : index
    %c0_294 = arith.constant 0 : index
    %539 = vector.load %arg2[%c64_293, %c0_294] : memref<192x256xf32, #tpu.memory_space<vmem>>, vector<64x256xf32>
    %540 = vector.extract_strided_slice %474 {offsets = [0, 0], sizes = [8, 64], strides = [1, 1]} : vector<8x128xf32> to vector<8x64xf32>
    %cst_295 = arith.constant dense<0.000000e+00> : vector<8x256xf32>
    %541 = tpu.matmul %540, %539, %cst_295 {dimension_numbers = #tpu.dot_dimension_numbers<[1], [0], [0], [1], [0, 0, 1, 1], [], []>} : vector<8x64xf32>, vector<64x256xf32>, vector<8x256xf32> -> vector<8x256xf32>
    %542 = vector.extract_strided_slice %474 {offsets = [0, 64], sizes = [8, 64], strides = [1, 1]} : vector<8x128xf32> to vector<8x64xf32>
    %cst_296 = arith.constant dense<0.000000e+00> : vector<8x256xf32>
    %543 = tpu.matmul %542, %539, %cst_296 {dimension_numbers = #tpu.dot_dimension_numbers<[1], [0], [0], [1], [0, 0, 1, 1], [], []>} : vector<8x64xf32>, vector<64x256xf32>, vector<8x256xf32> -> vector<8x256xf32>
    %544 = tpu.concatenate %541, %543 in 1 : vector<8x256xf32>, vector<8x256xf32> -> vector<8x512xf32>
    %545 = tpu.iota {dimensions = array<i32: 1>} : vector<1x512xi32>
    %c15_i32 = arith.constant 15 : i32
    %546 = vector.broadcast %c15_i32 : i32 to vector<1x512xi32>
    %547 = arith.andi %545, %546 : vector<1x512xi32>
    %c4_i32 = arith.constant 4 : i32
    %548 = vector.broadcast %c4_i32 : i32 to vector<1x512xi32>
    %549 = arith.shrsi %545, %548 : vector<1x512xi32>
    %c15_i32_297 = arith.constant 15 : i32
    %550 = vector.broadcast %c15_i32_297 : i32 to vector<1x512xi32>
    %551 = arith.andi %549, %550 : vector<1x512xi32>
    %c1_i32_298 = arith.constant 1 : i32
    %552 = vector.broadcast %c1_i32_298 : i32 to vector<1x512xi32>
    %553 = arith.cmpi sge, %547, %552 : vector<1x512xi32>
    %c14_i32 = arith.constant 14 : i32
    %554 = vector.broadcast %c14_i32 : i32 to vector<1x512xi32>
    %555 = arith.cmpi sle, %547, %554 : vector<1x512xi32>
    %c1_i32_299 = arith.constant 1 : i32
    %556 = vector.broadcast %c1_i32_299 : i32 to vector<1x512xi32>
    %557 = arith.cmpi sge, %551, %556 : vector<1x512xi32>
    %c14_i32_300 = arith.constant 14 : i32
    %558 = vector.broadcast %c14_i32_300 : i32 to vector<1x512xi32>
    %559 = arith.cmpi sle, %551, %558 : vector<1x512xi32>
    %560 = arith.andi %557, %553 : vector<1x512xi1>
    %561 = arith.extui %560 : vector<1x512xi1> to vector<1x512xi32>
    %562 = arith.sitofp %561 : vector<1x512xi32> to vector<1x512xf32>
    %563 = arith.extui %557 : vector<1x512xi1> to vector<1x512xi32>
    %564 = arith.sitofp %563 : vector<1x512xi32> to vector<1x512xf32>
    %565 = arith.andi %557, %555 : vector<1x512xi1>
    %566 = arith.extui %565 : vector<1x512xi1> to vector<1x512xi32>
    %567 = arith.sitofp %566 : vector<1x512xi32> to vector<1x512xf32>
    %568 = arith.extui %553 : vector<1x512xi1> to vector<1x512xi32>
    %569 = arith.sitofp %568 : vector<1x512xi32> to vector<1x512xf32>
    %570 = arith.extui %555 : vector<1x512xi1> to vector<1x512xi32>
    %571 = arith.sitofp %570 : vector<1x512xi32> to vector<1x512xf32>
    %572 = arith.andi %559, %553 : vector<1x512xi1>
    %573 = arith.extui %572 : vector<1x512xi1> to vector<1x512xi32>
    %574 = arith.sitofp %573 : vector<1x512xi32> to vector<1x512xf32>
    %575 = arith.extui %559 : vector<1x512xi1> to vector<1x512xi32>
    %576 = arith.sitofp %575 : vector<1x512xi32> to vector<1x512xf32>
    %577 = arith.andi %559, %555 : vector<1x512xi1>
    %578 = arith.extui %577 : vector<1x512xi1> to vector<1x512xi32>
    %579 = arith.sitofp %578 : vector<1x512xi32> to vector<1x512xf32>
    %c0_301 = arith.constant 0 : index
    %c128_302 = arith.constant 128 : index
    %580 = vector.load %arg4[%c0_301, %c128_302] : memref<32x768xf32, #tpu.memory_space<vmem>>, vector<8x512xf32>
    tpu.vector_store %arg4[%c0_301, %c128_302], %544 {strides = array<i32>} : memref<32x768xf32, #tpu.memory_space<vmem>>, vector<8x512xf32>,
    %c520 = arith.constant 520 : index
    %c8_303 = arith.constant 8 : index
    %581 = vector.load %arg1[%c520, %c8_303] : memref<880x128xf32, #tpu.memory_space<vmem>>, vector<8x1xf32>
    %cst_304 = arith.constant 0.000000e+00 : f32
    %582 = vector.broadcast %cst_304 : f32 to vector<8x512xf32>
    %583 = vector.broadcast %581 : vector<8x1xf32> to vector<8x512xf32>
    %584 = arith.addf %582, %583 : vector<8x512xf32>
    %c520_305 = arith.constant 520 : index
    %c0_306 = arith.constant 0 : index
    %585 = vector.load %arg1[%c520_305, %c0_306] : memref<880x128xf32, #tpu.memory_space<vmem>>, vector<8x8xf32>
    %c0_307 = arith.constant 0 : index
    %c111 = arith.constant 111 : index
    %586 = vector.load %arg4[%c0_307, %c111] : memref<32x768xf32, #tpu.memory_space<vmem>>, vector<8x512xf32>
    %587 = vector.broadcast %562 : vector<1x512xf32> to vector<8x512xf32>
    %588 = arith.mulf %586, %587 : vector<8x512xf32>
    %cst_308 = arith.constant dense<0.000000e+00> : vector<8x512xf32>
    %589 = tpu.matmul %585, %588, %cst_308 {dimension_numbers = #tpu.dot_dimension_numbers<[1], [0], [0], [1], [0, 0, 1, 1], [], []>} : vector<8x8xf32>, vector<8x512xf32>, vector<8x512xf32> -> vector<8x512xf32>
    %590 = arith.addf %584, %589 : vector<8x512xf32>
    %c528 = arith.constant 528 : index
    %c0_309 = arith.constant 0 : index
    %591 = vector.load %arg1[%c528, %c0_309] : memref<880x128xf32, #tpu.memory_space<vmem>>, vector<8x8xf32>
    %c0_310 = arith.constant 0 : index
    %c112 = arith.constant 112 : index
    %592 = vector.load %arg4[%c0_310, %c112] : memref<32x768xf32, #tpu.memory_space<vmem>>, vector<8x512xf32>
    %593 = vector.broadcast %564 : vector<1x512xf32> to vector<8x512xf32>
    %594 = arith.mulf %592, %593 : vector<8x512xf32>
    %cst_311 = arith.constant dense<0.000000e+00> : vector<8x512xf32>
    %595 = tpu.matmul %591, %594, %cst_311 {dimension_numbers = #tpu.dot_dimension_numbers<[1], [0], [0], [1], [0, 0, 1, 1], [], []>} : vector<8x8xf32>, vector<8x512xf32>, vector<8x512xf32> -> vector<8x512xf32>
    %596 = arith.addf %590, %595 : vector<8x512xf32>
    %c536 = arith.constant 536 : index
    %c0_312 = arith.constant 0 : index
    %597 = vector.load %arg1[%c536, %c0_312] : memref<880x128xf32, #tpu.memory_space<vmem>>, vector<8x8xf32>
    %c0_313 = arith.constant 0 : index
    %c113 = arith.constant 113 : index
    %598 = vector.load %arg4[%c0_313, %c113] : memref<32x768xf32, #tpu.memory_space<vmem>>, vector<8x512xf32>
    %599 = vector.broadcast %567 : vector<1x512xf32> to vector<8x512xf32>
    %600 = arith.mulf %598, %599 : vector<8x512xf32>
    %cst_314 = arith.constant dense<0.000000e+00> : vector<8x512xf32>
    %601 = tpu.matmul %597, %600, %cst_314 {dimension_numbers = #tpu.dot_dimension_numbers<[1], [0], [0], [1], [0, 0, 1, 1], [], []>} : vector<8x8xf32>, vector<8x512xf32>, vector<8x512xf32> -> vector<8x512xf32>
    %602 = arith.addf %596, %601 : vector<8x512xf32>
    %c544 = arith.constant 544 : index
    %c0_315 = arith.constant 0 : index
    %603 = vector.load %arg1[%c544, %c0_315] : memref<880x128xf32, #tpu.memory_space<vmem>>, vector<8x8xf32>
    %c0_316 = arith.constant 0 : index
    %c127_317 = arith.constant 127 : index
    %604 = vector.load %arg4[%c0_316, %c127_317] : memref<32x768xf32, #tpu.memory_space<vmem>>, vector<8x512xf32>
    %605 = vector.broadcast %569 : vector<1x512xf32> to vector<8x512xf32>
    %606 = arith.mulf %604, %605 : vector<8x512xf32>
    %cst_318 = arith.constant dense<0.000000e+00> : vector<8x512xf32>
    %607 = tpu.matmul %603, %606, %cst_318 {dimension_numbers = #tpu.dot_dimension_numbers<[1], [0], [0], [1], [0, 0, 1, 1], [], []>} : vector<8x8xf32>, vector<8x512xf32>, vector<8x512xf32> -> vector<8x512xf32>
    %608 = arith.addf %602, %607 : vector<8x512xf32>
    %c552 = arith.constant 552 : index
    %c0_319 = arith.constant 0 : index
    %609 = vector.load %arg1[%c552, %c0_319] : memref<880x128xf32, #tpu.memory_space<vmem>>, vector<8x8xf32>
    %c0_320 = arith.constant 0 : index
    %c128_321 = arith.constant 128 : index
    %610 = vector.load %arg4[%c0_320, %c128_321] : memref<32x768xf32, #tpu.memory_space<vmem>>, vector<8x512xf32>
    %cst_322 = arith.constant dense<0.000000e+00> : vector<8x512xf32>
    %611 = tpu.matmul %609, %610, %cst_322 {dimension_numbers = #tpu.dot_dimension_numbers<[1], [0], [0], [1], [0, 0, 1, 1], [], []>} : vector<8x8xf32>, vector<8x512xf32>, vector<8x512xf32> -> vector<8x512xf32>
    %612 = arith.addf %608, %611 : vector<8x512xf32>
    %c560 = arith.constant 560 : index
    %c0_323 = arith.constant 0 : index
    %613 = vector.load %arg1[%c560, %c0_323] : memref<880x128xf32, #tpu.memory_space<vmem>>, vector<8x8xf32>
    %c0_324 = arith.constant 0 : index
    %c129_325 = arith.constant 129 : index
    %614 = vector.load %arg4[%c0_324, %c129_325] : memref<32x768xf32, #tpu.memory_space<vmem>>, vector<8x512xf32>
    %615 = vector.broadcast %571 : vector<1x512xf32> to vector<8x512xf32>
    %616 = arith.mulf %614, %615 : vector<8x512xf32>
    %cst_326 = arith.constant dense<0.000000e+00> : vector<8x512xf32>
    %617 = tpu.matmul %613, %616, %cst_326 {dimension_numbers = #tpu.dot_dimension_numbers<[1], [0], [0], [1], [0, 0, 1, 1], [], []>} : vector<8x8xf32>, vector<8x512xf32>, vector<8x512xf32> -> vector<8x512xf32>
    %618 = arith.addf %612, %617 : vector<8x512xf32>
    %c568 = arith.constant 568 : index
    %c0_327 = arith.constant 0 : index
    %619 = vector.load %arg1[%c568, %c0_327] : memref<880x128xf32, #tpu.memory_space<vmem>>, vector<8x8xf32>
    %c0_328 = arith.constant 0 : index
    %c143 = arith.constant 143 : index
    %620 = vector.load %arg4[%c0_328, %c143] : memref<32x768xf32, #tpu.memory_space<vmem>>, vector<8x512xf32>
    %621 = vector.broadcast %574 : vector<1x512xf32> to vector<8x512xf32>
    %622 = arith.mulf %620, %621 : vector<8x512xf32>
    %cst_329 = arith.constant dense<0.000000e+00> : vector<8x512xf32>
    %623 = tpu.matmul %619, %622, %cst_329 {dimension_numbers = #tpu.dot_dimension_numbers<[1], [0], [0], [1], [0, 0, 1, 1], [], []>} : vector<8x8xf32>, vector<8x512xf32>, vector<8x512xf32> -> vector<8x512xf32>
    %624 = arith.addf %618, %623 : vector<8x512xf32>
    %c576 = arith.constant 576 : index
    %c0_330 = arith.constant 0 : index
    %625 = vector.load %arg1[%c576, %c0_330] : memref<880x128xf32, #tpu.memory_space<vmem>>, vector<8x8xf32>
    %c0_331 = arith.constant 0 : index
    %c144 = arith.constant 144 : index
    %626 = vector.load %arg4[%c0_331, %c144] : memref<32x768xf32, #tpu.memory_space<vmem>>, vector<8x512xf32>
    %627 = vector.broadcast %576 : vector<1x512xf32> to vector<8x512xf32>
    %628 = arith.mulf %626, %627 : vector<8x512xf32>
    %cst_332 = arith.constant dense<0.000000e+00> : vector<8x512xf32>
    %629 = tpu.matmul %625, %628, %cst_332 {dimension_numbers = #tpu.dot_dimension_numbers<[1], [0], [0], [1], [0, 0, 1, 1], [], []>} : vector<8x8xf32>, vector<8x512xf32>, vector<8x512xf32> -> vector<8x512xf32>
    %630 = arith.addf %624, %629 : vector<8x512xf32>
    %c584 = arith.constant 584 : index
    %c0_333 = arith.constant 0 : index
    %631 = vector.load %arg1[%c584, %c0_333] : memref<880x128xf32, #tpu.memory_space<vmem>>, vector<8x8xf32>
    %c0_334 = arith.constant 0 : index
    %c145 = arith.constant 145 : index
    %632 = vector.load %arg4[%c0_334, %c145] : memref<32x768xf32, #tpu.memory_space<vmem>>, vector<8x512xf32>
    %633 = vector.broadcast %579 : vector<1x512xf32> to vector<8x512xf32>
    %634 = arith.mulf %632, %633 : vector<8x512xf32>
    %cst_335 = arith.constant dense<0.000000e+00> : vector<8x512xf32>
    %635 = tpu.matmul %631, %634, %cst_335 {dimension_numbers = #tpu.dot_dimension_numbers<[1], [0], [0], [1], [0, 0, 1, 1], [], []>} : vector<8x8xf32>, vector<8x512xf32>, vector<8x512xf32> -> vector<8x512xf32>
    %636 = arith.addf %630, %635 : vector<8x512xf32>
    %cst_336 = arith.constant 0.000000e+00 : f32
    %637 = vector.broadcast %cst_336 : f32 to vector<8x512xf32>
    %638 = arith.maximumf %636, %637 : vector<8x512xf32>
    %c0_337 = arith.constant 0 : index
    %c128_338 = arith.constant 128 : index
    %639 = vector.load %arg4[%c0_337, %c128_338] : memref<32x768xf32, #tpu.memory_space<vmem>>, vector<8x512xf32>
    tpu.vector_store %arg4[%c0_337, %c128_338], %638 {strides = array<i32>} : memref<32x768xf32, #tpu.memory_space<vmem>>, vector<8x512xf32>,
    %c808 = arith.constant 808 : index
    %c8_339 = arith.constant 8 : index
    %640 = vector.load %arg1[%c808, %c8_339] : memref<880x128xf32, #tpu.memory_space<vmem>>, vector<3x1xf32>
    %cst_340 = arith.constant 0.000000e+00 : f32
    %641 = vector.broadcast %cst_340 : f32 to vector<3x512xf32>
    %642 = vector.broadcast %640 : vector<3x1xf32> to vector<3x512xf32>
    %643 = arith.addf %641, %642 : vector<3x512xf32>
    %c808_341 = arith.constant 808 : index
    %c0_342 = arith.constant 0 : index
    %644 = vector.load %arg1[%c808_341, %c0_342] : memref<880x128xf32, #tpu.memory_space<vmem>>, vector<3x8xf32>
    %c0_343 = arith.constant 0 : index
    %c111_344 = arith.constant 111 : index
    %645 = vector.load %arg4[%c0_343, %c111_344] : memref<32x768xf32, #tpu.memory_space<vmem>>, vector<8x512xf32>
    %646 = vector.broadcast %562 : vector<1x512xf32> to vector<8x512xf32>
    %647 = arith.mulf %645, %646 : vector<8x512xf32>
    %cst_345 = arith.constant dense<0.000000e+00> : vector<3x512xf32>
    %648 = tpu.matmul %644, %647, %cst_345 {dimension_numbers = #tpu.dot_dimension_numbers<[1], [0], [0], [1], [0, 0, 1, 1], [], []>} : vector<3x8xf32>, vector<8x512xf32>, vector<3x512xf32> -> vector<3x512xf32>
    %649 = arith.addf %643, %648 : vector<3x512xf32>
    %c816 = arith.constant 816 : index
    %c0_346 = arith.constant 0 : index
    %650 = vector.load %arg1[%c816, %c0_346] : memref<880x128xf32, #tpu.memory_space<vmem>>, vector<3x8xf32>
    %c0_347 = arith.constant 0 : index
    %c112_348 = arith.constant 112 : index
    %651 = vector.load %arg4[%c0_347, %c112_348] : memref<32x768xf32, #tpu.memory_space<vmem>>, vector<8x512xf32>
    %652 = vector.broadcast %564 : vector<1x512xf32> to vector<8x512xf32>
    %653 = arith.mulf %651, %652 : vector<8x512xf32>
    %cst_349 = arith.constant dense<0.000000e+00> : vector<3x512xf32>
    %654 = tpu.matmul %650, %653, %cst_349 {dimension_numbers = #tpu.dot_dimension_numbers<[1], [0], [0], [1], [0, 0, 1, 1], [], []>} : vector<3x8xf32>, vector<8x512xf32>, vector<3x512xf32> -> vector<3x512xf32>
    %655 = arith.addf %649, %654 : vector<3x512xf32>
    %c824 = arith.constant 824 : index
    %c0_350 = arith.constant 0 : index
    %656 = vector.load %arg1[%c824, %c0_350] : memref<880x128xf32, #tpu.memory_space<vmem>>, vector<3x8xf32>
    %c0_351 = arith.constant 0 : index
    %c113_352 = arith.constant 113 : index
    %657 = vector.load %arg4[%c0_351, %c113_352] : memref<32x768xf32, #tpu.memory_space<vmem>>, vector<8x512xf32>
    %658 = vector.broadcast %567 : vector<1x512xf32> to vector<8x512xf32>
    %659 = arith.mulf %657, %658 : vector<8x512xf32>
    %cst_353 = arith.constant dense<0.000000e+00> : vector<3x512xf32>
    %660 = tpu.matmul %656, %659, %cst_353 {dimension_numbers = #tpu.dot_dimension_numbers<[1], [0], [0], [1], [0, 0, 1, 1], [], []>} : vector<3x8xf32>, vector<8x512xf32>, vector<3x512xf32> -> vector<3x512xf32>
    %661 = arith.addf %655, %660 : vector<3x512xf32>
    %c832 = arith.constant 832 : index
    %c0_354 = arith.constant 0 : index
    %662 = vector.load %arg1[%c832, %c0_354] : memref<880x128xf32, #tpu.memory_space<vmem>>, vector<3x8xf32>
    %c0_355 = arith.constant 0 : index
    %c127_356 = arith.constant 127 : index
    %663 = vector.load %arg4[%c0_355, %c127_356] : memref<32x768xf32, #tpu.memory_space<vmem>>, vector<8x512xf32>
    %664 = vector.broadcast %569 : vector<1x512xf32> to vector<8x512xf32>
    %665 = arith.mulf %663, %664 : vector<8x512xf32>
    %cst_357 = arith.constant dense<0.000000e+00> : vector<3x512xf32>
    %666 = tpu.matmul %662, %665, %cst_357 {dimension_numbers = #tpu.dot_dimension_numbers<[1], [0], [0], [1], [0, 0, 1, 1], [], []>} : vector<3x8xf32>, vector<8x512xf32>, vector<3x512xf32> -> vector<3x512xf32>
    %667 = arith.addf %661, %666 : vector<3x512xf32>
    %c840 = arith.constant 840 : index
    %c0_358 = arith.constant 0 : index
    %668 = vector.load %arg1[%c840, %c0_358] : memref<880x128xf32, #tpu.memory_space<vmem>>, vector<3x8xf32>
    %c0_359 = arith.constant 0 : index
    %c128_360 = arith.constant 128 : index
    %669 = vector.load %arg4[%c0_359, %c128_360] : memref<32x768xf32, #tpu.memory_space<vmem>>, vector<8x512xf32>
    %cst_361 = arith.constant dense<0.000000e+00> : vector<3x512xf32>
    %670 = tpu.matmul %668, %669, %cst_361 {dimension_numbers = #tpu.dot_dimension_numbers<[1], [0], [0], [1], [0, 0, 1, 1], [], []>} : vector<3x8xf32>, vector<8x512xf32>, vector<3x512xf32> -> vector<3x512xf32>
    %671 = arith.addf %667, %670 : vector<3x512xf32>
    %c848 = arith.constant 848 : index
    %c0_362 = arith.constant 0 : index
    %672 = vector.load %arg1[%c848, %c0_362] : memref<880x128xf32, #tpu.memory_space<vmem>>, vector<3x8xf32>
    %c0_363 = arith.constant 0 : index
    %c129_364 = arith.constant 129 : index
    %673 = vector.load %arg4[%c0_363, %c129_364] : memref<32x768xf32, #tpu.memory_space<vmem>>, vector<8x512xf32>
    %674 = vector.broadcast %571 : vector<1x512xf32> to vector<8x512xf32>
    %675 = arith.mulf %673, %674 : vector<8x512xf32>
    %cst_365 = arith.constant dense<0.000000e+00> : vector<3x512xf32>
    %676 = tpu.matmul %672, %675, %cst_365 {dimension_numbers = #tpu.dot_dimension_numbers<[1], [0], [0], [1], [0, 0, 1, 1], [], []>} : vector<3x8xf32>, vector<8x512xf32>, vector<3x512xf32> -> vector<3x512xf32>
    %677 = arith.addf %671, %676 : vector<3x512xf32>
    %c856 = arith.constant 856 : index
    %c0_366 = arith.constant 0 : index
    %678 = vector.load %arg1[%c856, %c0_366] : memref<880x128xf32, #tpu.memory_space<vmem>>, vector<3x8xf32>
    %c0_367 = arith.constant 0 : index
    %c143_368 = arith.constant 143 : index
    %679 = vector.load %arg4[%c0_367, %c143_368] : memref<32x768xf32, #tpu.memory_space<vmem>>, vector<8x512xf32>
    %680 = vector.broadcast %574 : vector<1x512xf32> to vector<8x512xf32>
    %681 = arith.mulf %679, %680 : vector<8x512xf32>
    %cst_369 = arith.constant dense<0.000000e+00> : vector<3x512xf32>
    %682 = tpu.matmul %678, %681, %cst_369 {dimension_numbers = #tpu.dot_dimension_numbers<[1], [0], [0], [1], [0, 0, 1, 1], [], []>} : vector<3x8xf32>, vector<8x512xf32>, vector<3x512xf32> -> vector<3x512xf32>
    %683 = arith.addf %677, %682 : vector<3x512xf32>
    %c864 = arith.constant 864 : index
    %c0_370 = arith.constant 0 : index
    %684 = vector.load %arg1[%c864, %c0_370] : memref<880x128xf32, #tpu.memory_space<vmem>>, vector<3x8xf32>
    %c0_371 = arith.constant 0 : index
    %c144_372 = arith.constant 144 : index
    %685 = vector.load %arg4[%c0_371, %c144_372] : memref<32x768xf32, #tpu.memory_space<vmem>>, vector<8x512xf32>
    %686 = vector.broadcast %576 : vector<1x512xf32> to vector<8x512xf32>
    %687 = arith.mulf %685, %686 : vector<8x512xf32>
    %cst_373 = arith.constant dense<0.000000e+00> : vector<3x512xf32>
    %688 = tpu.matmul %684, %687, %cst_373 {dimension_numbers = #tpu.dot_dimension_numbers<[1], [0], [0], [1], [0, 0, 1, 1], [], []>} : vector<3x8xf32>, vector<8x512xf32>, vector<3x512xf32> -> vector<3x512xf32>
    %689 = arith.addf %683, %688 : vector<3x512xf32>
    %c872 = arith.constant 872 : index
    %c0_374 = arith.constant 0 : index
    %690 = vector.load %arg1[%c872, %c0_374] : memref<880x128xf32, #tpu.memory_space<vmem>>, vector<3x8xf32>
    %c0_375 = arith.constant 0 : index
    %c145_376 = arith.constant 145 : index
    %691 = vector.load %arg4[%c0_375, %c145_376] : memref<32x768xf32, #tpu.memory_space<vmem>>, vector<8x512xf32>
    %692 = vector.broadcast %579 : vector<1x512xf32> to vector<8x512xf32>
    %693 = arith.mulf %691, %692 : vector<8x512xf32>
    %cst_377 = arith.constant dense<0.000000e+00> : vector<3x512xf32>
    %694 = tpu.matmul %690, %693, %cst_377 {dimension_numbers = #tpu.dot_dimension_numbers<[1], [0], [0], [1], [0, 0, 1, 1], [], []>} : vector<3x8xf32>, vector<8x512xf32>, vector<3x512xf32> -> vector<3x512xf32>
    %695 = arith.addf %689, %694 : vector<3x512xf32>
    %696 = arith.addf %538, %695 : vector<3x512xf32>
    %cst_378 = arith.constant 0.000000e+00 : f32
    %697 = vector.broadcast %cst_378 : f32 to vector<3x512xf32>
    %698 = arith.subf %697, %696 : vector<3x512xf32>
    %699 = math.exp %698 : vector<3x512xf32>
    %cst_379 = arith.constant 1.000000e+00 : f32
    %700 = vector.broadcast %cst_379 : f32 to vector<3x512xf32>
    %701 = arith.addf %700, %699 : vector<3x512xf32>
    %702 = tpu.reciprocal %701 {approx = true} : vector<3x512xf32> -> vector<3x512xf32>
    %703 = vector.extract_strided_slice %702 {offsets = [0, 0], sizes = [3, 256], strides = [1, 1]} : vector<3x512xf32> to vector<3x256xf32>
    %c0_380 = arith.constant 0 : index
    %c0_381 = arith.constant 0 : index
    %704 = vector.load %arg3[%c0_380, %c0_381] : memref<6x256xf32, #tpu.memory_space<vmem>>, vector<3x256xf32>
    tpu.vector_store %arg3[%c0_380, %c0_381], %703 {strides = array<i32>} : memref<6x256xf32, #tpu.memory_space<vmem>>, vector<3x256xf32>,
    %705 = vector.extract_strided_slice %702 {offsets = [0, 256], sizes = [3, 256], strides = [1, 1]} : vector<3x512xf32> to vector<3x256xf32>
    %c3 = arith.constant 3 : index
    %c0_382 = arith.constant 0 : index
    %706 = vector.load %arg3[%c3, %c0_382] : memref<6x256xf32, #tpu.memory_space<vmem>>, vector<3x256xf32>
    tpu.vector_store %arg3[%c3, %c0_382], %705 {strides = array<i32>} : memref<6x256xf32, #tpu.memory_space<vmem>>, vector<3x256xf32>,
    return
  }
}

</mosaic_0001>

<llo_original>
// kernel: fwd.1
$region0: #{fwd.1}
  #allocation0 [shape = 'u32[]', space=smem, size = 0x4, offset = 0x4, fixed_abs, tag = 'smem constant byte address 0x4 - core index']
  #allocation1 [shape = 'u32[144,128]{1,0:T(1,128)}', space=vmem, size = 0x12000, scoped, tag = 'internal scratch']
  #allocation2 [shape = 'f32[32,768]{1,0:T(8,128)}', space=vmem, size = 0x18000, scoped, tag = 'scratch operand']
  %s0 = inlined_call_operand.vmem [shape: f32[32,2], index: 0, kind: input, shape index: {}]
  %s1 = inlined_call_operand.hbm [shape: f32[880,128], index: 1, kind: input, shape index: {}]
  %s2 = inlined_call_operand.hbm [shape: f32[192,256], index: 2, kind: input, shape index: {}]
  %s3 = inlined_call_operand.vmem [shape: f32[6,256], index: 3, kind: output, shape index: {}]
  %s4 = sld [smem:[#allocation0]]
  $region30: #{fwd.1} parent=0
    _
  %s6 = ssub.s32 1, %s4
  %s7 = scalar_select 0, %s6, %s4
  $region1: #{fwd.1} parent=0
    #allocation3 [shape = 'u8[450560]{0}', space=vmem, size = 0x6e000, scoped, tag = 'input window, operand 1, single buffered']
    #allocation4 [shape = 's32[1]{0}', space=sflag, size = 0x4, scoped, tag = 'scoped memory for fwd.1']
    #allocation5 [shape = 'u8[196608]{0}', space=vmem, size = 0x30000, scoped, tag = 'input window, operand 2, single buffered']
    #allocation6 [shape = 's32[1]{0}', space=sflag, size = 0x4, scoped, tag = 'scoped memory for fwd.1']
    %8 = vsyncpa [#allocation4], 0
    %9 = vsyncpa [#allocation6], 0
    // Predicated region
    $region2: #{fwd.1} parent=1 // pred_check
      _
    $region3: #{fwd.1} parent=1 // pred_check_branch
      %11 = sbr.rel (0) target = $region5
    $region4: #{fwd.1} parent=1 // pred_region
      _
    $region5: #{fwd.1} parent=1 // pred_fallthru
      _
    // Predicated region
    $region6: #{fwd.1} parent=1 // pred_check
      _
    $region7: #{fwd.1} parent=1 // pred_check_branch
      %13 = sbr.rel (0) target = $region9
    $region8: #{fwd.1} parent=1 // pred_region
      %s15 = ssub.s32 14080, 14080
      %16 = vsyncadd [#allocation4], %s15
      %s17 = sshll.u32 [#allocation3], 4
      %s18 = int_to_ptr.vmem [resolvable:$true] %s17
      %23 = dma.hbm_to_vmem [thread:$0]  %s1, 14080, %s18, [#allocation4], 128, 128, 8
    $region9: #{fwd.1} parent=1 // pred_fallthru
      _
    // Predicated region
    $region10: #{fwd.1} parent=1 // pred_check
      _
    $region11: #{fwd.1} parent=1 // pred_check_branch
      %25 = sbr.rel (0) target = $region13
    $region12: #{fwd.1} parent=1 // pred_region
      %s27 = ssub.s32 6144, 6144
      %28 = vsyncadd [#allocation6], %s27
      %s29 = sshll.u32 [#allocation5], 4
      %s30 = int_to_ptr.vmem [resolvable:$true] %s29
      %35 = dma.hbm_to_vmem [thread:$0]  %s2, 6144, %s30, [#allocation6], 256, 256, 16
    $region13: #{fwd.1} parent=1 // pred_fallthru
      _
    // Predicated region
    $region14: #{fwd.1} parent=1 // pred_check
      _
    $region15: #{fwd.1} parent=1 // pred_check_branch
      %37 = sbr.rel (0) target = $region17
    $region16: #{fwd.1} parent=1 // pred_region
      %38 = dma.done [#allocation4], 14080
    $region17: #{fwd.1} parent=1 // pred_fallthru
      _
    // Predicated region
    $region18: #{fwd.1} parent=1 // pred_check
      _
    $region19: #{fwd.1} parent=1 // pred_check_branch
      %40 = sbr.rel (0) target = $region21
    $region20: #{fwd.1} parent=1 // pred_region
      %41 = dma.done [#allocation6], 6144
    $region21: #{fwd.1} parent=1 // pred_fallthru
      _
    %42 = vst [vmem:[#allocation2] sm:$0xff] 0.0
    %43 = vst [vmem:[#allocation2 + $0x8] sm:$0xff] 0.0
    %44 = vst [vmem:[#allocation2 + $0x10] sm:$0xff] 0.0
    %45 = vst [vmem:[#allocation2 + $0x18] sm:$0xff] 0.0
    %46 = vst [vmem:[#allocation2 + $0x20] sm:$0xff] 0.0
    %47 = vst [vmem:[#allocation2 + $0x28] sm:$0xff] 0.0
    %48 = vst [vmem:[#allocation2 + $0x30] sm:$0xff] 0.0
    %49 = vst [vmem:[#allocation2 + $0x38] sm:$0xff] 0.0
    %50 = vst [vmem:[#allocation2 + $0x40] sm:$0xff] 0.0
    %51 = vst [vmem:[#allocation2 + $0x48] sm:$0xff] 0.0
    %52 = vst [vmem:[#allocation2 + $0x50] sm:$0xff] 0.0
    %53 = vst [vmem:[#allocation2 + $0x58] sm:$0xff] 0.0
    %54 = vst [vmem:[#allocation2 + $0x60] sm:$0xff] 0.0
    %55 = vst [vmem:[#allocation2 + $0x68] sm:$0xff] 0.0
    %56 = vst [vmem:[#allocation2 + $0x70] sm:$0xff] 0.0
    %57 = vst [vmem:[#allocation2 + $0x78] sm:$0xff] 0.0
    %58 = vst [vmem:[#allocation2 + $0x80] sm:$0xff] 0.0
    %59 = vst [vmem:[#allocation2 + $0x88] sm:$0xff] 0.0
    %60 = vst [vmem:[#allocation2 + $0x90] sm:$0xff] 0.0
    %61 = vst [vmem:[#allocation2 + $0x98] sm:$0xff] 0.0
    %62 = vst [vmem:[#allocation2 + $0xa0] sm:$0xff] 0.0
    %63 = vst [vmem:[#allocation2 + $0xa8] sm:$0xff] 0.0
    %64 = vst [vmem:[#allocation2 + $0xb0] sm:$0xff] 0.0
    %65 = vst [vmem:[#allocation2 + $0xb8] sm:$0xff] 0.0
    %v66 = vld [vmem:[%s0] sm:$0xff]
    %v67 = vld [vmem:[%s0 + $0x8] sm:$0xff]
    %v68 = vld [vmem:[%s0 + $0x10] sm:$0xff]
    %v69 = vld [vmem:[%s0 + $0x18] sm:$0xff]
    %v70 = vld [vmem:[#allocation3] sm:$0xff]
    %v71 = vld [vmem:[#allocation3 + $0x8] sm:$0xff]
    %v72 = vld [vmem:[#allocation3 + $0x10] sm:$0xff]
    %v73 = vld [vmem:[#allocation3 + $0x18] sm:$0xff]
    %v74 = vld [vmem:[#allocation3 + $0x20] sm:$0xff]
    %v75 = vld [vmem:[#allocation3 + $0x28] sm:$0xff]
    %v76 = vld [vmem:[#allocation3 + $0x30] sm:$0xff]
    %v77 = vld [vmem:[#allocation3 + $0x38] sm:$0xff]
    %79 = vset.pattern.permute.xlu0 32
    %80 = vperm.xlu0 %79, %v70
    %v81 = vpop.permute.xlu0 %80
    %84 = vset.pattern.permute.xlu0 32
    %85 = vperm.xlu0 %84, %v71
    %v86 = vpop.permute.xlu0 %85
    %89 = vset.pattern.permute.xlu0 32
    %90 = vperm.xlu0 %89, %v72
    %v91 = vpop.permute.xlu0 %90
    %94 = vset.pattern.permute.xlu0 32
    %95 = vperm.xlu0 %94, %v73
    %v96 = vpop.permute.xlu0 %95
    %99 = vset.pattern.permute.xlu0 32
    %100 = vperm.xlu0 %99, %v74
    %v101 = vpop.permute.xlu0 %100
    %104 = vset.pattern.permute.xlu0 32
    %105 = vperm.xlu0 %104, %v75
    %v106 = vpop.permute.xlu0 %105
    %109 = vset.pattern.permute.xlu0 32
    %110 = vperm.xlu0 %109, %v76
    %v111 = vpop.permute.xlu0 %110
    %114 = vset.pattern.permute.xlu0 32
    %115 = vperm.xlu0 %114, %v77
    %v116 = vpop.permute.xlu0 %115
    %vm118 = vcmask 261120
    %v119 = vsel %vm118, %v70, 0
    %v121 = vsel %vm118, %v71, 0
    %v123 = vsel %vm118, %v72, 0
    %v125 = vsel %vm118, %v73, 0
    %v127 = vsel %vm118, %v74, 0
    %v129 = vsel %vm118, %v75, 0
    %v131 = vsel %vm118, %v76, 0
    %v133 = vsel %vm118, %v77, 0
    %135 = vmatprep.subr.mxu0 0.0
    %136 = vmatpush1.msra.mxu0 %v66
    %137 = vmatprep.subr.mxu0 0.0
    %138 = vmatpush1.msra.mxu0 %v67
    %139 = vmatprep.subr.mxu0 0.0
    %140 = vmatpush1.msra.mxu0 %v68
    %141 = vmatprep.subr.mxu0 0.0
    %142 = vmatpush1.msra.mxu0 %v69
    %143 = vmatprep.subr.mxu0 0.0
    %144 = vmatpush1.msra.mxu0 0.0
    %145 = vmatprep.subr.mxu0 0.0
    %146 = vmatpush1.msra.mxu0 0.0
    %147 = vmatprep.subr.mxu0 0.0
    %148 = vmatpush1.msra.mxu0 0.0
    %149 = vmatprep.subr.mxu0 0.0
    %150 = vmatpush1.msra.mxu0 0.0
    %151 = vmatprep.subr.mxu0 0.0
    %152 = vmatpush1.msra.mxu0 0.0
    %153 = vmatprep.subr.mxu0 0.0
    %154 = vmatpush1.msra.mxu0 0.0
    %155 = vmatprep.subr.mxu0 0.0
    %156 = vmatpush1.msra.mxu0 0.0
    %157 = vmatprep.subr.mxu0 0.0
    %158 = vmatpush1.msra.mxu0 0.0
    %159 = vmatprep.subr.mxu0 0.0
    %160 = vmatpush1.msra.mxu0 0.0
    %161 = vmatprep.subr.mxu0 0.0
    %162 = vmatpush1.msra.mxu0 0.0
    %163 = vmatprep.subr.mxu0 0.0
    %164 = vmatpush1.msra.mxu0 0.0
    %165 = vmatprep.subr.mxu0 0.0
    %166 = vmatpush1.msra.mxu0 0.0
    %167 = vmatprep.subr.mxu0 0.0
    %168 = vmatpush1.msra.mxu0 0.0
    %169 = vmatprep.subr.mxu0 0.0
    %170 = vmatpush1.msra.mxu0 0.0
    %171 = vmatprep.subr.mxu0 0.0
    %172 = vmatpush1.msra.mxu0 0.0
    %173 = vmatprep.subr.mxu0 0.0
    %174 = vmatpush1.msra.mxu0 0.0
    %175 = vmatprep.subr.mxu0 0.0
    %176 = vmatpush1.msra.mxu0 0.0
    %177 = vmatprep.subr.mxu0 0.0
    %178 = vmatpush1.msra.mxu0 0.0
    %179 = vmatprep.subr.mxu0 0.0
    %180 = vmatpush1.msra.mxu0 0.0
    %181 = vmatprep.subr.mxu0 0.0
    %182 = vmatpush1.msra.mxu0 0.0
    %183 = vmatprep.subr.mxu0 0.0
    %184 = vmatpush1.msra.mxu0 0.0
    %185 = vmatprep.subr.mxu0 0.0
    %186 = vmatpush1.msra.mxu0 0.0
    %187 = vmatprep.subr.mxu0 0.0
    %188 = vmatpush1.msra.mxu0 0.0
    %189 = vmatprep.subr.mxu0 0.0
    %190 = vmatpush1.msra.mxu0 0.0
    %191 = vmatprep.subr.mxu0 0.0
    %192 = vmatpush1.msra.mxu0 0.0
    %193 = vmatprep.subr.mxu0 0.0
    %194 = vmatpush1.msra.mxu0 0.0
    %195 = vmatprep.subr.mxu0 0.0
    %196 = vmatpush1.msra.mxu0 0.0
    %197 = vmatprep.subr.mxu0 0.0
    %198 = vmatpush1.msra.mxu0 0.0
    %199 = vmatprep.mubr.f32.mxu0 0.0
    %200 = vmatmul.mubr.f32.gmra.mrb[0].mxu0 %v119
    %v201 = vpop.f32.mrb[0].mxu0
    %v202 = vadd.f32 %v81, %v201
    %v203 = vpop.f32.mrb[0].mxu0
    %204 = vmatprep.mubr.f32.mxu0 0.0
    %205 = vmatmul.mubr.f32.gmra.mrb[0].mxu0 %v121
    %v206 = vpop.f32.mrb[0].mxu0
    %v207 = vadd.f32 %v86, %v206
    %v208 = vpop.f32.mrb[0].mxu0
    %209 = vmatprep.mubr.f32.mxu0 0.0
    %210 = vmatmul.mubr.f32.gmra.mrb[0].mxu0 %v123
    %v211 = vpop.f32.mrb[0].mxu0
    %v212 = vadd.f32 %v91, %v211
    %v213 = vpop.f32.mrb[0].mxu0
    %214 = vmatprep.mubr.f32.mxu0 0.0
    %215 = vmatmul.mubr.f32.gmra.mrb[0].mxu0 %v125
    %v216 = vpop.f32.mrb[0].mxu0
    %v217 = vadd.f32 %v96, %v216
    %v218 = vpop.f32.mrb[0].mxu0
    %219 = vmatprep.mubr.f32.mxu0 0.0
    %220 = vmatmul.mubr.f32.gmra.mrb[0].mxu0 %v127
    %v221 = vpop.f32.mrb[0].mxu0
    %v222 = vadd.f32 %v101, %v221
    %v223 = vpop.f32.mrb[0].mxu0
    %224 = vmatprep.mubr.f32.mxu0 0.0
    %225 = vmatmul.mubr.f32.gmra.mrb[0].mxu0 %v129
    %v226 = vpop.f32.mrb[0].mxu0
    %v227 = vadd.f32 %v106, %v226
    %v228 = vpop.f32.mrb[0].mxu0
    %229 = vmatprep.mubr.f32.mxu0 0.0
    %230 = vmatmul.mubr.f32.gmra.mrb[0].mxu0 %v131
    %v231 = vpop.f32.mrb[0].mxu0
    %v232 = vadd.f32 %v111, %v231
    %v233 = vpop.f32.mrb[0].mxu0
    %234 = vmatprep.mubr.f32.mxu0 0.0
    %235 = vmatmul.mubr.f32.gmra.mrb[0].mxu0 %v133
    %v236 = vpop.f32.mrb[0].mxu0
    %v237 = vadd.f32 %v116, %v236
    %v238 = vpop.f32.mrb[0].mxu0
    %239 = vdwg.mxu0
    %v240 = vmax.f32 %v202, 0.0
    %v241 = vmax.f32 %v207, 0.0
    %v242 = vmax.f32 %v212, 0.0
    %v243 = vmax.f32 %v217, 0.0
    %v244 = vmax.f32 %v222, 0.0
    %v245 = vmax.f32 %v227, 0.0
    %v246 = vmax.f32 %v232, 0.0
    %v247 = vmax.f32 %v237, 0.0
    %v248 = vld [vmem:[#allocation3 + $0x40] sm:$0xff]
    %v249 = vld [vmem:[#allocation3 + $0x48] sm:$0xff]
    %v250 = vld [vmem:[#allocation3 + $0x50] sm:$0xff]
    %v251 = vld [vmem:[#allocation3 + $0x58] sm:$0xff]
    %v252 = vld [vmem:[#allocation3 + $0x60] sm:$0xff]
    %v253 = vld [vmem:[#allocation3 + $0x68] sm:$0xff]
    %v254 = vld [vmem:[#allocation3 + $0x70] sm:$0xff]
    %v255 = vld [vmem:[#allocation3 + $0x78] sm:$0xff]
    %257 = vset.pattern.permute.xlu0 64
    %258 = vperm.xlu0 %257, %v248
    %v259 = vpop.permute.xlu0 %258
    %262 = vset.pattern.permute.xlu0 64
    %263 = vperm.xlu0 %262, %v249
    %v264 = vpop.permute.xlu0 %263
    %267 = vset.pattern.permute.xlu0 64
    %268 = vperm.xlu0 %267, %v250
    %v269 = vpop.permute.xlu0 %268
    %272 = vset.pattern.permute.xlu0 64
    %273 = vperm.xlu0 %272, %v251
    %v274 = vpop.permute.xlu0 %273
    %277 = vset.pattern.permute.xlu0 64
    %278 = vperm.xlu0 %277, %v252
    %v279 = vpop.permute.xlu0 %278
    %282 = vset.pattern.permute.xlu0 64
    %283 = vperm.xlu0 %282, %v253
    %v284 = vpop.permute.xlu0 %283
    %287 = vset.pattern.permute.xlu0 64
    %288 = vperm.xlu0 %287, %v254
    %v289 = vpop.permute.xlu0 %288
    %292 = vset.pattern.permute.xlu0 64
    %293 = vperm.xlu0 %292, %v255
    %v294 = vpop.permute.xlu0 %293
    %vm296 = vcmask 523264
    %v297 = vsel %vm296, %v248, 0
    %v299 = vsel %vm296, %v249, 0
    %v301 = vsel %vm296, %v250, 0
    %v303 = vsel %vm296, %v251, 0
    %v305 = vsel %vm296, %v252, 0
    %v307 = vsel %vm296, %v253, 0
    %v309 = vsel %vm296, %v254, 0
    %v311 = vsel %vm296, %v255, 0
    %313 = vmatprep.subr.mxu0 0.0
    %314 = vmatpush1.msra.mxu0 %v240
    %315 = vmatprep.subr.mxu0 0.0
    %316 = vmatpush1.msra.mxu0 %v241
    %317 = vmatprep.subr.mxu0 0.0
    %318 = vmatpush1.msra.mxu0 %v242
    %319 = vmatprep.subr.mxu0 0.0
    %320 = vmatpush1.msra.mxu0 %v243
    %321 = vmatprep.subr.mxu0 0.0
    %322 = vmatpush1.msra.mxu0 %v244
    %323 = vmatprep.subr.mxu0 0.0
    %324 = vmatpush1.msra.mxu0 %v245
    %325 = vmatprep.subr.mxu0 0.0
    %326 = vmatpush1.msra.mxu0 %v246
    %327 = vmatprep.subr.mxu0 0.0
    %328 = vmatpush1.msra.mxu0 %v247
    %329 = vmatprep.subr.mxu0 0.0
    %330 = vmatpush1.msra.mxu0 0.0
    %331 = vmatprep.subr.mxu0 0.0
    %332 = vmatpush1.msra.mxu0 0.0
    %333 = vmatprep.subr.mxu0 0.0
    %334 = vmatpush1.msra.mxu0 0.0
    %335 = vmatprep.subr.mxu0 0.0
    %336 = vmatpush1.msra.mxu0 0.0
    %337 = vmatprep.subr.mxu0 0.0
    %338 = vmatpush1.msra.mxu0 0.0
    %339 = vmatprep.subr.mxu0 0.0
    %340 = vmatpush1.msra.mxu0 0.0
    %341 = vmatprep.subr.mxu0 0.0
    %342 = vmatpush1.msra.mxu0 0.0
    %343 = vmatprep.subr.mxu0 0.0
    %344 = vmatpush1.msra.mxu0 0.0
    %345 = vmatprep.subr.mxu0 0.0
    %346 = vmatpush1.msra.mxu0 0.0
    %347 = vmatprep.subr.mxu0 0.0
    %348 = vmatpush1.msra.mxu0 0.0
    %349 = vmatprep.subr.mxu0 0.0
    %350 = vmatpush1.msra.mxu0 0.0
    %351 = vmatprep.subr.mxu0 0.0
    %352 = vmatpush1.msra.mxu0 0.0
    %353 = vmatprep.subr.mxu0 0.0
    %354 = vmatpush1.msra.mxu0 0.0
    %355 = vmatprep.subr.mxu0 0.0
    %356 = vmatpush1.msra.mxu0 0.0
    %357 = vmatprep.subr.mxu0 0.0
    %358 = vmatpush1.msra.mxu0 0.0
    %359 = vmatprep.subr.mxu0 0.0
    %360 = vmatpush1.msra.mxu0 0.0
    %361 = vmatprep.subr.mxu0 0.0
    %362 = vmatpush1.msra.mxu0 0.0
    %363 = vmatprep.subr.mxu0 0.0
    %364 = vmatpush1.msra.mxu0 0.0
    %365 = vmatprep.subr.mxu0 0.0
    %366 = vmatpush1.msra.mxu0 0.0
    %367 = vmatprep.subr.mxu0 0.0
    %368 = vmatpush1.msra.mxu0 0.0
    %369 = vmatprep.subr.mxu0 0.0
    %370 = vmatpush1.msra.mxu0 0.0
    %371 = vmatprep.subr.mxu0 0.0
    %372 = vmatpush1.msra.mxu0 0.0
    %373 = vmatprep.subr.mxu0 0.0
    %374 = vmatpush1.msra.mxu0 0.0
    %375 = vmatprep.subr.mxu0 0.0
    %376 = vmatpush1.msra.mxu0 0.0
    %377 = vmatprep.mubr.f32.mxu0 0.0
    %378 = vmatmul.mubr.f32.gmra.mrb[0].mxu0 %v297
    %v379 = vpop.f32.mrb[0].mxu0
    %v380 = vadd.f32 %v259, %v379
    %v381 = vpop.f32.mrb[0].mxu0
    %382 = vmatprep.mubr.f32.mxu0 0.0
    %383 = vmatmul.mubr.f32.gmra.mrb[0].mxu0 %v299
    %v384 = vpop.f32.mrb[0].mxu0
    %v385 = vadd.f32 %v264, %v384
    %v386 = vpop.f32.mrb[0].mxu0
    %387 = vmatprep.mubr.f32.mxu0 0.0
    %388 = vmatmul.mubr.f32.gmra.mrb[0].mxu0 %v301
    %v389 = vpop.f32.mrb[0].mxu0
    %v390 = vadd.f32 %v269, %v389
    %v391 = vpop.f32.mrb[0].mxu0
    %392 = vmatprep.mubr.f32.mxu0 0.0
    %393 = vmatmul.mubr.f32.gmra.mrb[0].mxu0 %v303
    %v394 = vpop.f32.mrb[0].mxu0
    %v395 = vadd.f32 %v274, %v394
    %v396 = vpop.f32.mrb[0].mxu0
    %397 = vmatprep.mubr.f32.mxu0 0.0
    %398 = vmatmul.mubr.f32.gmra.mrb[0].mxu0 %v305
    %v399 = vpop.f32.mrb[0].mxu0
    %v400 = vadd.f32 %v279, %v399
    %v401 = vpop.f32.mrb[0].mxu0
    %402 = vmatprep.mubr.f32.mxu0 0.0
    %403 = vmatmul.mubr.f32.gmra.mrb[0].mxu0 %v307
    %v404 = vpop.f32.mrb[0].mxu0
    %v405 = vadd.f32 %v284, %v404
    %v406 = vpop.f32.mrb[0].mxu0
    %407 = vmatprep.mubr.f32.mxu0 0.0
    %408 = vmatmul.mubr.f32.gmra.mrb[0].mxu0 %v309
    %v409 = vpop.f32.mrb[0].mxu0
    %v410 = vadd.f32 %v289, %v409
    %v411 = vpop.f32.mrb[0].mxu0
    %412 = vmatprep.mubr.f32.mxu0 0.0
    %413 = vmatmul.mubr.f32.gmra.mrb[0].mxu0 %v311
    %v414 = vpop.f32.mrb[0].mxu0
    %v415 = vadd.f32 %v294, %v414
    %v416 = vpop.f32.mrb[0].mxu0
    %417 = vdwg.mxu0
    %v418 = vmax.f32 %v380, 0.0
    %v419 = vmax.f32 %v385, 0.0
    %v420 = vmax.f32 %v390, 0.0
    %v421 = vmax.f32 %v395, 0.0
    %v422 = vmax.f32 %v400, 0.0
    %v423 = vmax.f32 %v405, 0.0
    %v424 = vmax.f32 %v410, 0.0
    %v425 = vmax.f32 %v415, 0.0
    %v426 = vld [vmem:[#allocation3 + $0x80] sm:$0xff]
    %v427 = vld [vmem:[#allocation3 + $0x88] sm:$0xff]
    %v428 = vld [vmem:[#allocation3 + $0x90] sm:$0xff]
    %v429 = vld [vmem:[#allocation3 + $0x98] sm:$0xff]
    %v430 = vld [vmem:[#allocation3 + $0xa0] sm:$0xff]
    %v431 = vld [vmem:[#allocation3 + $0xa8] sm:$0xff]
    %v432 = vld [vmem:[#allocation3 + $0xb0] sm:$0xff]
    %v433 = vld [vmem:[#allocation3 + $0xb8] sm:$0xff]
    %435 = vset.pattern.permute.xlu0 64
    %436 = vperm.xlu0 %435, %v426
    %v437 = vpop.permute.xlu0 %436
    %440 = vset.pattern.permute.xlu0 64
    %441 = vperm.xlu0 %440, %v427
    %v442 = vpop.permute.xlu0 %441
    %445 = vset.pattern.permute.xlu0 64
    %446 = vperm.xlu0 %445, %v428
    %v447 = vpop.permute.xlu0 %446
    %449 = vset.pattern.permute.xlu0 64
    %450 = vperm.xlu0 %449, %v429
    %v451 = vpop.permute.xlu0 %450
    %453 = vset.pattern.permute.xlu0 64
    %454 = vperm.xlu0 %453, %v430
    %v455 = vpop.permute.xlu0 %454
    %457 = vset.pattern.permute.xlu0 64
    %458 = vperm.xlu0 %457, %v431
    %v459 = vpop.permute.xlu0 %458
    %461 = vset.pattern.permute.xlu0 64
    %462 = vperm.xlu0 %461, %v432
    %v463 = vpop.permute.xlu0 %462
    %465 = vset.pattern.permute.xlu0 64
    %466 = vperm.xlu0 %465, %v433
    %v467 = vpop.permute.xlu0 %466
    %v468 = vsel %vm296, %v426, 0
    %v470 = vsel %vm296, %v427, 0
    %v472 = vsel %vm296, %v428, 0
    %v474 = vsel %vm296, %v429, 0
    %v476 = vsel %vm296, %v430, 0
    %v478 = vsel %vm296, %v431, 0
    %v480 = vsel %vm296, %v432, 0
    %v482 = vsel %vm296, %v433, 0
    %484 = vmatprep.subr.mxu0 0.0
    %485 = vmatpush1.msra.mxu0 %v418
    %486 = vmatprep.subr.mxu0 0.0
    %487 = vmatpush1.msra.mxu0 %v419
    %488 = vmatprep.subr.mxu0 0.0
    %489 = vmatpush1.msra.mxu0 %v420
    %490 = vmatprep.subr.mxu0 0.0
    %491 = vmatpush1.msra.mxu0 %v421
    %492 = vmatprep.subr.mxu0 0.0
    %493 = vmatpush1.msra.mxu0 %v422
    %494 = vmatprep.subr.mxu0 0.0
    %495 = vmatpush1.msra.mxu0 %v423
    %496 = vmatprep.subr.mxu0 0.0
    %497 = vmatpush1.msra.mxu0 %v424
    %498 = vmatprep.subr.mxu0 0.0
    %499 = vmatpush1.msra.mxu0 %v425
    %500 = vmatprep.subr.mxu0 0.0
    %501 = vmatpush1.msra.mxu0 0.0
    %502 = vmatprep.subr.mxu0 0.0
    %503 = vmatpush1.msra.mxu0 0.0
    %504 = vmatprep.subr.mxu0 0.0
    %505 = vmatpush1.msra.mxu0 0.0
    %506 = vmatprep.subr.mxu0 0.0
    %507 = vmatpush1.msra.mxu0 0.0
    %508 = vmatprep.subr.mxu0 0.0
    %509 = vmatpush1.msra.mxu0 0.0
    %510 = vmatprep.subr.mxu0 0.0
    %511 = vmatpush1.msra.mxu0 0.0
    %512 = vmatprep.subr.mxu0 0.0
    %513 = vmatpush1.msra.mxu0 0.0
    %514 = vmatprep.subr.mxu0 0.0
    %515 = vmatpush1.msra.mxu0 0.0
    %516 = vmatprep.subr.mxu0 0.0
    %517 = vmatpush1.msra.mxu0 0.0
    %518 = vmatprep.subr.mxu0 0.0
    %519 = vmatpush1.msra.mxu0 0.0
    %520 = vmatprep.subr.mxu0 0.0
    %521 = vmatpush1.msra.mxu0 0.0
    %522 = vmatprep.subr.mxu0 0.0
    %523 = vmatpush1.msra.mxu0 0.0
    %524 = vmatprep.subr.mxu0 0.0
    %525 = vmatpush1.msra.mxu0 0.0
    %526 = vmatprep.subr.mxu0 0.0
    %527 = vmatpush1.msra.mxu0 0.0
    %528 = vmatprep.subr.mxu0 0.0
    %529 = vmatpush1.msra.mxu0 0.0
    %530 = vmatprep.subr.mxu0 0.0
    %531 = vmatpush1.msra.mxu0 0.0
    %532 = vmatprep.subr.mxu0 0.0
    %533 = vmatpush1.msra.mxu0 0.0
    %534 = vmatprep.subr.mxu0 0.0
    %535 = vmatpush1.msra.mxu0 0.0
    %536 = vmatprep.subr.mxu0 0.0
    %537 = vmatpush1.msra.mxu0 0.0
    %538 = vmatprep.subr.mxu0 0.0
    %539 = vmatpush1.msra.mxu0 0.0
    %540 = vmatprep.subr.mxu0 0.0
    %541 = vmatpush1.msra.mxu0 0.0
    %542 = vmatprep.subr.mxu0 0.0
    %543 = vmatpush1.msra.mxu0 0.0
    %544 = vmatprep.subr.mxu0 0.0
    %545 = vmatpush1.msra.mxu0 0.0
    %546 = vmatprep.subr.mxu0 0.0
    %547 = vmatpush1.msra.mxu0 0.0
    %548 = vmatprep.mubr.f32.mxu0 0.0
    %549 = vmatmul.mubr.f32.gmra.mrb[0].mxu0 %v468
    %v550 = vpop.f32.mrb[0].mxu0
    %v551 = vadd.f32 %v437, %v550
    %v552 = vpop.f32.mrb[0].mxu0
    %553 = vmatprep.mubr.f32.mxu0 0.0
    %554 = vmatmul.mubr.f32.gmra.mrb[0].mxu0 %v470
    %v555 = vpop.f32.mrb[0].mxu0
    %v556 = vadd.f32 %v442, %v555
    %v557 = vpop.f32.mrb[0].mxu0
    %558 = vmatprep.mubr.f32.mxu0 0.0
    %559 = vmatmul.mubr.f32.gmra.mrb[0].mxu0 %v472
    %v560 = vpop.f32.mrb[0].mxu0
    %v561 = vpop.f32.mrb[0].mxu0
    %562 = vmatprep.mubr.f32.mxu0 0.0
    %563 = vmatmul.mubr.f32.gmra.mrb[0].mxu0 %v474
    %v564 = vpop.f32.mrb[0].mxu0
    %v565 = vpop.f32.mrb[0].mxu0
    %566 = vmatprep.mubr.f32.mxu0 0.0
    %567 = vmatmul.mubr.f32.gmra.mrb[0].mxu0 %v476
    %v568 = vpop.f32.mrb[0].mxu0
    %v569 = vpop.f32.mrb[0].mxu0
    %570 = vmatprep.mubr.f32.mxu0 0.0
    %571 = vmatmul.mubr.f32.gmra.mrb[0].mxu0 %v478
    %v572 = vpop.f32.mrb[0].mxu0
    %v573 = vpop.f32.mrb[0].mxu0
    %574 = vmatprep.mubr.f32.mxu0 0.0
    %575 = vmatmul.mubr.f32.gmra.mrb[0].mxu0 %v480
    %v576 = vpop.f32.mrb[0].mxu0
    %v577 = vpop.f32.mrb[0].mxu0
    %578 = vmatprep.mubr.f32.mxu0 0.0
    %579 = vmatmul.mubr.f32.gmra.mrb[0].mxu0 %v482
    %v580 = vpop.f32.mrb[0].mxu0
    %v581 = vpop.f32.mrb[0].mxu0
    %582 = vdwg.mxu0
    %v583 = vld [vmem:[#allocation3 + $0xc0] sm:$0xff]
    %v584 = vld [vmem:[#allocation3 + $0xc8] sm:$0xff]
    %v585 = vld [vmem:[#allocation3 + $0xd0] sm:$0xff]
    %v586 = vld [vmem:[#allocation3 + $0xd8] sm:$0xff]
    %588 = vset.pattern.permute.xlu0 16
    %589 = vperm.xlu0 %588, %v583
    %v590 = vpop.permute.xlu0 %589
    %593 = vset.pattern.permute.xlu0 16
    %594 = vperm.xlu0 %593, %v584
    %v595 = vpop.permute.xlu0 %594
    %598 = vset.pattern.permute.xlu0 16
    %599 = vperm.xlu0 %598, %v585
    %v600 = vpop.permute.xlu0 %599
    %603 = vset.pattern.permute.xlu0 16
    %604 = vperm.xlu0 %603, %v586
    %v605 = vpop.permute.xlu0 %604
    %vm607 = vcmask 130048
    %v608 = vsel %vm607, %v583, 0
    %v610 = vsel %vm607, %v584, 0
    %v612 = vsel %vm607, %v585, 0
    %v614 = vsel %vm607, %v586, 0
    %616 = vmatprep.subr.mxu0 0.0
    %617 = vmatpush1.msra.mxu0 %v551
    %618 = vmatprep.subr.mxu0 0.0
    %619 = vmatpush1.msra.mxu0 %v556
    %620 = vmatprep.subr.mxu0 0.0
    %621 = vmatpush1.msra.mxu0 0.0
    %622 = vmatprep.subr.mxu0 0.0
    %623 = vmatpush1.msra.mxu0 0.0
    %624 = vmatprep.subr.mxu0 0.0
    %625 = vmatpush1.msra.mxu0 0.0
    %626 = vmatprep.subr.mxu0 0.0
    %627 = vmatpush1.msra.mxu0 0.0
    %628 = vmatprep.subr.mxu0 0.0
    %629 = vmatpush1.msra.mxu0 0.0
    %630 = vmatprep.subr.mxu0 0.0
    %631 = vmatpush1.msra.mxu0 0.0
    %632 = vmatprep.subr.mxu0 0.0
    %633 = vmatpush1.msra.mxu0 0.0
    %634 = vmatprep.subr.mxu0 0.0
    %635 = vmatpush1.msra.mxu0 0.0
    %636 = vmatprep.subr.mxu0 0.0
    %637 = vmatpush1.msra.mxu0 0.0
    %638 = vmatprep.subr.mxu0 0.0
    %639 = vmatpush1.msra.mxu0 0.0
    %640 = vmatprep.subr.mxu0 0.0
    %641 = vmatpush1.msra.mxu0 0.0
    %642 = vmatprep.subr.mxu0 0.0
    %643 = vmatpush1.msra.mxu0 0.0
    %644 = vmatprep.subr.mxu0 0.0
    %645 = vmatpush1.msra.mxu0 0.0
    %646 = vmatprep.subr.mxu0 0.0
    %647 = vmatpush1.msra.mxu0 0.0
    %648 = vmatprep.subr.mxu0 0.0
    %649 = vmatpush1.msra.mxu0 0.0
    %650 = vmatprep.subr.mxu0 0.0
    %651 = vmatpush1.msra.mxu0 0.0
    %652 = vmatprep.subr.mxu0 0.0
    %653 = vmatpush1.msra.mxu0 0.0
    %654 = vmatprep.subr.mxu0 0.0
    %655 = vmatpush1.msra.mxu0 0.0
    %656 = vmatprep.subr.mxu0 0.0
    %657 = vmatpush1.msra.mxu0 0.0
    %658 = vmatprep.subr.mxu0 0.0
    %659 = vmatpush1.msra.mxu0 0.0
    %660 = vmatprep.subr.mxu0 0.0
    %661 = vmatpush1.msra.mxu0 0.0
    %662 = vmatprep.subr.mxu0 0.0
    %663 = vmatpush1.msra.mxu0 0.0
    %664 = vmatprep.subr.mxu0 0.0
    %665 = vmatpush1.msra.mxu0 0.0
    %666 = vmatprep.subr.mxu0 0.0
    %667 = vmatpush1.msra.mxu0 0.0
    %668 = vmatprep.subr.mxu0 0.0
    %669 = vmatpush1.msra.mxu0 0.0
    %670 = vmatprep.subr.mxu0 0.0
    %671 = vmatpush1.msra.mxu0 0.0
    %672 = vmatprep.subr.mxu0 0.0
    %673 = vmatpush1.msra.mxu0 0.0
    %674 = vmatprep.subr.mxu0 0.0
    %675 = vmatpush1.msra.mxu0 0.0
    %676 = vmatprep.subr.mxu0 0.0
    %677 = vmatpush1.msra.mxu0 0.0
    %678 = vmatprep.subr.mxu0 0.0
    %679 = vmatpush1.msra.mxu0 0.0
    %680 = vmatprep.mubr.f32.mxu0 0.0
    %681 = vmatmul.mubr.f32.gmra.mrb[0].mxu0 %v608
    %v682 = vpop.f32.mrb[0].mxu0
    %v683 = vadd.f32 %v590, %v682
    %v684 = vpop.f32.mrb[0].mxu0
    %685 = vmatprep.mubr.f32.mxu0 0.0
    %686 = vmatmul.mubr.f32.gmra.mrb[0].mxu0 %v610
    %v687 = vpop.f32.mrb[0].mxu0
    %v688 = vadd.f32 %v595, %v687
    %v689 = vpop.f32.mrb[0].mxu0
    %690 = vmatprep.mubr.f32.mxu0 0.0
    %691 = vmatmul.mubr.f32.gmra.mrb[0].mxu0 %v612
    %v692 = vpop.f32.mrb[0].mxu0
    %v693 = vadd.f32 %v600, %v692
    %v694 = vpop.f32.mrb[0].mxu0
    %695 = vmatprep.mubr.f32.mxu0 0.0
    %696 = vmatmul.mubr.f32.gmra.mrb[0].mxu0 %v614
    %v697 = vpop.f32.mrb[0].mxu0
    %v698 = vadd.f32 %v605, %v697
    %v699 = vpop.f32.mrb[0].mxu0
    %700 = vdwg.mxu0
    %v701 = vld [vmem:[#allocation3 + $0xe0] sm:$0x7]
    %703 = vset.pattern.permute.xlu0 32
    %704 = vperm.xlu0 %703, %v701
    %v705 = vpop.permute.xlu0 %704
    %v707 = vsel %vm118, %v701, 0
    %709 = vmatprep.subr.mxu0 0.0
    %710 = vmatpush1.msra.mxu0 %v683
    %711 = vmatprep.subr.mxu0 0.0
    %712 = vmatpush1.msra.mxu0 %v688
    %713 = vmatprep.subr.mxu0 0.0
    %714 = vmatpush1.msra.mxu0 %v693
    %715 = vmatprep.subr.mxu0 0.0
    %716 = vmatpush1.msra.mxu0 %v698
    %717 = vmatprep.subr.mxu0 0.0
    %718 = vmatpush1.msra.mxu0 0.0
    %719 = vmatprep.subr.mxu0 0.0
    %720 = vmatpush1.msra.mxu0 0.0
    %721 = vmatprep.subr.mxu0 0.0
    %722 = vmatpush1.msra.mxu0 0.0
    %723 = vmatprep.subr.mxu0 0.0
    %724 = vmatpush1.msra.mxu0 0.0
    %725 = vmatprep.subr.mxu0 0.0
    %726 = vmatpush1.msra.mxu0 0.0
    %727 = vmatprep.subr.mxu0 0.0
    %728 = vmatpush1.msra.mxu0 0.0
    %729 = vmatprep.subr.mxu0 0.0
    %730 = vmatpush1.msra.mxu0 0.0
    %731 = vmatprep.subr.mxu0 0.0
    %732 = vmatpush1.msra.mxu0 0.0
    %733 = vmatprep.subr.mxu0 0.0
    %734 = vmatpush1.msra.mxu0 0.0
    %735 = vmatprep.subr.mxu0 0.0
    %736 = vmatpush1.msra.mxu0 0.0
    %737 = vmatprep.subr.mxu0 0.0
    %738 = vmatpush1.msra.mxu0 0.0
    %739 = vmatprep.subr.mxu0 0.0
    %740 = vmatpush1.msra.mxu0 0.0
    %741 = vmatprep.subr.mxu0 0.0
    %742 = vmatpush1.msra.mxu0 0.0
    %743 = vmatprep.subr.mxu0 0.0
    %744 = vmatpush1.msra.mxu0 0.0
    %745 = vmatprep.subr.mxu0 0.0
    %746 = vmatpush1.msra.mxu0 0.0
    %747 = vmatprep.subr.mxu0 0.0
    %748 = vmatpush1.msra.mxu0 0.0
    %749 = vmatprep.subr.mxu0 0.0
    %750 = vmatpush1.msra.mxu0 0.0
    %751 = vmatprep.subr.mxu0 0.0
    %752 = vmatpush1.msra.mxu0 0.0
    %753 = vmatprep.subr.mxu0 0.0
    %754 = vmatpush1.msra.mxu0 0.0
    %755 = vmatprep.subr.mxu0 0.0
    %756 = vmatpush1.msra.mxu0 0.0
    %757 = vmatprep.subr.mxu0 0.0
    %758 = vmatpush1.msra.mxu0 0.0
    %759 = vmatprep.subr.mxu0 0.0
    %760 = vmatpush1.msra.mxu0 0.0
    %761 = vmatprep.subr.mxu0 0.0
    %762 = vmatpush1.msra.mxu0 0.0
    %763 = vmatprep.subr.mxu0 0.0
    %764 = vmatpush1.msra.mxu0 0.0
    %765 = vmatprep.subr.mxu0 0.0
    %766 = vmatpush1.msra.mxu0 0.0
    %767 = vmatprep.subr.mxu0 0.0
    %768 = vmatpush1.msra.mxu0 0.0
    %769 = vmatprep.subr.mxu0 0.0
    %770 = vmatpush1.msra.mxu0 0.0
    %771 = vmatprep.subr.mxu0 0.0
    %772 = vmatpush1.msra.mxu0 0.0
    %773 = vmatprep.mubr.f32.mxu0 0.0
    %774 = vmatmul.mubr.f32.gmra.mrb[0].mxu0 %v707
    %v775 = vpop.f32.mrb[0].mxu0
    %v776 = vadd.f32 %v705, %v775
    %v777 = vpop.f32.mrb[0].mxu0
    %778 = vdwg.mxu0
    %v779 = vld [vmem:[#allocation5 + $0x10] ss:$0 sm:$0xff]
    %781 = vset.pattern.permute.xlu0 0
    %782 = vperm.xlu0 %781, %v776
    %v783 = vpop.permute.xlu0 %782
    %v785 = vmul.f32 %v783, %v779
    %786 = vset.pattern.permute.xlu0 1
    %787 = vperm.xlu0 %786, %v776
    %v788 = vpop.permute.xlu0 %787
    %v790 = vmul.f32 %v788, %v779
    %792 = vrot.lane.b32.xlu0 %v790, 4
    %v793 = vpop.permute.xlu0 %792
    %vm795 = vcmask 31744
    %v796 = vsel %vm795, %v785, %v793
    %v797 = vld [vmem:[#allocation5] ss:$0 sm:$0xff]
    %799 = vset.pattern.permute.xlu0 0
    %800 = vperm.xlu0 %799, %v683
    %v801 = vpop.permute.xlu0 %800
    %804 = vset.pattern.permute.xlu0 0
    %805 = vperm.xlu0 %804, %v688
    %v806 = vpop.permute.xlu0 %805
    %809 = vset.pattern.permute.xlu0 0
    %810 = vperm.xlu0 %809, %v693
    %v811 = vpop.permute.xlu0 %810
    %814 = vset.pattern.permute.xlu0 0
    %815 = vperm.xlu0 %814, %v698
    %v816 = vpop.permute.xlu0 %815
    %v818 = vmul.f32 %v801, %v797
    %v819 = vmul.f32 %v806, %v797
    %v820 = vmul.f32 %v811, %v797
    %v821 = vmul.f32 %v816, %v797
    %822 = vset.pattern.permute.xlu0 1
    %823 = vperm.xlu0 %822, %v683
    %v824 = vpop.permute.xlu0 %823
    %826 = vset.pattern.permute.xlu0 1
    %827 = vperm.xlu0 %826, %v688
    %v828 = vpop.permute.xlu0 %827
    %830 = vset.pattern.permute.xlu0 1
    %831 = vperm.xlu0 %830, %v693
    %v832 = vpop.permute.xlu0 %831
    %834 = vset.pattern.permute.xlu0 1
    %835 = vperm.xlu0 %834, %v698
    %v836 = vpop.permute.xlu0 %835
    %v838 = vmul.f32 %v824, %v797
    %v839 = vmul.f32 %v828, %v797
    %v840 = vmul.f32 %v832, %v797
    %v841 = vmul.f32 %v836, %v797
    %846 = vrot.lane.b32.xlu0 %v838, 4
    %v847 = vpop.permute.xlu0 %846
    %848 = vrot.lane.b32.xlu0 %v839, 4
    %v849 = vpop.permute.xlu0 %848
    %850 = vrot.lane.b32.xlu0 %v840, 4
    %v851 = vpop.permute.xlu0 %850
    %852 = vrot.lane.b32.xlu0 %v841, 4
    %v853 = vpop.permute.xlu0 %852
    %v858 = vsel %vm795, %v818, %v847
    %v859 = vsel %vm795, %v819, %v849
    %v860 = vsel %vm795, %v820, %v851
    %v861 = vsel %vm795, %v821, %v853
    %v862 = vlaneseq
    %v863 = vand.u32 %v862, 127
    %v864 = vand.u32 %v863, 1
    %v865 = vshra.s32 %v863, 1
    %v866 = vand.u32 %v865, 1
    %vm867 = vcmp.ge.s32.totalorder %v864, 1
    %vm868 = vcmp.le.s32.totalorder %v864, 0
    %vm869 = vcmp.ge.s32.totalorder %v866, 1
    %vm870 = vcmp.le.s32.totalorder %v866, 0
    %vm871 = vmand %vm869, %vm867
    %v872 = vsel %vm871, 1, 0
    %v873 = vcvt.s32.f32 %v872
    %v874 = vsel %vm869, 1, 0
    %v875 = vcvt.s32.f32 %v874
    %vm876 = vmand %vm869, %vm868
    %v877 = vsel %vm876, 1, 0
    %v878 = vcvt.s32.f32 %v877
    %v879 = vsel %vm867, 1, 0
    %v880 = vcvt.s32.f32 %v879
    %v881 = vsel %vm868, 1, 0
    %v882 = vcvt.s32.f32 %v881
    %vm883 = vmand %vm870, %vm867
    %v884 = vsel %vm883, 1, 0
    %v885 = vcvt.s32.f32 %v884
    %v886 = vsel %vm870, 1, 0
    %v887 = vcvt.s32.f32 %v886
    %vm888 = vmand %vm870, %vm868
    %v889 = vsel %vm888, 1, 0
    %v890 = vcvt.s32.f32 %v889
    %vm891 = vcmask 64512
    %892 = vst.msk [vmem:[#allocation2 + $0x8] sm:$0xff] %vm891, %v858
    %893 = vst.msk [vmem:[#allocation2 + $0x38] sm:$0xff] %vm891, %v859
    %894 = vst.msk [vmem:[#allocation2 + $0x68] sm:$0xff] %vm891, %v860
    %895 = vst.msk [vmem:[#allocation2 + $0x98] sm:$0xff] %vm891, %v861
    %v896 = vld [vmem:[#allocation3 + $0xe8] sm:$0xff]
    %v897 = vld [vmem:[#allocation3 + $0xf0] sm:$0xff]
    %899 = vset.pattern.permute.xlu0 32
    %900 = vperm.xlu0 %899, %v896
    %v901 = vpop.permute.xlu0 %900
    %904 = vset.pattern.permute.xlu0 32
    %905 = vperm.xlu0 %904, %v897
    %v906 = vpop.permute.xlu0 %905
    %v908 = vadd.f32 %v901, 0.0
    %v909 = vadd.f32 %v906, 0.0
    %v910 = vld [vmem:[#allocation2] sm:$0xff]
    %v911 = vld [vmem:[#allocation2 + $0x8] sm:$0xff]
    %v912 = vld [vmem:[#allocation2 + $0x30] sm:$0xff]
    %v913 = vld [vmem:[#allocation2 + $0x38] sm:$0xff]
    %v914 = vld [vmem:[#allocation2 + $0x60] sm:$0xff]
    %v915 = vld [vmem:[#allocation2 + $0x68] sm:$0xff]
    %v916 = vld [vmem:[#allocation2 + $0x90] sm:$0xff]
    %v917 = vld [vmem:[#allocation2 + $0x98] sm:$0xff]
    %919 = vrot.lane.b32.xlu0 %v873, 125
    %v920 = vpop.permute.xlu0 %919
    %v922 = vmul.f32 %v910, %v920
    %v923 = vmul.f32 %v911, %v920
    %v924 = vmul.f32 %v912, %v920
    %v925 = vmul.f32 %v913, %v920
    %v926 = vmul.f32 %v914, %v920
    %v927 = vmul.f32 %v915, %v920
    %v928 = vmul.f32 %v916, %v920
    %v929 = vmul.f32 %v917, %v920
    %938 = vrot.lane.b32.xlu0 %v922, 3
    %v939 = vpop.permute.xlu0 %938
    %940 = vrot.lane.b32.xlu0 %v923, 3
    %v941 = vpop.permute.xlu0 %940
    %942 = vrot.lane.b32.xlu0 %v924, 3
    %v943 = vpop.permute.xlu0 %942
    %944 = vrot.lane.b32.xlu0 %v925, 3
    %v945 = vpop.permute.xlu0 %944
    %946 = vrot.lane.b32.xlu0 %v926, 3
    %v947 = vpop.permute.xlu0 %946
    %948 = vrot.lane.b32.xlu0 %v927, 3
    %v949 = vpop.permute.xlu0 %948
    %950 = vrot.lane.b32.xlu0 %v928, 3
    %v951 = vpop.permute.xlu0 %950
    %952 = vrot.lane.b32.xlu0 %v929, 3
    %v953 = vpop.permute.xlu0 %952
    %vm954 = vcmask 23552
    %v955 = vsel %vm954, %v939, %v941
    %v956 = vsel %vm954, %v943, %v945
    %v957 = vsel %vm954, %v947, %v949
    %v958 = vsel %vm954, %v951, %v953
    %v963 = vsel %vm118, %v896, 0
    %v965 = vsel %vm118, %v897, 0
    %967 = vmatprep.subr.mxu0 0.0
    %968 = vmatpush1.msra.mxu0 %v955
    %969 = vmatprep.subr.mxu0 0.0
    %970 = vmatpush1.msra.mxu0 %v956
    %971 = vmatprep.subr.mxu0 0.0
    %972 = vmatpush1.msra.mxu0 %v957
    %973 = vmatprep.subr.mxu0 0.0
    %974 = vmatpush1.msra.mxu0 %v958
    %975 = vmatprep.subr.mxu0 0.0
    %976 = vmatpush1.msra.mxu0 0.0
    %977 = vmatprep.subr.mxu0 0.0
    %978 = vmatpush1.msra.mxu0 0.0
    %979 = vmatprep.subr.mxu0 0.0
    %980 = vmatpush1.msra.mxu0 0.0
    %981 = vmatprep.subr.mxu0 0.0
    %982 = vmatpush1.msra.mxu0 0.0
    %983 = vmatprep.subr.mxu0 0.0
    %984 = vmatpush1.msra.mxu0 0.0
    %985 = vmatprep.subr.mxu0 0.0
    %986 = vmatpush1.msra.mxu0 0.0
    %987 = vmatprep.subr.mxu0 0.0
    %988 = vmatpush1.msra.mxu0 0.0
    %989 = vmatprep.subr.mxu0 0.0
    %990 = vmatpush1.msra.mxu0 0.0
    %991 = vmatprep.subr.mxu0 0.0
    %992 = vmatpush1.msra.mxu0 0.0
    %993 = vmatprep.subr.mxu0 0.0
    %994 = vmatpush1.msra.mxu0 0.0
    %995 = vmatprep.subr.mxu0 0.0
    %996 = vmatpush1.msra.mxu0 0.0
    %997 = vmatprep.subr.mxu0 0.0
    %998 = vmatpush1.msra.mxu0 0.0
    %999 = vmatprep.subr.mxu0 0.0
    %1000 = vmatpush1.msra.mxu0 0.0
    %1001 = vmatprep.subr.mxu0 0.0
    %1002 = vmatpush1.msra.mxu0 0.0
    %1003 = vmatprep.subr.mxu0 0.0
    %1004 = vmatpush1.msra.mxu0 0.0
    %1005 = vmatprep.subr.mxu0 0.0
    %1006 = vmatpush1.msra.mxu0 0.0
    %1007 = vmatprep.subr.mxu0 0.0
    %1008 = vmatpush1.msra.mxu0 0.0
    %1009 = vmatprep.subr.mxu0 0.0
    %1010 = vmatpush1.msra.mxu0 0.0
    %1011 = vmatprep.subr.mxu0 0.0
    %1012 = vmatpush1.msra.mxu0 0.0
    %1013 = vmatprep.subr.mxu0 0.0
    %1014 = vmatpush1.msra.mxu0 0.0
    %1015 = vmatprep.subr.mxu0 0.0
    %1016 = vmatpush1.msra.mxu0 0.0
    %1017 = vmatprep.subr.mxu0 0.0
    %1018 = vmatpush1.msra.mxu0 0.0
    %1019 = vmatprep.subr.mxu0 0.0
    %1020 = vmatpush1.msra.mxu0 0.0
    %1021 = vmatprep.subr.mxu0 0.0
    %1022 = vmatpush1.msra.mxu0 0.0
    %1023 = vmatprep.subr.mxu0 0.0
    %1024 = vmatpush1.msra.mxu0 0.0
    %1025 = vmatprep.subr.mxu0 0.0
    %1026 = vmatpush1.msra.mxu0 0.0
    %1027 = vmatprep.subr.mxu0 0.0
    %1028 = vmatpush1.msra.mxu0 0.0
    %1029 = vmatprep.subr.mxu0 0.0
    %1030 = vmatpush1.msra.mxu0 0.0
    %1031 = vmatprep.mubr.f32.mxu0 0.0
    %1032 = vmatmul.mubr.f32.gmra.mrb[0].mxu0 %v963
    %v1033 = vpop.f32.mrb[0].mxu0
    %v1034 = vadd.f32 0.0, %v1033
    %v1035 = vpop.f32.mrb[0].mxu0
    %1036 = vmatprep.mubr.f32.mxu0 0.0
    %1037 = vmatmul.mubr.f32.gmra.mrb[0].mxu0 %v965
    %v1038 = vpop.f32.mrb[0].mxu0
    %v1039 = vadd.f32 0.0, %v1038
    %v1040 = vpop.f32.mrb[0].mxu0
    %1041 = vdwg.mxu0
    %v1042 = vadd.f32 %v908, %v1034
    %v1043 = vadd.f32 %v909, %v1039
    %v1044 = vld [vmem:[#allocation3 + $0xf8] sm:$0xff]
    %v1045 = vld [vmem:[#allocation3 + $0x100] sm:$0xff]
    %1047 = vrot.lane.b32.xlu0 %v875, 126
    %v1048 = vpop.permute.xlu0 %1047
    %v1050 = vmul.f32 %v910, %v1048
    %v1051 = vmul.f32 %v911, %v1048
    %v1052 = vmul.f32 %v912, %v1048
    %v1053 = vmul.f32 %v913, %v1048
    %v1054 = vmul.f32 %v914, %v1048
    %v1055 = vmul.f32 %v915, %v1048
    %v1056 = vmul.f32 %v916, %v1048
    %v1057 = vmul.f32 %v917, %v1048
    %1066 = vrot.lane.b32.xlu0 %v1050, 2
    %v1067 = vpop.permute.xlu0 %1066
    %1068 = vrot.lane.b32.xlu0 %v1051, 2
    %v1069 = vpop.permute.xlu0 %1068
    %1070 = vrot.lane.b32.xlu0 %v1052, 2
    %v1071 = vpop.permute.xlu0 %1070
    %1072 = vrot.lane.b32.xlu0 %v1053, 2
    %v1073 = vpop.permute.xlu0 %1072
    %1074 = vrot.lane.b32.xlu0 %v1054, 2
    %v1075 = vpop.permute.xlu0 %1074
    %1076 = vrot.lane.b32.xlu0 %v1055, 2
    %v1077 = vpop.permute.xlu0 %1076
    %1078 = vrot.lane.b32.xlu0 %v1056, 2
    %v1079 = vpop.permute.xlu0 %1078
    %1080 = vrot.lane.b32.xlu0 %v1057, 2
    %v1081 = vpop.permute.xlu0 %1080
    %vm1082 = vcmask 15360
    %v1083 = vsel %vm1082, %v1067, %v1069
    %v1084 = vsel %vm1082, %v1071, %v1073
    %v1085 = vsel %vm1082, %v1075, %v1077
    %v1086 = vsel %vm1082, %v1079, %v1081
    %v1092 = vsel %vm118, %v1044, 0
    %v1095 = vsel %vm118, %v1045, 0
    %1097 = vmatprep.subr.mxu0 0.0
    %1098 = vmatpush1.msra.mxu0 %v1083
    %1099 = vmatprep.subr.mxu0 0.0
    %1100 = vmatpush1.msra.mxu0 %v1084
    %1101 = vmatprep.subr.mxu0 0.0
    %1102 = vmatpush1.msra.mxu0 %v1085
    %1103 = vmatprep.subr.mxu0 0.0
    %1104 = vmatpush1.msra.mxu0 %v1086
    %1105 = vmatprep.subr.mxu0 0.0
    %1106 = vmatpush1.msra.mxu0 0.0
    %1107 = vmatprep.subr.mxu0 0.0
    %1108 = vmatpush1.msra.mxu0 0.0
    %1109 = vmatprep.subr.mxu0 0.0
    %1110 = vmatpush1.msra.mxu0 0.0
    %1111 = vmatprep.subr.mxu0 0.0
    %1112 = vmatpush1.msra.mxu0 0.0
    %1113 = vmatprep.subr.mxu0 0.0
    %1114 = vmatpush1.msra.mxu0 0.0
    %1115 = vmatprep.subr.mxu0 0.0
    %1116 = vmatpush1.msra.mxu0 0.0
    %1117 = vmatprep.subr.mxu0 0.0
    %1118 = vmatpush1.msra.mxu0 0.0
    %1119 = vmatprep.subr.mxu0 0.0
    %1120 = vmatpush1.msra.mxu0 0.0
    %1121 = vmatprep.subr.mxu0 0.0
    %1122 = vmatpush1.msra.mxu0 0.0
    %1123 = vmatprep.subr.mxu0 0.0
    %1124 = vmatpush1.msra.mxu0 0.0
    %1125 = vmatprep.subr.mxu0 0.0
    %1126 = vmatpush1.msra.mxu0 0.0
    %1127 = vmatprep.subr.mxu0 0.0
    %1128 = vmatpush1.msra.mxu0 0.0
    %1129 = vmatprep.subr.mxu0 0.0
    %1130 = vmatpush1.msra.mxu0 0.0
    %1131 = vmatprep.subr.mxu0 0.0
    %1132 = vmatpush1.msra.mxu0 0.0
    %1133 = vmatprep.subr.mxu0 0.0
    %1134 = vmatpush1.msra.mxu0 0.0
    %1135 = vmatprep.subr.mxu0 0.0
    %1136 = vmatpush1.msra.mxu0 0.0
    %1137 = vmatprep.subr.mxu0 0.0
    %1138 = vmatpush1.msra.mxu0 0.0
    %1139 = vmatprep.subr.mxu0 0.0
    %1140 = vmatpush1.msra.mxu0 0.0
    %1141 = vmatprep.subr.mxu0 0.0
    %1142 = vmatpush1.msra.mxu0 0.0
    %1143 = vmatprep.subr.mxu0 0.0
    %1144 = vmatpush1.msra.mxu0 0.0
    %1145 = vmatprep.subr.mxu0 0.0
    %1146 = vmatpush1.msra.mxu0 0.0
    %1147 = vmatprep.subr.mxu0 0.0
    %1148 = vmatpush1.msra.mxu0 0.0
    %1149 = vmatprep.subr.mxu0 0.0
    %1150 = vmatpush1.msra.mxu0 0.0
    %1151 = vmatprep.subr.mxu0 0.0
    %1152 = vmatpush1.msra.mxu0 0.0
    %1153 = vmatprep.subr.mxu0 0.0
    %1154 = vmatpush1.msra.mxu0 0.0
    %1155 = vmatprep.subr.mxu0 0.0
    %1156 = vmatpush1.msra.mxu0 0.0
    %1157 = vmatprep.subr.mxu0 0.0
    %1158 = vmatpush1.msra.mxu0 0.0
    %1159 = vmatprep.subr.mxu0 0.0
    %1160 = vmatpush1.msra.mxu0 0.0
    %1161 = vmatprep.mubr.f32.mxu0 0.0
    %1162 = vmatmul.mubr.f32.gmra.mrb[0].mxu0 %v1092
    %v1163 = vpop.f32.mrb[0].mxu0
    %v1164 = vadd.f32 0.0, %v1163
    %v1165 = vpop.f32.mrb[0].mxu0
    %1166 = vmatprep.mubr.f32.mxu0 0.0
    %1167 = vmatmul.mubr.f32.gmra.mrb[0].mxu0 %v1095
    %v1168 = vpop.f32.mrb[0].mxu0
    %v1169 = vadd.f32 0.0, %v1168
    %v1170 = vpop.f32.mrb[0].mxu0
    %1171 = vdwg.mxu0
    %v1172 = vadd.f32 %v1042, %v1164
    %v1173 = vadd.f32 %v1043, %v1169
    %v1174 = vld [vmem:[#allocation3 + $0x108] sm:$0xff]
    %v1175 = vld [vmem:[#allocation3 + $0x110] sm:$0xff]
    %1177 = vrot.lane.b32.xlu0 %v878, 127
    %v1178 = vpop.permute.xlu0 %1177
    %v1180 = vmul.f32 %v910, %v1178
    %v1181 = vmul.f32 %v911, %v1178
    %v1182 = vmul.f32 %v912, %v1178
    %v1183 = vmul.f32 %v913, %v1178
    %v1184 = vmul.f32 %v914, %v1178
    %v1185 = vmul.f32 %v915, %v1178
    %v1186 = vmul.f32 %v916, %v1178
    %v1187 = vmul.f32 %v917, %v1178
    %1196 = vrot.lane.b32.xlu0 %v1180, 1
    %v1197 = vpop.permute.xlu0 %1196
    %1198 = vrot.lane.b32.xlu0 %v1181, 1
    %v1199 = vpop.permute.xlu0 %1198
    %1200 = vrot.lane.b32.xlu0 %v1182, 1
    %v1201 = vpop.permute.xlu0 %1200
    %1202 = vrot.lane.b32.xlu0 %v1183, 1
    %v1203 = vpop.permute.xlu0 %1202
    %1204 = vrot.lane.b32.xlu0 %v1184, 1
    %v1205 = vpop.permute.xlu0 %1204
    %1206 = vrot.lane.b32.xlu0 %v1185, 1
    %v1207 = vpop.permute.xlu0 %1206
    %1208 = vrot.lane.b32.xlu0 %v1186, 1
    %v1209 = vpop.permute.xlu0 %1208
    %1210 = vrot.lane.b32.xlu0 %v1187, 1
    %v1211 = vpop.permute.xlu0 %1210
    %vm1212 = vcmask 7168
    %v1213 = vsel %vm1212, %v1197, %v1199
    %v1214 = vsel %vm1212, %v1201, %v1203
    %v1215 = vsel %vm1212, %v1205, %v1207
    %v1216 = vsel %vm1212, %v1209, %v1211
    %v1222 = vsel %vm118, %v1174, 0
    %v1225 = vsel %vm118, %v1175, 0
    %1227 = vmatprep.subr.mxu0 0.0
    %1228 = vmatpush1.msra.mxu0 %v1213
    %1229 = vmatprep.subr.mxu0 0.0
    %1230 = vmatpush1.msra.mxu0 %v1214
    %1231 = vmatprep.subr.mxu0 0.0
    %1232 = vmatpush1.msra.mxu0 %v1215
    %1233 = vmatprep.subr.mxu0 0.0
    %1234 = vmatpush1.msra.mxu0 %v1216
    %1235 = vmatprep.subr.mxu0 0.0
    %1236 = vmatpush1.msra.mxu0 0.0
    %1237 = vmatprep.subr.mxu0 0.0
    %1238 = vmatpush1.msra.mxu0 0.0
    %1239 = vmatprep.subr.mxu0 0.0
    %1240 = vmatpush1.msra.mxu0 0.0
    %1241 = vmatprep.subr.mxu0 0.0
    %1242 = vmatpush1.msra.mxu0 0.0
    %1243 = vmatprep.subr.mxu0 0.0
    %1244 = vmatpush1.msra.mxu0 0.0
    %1245 = vmatprep.subr.mxu0 0.0
    %1246 = vmatpush1.msra.mxu0 0.0
    %1247 = vmatprep.subr.mxu0 0.0
    %1248 = vmatpush1.msra.mxu0 0.0
    %1249 = vmatprep.subr.mxu0 0.0
    %1250 = vmatpush1.msra.mxu0 0.0
    %1251 = vmatprep.subr.mxu0 0.0
    %1252 = vmatpush1.msra.mxu0 0.0
    %1253 = vmatprep.subr.mxu0 0.0
    %1254 = vmatpush1.msra.mxu0 0.0
    %1255 = vmatprep.subr.mxu0 0.0
    %1256 = vmatpush1.msra.mxu0 0.0
    %1257 = vmatprep.subr.mxu0 0.0
    %1258 = vmatpush1.msra.mxu0 0.0
    %1259 = vmatprep.subr.mxu0 0.0
    %1260 = vmatpush1.msra.mxu0 0.0
    %1261 = vmatprep.subr.mxu0 0.0
    %1262 = vmatpush1.msra.mxu0 0.0
    %1263 = vmatprep.subr.mxu0 0.0
    %1264 = vmatpush1.msra.mxu0 0.0
    %1265 = vmatprep.subr.mxu0 0.0
    %1266 = vmatpush1.msra.mxu0 0.0
    %1267 = vmatprep.subr.mxu0 0.0
    %1268 = vmatpush1.msra.mxu0 0.0
    %1269 = vmatprep.subr.mxu0 0.0
    %1270 = vmatpush1.msra.mxu0 0.0
    %1271 = vmatprep.subr.mxu0 0.0
    %1272 = vmatpush1.msra.mxu0 0.0
    %1273 = vmatprep.subr.mxu0 0.0
    %1274 = vmatpush1.msra.mxu0 0.0
    %1275 = vmatprep.subr.mxu0 0.0
    %1276 = vmatpush1.msra.mxu0 0.0
    %1277 = vmatprep.subr.mxu0 0.0
    %1278 = vmatpush1.msra.mxu0 0.0
    %1279 = vmatprep.subr.mxu0 0.0
    %1280 = vmatpush1.msra.mxu0 0.0
    %1281 = vmatprep.subr.mxu0 0.0
    %1282 = vmatpush1.msra.mxu0 0.0
    %1283 = vmatprep.subr.mxu0 0.0
    %1284 = vmatpush1.msra.mxu0 0.0
    %1285 = vmatprep.subr.mxu0 0.0
    %1286 = vmatpush1.msra.mxu0 0.0
    %1287 = vmatprep.subr.mxu0 0.0
    %1288 = vmatpush1.msra.mxu0 0.0
    %1289 = vmatprep.subr.mxu0 0.0
    %1290 = vmatpush1.msra.mxu0 0.0
    %1291 = vmatprep.mubr.f32.mxu0 0.0
    %1292 = vmatmul.mubr.f32.gmra.mrb[0].mxu0 %v1222
    %v1293 = vpop.f32.mrb[0].mxu0
    %v1294 = vadd.f32 0.0, %v1293
    %v1295 = vpop.f32.mrb[0].mxu0
    %1296 = vmatprep.mubr.f32.mxu0 0.0
    %1297 = vmatmul.mubr.f32.gmra.mrb[0].mxu0 %v1225
    %v1298 = vpop.f32.mrb[0].mxu0
    %v1299 = vadd.f32 0.0, %v1298
    %v1300 = vpop.f32.mrb[0].mxu0
    %1301 = vdwg.mxu0
    %v1302 = vadd.f32 %v1172, %v1294
    %v1303 = vadd.f32 %v1173, %v1299
    %v1304 = vld [vmem:[#allocation3 + $0x118] sm:$0xff]
    %v1305 = vld [vmem:[#allocation3 + $0x120] sm:$0xff]
    %1307 = vrot.lane.b32.xlu0 %v880, 127
    %v1308 = vpop.permute.xlu0 %1307
    %v1310 = vmul.f32 %v910, %v1308
    %v1311 = vmul.f32 %v911, %v1308
    %v1312 = vmul.f32 %v912, %v1308
    %v1313 = vmul.f32 %v913, %v1308
    %v1314 = vmul.f32 %v914, %v1308
    %v1315 = vmul.f32 %v915, %v1308
    %v1316 = vmul.f32 %v916, %v1308
    %v1317 = vmul.f32 %v917, %v1308
    %1326 = vrot.lane.b32.xlu0 %v1310, 1
    %v1327 = vpop.permute.xlu0 %1326
    %1328 = vrot.lane.b32.xlu0 %v1311, 1
    %v1329 = vpop.permute.xlu0 %1328
    %1330 = vrot.lane.b32.xlu0 %v1312, 1
    %v1331 = vpop.permute.xlu0 %1330
    %1332 = vrot.lane.b32.xlu0 %v1313, 1
    %v1333 = vpop.permute.xlu0 %1332
    %1334 = vrot.lane.b32.xlu0 %v1314, 1
    %v1335 = vpop.permute.xlu0 %1334
    %1336 = vrot.lane.b32.xlu0 %v1315, 1
    %v1337 = vpop.permute.xlu0 %1336
    %1338 = vrot.lane.b32.xlu0 %v1316, 1
    %v1339 = vpop.permute.xlu0 %1338
    %1340 = vrot.lane.b32.xlu0 %v1317, 1
    %v1341 = vpop.permute.xlu0 %1340
    %v1342 = vsel %vm1212, %v1327, %v1329
    %v1343 = vsel %vm1212, %v1331, %v1333
    %v1344 = vsel %vm1212, %v1335, %v1337
    %v1345 = vsel %vm1212, %v1339, %v1341
    %v1351 = vsel %vm118, %v1304, 0
    %v1354 = vsel %vm118, %v1305, 0
    %1356 = vmatprep.subr.mxu0 0.0
    %1357 = vmatpush1.msra.mxu0 %v1342
    %1358 = vmatprep.subr.mxu0 0.0
    %1359 = vmatpush1.msra.mxu0 %v1343
    %1360 = vmatprep.subr.mxu0 0.0
    %1361 = vmatpush1.msra.mxu0 %v1344
    %1362 = vmatprep.subr.mxu0 0.0
    %1363 = vmatpush1.msra.mxu0 %v1345
    %1364 = vmatprep.subr.mxu0 0.0
    %1365 = vmatpush1.msra.mxu0 0.0
    %1366 = vmatprep.subr.mxu0 0.0
    %1367 = vmatpush1.msra.mxu0 0.0
    %1368 = vmatprep.subr.mxu0 0.0
    %1369 = vmatpush1.msra.mxu0 0.0
    %1370 = vmatprep.subr.mxu0 0.0
    %1371 = vmatpush1.msra.mxu0 0.0
    %1372 = vmatprep.subr.mxu0 0.0
    %1373 = vmatpush1.msra.mxu0 0.0
    %1374 = vmatprep.subr.mxu0 0.0
    %1375 = vmatpush1.msra.mxu0 0.0
    %1376 = vmatprep.subr.mxu0 0.0
    %1377 = vmatpush1.msra.mxu0 0.0
    %1378 = vmatprep.subr.mxu0 0.0
    %1379 = vmatpush1.msra.mxu0 0.0
    %1380 = vmatprep.subr.mxu0 0.0
    %1381 = vmatpush1.msra.mxu0 0.0
    %1382 = vmatprep.subr.mxu0 0.0
    %1383 = vmatpush1.msra.mxu0 0.0
    %1384 = vmatprep.subr.mxu0 0.0
    %1385 = vmatpush1.msra.mxu0 0.0
    %1386 = vmatprep.subr.mxu0 0.0
    %1387 = vmatpush1.msra.mxu0 0.0
    %1388 = vmatprep.subr.mxu0 0.0
    %1389 = vmatpush1.msra.mxu0 0.0
    %1390 = vmatprep.subr.mxu0 0.0
    %1391 = vmatpush1.msra.mxu0 0.0
    %1392 = vmatprep.subr.mxu0 0.0
    %1393 = vmatpush1.msra.mxu0 0.0
    %1394 = vmatprep.subr.mxu0 0.0
    %1395 = vmatpush1.msra.mxu0 0.0
    %1396 = vmatprep.subr.mxu0 0.0
    %1397 = vmatpush1.msra.mxu0 0.0
    %1398 = vmatprep.subr.mxu0 0.0
    %1399 = vmatpush1.msra.mxu0 0.0
    %1400 = vmatprep.subr.mxu0 0.0
    %1401 = vmatpush1.msra.mxu0 0.0
    %1402 = vmatprep.subr.mxu0 0.0
    %1403 = vmatpush1.msra.mxu0 0.0
    %1404 = vmatprep.subr.mxu0 0.0
    %1405 = vmatpush1.msra.mxu0 0.0
    %1406 = vmatprep.subr.mxu0 0.0
    %1407 = vmatpush1.msra.mxu0 0.0
    %1408 = vmatprep.subr.mxu0 0.0
    %1409 = vmatpush1.msra.mxu0 0.0
    %1410 = vmatprep.subr.mxu0 0.0
    %1411 = vmatpush1.msra.mxu0 0.0
    %1412 = vmatprep.subr.mxu0 0.0
    %1413 = vmatpush1.msra.mxu0 0.0
    %1414 = vmatprep.subr.mxu0 0.0
    %1415 = vmatpush1.msra.mxu0 0.0
    %1416 = vmatprep.subr.mxu0 0.0
    %1417 = vmatpush1.msra.mxu0 0.0
    %1418 = vmatprep.subr.mxu0 0.0
    %1419 = vmatpush1.msra.mxu0 0.0
    %1420 = vmatprep.mubr.f32.mxu0 0.0
    %1421 = vmatmul.mubr.f32.gmra.mrb[0].mxu0 %v1351
    %v1422 = vpop.f32.mrb[0].mxu0
    %v1423 = vadd.f32 0.0, %v1422
    %v1424 = vpop.f32.mrb[0].mxu0
    %1425 = vmatprep.mubr.f32.mxu0 0.0
    %1426 = vmatmul.mubr.f32.gmra.mrb[0].mxu0 %v1354
    %v1427 = vpop.f32.mrb[0].mxu0
    %v1428 = vadd.f32 0.0, %v1427
    %v1429 = vpop.f32.mrb[0].mxu0
    %1430 = vdwg.mxu0
    %v1431 = vadd.f32 %v1302, %v1423
    %v1432 = vadd.f32 %v1303, %v1428
    %v1433 = vld [vmem:[#allocation3 + $0x128] sm:$0xff]
    %v1434 = vld [vmem:[#allocation3 + $0x130] sm:$0xff]
    %v1436 = vsel %vm118, %v1433, 0
    %v1439 = vsel %vm118, %v1434, 0
    %1441 = vmatprep.subr.mxu0 0.0
    %1442 = vmatpush1.msra.mxu0 %v911
    %1443 = vmatprep.subr.mxu0 0.0
    %1444 = vmatpush1.msra.mxu0 %v913
    %1445 = vmatprep.subr.mxu0 0.0
    %1446 = vmatpush1.msra.mxu0 %v915
    %1447 = vmatprep.subr.mxu0 0.0
    %1448 = vmatpush1.msra.mxu0 %v917
    %1449 = vmatprep.subr.mxu0 0.0
    %1450 = vmatpush1.msra.mxu0 0.0
    %1451 = vmatprep.subr.mxu0 0.0
    %1452 = vmatpush1.msra.mxu0 0.0
    %1453 = vmatprep.subr.mxu0 0.0
    %1454 = vmatpush1.msra.mxu0 0.0
    %1455 = vmatprep.subr.mxu0 0.0
    %1456 = vmatpush1.msra.mxu0 0.0
    %1457 = vmatprep.subr.mxu0 0.0
    %1458 = vmatpush1.msra.mxu0 0.0
    %1459 = vmatprep.subr.mxu0 0.0
    %1460 = vmatpush1.msra.mxu0 0.0
    %1461 = vmatprep.subr.mxu0 0.0
    %1462 = vmatpush1.msra.mxu0 0.0
    %1463 = vmatprep.subr.mxu0 0.0
    %1464 = vmatpush1.msra.mxu0 0.0
    %1465 = vmatprep.subr.mxu0 0.0
    %1466 = vmatpush1.msra.mxu0 0.0
    %1467 = vmatprep.subr.mxu0 0.0
    %1468 = vmatpush1.msra.mxu0 0.0
    %1469 = vmatprep.subr.mxu0 0.0
    %1470 = vmatpush1.msra.mxu0 0.0
    %1471 = vmatprep.subr.mxu0 0.0
    %1472 = vmatpush1.msra.mxu0 0.0
    %1473 = vmatprep.subr.mxu0 0.0
    %1474 = vmatpush1.msra.mxu0 0.0
    %1475 = vmatprep.subr.mxu0 0.0
    %1476 = vmatpush1.msra.mxu0 0.0
    %1477 = vmatprep.subr.mxu0 0.0
    %1478 = vmatpush1.msra.mxu0 0.0
    %1479 = vmatprep.subr.mxu0 0.0
    %1480 = vmatpush1.msra.mxu0 0.0
    %1481 = vmatprep.subr.mxu0 0.0
    %1482 = vmatpush1.msra.mxu0 0.0
    %1483 = vmatprep.subr.mxu0 0.0
    %1484 = vmatpush1.msra.mxu0 0.0
    %1485 = vmatprep.subr.mxu0 0.0
    %1486 = vmatpush1.msra.mxu0 0.0
    %1487 = vmatprep.subr.mxu0 0.0
    %1488 = vmatpush1.msra.mxu0 0.0
    %1489 = vmatprep.subr.mxu0 0.0
    %1490 = vmatpush1.msra.mxu0 0.0
    %1491 = vmatprep.subr.mxu0 0.0
    %1492 = vmatpush1.msra.mxu0 0.0
    %1493 = vmatprep.subr.mxu0 0.0
    %1494 = vmatpush1.msra.mxu0 0.0
    %1495 = vmatprep.subr.mxu0 0.0
    %1496 = vmatpush1.msra.mxu0 0.0
    %1497 = vmatprep.subr.mxu0 0.0
    %1498 = vmatpush1.msra.mxu0 0.0
    %1499 = vmatprep.subr.mxu0 0.0
    %1500 = vmatpush1.msra.mxu0 0.0
    %1501 = vmatprep.subr.mxu0 0.0
    %1502 = vmatpush1.msra.mxu0 0.0
    %1503 = vmatprep.subr.mxu0 0.0
    %1504 = vmatpush1.msra.mxu0 0.0
    %1505 = vmatprep.mubr.f32.mxu0 0.0
    %1506 = vmatmul.mubr.f32.gmra.mrb[0].mxu0 %v1436
    %v1507 = vpop.f32.mrb[0].mxu0
    %v1508 = vadd.f32 0.0, %v1507
    %v1509 = vpop.f32.mrb[0].mxu0
    %1510 = vmatprep.mubr.f32.mxu0 0.0
    %1511 = vmatmul.mubr.f32.gmra.mrb[0].mxu0 %v1439
    %v1512 = vpop.f32.mrb[0].mxu0
    %v1513 = vadd.f32 0.0, %v1512
    %v1514 = vpop.f32.mrb[0].mxu0
    %1515 = vdwg.mxu0
    %v1516 = vadd.f32 %v1431, %v1508
    %v1517 = vadd.f32 %v1432, %v1513
    %v1518 = vld [vmem:[#allocation3 + $0x138] sm:$0xff]
    %v1519 = vld [vmem:[#allocation3 + $0x140] sm:$0xff]
    %1521 = vrot.lane.b32.xlu0 %v882, 1
    %v1522 = vpop.permute.xlu0 %1521
    %v1524 = vmul.f32 %v911, %v1522
    %v1525 = vmul.f32 %v913, %v1522
    %v1526 = vmul.f32 %v915, %v1522
    %v1527 = vmul.f32 %v917, %v1522
    %1532 = vrot.lane.b32.xlu0 %v1524, 127
    %v1533 = vpop.permute.xlu0 %1532
    %1534 = vrot.lane.b32.xlu0 %v1525, 127
    %v1535 = vpop.permute.xlu0 %1534
    %1536 = vrot.lane.b32.xlu0 %v1526, 127
    %v1537 = vpop.permute.xlu0 %1536
    %1538 = vrot.lane.b32.xlu0 %v1527, 127
    %v1539 = vpop.permute.xlu0 %1538
    %v1545 = vsel %vm118, %v1518, 0
    %v1548 = vsel %vm118, %v1519, 0
    %1550 = vmatprep.subr.mxu0 0.0
    %1551 = vmatpush1.msra.mxu0 %v1533
    %1552 = vmatprep.subr.mxu0 0.0
    %1553 = vmatpush1.msra.mxu0 %v1535
    %1554 = vmatprep.subr.mxu0 0.0
    %1555 = vmatpush1.msra.mxu0 %v1537
    %1556 = vmatprep.subr.mxu0 0.0
    %1557 = vmatpush1.msra.mxu0 %v1539
    %1558 = vmatprep.subr.mxu0 0.0
    %1559 = vmatpush1.msra.mxu0 0.0
    %1560 = vmatprep.subr.mxu0 0.0
    %1561 = vmatpush1.msra.mxu0 0.0
    %1562 = vmatprep.subr.mxu0 0.0
    %1563 = vmatpush1.msra.mxu0 0.0
    %1564 = vmatprep.subr.mxu0 0.0
    %1565 = vmatpush1.msra.mxu0 0.0
    %1566 = vmatprep.subr.mxu0 0.0
    %1567 = vmatpush1.msra.mxu0 0.0
    %1568 = vmatprep.subr.mxu0 0.0
    %1569 = vmatpush1.msra.mxu0 0.0
    %1570 = vmatprep.subr.mxu0 0.0
    %1571 = vmatpush1.msra.mxu0 0.0
    %1572 = vmatprep.subr.mxu0 0.0
    %1573 = vmatpush1.msra.mxu0 0.0
    %1574 = vmatprep.subr.mxu0 0.0
    %1575 = vmatpush1.msra.mxu0 0.0
    %1576 = vmatprep.subr.mxu0 0.0
    %1577 = vmatpush1.msra.mxu0 0.0
    %1578 = vmatprep.subr.mxu0 0.0
    %1579 = vmatpush1.msra.mxu0 0.0
    %1580 = vmatprep.subr.mxu0 0.0
    %1581 = vmatpush1.msra.mxu0 0.0
    %1582 = vmatprep.subr.mxu0 0.0
    %1583 = vmatpush1.msra.mxu0 0.0
    %1584 = vmatprep.subr.mxu0 0.0
    %1585 = vmatpush1.msra.mxu0 0.0
    %1586 = vmatprep.subr.mxu0 0.0
    %1587 = vmatpush1.msra.mxu0 0.0
    %1588 = vmatprep.subr.mxu0 0.0
    %1589 = vmatpush1.msra.mxu0 0.0
    %1590 = vmatprep.subr.mxu0 0.0
    %1591 = vmatpush1.msra.mxu0 0.0
    %1592 = vmatprep.subr.mxu0 0.0
    %1593 = vmatpush1.msra.mxu0 0.0
    %1594 = vmatprep.subr.mxu0 0.0
    %1595 = vmatpush1.msra.mxu0 0.0
    %1596 = vmatprep.subr.mxu0 0.0
    %1597 = vmatpush1.msra.mxu0 0.0
    %1598 = vmatprep.subr.mxu0 0.0
    %1599 = vmatpush1.msra.mxu0 0.0
    %1600 = vmatprep.subr.mxu0 0.0
    %1601 = vmatpush1.msra.mxu0 0.0
    %1602 = vmatprep.subr.mxu0 0.0
    %1603 = vmatpush1.msra.mxu0 0.0
    %1604 = vmatprep.subr.mxu0 0.0
    %1605 = vmatpush1.msra.mxu0 0.0
    %1606 = vmatprep.subr.mxu0 0.0
    %1607 = vmatpush1.msra.mxu0 0.0
    %1608 = vmatprep.subr.mxu0 0.0
    %1609 = vmatpush1.msra.mxu0 0.0
    %1610 = vmatprep.subr.mxu0 0.0
    %1611 = vmatpush1.msra.mxu0 0.0
    %1612 = vmatprep.subr.mxu0 0.0
    %1613 = vmatpush1.msra.mxu0 0.0
    %1614 = vmatprep.mubr.f32.mxu0 0.0
    %1615 = vmatmul.mubr.f32.gmra.mrb[0].mxu0 %v1545
    %v1616 = vpop.f32.mrb[0].mxu0
    %v1617 = vadd.f32 0.0, %v1616
    %v1618 = vpop.f32.mrb[0].mxu0
    %1619 = vmatprep.mubr.f32.mxu0 0.0
    %1620 = vmatmul.mubr.f32.gmra.mrb[0].mxu0 %v1548
    %v1621 = vpop.f32.mrb[0].mxu0
    %v1622 = vadd.f32 0.0, %v1621
    %v1623 = vpop.f32.mrb[0].mxu0
    %1624 = vdwg.mxu0
    %v1625 = vadd.f32 %v1516, %v1617
    %v1626 = vadd.f32 %v1517, %v1622
    %v1627 = vld [vmem:[#allocation3 + $0x148] sm:$0xff]
    %v1628 = vld [vmem:[#allocation3 + $0x150] sm:$0xff]
    %1630 = vrot.lane.b32.xlu0 %v885, 1
    %v1631 = vpop.permute.xlu0 %1630
    %v1633 = vmul.f32 %v911, %v1631
    %v1634 = vmul.f32 %v913, %v1631
    %v1635 = vmul.f32 %v915, %v1631
    %v1636 = vmul.f32 %v917, %v1631
    %1641 = vrot.lane.b32.xlu0 %v1633, 127
    %v1642 = vpop.permute.xlu0 %1641
    %1643 = vrot.lane.b32.xlu0 %v1634, 127
    %v1644 = vpop.permute.xlu0 %1643
    %1645 = vrot.lane.b32.xlu0 %v1635, 127
    %v1646 = vpop.permute.xlu0 %1645
    %1647 = vrot.lane.b32.xlu0 %v1636, 127
    %v1648 = vpop.permute.xlu0 %1647
    %v1654 = vsel %vm118, %v1627, 0
    %v1657 = vsel %vm118, %v1628, 0
    %1659 = vmatprep.subr.mxu0 0.0
    %1660 = vmatpush1.msra.mxu0 %v1642
    %1661 = vmatprep.subr.mxu0 0.0
    %1662 = vmatpush1.msra.mxu0 %v1644
    %1663 = vmatprep.subr.mxu0 0.0
    %1664 = vmatpush1.msra.mxu0 %v1646
    %1665 = vmatprep.subr.mxu0 0.0
    %1666 = vmatpush1.msra.mxu0 %v1648
    %1667 = vmatprep.subr.mxu0 0.0
    %1668 = vmatpush1.msra.mxu0 0.0
    %1669 = vmatprep.subr.mxu0 0.0
    %1670 = vmatpush1.msra.mxu0 0.0
    %1671 = vmatprep.subr.mxu0 0.0
    %1672 = vmatpush1.msra.mxu0 0.0
    %1673 = vmatprep.subr.mxu0 0.0
    %1674 = vmatpush1.msra.mxu0 0.0
    %1675 = vmatprep.subr.mxu0 0.0
    %1676 = vmatpush1.msra.mxu0 0.0
    %1677 = vmatprep.subr.mxu0 0.0
    %1678 = vmatpush1.msra.mxu0 0.0
    %1679 = vmatprep.subr.mxu0 0.0
    %1680 = vmatpush1.msra.mxu0 0.0
    %1681 = vmatprep.subr.mxu0 0.0
    %1682 = vmatpush1.msra.mxu0 0.0
    %1683 = vmatprep.subr.mxu0 0.0
    %1684 = vmatpush1.msra.mxu0 0.0
    %1685 = vmatprep.subr.mxu0 0.0
    %1686 = vmatpush1.msra.mxu0 0.0
    %1687 = vmatprep.subr.mxu0 0.0
    %1688 = vmatpush1.msra.mxu0 0.0
    %1689 = vmatprep.subr.mxu0 0.0
    %1690 = vmatpush1.msra.mxu0 0.0
    %1691 = vmatprep.subr.mxu0 0.0
    %1692 = vmatpush1.msra.mxu0 0.0
    %1693 = vmatprep.subr.mxu0 0.0
    %1694 = vmatpush1.msra.mxu0 0.0
    %1695 = vmatprep.subr.mxu0 0.0
    %1696 = vmatpush1.msra.mxu0 0.0
    %1697 = vmatprep.subr.mxu0 0.0
    %1698 = vmatpush1.msra.mxu0 0.0
    %1699 = vmatprep.subr.mxu0 0.0
    %1700 = vmatpush1.msra.mxu0 0.0
    %1701 = vmatprep.subr.mxu0 0.0
    %1702 = vmatpush1.msra.mxu0 0.0
    %1703 = vmatprep.subr.mxu0 0.0
    %1704 = vmatpush1.msra.mxu0 0.0
    %1705 = vmatprep.subr.mxu0 0.0
    %1706 = vmatpush1.msra.mxu0 0.0
    %1707 = vmatprep.subr.mxu0 0.0
    %1708 = vmatpush1.msra.mxu0 0.0
    %1709 = vmatprep.subr.mxu0 0.0
    %1710 = vmatpush1.msra.mxu0 0.0
    %1711 = vmatprep.subr.mxu0 0.0
    %1712 = vmatpush1.msra.mxu0 0.0
    %1713 = vmatprep.subr.mxu0 0.0
    %1714 = vmatpush1.msra.mxu0 0.0
    %1715 = vmatprep.subr.mxu0 0.0
    %1716 = vmatpush1.msra.mxu0 0.0
    %1717 = vmatprep.subr.mxu0 0.0
    %1718 = vmatpush1.msra.mxu0 0.0
    %1719 = vmatprep.subr.mxu0 0.0
    %1720 = vmatpush1.msra.mxu0 0.0
    %1721 = vmatprep.subr.mxu0 0.0
    %1722 = vmatpush1.msra.mxu0 0.0
    %1723 = vmatprep.mubr.f32.mxu0 0.0
    %1724 = vmatmul.mubr.f32.gmra.mrb[0].mxu0 %v1654
    %v1725 = vpop.f32.mrb[0].mxu0
    %v1726 = vadd.f32 0.0, %v1725
    %v1727 = vpop.f32.mrb[0].mxu0
    %1728 = vmatprep.mubr.f32.mxu0 0.0
    %1729 = vmatmul.mubr.f32.gmra.mrb[0].mxu0 %v1657
    %v1730 = vpop.f32.mrb[0].mxu0
    %v1731 = vadd.f32 0.0, %v1730
    %v1732 = vpop.f32.mrb[0].mxu0
    %1733 = vdwg.mxu0
    %v1734 = vadd.f32 %v1625, %v1726
    %v1735 = vadd.f32 %v1626, %v1731
    %v1736 = vld [vmem:[#allocation3 + $0x158] sm:$0xff]
    %v1737 = vld [vmem:[#allocation3 + $0x160] sm:$0xff]
    %1739 = vrot.lane.b32.xlu0 %v887, 2
    %v1740 = vpop.permute.xlu0 %1739
    %v1742 = vmul.f32 %v911, %v1740
    %v1743 = vmul.f32 %v913, %v1740
    %v1744 = vmul.f32 %v915, %v1740
    %v1745 = vmul.f32 %v917, %v1740
    %1750 = vrot.lane.b32.xlu0 %v1742, 126
    %v1751 = vpop.permute.xlu0 %1750
    %1752 = vrot.lane.b32.xlu0 %v1743, 126
    %v1753 = vpop.permute.xlu0 %1752
    %1754 = vrot.lane.b32.xlu0 %v1744, 126
    %v1755 = vpop.permute.xlu0 %1754
    %1756 = vrot.lane.b32.xlu0 %v1745, 126
    %v1757 = vpop.permute.xlu0 %1756
    %v1763 = vsel %vm118, %v1736, 0
    %v1766 = vsel %vm118, %v1737, 0
    %1768 = vmatprep.subr.mxu0 0.0
    %1769 = vmatpush1.msra.mxu0 %v1751
    %1770 = vmatprep.subr.mxu0 0.0
    %1771 = vmatpush1.msra.mxu0 %v1753
    %1772 = vmatprep.subr.mxu0 0.0
    %1773 = vmatpush1.msra.mxu0 %v1755
    %1774 = vmatprep.subr.mxu0 0.0
    %1775 = vmatpush1.msra.mxu0 %v1757
    %1776 = vmatprep.subr.mxu0 0.0
    %1777 = vmatpush1.msra.mxu0 0.0
    %1778 = vmatprep.subr.mxu0 0.0
    %1779 = vmatpush1.msra.mxu0 0.0
    %1780 = vmatprep.subr.mxu0 0.0
    %1781 = vmatpush1.msra.mxu0 0.0
    %1782 = vmatprep.subr.mxu0 0.0
    %1783 = vmatpush1.msra.mxu0 0.0
    %1784 = vmatprep.subr.mxu0 0.0
    %1785 = vmatpush1.msra.mxu0 0.0
    %1786 = vmatprep.subr.mxu0 0.0
    %1787 = vmatpush1.msra.mxu0 0.0
    %1788 = vmatprep.subr.mxu0 0.0
    %1789 = vmatpush1.msra.mxu0 0.0
    %1790 = vmatprep.subr.mxu0 0.0
    %1791 = vmatpush1.msra.mxu0 0.0
    %1792 = vmatprep.subr.mxu0 0.0
    %1793 = vmatpush1.msra.mxu0 0.0
    %1794 = vmatprep.subr.mxu0 0.0
    %1795 = vmatpush1.msra.mxu0 0.0
    %1796 = vmatprep.subr.mxu0 0.0
    %1797 = vmatpush1.msra.mxu0 0.0
    %1798 = vmatprep.subr.mxu0 0.0
    %1799 = vmatpush1.msra.mxu0 0.0
    %1800 = vmatprep.subr.mxu0 0.0
    %1801 = vmatpush1.msra.mxu0 0.0
    %1802 = vmatprep.subr.mxu0 0.0
    %1803 = vmatpush1.msra.mxu0 0.0
    %1804 = vmatprep.subr.mxu0 0.0
    %1805 = vmatpush1.msra.mxu0 0.0
    %1806 = vmatprep.subr.mxu0 0.0
    %1807 = vmatpush1.msra.mxu0 0.0
    %1808 = vmatprep.subr.mxu0 0.0
    %1809 = vmatpush1.msra.mxu0 0.0
    %1810 = vmatprep.subr.mxu0 0.0
    %1811 = vmatpush1.msra.mxu0 0.0
    %1812 = vmatprep.subr.mxu0 0.0
    %1813 = vmatpush1.msra.mxu0 0.0
    %1814 = vmatprep.subr.mxu0 0.0
    %1815 = vmatpush1.msra.mxu0 0.0
    %1816 = vmatprep.subr.mxu0 0.0
    %1817 = vmatpush1.msra.mxu0 0.0
    %1818 = vmatprep.subr.mxu0 0.0
    %1819 = vmatpush1.msra.mxu0 0.0
    %1820 = vmatprep.subr.mxu0 0.0
    %1821 = vmatpush1.msra.mxu0 0.0
    %1822 = vmatprep.subr.mxu0 0.0
    %1823 = vmatpush1.msra.mxu0 0.0
    %1824 = vmatprep.subr.mxu0 0.0
    %1825 = vmatpush1.msra.mxu0 0.0
    %1826 = vmatprep.subr.mxu0 0.0
    %1827 = vmatpush1.msra.mxu0 0.0
    %1828 = vmatprep.subr.mxu0 0.0
    %1829 = vmatpush1.msra.mxu0 0.0
    %1830 = vmatprep.subr.mxu0 0.0
    %1831 = vmatpush1.msra.mxu0 0.0
    %1832 = vmatprep.mubr.f32.mxu0 0.0
    %1833 = vmatmul.mubr.f32.gmra.mrb[0].mxu0 %v1763
    %v1834 = vpop.f32.mrb[0].mxu0
    %v1835 = vadd.f32 0.0, %v1834
    %v1836 = vpop.f32.mrb[0].mxu0
    %1837 = vmatprep.mubr.f32.mxu0 0.0
    %1838 = vmatmul.mubr.f32.gmra.mrb[0].mxu0 %v1766
    %v1839 = vpop.f32.mrb[0].mxu0
    %v1840 = vadd.f32 0.0, %v1839
    %v1841 = vpop.f32.mrb[0].mxu0
    %1842 = vdwg.mxu0
    %v1843 = vadd.f32 %v1734, %v1835
    %v1844 = vadd.f32 %v1735, %v1840
    %v1845 = vld [vmem:[#allocation3 + $0x168] sm:$0xff]
    %v1846 = vld [vmem:[#allocation3 + $0x170] sm:$0xff]
    %1848 = vrot.lane.b32.xlu0 %v890, 3
    %v1849 = vpop.permute.xlu0 %1848
    %v1851 = vmul.f32 %v911, %v1849
    %v1852 = vmul.f32 %v913, %v1849
    %v1853 = vmul.f32 %v915, %v1849
    %v1854 = vmul.f32 %v917, %v1849
    %1859 = vrot.lane.b32.xlu0 %v1851, 125
    %v1860 = vpop.permute.xlu0 %1859
    %1861 = vrot.lane.b32.xlu0 %v1852, 125
    %v1862 = vpop.permute.xlu0 %1861
    %1863 = vrot.lane.b32.xlu0 %v1853, 125
    %v1864 = vpop.permute.xlu0 %1863
    %1865 = vrot.lane.b32.xlu0 %v1854, 125
    %v1866 = vpop.permute.xlu0 %1865
    %v1872 = vsel %vm118, %v1845, 0
    %v1875 = vsel %vm118, %v1846, 0
    %1877 = vmatprep.subr.mxu0 0.0
    %1878 = vmatpush1.msra.mxu0 %v1860
    %1879 = vmatprep.subr.mxu0 0.0
    %1880 = vmatpush1.msra.mxu0 %v1862
    %1881 = vmatprep.subr.mxu0 0.0
    %1882 = vmatpush1.msra.mxu0 %v1864
    %1883 = vmatprep.subr.mxu0 0.0
    %1884 = vmatpush1.msra.mxu0 %v1866
    %1885 = vmatprep.subr.mxu0 0.0
    %1886 = vmatpush1.msra.mxu0 0.0
    %1887 = vmatprep.subr.mxu0 0.0
    %1888 = vmatpush1.msra.mxu0 0.0
    %1889 = vmatprep.subr.mxu0 0.0
    %1890 = vmatpush1.msra.mxu0 0.0
    %1891 = vmatprep.subr.mxu0 0.0
    %1892 = vmatpush1.msra.mxu0 0.0
    %1893 = vmatprep.subr.mxu0 0.0
    %1894 = vmatpush1.msra.mxu0 0.0
    %1895 = vmatprep.subr.mxu0 0.0
    %1896 = vmatpush1.msra.mxu0 0.0
    %1897 = vmatprep.subr.mxu0 0.0
    %1898 = vmatpush1.msra.mxu0 0.0
    %1899 = vmatprep.subr.mxu0 0.0
    %1900 = vmatpush1.msra.mxu0 0.0
    %1901 = vmatprep.subr.mxu0 0.0
    %1902 = vmatpush1.msra.mxu0 0.0
    %1903 = vmatprep.subr.mxu0 0.0
    %1904 = vmatpush1.msra.mxu0 0.0
    %1905 = vmatprep.subr.mxu0 0.0
    %1906 = vmatpush1.msra.mxu0 0.0
    %1907 = vmatprep.subr.mxu0 0.0
    %1908 = vmatpush1.msra.mxu0 0.0
    %1909 = vmatprep.subr.mxu0 0.0
    %1910 = vmatpush1.msra.mxu0 0.0
    %1911 = vmatprep.subr.mxu0 0.0
    %1912 = vmatpush1.msra.mxu0 0.0
    %1913 = vmatprep.subr.mxu0 0.0
    %1914 = vmatpush1.msra.mxu0 0.0
    %1915 = vmatprep.subr.mxu0 0.0
    %1916 = vmatpush1.msra.mxu0 0.0
    %1917 = vmatprep.subr.mxu0 0.0
    %1918 = vmatpush1.msra.mxu0 0.0
    %1919 = vmatprep.subr.mxu0 0.0
    %1920 = vmatpush1.msra.mxu0 0.0
    %1921 = vmatprep.subr.mxu0 0.0
    %1922 = vmatpush1.msra.mxu0 0.0
    %1923 = vmatprep.subr.mxu0 0.0
    %1924 = vmatpush1.msra.mxu0 0.0
    %1925 = vmatprep.subr.mxu0 0.0
    %1926 = vmatpush1.msra.mxu0 0.0
    %1927 = vmatprep.subr.mxu0 0.0
    %1928 = vmatpush1.msra.mxu0 0.0
    %1929 = vmatprep.subr.mxu0 0.0
    %1930 = vmatpush1.msra.mxu0 0.0
    %1931 = vmatprep.subr.mxu0 0.0
    %1932 = vmatpush1.msra.mxu0 0.0
    %1933 = vmatprep.subr.mxu0 0.0
    %1934 = vmatpush1.msra.mxu0 0.0
    %1935 = vmatprep.subr.mxu0 0.0
    %1936 = vmatpush1.msra.mxu0 0.0
    %1937 = vmatprep.subr.mxu0 0.0
    %1938 = vmatpush1.msra.mxu0 0.0
    %1939 = vmatprep.subr.mxu0 0.0
    %1940 = vmatpush1.msra.mxu0 0.0
    %1941 = vmatprep.mubr.f32.mxu0 0.0
    %1942 = vmatmul.mubr.f32.gmra.mrb[0].mxu0 %v1872
    %v1943 = vpop.f32.mrb[0].mxu0
    %v1944 = vadd.f32 0.0, %v1943
    %v1945 = vpop.f32.mrb[0].mxu0
    %1946 = vmatprep.mubr.f32.mxu0 0.0
    %1947 = vmatmul.mubr.f32.gmra.mrb[0].mxu0 %v1875
    %v1948 = vpop.f32.mrb[0].mxu0
    %v1949 = vadd.f32 0.0, %v1948
    %v1950 = vpop.f32.mrb[0].mxu0
    %1951 = vdwg.mxu0
    %v1952 = vadd.f32 %v1843, %v1944
    %v1953 = vadd.f32 %v1844, %v1949
    %v1954 = vmax.f32 %v1952, 0.0
    %v1955 = vmax.f32 %v1953, 0.0
    %1956 = vst.msk [vmem:[#allocation2 + $0x8] sm:$0xff] %vm891, %v1954
    %1957 = vst.msk [vmem:[#allocation2 + $0x38] sm:$0xff] %vm891, %v1955
    %v1958 = vld [vmem:[#allocation3 + $0x250] sm:$0x7]
    %1960 = vset.pattern.permute.xlu0 16
    %1961 = vperm.xlu0 %1960, %v1958
    %v1962 = vpop.permute.xlu0 %1961
    %v1964 = vadd.f32 %v1962, 0.0
    %v1965 = vld [vmem:[#allocation2] sm:$0xff]
    %v1966 = vld [vmem:[#allocation2 + $0x8] sm:$0xff]
    %v1967 = vld [vmem:[#allocation2 + $0x30] sm:$0xff]
    %v1968 = vld [vmem:[#allocation2 + $0x38] sm:$0xff]
    %v1969 = vmul.f32 %v1965, %v920
    %v1970 = vmul.f32 %v1966, %v920
    %v1971 = vmul.f32 %v1967, %v920
    %v1972 = vmul.f32 %v1968, %v920
    %1977 = vrot.lane.b32.xlu0 %v1969, 3
    %v1978 = vpop.permute.xlu0 %1977
    %1979 = vrot.lane.b32.xlu0 %v1970, 3
    %v1980 = vpop.permute.xlu0 %1979
    %1981 = vrot.lane.b32.xlu0 %v1971, 3
    %v1982 = vpop.permute.xlu0 %1981
    %1983 = vrot.lane.b32.xlu0 %v1972, 3
    %v1984 = vpop.permute.xlu0 %1983
    %v1985 = vsel %vm954, %v1978, %v1980
    %v1986 = vsel %vm954, %v1982, %v1984
    %v1989 = vsel %vm607, %v1958, 0
    %1991 = vmatprep.subr.mxu0 0.0
    %1992 = vmatpush1.msra.mxu0 %v1985
    %1993 = vmatprep.subr.mxu0 0.0
    %1994 = vmatpush1.msra.mxu0 %v1986
    %1995 = vmatprep.subr.mxu0 0.0
    %1996 = vmatpush1.msra.mxu0 0.0
    %1997 = vmatprep.subr.mxu0 0.0
    %1998 = vmatpush1.msra.mxu0 0.0
    %1999 = vmatprep.subr.mxu0 0.0
    %2000 = vmatpush1.msra.mxu0 0.0
    %2001 = vmatprep.subr.mxu0 0.0
    %2002 = vmatpush1.msra.mxu0 0.0
    %2003 = vmatprep.subr.mxu0 0.0
    %2004 = vmatpush1.msra.mxu0 0.0
    %2005 = vmatprep.subr.mxu0 0.0
    %2006 = vmatpush1.msra.mxu0 0.0
    %2007 = vmatprep.subr.mxu0 0.0
    %2008 = vmatpush1.msra.mxu0 0.0
    %2009 = vmatprep.subr.mxu0 0.0
    %2010 = vmatpush1.msra.mxu0 0.0
    %2011 = vmatprep.subr.mxu0 0.0
    %2012 = vmatpush1.msra.mxu0 0.0
    %2013 = vmatprep.subr.mxu0 0.0
    %2014 = vmatpush1.msra.mxu0 0.0
    %2015 = vmatprep.subr.mxu0 0.0
    %2016 = vmatpush1.msra.mxu0 0.0
    %2017 = vmatprep.subr.mxu0 0.0
    %2018 = vmatpush1.msra.mxu0 0.0
    %2019 = vmatprep.subr.mxu0 0.0
    %2020 = vmatpush1.msra.mxu0 0.0
    %2021 = vmatprep.subr.mxu0 0.0
    %2022 = vmatpush1.msra.mxu0 0.0
    %2023 = vmatprep.subr.mxu0 0.0
    %2024 = vmatpush1.msra.mxu0 0.0
    %2025 = vmatprep.subr.mxu0 0.0
    %2026 = vmatpush1.msra.mxu0 0.0
    %2027 = vmatprep.subr.mxu0 0.0
    %2028 = vmatpush1.msra.mxu0 0.0
    %2029 = vmatprep.subr.mxu0 0.0
    %2030 = vmatpush1.msra.mxu0 0.0
    %2031 = vmatprep.subr.mxu0 0.0
    %2032 = vmatpush1.msra.mxu0 0.0
    %2033 = vmatprep.subr.mxu0 0.0
    %2034 = vmatpush1.msra.mxu0 0.0
    %2035 = vmatprep.subr.mxu0 0.0
    %2036 = vmatpush1.msra.mxu0 0.0
    %2037 = vmatprep.subr.mxu0 0.0
    %2038 = vmatpush1.msra.mxu0 0.0
    %2039 = vmatprep.subr.mxu0 0.0
    %2040 = vmatpush1.msra.mxu0 0.0
    %2041 = vmatprep.subr.mxu0 0.0
    %2042 = vmatpush1.msra.mxu0 0.0
    %2043 = vmatprep.subr.mxu0 0.0
    %2044 = vmatpush1.msra.mxu0 0.0
    %2045 = vmatprep.subr.mxu0 0.0
    %2046 = vmatpush1.msra.mxu0 0.0
    %2047 = vmatprep.subr.mxu0 0.0
    %2048 = vmatpush1.msra.mxu0 0.0
    %2049 = vmatprep.subr.mxu0 0.0
    %2050 = vmatpush1.msra.mxu0 0.0
    %2051 = vmatprep.subr.mxu0 0.0
    %2052 = vmatpush1.msra.mxu0 0.0
    %2053 = vmatprep.subr.mxu0 0.0
    %2054 = vmatpush1.msra.mxu0 0.0
    %2055 = vmatprep.mubr.f32.mxu0 0.0
    %2056 = vmatmul.mubr.f32.gmra.mrb[0].mxu0 %v1989
    %v2057 = vpop.f32.mrb[0].mxu0
    %v2058 = vadd.f32 0.0, %v2057
    %v2059 = vpop.f32.mrb[0].mxu0
    %2060 = vdwg.mxu0
    %v2061 = vadd.f32 %v1964, %v2058
    %v2062 = vld [vmem:[#allocation3 + $0x258] sm:$0x7]
    %v2063 = vmul.f32 %v1965, %v1048
    %v2064 = vmul.f32 %v1966, %v1048
    %v2065 = vmul.f32 %v1967, %v1048
    %v2066 = vmul.f32 %v1968, %v1048
    %2071 = vrot.lane.b32.xlu0 %v2063, 2
    %v2072 = vpop.permute.xlu0 %2071
    %2073 = vrot.lane.b32.xlu0 %v2064, 2
    %v2074 = vpop.permute.xlu0 %2073
    %2075 = vrot.lane.b32.xlu0 %v2065, 2
    %v2076 = vpop.permute.xlu0 %2075
    %2077 = vrot.lane.b32.xlu0 %v2066, 2
    %v2078 = vpop.permute.xlu0 %2077
    %v2079 = vsel %vm1082, %v2072, %v2074
    %v2080 = vsel %vm1082, %v2076, %v2078
    %v2084 = vsel %vm607, %v2062, 0
    %2086 = vmatprep.subr.mxu0 0.0
    %2087 = vmatpush1.msra.mxu0 %v2079
    %2088 = vmatprep.subr.mxu0 0.0
    %2089 = vmatpush1.msra.mxu0 %v2080
    %2090 = vmatprep.subr.mxu0 0.0
    %2091 = vmatpush1.msra.mxu0 0.0
    %2092 = vmatprep.subr.mxu0 0.0
    %2093 = vmatpush1.msra.mxu0 0.0
    %2094 = vmatprep.subr.mxu0 0.0
    %2095 = vmatpush1.msra.mxu0 0.0
    %2096 = vmatprep.subr.mxu0 0.0
    %2097 = vmatpush1.msra.mxu0 0.0
    %2098 = vmatprep.subr.mxu0 0.0
    %2099 = vmatpush1.msra.mxu0 0.0
    %2100 = vmatprep.subr.mxu0 0.0
    %2101 = vmatpush1.msra.mxu0 0.0
    %2102 = vmatprep.subr.mxu0 0.0
    %2103 = vmatpush1.msra.mxu0 0.0
    %2104 = vmatprep.subr.mxu0 0.0
    %2105 = vmatpush1.msra.mxu0 0.0
    %2106 = vmatprep.subr.mxu0 0.0
    %2107 = vmatpush1.msra.mxu0 0.0
    %2108 = vmatprep.subr.mxu0 0.0
    %2109 = vmatpush1.msra.mxu0 0.0
    %2110 = vmatprep.subr.mxu0 0.0
    %2111 = vmatpush1.msra.mxu0 0.0
    %2112 = vmatprep.subr.mxu0 0.0
    %2113 = vmatpush1.msra.mxu0 0.0
    %2114 = vmatprep.subr.mxu0 0.0
    %2115 = vmatpush1.msra.mxu0 0.0
    %2116 = vmatprep.subr.mxu0 0.0
    %2117 = vmatpush1.msra.mxu0 0.0
    %2118 = vmatprep.subr.mxu0 0.0
    %2119 = vmatpush1.msra.mxu0 0.0
    %2120 = vmatprep.subr.mxu0 0.0
    %2121 = vmatpush1.msra.mxu0 0.0
    %2122 = vmatprep.subr.mxu0 0.0
    %2123 = vmatpush1.msra.mxu0 0.0
    %2124 = vmatprep.subr.mxu0 0.0
    %2125 = vmatpush1.msra.mxu0 0.0
    %2126 = vmatprep.subr.mxu0 0.0
    %2127 = vmatpush1.msra.mxu0 0.0
    %2128 = vmatprep.subr.mxu0 0.0
    %2129 = vmatpush1.msra.mxu0 0.0
    %2130 = vmatprep.subr.mxu0 0.0
    %2131 = vmatpush1.msra.mxu0 0.0
    %2132 = vmatprep.subr.mxu0 0.0
    %2133 = vmatpush1.msra.mxu0 0.0
    %2134 = vmatprep.subr.mxu0 0.0
    %2135 = vmatpush1.msra.mxu0 0.0
    %2136 = vmatprep.subr.mxu0 0.0
    %2137 = vmatpush1.msra.mxu0 0.0
    %2138 = vmatprep.subr.mxu0 0.0
    %2139 = vmatpush1.msra.mxu0 0.0
    %2140 = vmatprep.subr.mxu0 0.0
    %2141 = vmatpush1.msra.mxu0 0.0
    %2142 = vmatprep.subr.mxu0 0.0
    %2143 = vmatpush1.msra.mxu0 0.0
    %2144 = vmatprep.subr.mxu0 0.0
    %2145 = vmatpush1.msra.mxu0 0.0
    %2146 = vmatprep.subr.mxu0 0.0
    %2147 = vmatpush1.msra.mxu0 0.0
    %2148 = vmatprep.subr.mxu0 0.0
    %2149 = vmatpush1.msra.mxu0 0.0
    %2150 = vmatprep.mubr.f32.mxu0 0.0
    %2151 = vmatmul.mubr.f32.gmra.mrb[0].mxu0 %v2084
    %v2152 = vpop.f32.mrb[0].mxu0
    %v2153 = vadd.f32 0.0, %v2152
    %v2154 = vpop.f32.mrb[0].mxu0
    %2155 = vdwg.mxu0
    %v2156 = vadd.f32 %v2061, %v2153
    %v2157 = vld [vmem:[#allocation3 + $0x260] sm:$0x7]
    %v2158 = vmul.f32 %v1965, %v1178
    %v2159 = vmul.f32 %v1966, %v1178
    %v2160 = vmul.f32 %v1967, %v1178
    %v2161 = vmul.f32 %v1968, %v1178
    %2166 = vrot.lane.b32.xlu0 %v2158, 1
    %v2167 = vpop.permute.xlu0 %2166
    %2168 = vrot.lane.b32.xlu0 %v2159, 1
    %v2169 = vpop.permute.xlu0 %2168
    %2170 = vrot.lane.b32.xlu0 %v2160, 1
    %v2171 = vpop.permute.xlu0 %2170
    %2172 = vrot.lane.b32.xlu0 %v2161, 1
    %v2173 = vpop.permute.xlu0 %2172
    %v2174 = vsel %vm1212, %v2167, %v2169
    %v2175 = vsel %vm1212, %v2171, %v2173
    %v2179 = vsel %vm607, %v2157, 0
    %2181 = vmatprep.subr.mxu0 0.0
    %2182 = vmatpush1.msra.mxu0 %v2174
    %2183 = vmatprep.subr.mxu0 0.0
    %2184 = vmatpush1.msra.mxu0 %v2175
    %2185 = vmatprep.subr.mxu0 0.0
    %2186 = vmatpush1.msra.mxu0 0.0
    %2187 = vmatprep.subr.mxu0 0.0
    %2188 = vmatpush1.msra.mxu0 0.0
    %2189 = vmatprep.subr.mxu0 0.0
    %2190 = vmatpush1.msra.mxu0 0.0
    %2191 = vmatprep.subr.mxu0 0.0
    %2192 = vmatpush1.msra.mxu0 0.0
    %2193 = vmatprep.subr.mxu0 0.0
    %2194 = vmatpush1.msra.mxu0 0.0
    %2195 = vmatprep.subr.mxu0 0.0
    %2196 = vmatpush1.msra.mxu0 0.0
    %2197 = vmatprep.subr.mxu0 0.0
    %2198 = vmatpush1.msra.mxu0 0.0
    %2199 = vmatprep.subr.mxu0 0.0
    %2200 = vmatpush1.msra.mxu0 0.0
    %2201 = vmatprep.subr.mxu0 0.0
    %2202 = vmatpush1.msra.mxu0 0.0
    %2203 = vmatprep.subr.mxu0 0.0
    %2204 = vmatpush1.msra.mxu0 0.0
    %2205 = vmatprep.subr.mxu0 0.0
    %2206 = vmatpush1.msra.mxu0 0.0
    %2207 = vmatprep.subr.mxu0 0.0
    %2208 = vmatpush1.msra.mxu0 0.0
    %2209 = vmatprep.subr.mxu0 0.0
    %2210 = vmatpush1.msra.mxu0 0.0
    %2211 = vmatprep.subr.mxu0 0.0
    %2212 = vmatpush1.msra.mxu0 0.0
    %2213 = vmatprep.subr.mxu0 0.0
    %2214 = vmatpush1.msra.mxu0 0.0
    %2215 = vmatprep.subr.mxu0 0.0
    %2216 = vmatpush1.msra.mxu0 0.0
    %2217 = vmatprep.subr.mxu0 0.0
    %2218 = vmatpush1.msra.mxu0 0.0
    %2219 = vmatprep.subr.mxu0 0.0
    %2220 = vmatpush1.msra.mxu0 0.0
    %2221 = vmatprep.subr.mxu0 0.0
    %2222 = vmatpush1.msra.mxu0 0.0
    %2223 = vmatprep.subr.mxu0 0.0
    %2224 = vmatpush1.msra.mxu0 0.0
    %2225 = vmatprep.subr.mxu0 0.0
    %2226 = vmatpush1.msra.mxu0 0.0
    %2227 = vmatprep.subr.mxu0 0.0
    %2228 = vmatpush1.msra.mxu0 0.0
    %2229 = vmatprep.subr.mxu0 0.0
    %2230 = vmatpush1.msra.mxu0 0.0
    %2231 = vmatprep.subr.mxu0 0.0
    %2232 = vmatpush1.msra.mxu0 0.0
    %2233 = vmatprep.subr.mxu0 0.0
    %2234 = vmatpush1.msra.mxu0 0.0
    %2235 = vmatprep.subr.mxu0 0.0
    %2236 = vmatpush1.msra.mxu0 0.0
    %2237 = vmatprep.subr.mxu0 0.0
    %2238 = vmatpush1.msra.mxu0 0.0
    %2239 = vmatprep.subr.mxu0 0.0
    %2240 = vmatpush1.msra.mxu0 0.0
    %2241 = vmatprep.subr.mxu0 0.0
    %2242 = vmatpush1.msra.mxu0 0.0
    %2243 = vmatprep.subr.mxu0 0.0
    %2244 = vmatpush1.msra.mxu0 0.0
    %2245 = vmatprep.mubr.f32.mxu0 0.0
    %2246 = vmatmul.mubr.f32.gmra.mrb[0].mxu0 %v2179
    %v2247 = vpop.f32.mrb[0].mxu0
    %v2248 = vadd.f32 0.0, %v2247
    %v2249 = vpop.f32.mrb[0].mxu0
    %2250 = vdwg.mxu0
    %v2251 = vadd.f32 %v2156, %v2248
    %v2252 = vld [vmem:[#allocation3 + $0x268] sm:$0x7]
    %v2253 = vmul.f32 %v1965, %v1308
    %v2254 = vmul.f32 %v1966, %v1308
    %v2255 = vmul.f32 %v1967, %v1308
    %v2256 = vmul.f32 %v1968, %v1308
    %2261 = vrot.lane.b32.xlu0 %v2253, 1
    %v2262 = vpop.permute.xlu0 %2261
    %2263 = vrot.lane.b32.xlu0 %v2254, 1
    %v2264 = vpop.permute.xlu0 %2263
    %2265 = vrot.lane.b32.xlu0 %v2255, 1
    %v2266 = vpop.permute.xlu0 %2265
    %2267 = vrot.lane.b32.xlu0 %v2256, 1
    %v2268 = vpop.permute.xlu0 %2267
    %v2269 = vsel %vm1212, %v2262, %v2264
    %v2270 = vsel %vm1212, %v2266, %v2268
    %v2274 = vsel %vm607, %v2252, 0
    %2276 = vmatprep.subr.mxu0 0.0
    %2277 = vmatpush1.msra.mxu0 %v2269
    %2278 = vmatprep.subr.mxu0 0.0
    %2279 = vmatpush1.msra.mxu0 %v2270
    %2280 = vmatprep.subr.mxu0 0.0
    %2281 = vmatpush1.msra.mxu0 0.0
    %2282 = vmatprep.subr.mxu0 0.0
    %2283 = vmatpush1.msra.mxu0 0.0
    %2284 = vmatprep.subr.mxu0 0.0
    %2285 = vmatpush1.msra.mxu0 0.0
    %2286 = vmatprep.subr.mxu0 0.0
    %2287 = vmatpush1.msra.mxu0 0.0
    %2288 = vmatprep.subr.mxu0 0.0
    %2289 = vmatpush1.msra.mxu0 0.0
    %2290 = vmatprep.subr.mxu0 0.0
    %2291 = vmatpush1.msra.mxu0 0.0
    %2292 = vmatprep.subr.mxu0 0.0
    %2293 = vmatpush1.msra.mxu0 0.0
    %2294 = vmatprep.subr.mxu0 0.0
    %2295 = vmatpush1.msra.mxu0 0.0
    %2296 = vmatprep.subr.mxu0 0.0
    %2297 = vmatpush1.msra.mxu0 0.0
    %2298 = vmatprep.subr.mxu0 0.0
    %2299 = vmatpush1.msra.mxu0 0.0
    %2300 = vmatprep.subr.mxu0 0.0
    %2301 = vmatpush1.msra.mxu0 0.0
    %2302 = vmatprep.subr.mxu0 0.0
    %2303 = vmatpush1.msra.mxu0 0.0
    %2304 = vmatprep.subr.mxu0 0.0
    %2305 = vmatpush1.msra.mxu0 0.0
    %2306 = vmatprep.subr.mxu0 0.0
    %2307 = vmatpush1.msra.mxu0 0.0
    %2308 = vmatprep.subr.mxu0 0.0
    %2309 = vmatpush1.msra.mxu0 0.0
    %2310 = vmatprep.subr.mxu0 0.0
    %2311 = vmatpush1.msra.mxu0 0.0
    %2312 = vmatprep.subr.mxu0 0.0
    %2313 = vmatpush1.msra.mxu0 0.0
    %2314 = vmatprep.subr.mxu0 0.0
    %2315 = vmatpush1.msra.mxu0 0.0
    %2316 = vmatprep.subr.mxu0 0.0
    %2317 = vmatpush1.msra.mxu0 0.0
    %2318 = vmatprep.subr.mxu0 0.0
    %2319 = vmatpush1.msra.mxu0 0.0
    %2320 = vmatprep.subr.mxu0 0.0
    %2321 = vmatpush1.msra.mxu0 0.0
    %2322 = vmatprep.subr.mxu0 0.0
    %2323 = vmatpush1.msra.mxu0 0.0
    %2324 = vmatprep.subr.mxu0 0.0
    %2325 = vmatpush1.msra.mxu0 0.0
    %2326 = vmatprep.subr.mxu0 0.0
    %2327 = vmatpush1.msra.mxu0 0.0
    %2328 = vmatprep.subr.mxu0 0.0
    %2329 = vmatpush1.msra.mxu0 0.0
    %2330 = vmatprep.subr.mxu0 0.0
    %2331 = vmatpush1.msra.mxu0 0.0
    %2332 = vmatprep.subr.mxu0 0.0
    %2333 = vmatpush1.msra.mxu0 0.0
    %2334 = vmatprep.subr.mxu0 0.0
    %2335 = vmatpush1.msra.mxu0 0.0
    %2336 = vmatprep.subr.mxu0 0.0
    %2337 = vmatpush1.msra.mxu0 0.0
    %2338 = vmatprep.subr.mxu0 0.0
    %2339 = vmatpush1.msra.mxu0 0.0
    %2340 = vmatprep.mubr.f32.mxu0 0.0
    %2341 = vmatmul.mubr.f32.gmra.mrb[0].mxu0 %v2274
    %v2342 = vpop.f32.mrb[0].mxu0
    %v2343 = vadd.f32 0.0, %v2342
    %v2344 = vpop.f32.mrb[0].mxu0
    %2345 = vdwg.mxu0
    %v2346 = vadd.f32 %v2251, %v2343
    %v2347 = vld [vmem:[#allocation3 + $0x270] sm:$0x7]
    %v2349 = vsel %vm607, %v2347, 0
    %2351 = vmatprep.subr.mxu0 0.0
    %2352 = vmatpush1.msra.mxu0 %v1966
    %2353 = vmatprep.subr.mxu0 0.0
    %2354 = vmatpush1.msra.mxu0 %v1968
    %2355 = vmatprep.subr.mxu0 0.0
    %2356 = vmatpush1.msra.mxu0 0.0
    %2357 = vmatprep.subr.mxu0 0.0
    %2358 = vmatpush1.msra.mxu0 0.0
    %2359 = vmatprep.subr.mxu0 0.0
    %2360 = vmatpush1.msra.mxu0 0.0
    %2361 = vmatprep.subr.mxu0 0.0
    %2362 = vmatpush1.msra.mxu0 0.0
    %2363 = vmatprep.subr.mxu0 0.0
    %2364 = vmatpush1.msra.mxu0 0.0
    %2365 = vmatprep.subr.mxu0 0.0
    %2366 = vmatpush1.msra.mxu0 0.0
    %2367 = vmatprep.subr.mxu0 0.0
    %2368 = vmatpush1.msra.mxu0 0.0
    %2369 = vmatprep.subr.mxu0 0.0
    %2370 = vmatpush1.msra.mxu0 0.0
    %2371 = vmatprep.subr.mxu0 0.0
    %2372 = vmatpush1.msra.mxu0 0.0
    %2373 = vmatprep.subr.mxu0 0.0
    %2374 = vmatpush1.msra.mxu0 0.0
    %2375 = vmatprep.subr.mxu0 0.0
    %2376 = vmatpush1.msra.mxu0 0.0
    %2377 = vmatprep.subr.mxu0 0.0
    %2378 = vmatpush1.msra.mxu0 0.0
    %2379 = vmatprep.subr.mxu0 0.0
    %2380 = vmatpush1.msra.mxu0 0.0
    %2381 = vmatprep.subr.mxu0 0.0
    %2382 = vmatpush1.msra.mxu0 0.0
    %2383 = vmatprep.subr.mxu0 0.0
    %2384 = vmatpush1.msra.mxu0 0.0
    %2385 = vmatprep.subr.mxu0 0.0
    %2386 = vmatpush1.msra.mxu0 0.0
    %2387 = vmatprep.subr.mxu0 0.0
    %2388 = vmatpush1.msra.mxu0 0.0
    %2389 = vmatprep.subr.mxu0 0.0
    %2390 = vmatpush1.msra.mxu0 0.0
    %2391 = vmatprep.subr.mxu0 0.0
    %2392 = vmatpush1.msra.mxu0 0.0
    %2393 = vmatprep.subr.mxu0 0.0
    %2394 = vmatpush1.msra.mxu0 0.0
    %2395 = vmatprep.subr.mxu0 0.0
    %2396 = vmatpush1.msra.mxu0 0.0
    %2397 = vmatprep.subr.mxu0 0.0
    %2398 = vmatpush1.msra.mxu0 0.0
    %2399 = vmatprep.subr.mxu0 0.0
    %2400 = vmatpush1.msra.mxu0 0.0
    %2401 = vmatprep.subr.mxu0 0.0
    %2402 = vmatpush1.msra.mxu0 0.0
    %2403 = vmatprep.subr.mxu0 0.0
    %2404 = vmatpush1.msra.mxu0 0.0
    %2405 = vmatprep.subr.mxu0 0.0
    %2406 = vmatpush1.msra.mxu0 0.0
    %2407 = vmatprep.subr.mxu0 0.0
    %2408 = vmatpush1.msra.mxu0 0.0
    %2409 = vmatprep.subr.mxu0 0.0
    %2410 = vmatpush1.msra.mxu0 0.0
    %2411 = vmatprep.subr.mxu0 0.0
    %2412 = vmatpush1.msra.mxu0 0.0
    %2413 = vmatprep.subr.mxu0 0.0
    %2414 = vmatpush1.msra.mxu0 0.0
    %2415 = vmatprep.mubr.f32.mxu0 0.0
    %2416 = vmatmul.mubr.f32.gmra.mrb[0].mxu0 %v2349
    %v2417 = vpop.f32.mrb[0].mxu0
    %v2418 = vadd.f32 0.0, %v2417
    %v2419 = vpop.f32.mrb[0].mxu0
    %2420 = vdwg.mxu0
    %v2421 = vadd.f32 %v2346, %v2418
    %v2422 = vld [vmem:[#allocation3 + $0x278] sm:$0x7]
    %v2423 = vmul.f32 %v1966, %v1522
    %v2424 = vmul.f32 %v1968, %v1522
    %2427 = vrot.lane.b32.xlu0 %v2423, 127
    %v2428 = vpop.permute.xlu0 %2427
    %2429 = vrot.lane.b32.xlu0 %v2424, 127
    %v2430 = vpop.permute.xlu0 %2429
    %v2434 = vsel %vm607, %v2422, 0
    %2436 = vmatprep.subr.mxu0 0.0
    %2437 = vmatpush1.msra.mxu0 %v2428
    %2438 = vmatprep.subr.mxu0 0.0
    %2439 = vmatpush1.msra.mxu0 %v2430
    %2440 = vmatprep.subr.mxu0 0.0
    %2441 = vmatpush1.msra.mxu0 0.0
    %2442 = vmatprep.subr.mxu0 0.0
    %2443 = vmatpush1.msra.mxu0 0.0
    %2444 = vmatprep.subr.mxu0 0.0
    %2445 = vmatpush1.msra.mxu0 0.0
    %2446 = vmatprep.subr.mxu0 0.0
    %2447 = vmatpush1.msra.mxu0 0.0
    %2448 = vmatprep.subr.mxu0 0.0
    %2449 = vmatpush1.msra.mxu0 0.0
    %2450 = vmatprep.subr.mxu0 0.0
    %2451 = vmatpush1.msra.mxu0 0.0
    %2452 = vmatprep.subr.mxu0 0.0
    %2453 = vmatpush1.msra.mxu0 0.0
    %2454 = vmatprep.subr.mxu0 0.0
    %2455 = vmatpush1.msra.mxu0 0.0
    %2456 = vmatprep.subr.mxu0 0.0
    %2457 = vmatpush1.msra.mxu0 0.0
    %2458 = vmatprep.subr.mxu0 0.0
    %2459 = vmatpush1.msra.mxu0 0.0
    %2460 = vmatprep.subr.mxu0 0.0
    %2461 = vmatpush1.msra.mxu0 0.0
    %2462 = vmatprep.subr.mxu0 0.0
    %2463 = vmatpush1.msra.mxu0 0.0
    %2464 = vmatprep.subr.mxu0 0.0
    %2465 = vmatpush1.msra.mxu0 0.0
    %2466 = vmatprep.subr.mxu0 0.0
    %2467 = vmatpush1.msra.mxu0 0.0
    %2468 = vmatprep.subr.mxu0 0.0
    %2469 = vmatpush1.msra.mxu0 0.0
    %2470 = vmatprep.subr.mxu0 0.0
    %2471 = vmatpush1.msra.mxu0 0.0
    %2472 = vmatprep.subr.mxu0 0.0
    %2473 = vmatpush1.msra.mxu0 0.0
    %2474 = vmatprep.subr.mxu0 0.0
    %2475 = vmatpush1.msra.mxu0 0.0
    %2476 = vmatprep.subr.mxu0 0.0
    %2477 = vmatpush1.msra.mxu0 0.0
    %2478 = vmatprep.subr.mxu0 0.0
    %2479 = vmatpush1.msra.mxu0 0.0
    %2480 = vmatprep.subr.mxu0 0.0
    %2481 = vmatpush1.msra.mxu0 0.0
    %2482 = vmatprep.subr.mxu0 0.0
    %2483 = vmatpush1.msra.mxu0 0.0
    %2484 = vmatprep.subr.mxu0 0.0
    %2485 = vmatpush1.msra.mxu0 0.0
    %2486 = vmatprep.subr.mxu0 0.0
    %2487 = vmatpush1.msra.mxu0 0.0
    %2488 = vmatprep.subr.mxu0 0.0
    %2489 = vmatpush1.msra.mxu0 0.0
    %2490 = vmatprep.subr.mxu0 0.0
    %2491 = vmatpush1.msra.mxu0 0.0
    %2492 = vmatprep.subr.mxu0 0.0
    %2493 = vmatpush1.msra.mxu0 0.0
    %2494 = vmatprep.subr.mxu0 0.0
    %2495 = vmatpush1.msra.mxu0 0.0
    %2496 = vmatprep.subr.mxu0 0.0
    %2497 = vmatpush1.msra.mxu0 0.0
    %2498 = vmatprep.subr.mxu0 0.0
    %2499 = vmatpush1.msra.mxu0 0.0
    %2500 = vmatprep.mubr.f32.mxu0 0.0
    %2501 = vmatmul.mubr.f32.gmra.mrb[0].mxu0 %v2434
    %v2502 = vpop.f32.mrb[0].mxu0
    %v2503 = vadd.f32 0.0, %v2502
    %v2504 = vpop.f32.mrb[0].mxu0
    %2505 = vdwg.mxu0
    %v2506 = vadd.f32 %v2421, %v2503
    %v2507 = vld [vmem:[#allocation3 + $0x280] sm:$0x7]
    %v2508 = vmul.f32 %v1966, %v1631
    %v2509 = vmul.f32 %v1968, %v1631
    %2512 = vrot.lane.b32.xlu0 %v2508, 127
    %v2513 = vpop.permute.xlu0 %2512
    %2514 = vrot.lane.b32.xlu0 %v2509, 127
    %v2515 = vpop.permute.xlu0 %2514
    %v2519 = vsel %vm607, %v2507, 0
    %2521 = vmatprep.subr.mxu0 0.0
    %2522 = vmatpush1.msra.mxu0 %v2513
    %2523 = vmatprep.subr.mxu0 0.0
    %2524 = vmatpush1.msra.mxu0 %v2515
    %2525 = vmatprep.subr.mxu0 0.0
    %2526 = vmatpush1.msra.mxu0 0.0
    %2527 = vmatprep.subr.mxu0 0.0
    %2528 = vmatpush1.msra.mxu0 0.0
    %2529 = vmatprep.subr.mxu0 0.0
    %2530 = vmatpush1.msra.mxu0 0.0
    %2531 = vmatprep.subr.mxu0 0.0
    %2532 = vmatpush1.msra.mxu0 0.0
    %2533 = vmatprep.subr.mxu0 0.0
    %2534 = vmatpush1.msra.mxu0 0.0
    %2535 = vmatprep.subr.mxu0 0.0
    %2536 = vmatpush1.msra.mxu0 0.0
    %2537 = vmatprep.subr.mxu0 0.0
    %2538 = vmatpush1.msra.mxu0 0.0
    %2539 = vmatprep.subr.mxu0 0.0
    %2540 = vmatpush1.msra.mxu0 0.0
    %2541 = vmatprep.subr.mxu0 0.0
    %2542 = vmatpush1.msra.mxu0 0.0
    %2543 = vmatprep.subr.mxu0 0.0
    %2544 = vmatpush1.msra.mxu0 0.0
    %2545 = vmatprep.subr.mxu0 0.0
    %2546 = vmatpush1.msra.mxu0 0.0
    %2547 = vmatprep.subr.mxu0 0.0
    %2548 = vmatpush1.msra.mxu0 0.0
    %2549 = vmatprep.subr.mxu0 0.0
    %2550 = vmatpush1.msra.mxu0 0.0
    %2551 = vmatprep.subr.mxu0 0.0
    %2552 = vmatpush1.msra.mxu0 0.0
    %2553 = vmatprep.subr.mxu0 0.0
    %2554 = vmatpush1.msra.mxu0 0.0
    %2555 = vmatprep.subr.mxu0 0.0
    %2556 = vmatpush1.msra.mxu0 0.0
    %2557 = vmatprep.subr.mxu0 0.0
    %2558 = vmatpush1.msra.mxu0 0.0
    %2559 = vmatprep.subr.mxu0 0.0
    %2560 = vmatpush1.msra.mxu0 0.0
    %2561 = vmatprep.subr.mxu0 0.0
    %2562 = vmatpush1.msra.mxu0 0.0
    %2563 = vmatprep.subr.mxu0 0.0
    %2564 = vmatpush1.msra.mxu0 0.0
    %2565 = vmatprep.subr.mxu0 0.0
    %2566 = vmatpush1.msra.mxu0 0.0
    %2567 = vmatprep.subr.mxu0 0.0
    %2568 = vmatpush1.msra.mxu0 0.0
    %2569 = vmatprep.subr.mxu0 0.0
    %2570 = vmatpush1.msra.mxu0 0.0
    %2571 = vmatprep.subr.mxu0 0.0
    %2572 = vmatpush1.msra.mxu0 0.0
    %2573 = vmatprep.subr.mxu0 0.0
    %2574 = vmatpush1.msra.mxu0 0.0
    %2575 = vmatprep.subr.mxu0 0.0
    %2576 = vmatpush1.msra.mxu0 0.0
    %2577 = vmatprep.subr.mxu0 0.0
    %2578 = vmatpush1.msra.mxu0 0.0
    %2579 = vmatprep.subr.mxu0 0.0
    %2580 = vmatpush1.msra.mxu0 0.0
    %2581 = vmatprep.subr.mxu0 0.0
    %2582 = vmatpush1.msra.mxu0 0.0
    %2583 = vmatprep.subr.mxu0 0.0
    %2584 = vmatpush1.msra.mxu0 0.0
    %2585 = vmatprep.mubr.f32.mxu0 0.0
    %2586 = vmatmul.mubr.f32.gmra.mrb[0].mxu0 %v2519
    %v2587 = vpop.f32.mrb[0].mxu0
    %v2588 = vadd.f32 0.0, %v2587
    %v2589 = vpop.f32.mrb[0].mxu0
    %2590 = vdwg.mxu0
    %v2591 = vadd.f32 %v2506, %v2588
    %v2592 = vld [vmem:[#allocation3 + $0x288] sm:$0x7]
    %v2593 = vmul.f32 %v1966, %v1740
    %v2594 = vmul.f32 %v1968, %v1740
    %2597 = vrot.lane.b32.xlu0 %v2593, 126
    %v2598 = vpop.permute.xlu0 %2597
    %2599 = vrot.lane.b32.xlu0 %v2594, 126
    %v2600 = vpop.permute.xlu0 %2599
    %v2604 = vsel %vm607, %v2592, 0
    %2606 = vmatprep.subr.mxu0 0.0
    %2607 = vmatpush1.msra.mxu0 %v2598
    %2608 = vmatprep.subr.mxu0 0.0
    %2609 = vmatpush1.msra.mxu0 %v2600
    %2610 = vmatprep.subr.mxu0 0.0
    %2611 = vmatpush1.msra.mxu0 0.0
    %2612 = vmatprep.subr.mxu0 0.0
    %2613 = vmatpush1.msra.mxu0 0.0
    %2614 = vmatprep.subr.mxu0 0.0
    %2615 = vmatpush1.msra.mxu0 0.0
    %2616 = vmatprep.subr.mxu0 0.0
    %2617 = vmatpush1.msra.mxu0 0.0
    %2618 = vmatprep.subr.mxu0 0.0
    %2619 = vmatpush1.msra.mxu0 0.0
    %2620 = vmatprep.subr.mxu0 0.0
    %2621 = vmatpush1.msra.mxu0 0.0
    %2622 = vmatprep.subr.mxu0 0.0
    %2623 = vmatpush1.msra.mxu0 0.0
    %2624 = vmatprep.subr.mxu0 0.0
    %2625 = vmatpush1.msra.mxu0 0.0
    %2626 = vmatprep.subr.mxu0 0.0
    %2627 = vmatpush1.msra.mxu0 0.0
    %2628 = vmatprep.subr.mxu0 0.0
    %2629 = vmatpush1.msra.mxu0 0.0
    %2630 = vmatprep.subr.mxu0 0.0
    %2631 = vmatpush1.msra.mxu0 0.0
    %2632 = vmatprep.subr.mxu0 0.0
    %2633 = vmatpush1.msra.mxu0 0.0
    %2634 = vmatprep.subr.mxu0 0.0
    %2635 = vmatpush1.msra.mxu0 0.0
    %2636 = vmatprep.subr.mxu0 0.0
    %2637 = vmatpush1.msra.mxu0 0.0
    %2638 = vmatprep.subr.mxu0 0.0
    %2639 = vmatpush1.msra.mxu0 0.0
    %2640 = vmatprep.subr.mxu0 0.0
    %2641 = vmatpush1.msra.mxu0 0.0
    %2642 = vmatprep.subr.mxu0 0.0
    %2643 = vmatpush1.msra.mxu0 0.0
    %2644 = vmatprep.subr.mxu0 0.0
    %2645 = vmatpush1.msra.mxu0 0.0
    %2646 = vmatprep.subr.mxu0 0.0
    %2647 = vmatpush1.msra.mxu0 0.0
    %2648 = vmatprep.subr.mxu0 0.0
    %2649 = vmatpush1.msra.mxu0 0.0
    %2650 = vmatprep.subr.mxu0 0.0
    %2651 = vmatpush1.msra.mxu0 0.0
    %2652 = vmatprep.subr.mxu0 0.0
    %2653 = vmatpush1.msra.mxu0 0.0
    %2654 = vmatprep.subr.mxu0 0.0
    %2655 = vmatpush1.msra.mxu0 0.0
    %2656 = vmatprep.subr.mxu0 0.0
    %2657 = vmatpush1.msra.mxu0 0.0
    %2658 = vmatprep.subr.mxu0 0.0
    %2659 = vmatpush1.msra.mxu0 0.0
    %2660 = vmatprep.subr.mxu0 0.0
    %2661 = vmatpush1.msra.mxu0 0.0
    %2662 = vmatprep.subr.mxu0 0.0
    %2663 = vmatpush1.msra.mxu0 0.0
    %2664 = vmatprep.subr.mxu0 0.0
    %2665 = vmatpush1.msra.mxu0 0.0
    %2666 = vmatprep.subr.mxu0 0.0
    %2667 = vmatpush1.msra.mxu0 0.0
    %2668 = vmatprep.subr.mxu0 0.0
    %2669 = vmatpush1.msra.mxu0 0.0
    %2670 = vmatprep.mubr.f32.mxu0 0.0
    %2671 = vmatmul.mubr.f32.gmra.mrb[0].mxu0 %v2604
    %v2672 = vpop.f32.mrb[0].mxu0
    %v2673 = vadd.f32 0.0, %v2672
    %v2674 = vpop.f32.mrb[0].mxu0
    %2675 = vdwg.mxu0
    %v2676 = vadd.f32 %v2591, %v2673
    %v2677 = vld [vmem:[#allocation3 + $0x290] sm:$0x7]
    %v2678 = vmul.f32 %v1966, %v1849
    %v2679 = vmul.f32 %v1968, %v1849
    %2682 = vrot.lane.b32.xlu0 %v2678, 125
    %v2683 = vpop.permute.xlu0 %2682
    %2684 = vrot.lane.b32.xlu0 %v2679, 125
    %v2685 = vpop.permute.xlu0 %2684
    %v2689 = vsel %vm607, %v2677, 0
    %2691 = vmatprep.subr.mxu0 0.0
    %2692 = vmatpush1.msra.mxu0 %v2683
    %2693 = vmatprep.subr.mxu0 0.0
    %2694 = vmatpush1.msra.mxu0 %v2685
    %2695 = vmatprep.subr.mxu0 0.0
    %2696 = vmatpush1.msra.mxu0 0.0
    %2697 = vmatprep.subr.mxu0 0.0
    %2698 = vmatpush1.msra.mxu0 0.0
    %2699 = vmatprep.subr.mxu0 0.0
    %2700 = vmatpush1.msra.mxu0 0.0
    %2701 = vmatprep.subr.mxu0 0.0
    %2702 = vmatpush1.msra.mxu0 0.0
    %2703 = vmatprep.subr.mxu0 0.0
    %2704 = vmatpush1.msra.mxu0 0.0
    %2705 = vmatprep.subr.mxu0 0.0
    %2706 = vmatpush1.msra.mxu0 0.0
    %2707 = vmatprep.subr.mxu0 0.0
    %2708 = vmatpush1.msra.mxu0 0.0
    %2709 = vmatprep.subr.mxu0 0.0
    %2710 = vmatpush1.msra.mxu0 0.0
    %2711 = vmatprep.subr.mxu0 0.0
    %2712 = vmatpush1.msra.mxu0 0.0
    %2713 = vmatprep.subr.mxu0 0.0
    %2714 = vmatpush1.msra.mxu0 0.0
    %2715 = vmatprep.subr.mxu0 0.0
    %2716 = vmatpush1.msra.mxu0 0.0
    %2717 = vmatprep.subr.mxu0 0.0
    %2718 = vmatpush1.msra.mxu0 0.0
    %2719 = vmatprep.subr.mxu0 0.0
    %2720 = vmatpush1.msra.mxu0 0.0
    %2721 = vmatprep.subr.mxu0 0.0
    %2722 = vmatpush1.msra.mxu0 0.0
    %2723 = vmatprep.subr.mxu0 0.0
    %2724 = vmatpush1.msra.mxu0 0.0
    %2725 = vmatprep.subr.mxu0 0.0
    %2726 = vmatpush1.msra.mxu0 0.0
    %2727 = vmatprep.subr.mxu0 0.0
    %2728 = vmatpush1.msra.mxu0 0.0
    %2729 = vmatprep.subr.mxu0 0.0
    %2730 = vmatpush1.msra.mxu0 0.0
    %2731 = vmatprep.subr.mxu0 0.0
    %2732 = vmatpush1.msra.mxu0 0.0
    %2733 = vmatprep.subr.mxu0 0.0
    %2734 = vmatpush1.msra.mxu0 0.0
    %2735 = vmatprep.subr.mxu0 0.0
    %2736 = vmatpush1.msra.mxu0 0.0
    %2737 = vmatprep.subr.mxu0 0.0
    %2738 = vmatpush1.msra.mxu0 0.0
    %2739 = vmatprep.subr.mxu0 0.0
    %2740 = vmatpush1.msra.mxu0 0.0
    %2741 = vmatprep.subr.mxu0 0.0
    %2742 = vmatpush1.msra.mxu0 0.0
    %2743 = vmatprep.subr.mxu0 0.0
    %2744 = vmatpush1.msra.mxu0 0.0
    %2745 = vmatprep.subr.mxu0 0.0
    %2746 = vmatpush1.msra.mxu0 0.0
    %2747 = vmatprep.subr.mxu0 0.0
    %2748 = vmatpush1.msra.mxu0 0.0
    %2749 = vmatprep.subr.mxu0 0.0
    %2750 = vmatpush1.msra.mxu0 0.0
    %2751 = vmatprep.subr.mxu0 0.0
    %2752 = vmatpush1.msra.mxu0 0.0
    %2753 = vmatprep.subr.mxu0 0.0
    %2754 = vmatpush1.msra.mxu0 0.0
    %2755 = vmatprep.mubr.f32.mxu0 0.0
    %2756 = vmatmul.mubr.f32.gmra.mrb[0].mxu0 %v2689
    %v2757 = vpop.f32.mrb[0].mxu0
    %v2758 = vadd.f32 0.0, %v2757
    %v2759 = vpop.f32.mrb[0].mxu0
    %2760 = vdwg.mxu0
    %v2761 = vadd.f32 %v2676, %v2758
    %v2762 = vadd.f32 %v796, %v2761
    %v2763 = vld [vmem:[#allocation5 + $0x30] sm:$0xf]
    %v2765 = vsel %vm795, %v2762, 0
    %vm2767 = vcmask 1043456
    %v2769 = vsel %vm2767, %v2763, 0
    %2771 = vmatprep.subr.mxu0 0.0
    %2772 = vmatpush1.msra.mxu0 %v2769
    %2773 = vmatprep.subr.mxu0 0.0
    %2774 = vmatpush1.msra.mxu0 0.0
    %2775 = vmatprep.subr.mxu0 0.0
    %2776 = vmatpush1.msra.mxu0 0.0
    %2777 = vmatprep.subr.mxu0 0.0
    %2778 = vmatpush1.msra.mxu0 0.0
    %2779 = vmatprep.subr.mxu0 0.0
    %2780 = vmatpush1.msra.mxu0 0.0
    %2781 = vmatprep.subr.mxu0 0.0
    %2782 = vmatpush1.msra.mxu0 0.0
    %2783 = vmatprep.subr.mxu0 0.0
    %2784 = vmatpush1.msra.mxu0 0.0
    %2785 = vmatprep.subr.mxu0 0.0
    %2786 = vmatpush1.msra.mxu0 0.0
    %2787 = vmatprep.subr.mxu0 0.0
    %2788 = vmatpush1.msra.mxu0 0.0
    %2789 = vmatprep.subr.mxu0 0.0
    %2790 = vmatpush1.msra.mxu0 0.0
    %2791 = vmatprep.subr.mxu0 0.0
    %2792 = vmatpush1.msra.mxu0 0.0
    %2793 = vmatprep.subr.mxu0 0.0
    %2794 = vmatpush1.msra.mxu0 0.0
    %2795 = vmatprep.subr.mxu0 0.0
    %2796 = vmatpush1.msra.mxu0 0.0
    %2797 = vmatprep.subr.mxu0 0.0
    %2798 = vmatpush1.msra.mxu0 0.0
    %2799 = vmatprep.subr.mxu0 0.0
    %2800 = vmatpush1.msra.mxu0 0.0
    %2801 = vmatprep.subr.mxu0 0.0
    %2802 = vmatpush1.msra.mxu0 0.0
    %2803 = vmatprep.subr.mxu0 0.0
    %2804 = vmatpush1.msra.mxu0 0.0
    %2805 = vmatprep.subr.mxu0 0.0
    %2806 = vmatpush1.msra.mxu0 0.0
    %2807 = vmatprep.subr.mxu0 0.0
    %2808 = vmatpush1.msra.mxu0 0.0
    %2809 = vmatprep.subr.mxu0 0.0
    %2810 = vmatpush1.msra.mxu0 0.0
    %2811 = vmatprep.subr.mxu0 0.0
    %2812 = vmatpush1.msra.mxu0 0.0
    %2813 = vmatprep.subr.mxu0 0.0
    %2814 = vmatpush1.msra.mxu0 0.0
    %2815 = vmatprep.subr.mxu0 0.0
    %2816 = vmatpush1.msra.mxu0 0.0
    %2817 = vmatprep.subr.mxu0 0.0
    %2818 = vmatpush1.msra.mxu0 0.0
    %2819 = vmatprep.subr.mxu0 0.0
    %2820 = vmatpush1.msra.mxu0 0.0
    %2821 = vmatprep.subr.mxu0 0.0
    %2822 = vmatpush1.msra.mxu0 0.0
    %2823 = vmatprep.subr.mxu0 0.0
    %2824 = vmatpush1.msra.mxu0 0.0
    %2825 = vmatprep.subr.mxu0 0.0
    %2826 = vmatpush1.msra.mxu0 0.0
    %2827 = vmatprep.subr.mxu0 0.0
    %2828 = vmatpush1.msra.mxu0 0.0
    %2829 = vmatprep.subr.mxu0 0.0
    %2830 = vmatpush1.msra.mxu0 0.0
    %2831 = vmatprep.subr.mxu0 0.0
    %2832 = vmatpush1.msra.mxu0 0.0
    %2833 = vmatprep.subr.mxu0 0.0
    %2834 = vmatpush1.msra.mxu0 0.0
    %2835 = vmatprep.mubr.f32.mxu0 0.0
    %2836 = vmatmul.mubr.f32.gmra.mrb[0].mxu0 %v2765
    %v2837 = vpop.f32.mrb[0].mxu0
    %v2838 = vadd.f32 0.0, %v2837
    %v2839 = vpop.f32.mrb[0].mxu0
    %2840 = vdwg.mxu0
    %2841 = vrot.lane.b32.xlu0 %v2762, 124
    %v2842 = vpop.permute.xlu0 %2841
    %v2843 = vsel %vm795, %v2842, 0
    %2845 = vmatprep.subr.mxu0 0.0
    %2846 = vmatpush1.msra.mxu0 %v2769
    %2847 = vmatprep.subr.mxu0 0.0
    %2848 = vmatpush1.msra.mxu0 0.0
    %2849 = vmatprep.subr.mxu0 0.0
    %2850 = vmatpush1.msra.mxu0 0.0
    %2851 = vmatprep.subr.mxu0 0.0
    %2852 = vmatpush1.msra.mxu0 0.0
    %2853 = vmatprep.subr.mxu0 0.0
    %2854 = vmatpush1.msra.mxu0 0.0
    %2855 = vmatprep.subr.mxu0 0.0
    %2856 = vmatpush1.msra.mxu0 0.0
    %2857 = vmatprep.subr.mxu0 0.0
    %2858 = vmatpush1.msra.mxu0 0.0
    %2859 = vmatprep.subr.mxu0 0.0
    %2860 = vmatpush1.msra.mxu0 0.0
    %2861 = vmatprep.subr.mxu0 0.0
    %2862 = vmatpush1.msra.mxu0 0.0
    %2863 = vmatprep.subr.mxu0 0.0
    %2864 = vmatpush1.msra.mxu0 0.0
    %2865 = vmatprep.subr.mxu0 0.0
    %2866 = vmatpush1.msra.mxu0 0.0
    %2867 = vmatprep.subr.mxu0 0.0
    %2868 = vmatpush1.msra.mxu0 0.0
    %2869 = vmatprep.subr.mxu0 0.0
    %2870 = vmatpush1.msra.mxu0 0.0
    %2871 = vmatprep.subr.mxu0 0.0
    %2872 = vmatpush1.msra.mxu0 0.0
    %2873 = vmatprep.subr.mxu0 0.0
    %2874 = vmatpush1.msra.mxu0 0.0
    %2875 = vmatprep.subr.mxu0 0.0
    %2876 = vmatpush1.msra.mxu0 0.0
    %2877 = vmatprep.subr.mxu0 0.0
    %2878 = vmatpush1.msra.mxu0 0.0
    %2879 = vmatprep.subr.mxu0 0.0
    %2880 = vmatpush1.msra.mxu0 0.0
    %2881 = vmatprep.subr.mxu0 0.0
    %2882 = vmatpush1.msra.mxu0 0.0
    %2883 = vmatprep.subr.mxu0 0.0
    %2884 = vmatpush1.msra.mxu0 0.0
    %2885 = vmatprep.subr.mxu0 0.0
    %2886 = vmatpush1.msra.mxu0 0.0
    %2887 = vmatprep.subr.mxu0 0.0
    %2888 = vmatpush1.msra.mxu0 0.0
    %2889 = vmatprep.subr.mxu0 0.0
    %2890 = vmatpush1.msra.mxu0 0.0
    %2891 = vmatprep.subr.mxu0 0.0
    %2892 = vmatpush1.msra.mxu0 0.0
    %2893 = vmatprep.subr.mxu0 0.0
    %2894 = vmatpush1.msra.mxu0 0.0
    %2895 = vmatprep.subr.mxu0 0.0
    %2896 = vmatpush1.msra.mxu0 0.0
    %2897 = vmatprep.subr.mxu0 0.0
    %2898 = vmatpush1.msra.mxu0 0.0
    %2899 = vmatprep.subr.mxu0 0.0
    %2900 = vmatpush1.msra.mxu0 0.0
    %2901 = vmatprep.subr.mxu0 0.0
    %2902 = vmatpush1.msra.mxu0 0.0
    %2903 = vmatprep.subr.mxu0 0.0
    %2904 = vmatpush1.msra.mxu0 0.0
    %2905 = vmatprep.subr.mxu0 0.0
    %2906 = vmatpush1.msra.mxu0 0.0
    %2907 = vmatprep.subr.mxu0 0.0
    %2908 = vmatpush1.msra.mxu0 0.0
    %2909 = vmatprep.mubr.f32.mxu0 0.0
    %2910 = vmatmul.mubr.f32.gmra.mrb[0].mxu0 %v2843
    %v2911 = vpop.f32.mrb[0].mxu0
    %v2912 = vadd.f32 0.0, %v2911
    %v2913 = vpop.f32.mrb[0].mxu0
    %2914 = vdwg.mxu0
    %2916 = vrot.lane.b32.xlu0 %v2912, 16
    %v2917 = vpop.permute.xlu0 %2916
    %v2919 = vsel %vm607, %v2838, %v2917
    %v2920 = vld [vmem:[#allocation5 + $0x20] sm:$0xf]
    %v2922 = vsel %vm795, %v1954, 0
    %v2925 = vsel %vm795, %v1955, 0
    %v2928 = vsel %vm2767, %v2920, 0
    %2930 = vmatprep.subr.mxu0 0.0
    %2931 = vmatpush1.msra.mxu0 %v2928
    %2932 = vmatprep.subr.mxu0 0.0
    %2933 = vmatpush1.msra.mxu0 0.0
    %2934 = vmatprep.subr.mxu0 0.0
    %2935 = vmatpush1.msra.mxu0 0.0
    %2936 = vmatprep.subr.mxu0 0.0
    %2937 = vmatpush1.msra.mxu0 0.0
    %2938 = vmatprep.subr.mxu0 0.0
    %2939 = vmatpush1.msra.mxu0 0.0
    %2940 = vmatprep.subr.mxu0 0.0
    %2941 = vmatpush1.msra.mxu0 0.0
    %2942 = vmatprep.subr.mxu0 0.0
    %2943 = vmatpush1.msra.mxu0 0.0
    %2944 = vmatprep.subr.mxu0 0.0
    %2945 = vmatpush1.msra.mxu0 0.0
    %2946 = vmatprep.subr.mxu0 0.0
    %2947 = vmatpush1.msra.mxu0 0.0
    %2948 = vmatprep.subr.mxu0 0.0
    %2949 = vmatpush1.msra.mxu0 0.0
    %2950 = vmatprep.subr.mxu0 0.0
    %2951 = vmatpush1.msra.mxu0 0.0
    %2952 = vmatprep.subr.mxu0 0.0
    %2953 = vmatpush1.msra.mxu0 0.0
    %2954 = vmatprep.subr.mxu0 0.0
    %2955 = vmatpush1.msra.mxu0 0.0
    %2956 = vmatprep.subr.mxu0 0.0
    %2957 = vmatpush1.msra.mxu0 0.0
    %2958 = vmatprep.subr.mxu0 0.0
    %2959 = vmatpush1.msra.mxu0 0.0
    %2960 = vmatprep.subr.mxu0 0.0
    %2961 = vmatpush1.msra.mxu0 0.0
    %2962 = vmatprep.subr.mxu0 0.0
    %2963 = vmatpush1.msra.mxu0 0.0
    %2964 = vmatprep.subr.mxu0 0.0
    %2965 = vmatpush1.msra.mxu0 0.0
    %2966 = vmatprep.subr.mxu0 0.0
    %2967 = vmatpush1.msra.mxu0 0.0
    %2968 = vmatprep.subr.mxu0 0.0
    %2969 = vmatpush1.msra.mxu0 0.0
    %2970 = vmatprep.subr.mxu0 0.0
    %2971 = vmatpush1.msra.mxu0 0.0
    %2972 = vmatprep.subr.mxu0 0.0
    %2973 = vmatpush1.msra.mxu0 0.0
    %2974 = vmatprep.subr.mxu0 0.0
    %2975 = vmatpush1.msra.mxu0 0.0
    %2976 = vmatprep.subr.mxu0 0.0
    %2977 = vmatpush1.msra.mxu0 0.0
    %2978 = vmatprep.subr.mxu0 0.0
    %2979 = vmatpush1.msra.mxu0 0.0
    %2980 = vmatprep.subr.mxu0 0.0
    %2981 = vmatpush1.msra.mxu0 0.0
    %2982 = vmatprep.subr.mxu0 0.0
    %2983 = vmatpush1.msra.mxu0 0.0
    %2984 = vmatprep.subr.mxu0 0.0
    %2985 = vmatpush1.msra.mxu0 0.0
    %2986 = vmatprep.subr.mxu0 0.0
    %2987 = vmatpush1.msra.mxu0 0.0
    %2988 = vmatprep.subr.mxu0 0.0
    %2989 = vmatpush1.msra.mxu0 0.0
    %2990 = vmatprep.subr.mxu0 0.0
    %2991 = vmatpush1.msra.mxu0 0.0
    %2992 = vmatprep.subr.mxu0 0.0
    %2993 = vmatpush1.msra.mxu0 0.0
    %2994 = vmatprep.mubr.f32.mxu0 0.0
    %2995 = vmatmul.mubr.f32.gmra.mrb[0].mxu0 %v2922
    %v2996 = vpop.f32.mrb[0].mxu0
    %v2997 = vadd.f32 0.0, %v2996
    %v2998 = vpop.f32.mrb[0].mxu0
    %2999 = vmatprep.mubr.f32.mxu0 0.0
    %3000 = vmatmul.mubr.f32.gmra.mrb[0].mxu0 %v2925
    %v3001 = vpop.f32.mrb[0].mxu0
    %v3002 = vadd.f32 0.0, %v3001
    %v3003 = vpop.f32.mrb[0].mxu0
    %3004 = vdwg.mxu0
    %3005 = vrot.lane.b32.xlu0 %v1954, 124
    %v3006 = vpop.permute.xlu0 %3005
    %3007 = vrot.lane.b32.xlu0 %v1955, 124
    %v3008 = vpop.permute.xlu0 %3007
    %v3009 = vsel %vm795, %v3006, 0
    %v3011 = vsel %vm795, %v3008, 0
    %3013 = vmatprep.subr.mxu0 0.0
    %3014 = vmatpush1.msra.mxu0 %v2928
    %3015 = vmatprep.subr.mxu0 0.0
    %3016 = vmatpush1.msra.mxu0 0.0
    %3017 = vmatprep.subr.mxu0 0.0
    %3018 = vmatpush1.msra.mxu0 0.0
    %3019 = vmatprep.subr.mxu0 0.0
    %3020 = vmatpush1.msra.mxu0 0.0
    %3021 = vmatprep.subr.mxu0 0.0
    %3022 = vmatpush1.msra.mxu0 0.0
    %3023 = vmatprep.subr.mxu0 0.0
    %3024 = vmatpush1.msra.mxu0 0.0
    %3025 = vmatprep.subr.mxu0 0.0
    %3026 = vmatpush1.msra.mxu0 0.0
    %3027 = vmatprep.subr.mxu0 0.0
    %3028 = vmatpush1.msra.mxu0 0.0
    %3029 = vmatprep.subr.mxu0 0.0
    %3030 = vmatpush1.msra.mxu0 0.0
    %3031 = vmatprep.subr.mxu0 0.0
    %3032 = vmatpush1.msra.mxu0 0.0
    %3033 = vmatprep.subr.mxu0 0.0
    %3034 = vmatpush1.msra.mxu0 0.0
    %3035 = vmatprep.subr.mxu0 0.0
    %3036 = vmatpush1.msra.mxu0 0.0
    %3037 = vmatprep.subr.mxu0 0.0
    %3038 = vmatpush1.msra.mxu0 0.0
    %3039 = vmatprep.subr.mxu0 0.0
    %3040 = vmatpush1.msra.mxu0 0.0
    %3041 = vmatprep.subr.mxu0 0.0
    %3042 = vmatpush1.msra.mxu0 0.0
    %3043 = vmatprep.subr.mxu0 0.0
    %3044 = vmatpush1.msra.mxu0 0.0
    %3045 = vmatprep.subr.mxu0 0.0
    %3046 = vmatpush1.msra.mxu0 0.0
    %3047 = vmatprep.subr.mxu0 0.0
    %3048 = vmatpush1.msra.mxu0 0.0
    %3049 = vmatprep.subr.mxu0 0.0
    %3050 = vmatpush1.msra.mxu0 0.0
    %3051 = vmatprep.subr.mxu0 0.0
    %3052 = vmatpush1.msra.mxu0 0.0
    %3053 = vmatprep.subr.mxu0 0.0
    %3054 = vmatpush1.msra.mxu0 0.0
    %3055 = vmatprep.subr.mxu0 0.0
    %3056 = vmatpush1.msra.mxu0 0.0
    %3057 = vmatprep.subr.mxu0 0.0
    %3058 = vmatpush1.msra.mxu0 0.0
    %3059 = vmatprep.subr.mxu0 0.0
    %3060 = vmatpush1.msra.mxu0 0.0
    %3061 = vmatprep.subr.mxu0 0.0
    %3062 = vmatpush1.msra.mxu0 0.0
    %3063 = vmatprep.subr.mxu0 0.0
    %3064 = vmatpush1.msra.mxu0 0.0
    %3065 = vmatprep.subr.mxu0 0.0
    %3066 = vmatpush1.msra.mxu0 0.0
    %3067 = vmatprep.subr.mxu0 0.0
    %3068 = vmatpush1.msra.mxu0 0.0
    %3069 = vmatprep.subr.mxu0 0.0
    %3070 = vmatpush1.msra.mxu0 0.0
    %3071 = vmatprep.subr.mxu0 0.0
    %3072 = vmatpush1.msra.mxu0 0.0
    %3073 = vmatprep.subr.mxu0 0.0
    %3074 = vmatpush1.msra.mxu0 0.0
    %3075 = vmatprep.subr.mxu0 0.0
    %3076 = vmatpush1.msra.mxu0 0.0
    %3077 = vmatprep.mubr.f32.mxu0 0.0
    %3078 = vmatmul.mubr.f32.gmra.mrb[0].mxu0 %v3009
    %v3079 = vpop.f32.mrb[0].mxu0
    %v3080 = vadd.f32 0.0, %v3079
    %v3081 = vpop.f32.mrb[0].mxu0
    %3082 = vmatprep.mubr.f32.mxu0 0.0
    %3083 = vmatmul.mubr.f32.gmra.mrb[0].mxu0 %v3011
    %v3084 = vpop.f32.mrb[0].mxu0
    %v3085 = vadd.f32 0.0, %v3084
    %v3086 = vpop.f32.mrb[0].mxu0
    %3087 = vdwg.mxu0
    %3090 = vrot.lane.b32.xlu0 %v3080, 16
    %v3091 = vpop.permute.xlu0 %3090
    %3092 = vrot.lane.b32.xlu0 %v3085, 16
    %v3093 = vpop.permute.xlu0 %3092
    %v3096 = vsel %vm607, %v2997, %v3091
    %v3097 = vsel %vm607, %v3002, %v3093
    %v3098 = vand.u32 %v863, 3
    %v3099 = vshra.s32 %v863, 2
    %v3100 = vand.u32 %v3099, 3
    %vm3101 = vcmp.ge.s32.totalorder %v3098, 1
    %vm3102 = vcmp.le.s32.totalorder %v3098, 2
    %vm3103 = vcmp.ge.s32.totalorder %v3100, 1
    %vm3104 = vcmp.le.s32.totalorder %v3100, 2
    %vm3105 = vmand %vm3103, %vm3101
    %v3106 = vsel %vm3105, 1, 0
    %v3107 = vcvt.s32.f32 %v3106
    %v3108 = vsel %vm3103, 1, 0
    %v3109 = vcvt.s32.f32 %v3108
    %vm3110 = vmand %vm3103, %vm3102
    %v3111 = vsel %vm3110, 1, 0
    %v3112 = vcvt.s32.f32 %v3111
    %v3113 = vsel %vm3101, 1, 0
    %v3114 = vcvt.s32.f32 %v3113
    %v3115 = vsel %vm3102, 1, 0
    %v3116 = vcvt.s32.f32 %v3115
    %vm3117 = vmand %vm3104, %vm3101
    %v3118 = vsel %vm3117, 1, 0
    %v3119 = vcvt.s32.f32 %v3118
    %v3120 = vsel %vm3104, 1, 0
    %v3121 = vcvt.s32.f32 %v3120
    %vm3122 = vmand %vm3104, %vm3102
    %v3123 = vsel %vm3122, 1, 0
    %v3124 = vcvt.s32.f32 %v3123
    %3125 = vst.msk [vmem:[#allocation2 + $0x8] sm:$0xff] %vm118, %v3096
    %3126 = vst.msk [vmem:[#allocation2 + $0x38] sm:$0xff] %vm118, %v3097
    %v3127 = vld [vmem:[#allocation3 + $0x178] sm:$0xff]
    %3129 = vset.pattern.permute.xlu0 16
    %3130 = vperm.xlu0 %3129, %v3127
    %v3131 = vpop.permute.xlu0 %3130
    %v3133 = vadd.f32 %v3131, 0.0
    %v3134 = vld [vmem:[#allocation2] sm:$0xff]
    %v3135 = vld [vmem:[#allocation2 + $0x8] sm:$0xff]
    %v3136 = vld [vmem:[#allocation2 + $0x30] sm:$0xff]
    %v3137 = vld [vmem:[#allocation2 + $0x38] sm:$0xff]
    %3139 = vrot.lane.b32.xlu0 %v3107, 123
    %v3140 = vpop.permute.xlu0 %3139
    %v3142 = vmul.f32 %v3134, %v3140
    %v3143 = vmul.f32 %v3135, %v3140
    %v3144 = vmul.f32 %v3136, %v3140
    %v3145 = vmul.f32 %v3137, %v3140
    %3150 = vrot.lane.b32.xlu0 %v3142, 5
    %v3151 = vpop.permute.xlu0 %3150
    %3152 = vrot.lane.b32.xlu0 %v3143, 5
    %v3153 = vpop.permute.xlu0 %3152
    %3154 = vrot.lane.b32.xlu0 %v3144, 5
    %v3155 = vpop.permute.xlu0 %3154
    %3156 = vrot.lane.b32.xlu0 %v3145, 5
    %v3157 = vpop.permute.xlu0 %3156
    %vm3158 = vcmask 39936
    %v3159 = vsel %vm3158, %v3151, %v3153
    %v3160 = vsel %vm3158, %v3155, %v3157
    %v3163 = vsel %vm607, %v3127, 0
    %3165 = vmatprep.subr.mxu0 0.0
    %3166 = vmatpush1.msra.mxu0 %v3159
    %3167 = vmatprep.subr.mxu0 0.0
    %3168 = vmatpush1.msra.mxu0 %v3160
    %3169 = vmatprep.subr.mxu0 0.0
    %3170 = vmatpush1.msra.mxu0 0.0
    %3171 = vmatprep.subr.mxu0 0.0
    %3172 = vmatpush1.msra.mxu0 0.0
    %3173 = vmatprep.subr.mxu0 0.0
    %3174 = vmatpush1.msra.mxu0 0.0
    %3175 = vmatprep.subr.mxu0 0.0
    %3176 = vmatpush1.msra.mxu0 0.0
    %3177 = vmatprep.subr.mxu0 0.0
    %3178 = vmatpush1.msra.mxu0 0.0
    %3179 = vmatprep.subr.mxu0 0.0
    %3180 = vmatpush1.msra.mxu0 0.0
    %3181 = vmatprep.subr.mxu0 0.0
    %3182 = vmatpush1.msra.mxu0 0.0
    %3183 = vmatprep.subr.mxu0 0.0
    %3184 = vmatpush1.msra.mxu0 0.0
    %3185 = vmatprep.subr.mxu0 0.0
    %3186 = vmatpush1.msra.mxu0 0.0
    %3187 = vmatprep.subr.mxu0 0.0
    %3188 = vmatpush1.msra.mxu0 0.0
    %3189 = vmatprep.subr.mxu0 0.0
    %3190 = vmatpush1.msra.mxu0 0.0
    %3191 = vmatprep.subr.mxu0 0.0
    %3192 = vmatpush1.msra.mxu0 0.0
    %3193 = vmatprep.subr.mxu0 0.0
    %3194 = vmatpush1.msra.mxu0 0.0
    %3195 = vmatprep.subr.mxu0 0.0
    %3196 = vmatpush1.msra.mxu0 0.0
    %3197 = vmatprep.subr.mxu0 0.0
    %3198 = vmatpush1.msra.mxu0 0.0
    %3199 = vmatprep.subr.mxu0 0.0
    %3200 = vmatpush1.msra.mxu0 0.0
    %3201 = vmatprep.subr.mxu0 0.0
    %3202 = vmatpush1.msra.mxu0 0.0
    %3203 = vmatprep.subr.mxu0 0.0
    %3204 = vmatpush1.msra.mxu0 0.0
    %3205 = vmatprep.subr.mxu0 0.0
    %3206 = vmatpush1.msra.mxu0 0.0
    %3207 = vmatprep.subr.mxu0 0.0
    %3208 = vmatpush1.msra.mxu0 0.0
    %3209 = vmatprep.subr.mxu0 0.0
    %3210 = vmatpush1.msra.mxu0 0.0
    %3211 = vmatprep.subr.mxu0 0.0
    %3212 = vmatpush1.msra.mxu0 0.0
    %3213 = vmatprep.subr.mxu0 0.0
    %3214 = vmatpush1.msra.mxu0 0.0
    %3215 = vmatprep.subr.mxu0 0.0
    %3216 = vmatpush1.msra.mxu0 0.0
    %3217 = vmatprep.subr.mxu0 0.0
    %3218 = vmatpush1.msra.mxu0 0.0
    %3219 = vmatprep.subr.mxu0 0.0
    %3220 = vmatpush1.msra.mxu0 0.0
    %3221 = vmatprep.subr.mxu0 0.0
    %3222 = vmatpush1.msra.mxu0 0.0
    %3223 = vmatprep.subr.mxu0 0.0
    %3224 = vmatpush1.msra.mxu0 0.0
    %3225 = vmatprep.subr.mxu0 0.0
    %3226 = vmatpush1.msra.mxu0 0.0
    %3227 = vmatprep.subr.mxu0 0.0
    %3228 = vmatpush1.msra.mxu0 0.0
    %3229 = vmatprep.mubr.f32.mxu0 0.0
    %3230 = vmatmul.mubr.f32.gmra.mrb[0].mxu0 %v3163
    %v3231 = vpop.f32.mrb[0].mxu0
    %v3232 = vadd.f32 0.0, %v3231
    %v3233 = vpop.f32.mrb[0].mxu0
    %3234 = vdwg.mxu0
    %v3235 = vadd.f32 %v3133, %v3232
    %v3236 = vld [vmem:[#allocation3 + $0x180] sm:$0xff]
    %3238 = vrot.lane.b32.xlu0 %v3109, 124
    %v3239 = vpop.permute.xlu0 %3238
    %v3241 = vmul.f32 %v3134, %v3239
    %v3242 = vmul.f32 %v3135, %v3239
    %v3243 = vmul.f32 %v3136, %v3239
    %v3244 = vmul.f32 %v3137, %v3239
    %3249 = vrot.lane.b32.xlu0 %v3241, 4
    %v3250 = vpop.permute.xlu0 %3249
    %3251 = vrot.lane.b32.xlu0 %v3242, 4
    %v3252 = vpop.permute.xlu0 %3251
    %3253 = vrot.lane.b32.xlu0 %v3243, 4
    %v3254 = vpop.permute.xlu0 %3253
    %3255 = vrot.lane.b32.xlu0 %v3244, 4
    %v3256 = vpop.permute.xlu0 %3255
    %v3257 = vsel %vm795, %v3250, %v3252
    %v3258 = vsel %vm795, %v3254, %v3256
    %v3262 = vsel %vm607, %v3236, 0
    %3264 = vmatprep.subr.mxu0 0.0
    %3265 = vmatpush1.msra.mxu0 %v3257
    %3266 = vmatprep.subr.mxu0 0.0
    %3267 = vmatpush1.msra.mxu0 %v3258
    %3268 = vmatprep.subr.mxu0 0.0
    %3269 = vmatpush1.msra.mxu0 0.0
    %3270 = vmatprep.subr.mxu0 0.0
    %3271 = vmatpush1.msra.mxu0 0.0
    %3272 = vmatprep.subr.mxu0 0.0
    %3273 = vmatpush1.msra.mxu0 0.0
    %3274 = vmatprep.subr.mxu0 0.0
    %3275 = vmatpush1.msra.mxu0 0.0
    %3276 = vmatprep.subr.mxu0 0.0
    %3277 = vmatpush1.msra.mxu0 0.0
    %3278 = vmatprep.subr.mxu0 0.0
    %3279 = vmatpush1.msra.mxu0 0.0
    %3280 = vmatprep.subr.mxu0 0.0
    %3281 = vmatpush1.msra.mxu0 0.0
    %3282 = vmatprep.subr.mxu0 0.0
    %3283 = vmatpush1.msra.mxu0 0.0
    %3284 = vmatprep.subr.mxu0 0.0
    %3285 = vmatpush1.msra.mxu0 0.0
    %3286 = vmatprep.subr.mxu0 0.0
    %3287 = vmatpush1.msra.mxu0 0.0
    %3288 = vmatprep.subr.mxu0 0.0
    %3289 = vmatpush1.msra.mxu0 0.0
    %3290 = vmatprep.subr.mxu0 0.0
    %3291 = vmatpush1.msra.mxu0 0.0
    %3292 = vmatprep.subr.mxu0 0.0
    %3293 = vmatpush1.msra.mxu0 0.0
    %3294 = vmatprep.subr.mxu0 0.0
    %3295 = vmatpush1.msra.mxu0 0.0
    %3296 = vmatprep.subr.mxu0 0.0
    %3297 = vmatpush1.msra.mxu0 0.0
    %3298 = vmatprep.subr.mxu0 0.0
    %3299 = vmatpush1.msra.mxu0 0.0
    %3300 = vmatprep.subr.mxu0 0.0
    %3301 = vmatpush1.msra.mxu0 0.0
    %3302 = vmatprep.subr.mxu0 0.0
    %3303 = vmatpush1.msra.mxu0 0.0
    %3304 = vmatprep.subr.mxu0 0.0
    %3305 = vmatpush1.msra.mxu0 0.0
    %3306 = vmatprep.subr.mxu0 0.0
    %3307 = vmatpush1.msra.mxu0 0.0
    %3308 = vmatprep.subr.mxu0 0.0
    %3309 = vmatpush1.msra.mxu0 0.0
    %3310 = vmatprep.subr.mxu0 0.0
    %3311 = vmatpush1.msra.mxu0 0.0
    %3312 = vmatprep.subr.mxu0 0.0
    %3313 = vmatpush1.msra.mxu0 0.0
    %3314 = vmatprep.subr.mxu0 0.0
    %3315 = vmatpush1.msra.mxu0 0.0
    %3316 = vmatprep.subr.mxu0 0.0
    %3317 = vmatpush1.msra.mxu0 0.0
    %3318 = vmatprep.subr.mxu0 0.0
    %3319 = vmatpush1.msra.mxu0 0.0
    %3320 = vmatprep.subr.mxu0 0.0
    %3321 = vmatpush1.msra.mxu0 0.0
    %3322 = vmatprep.subr.mxu0 0.0
    %3323 = vmatpush1.msra.mxu0 0.0
    %3324 = vmatprep.subr.mxu0 0.0
    %3325 = vmatpush1.msra.mxu0 0.0
    %3326 = vmatprep.subr.mxu0 0.0
    %3327 = vmatpush1.msra.mxu0 0.0
    %3328 = vmatprep.mubr.f32.mxu0 0.0
    %3329 = vmatmul.mubr.f32.gmra.mrb[0].mxu0 %v3262
    %v3330 = vpop.f32.mrb[0].mxu0
    %v3331 = vadd.f32 0.0, %v3330
    %v3332 = vpop.f32.mrb[0].mxu0
    %3333 = vdwg.mxu0
    %v3334 = vadd.f32 %v3235, %v3331
    %v3335 = vld [vmem:[#allocation3 + $0x188] sm:$0xff]
    %3337 = vrot.lane.b32.xlu0 %v3112, 125
    %v3338 = vpop.permute.xlu0 %3337
    %v3340 = vmul.f32 %v3134, %v3338
    %v3341 = vmul.f32 %v3135, %v3338
    %v3342 = vmul.f32 %v3136, %v3338
    %v3343 = vmul.f32 %v3137, %v3338
    %3348 = vrot.lane.b32.xlu0 %v3340, 3
    %v3349 = vpop.permute.xlu0 %3348
    %3350 = vrot.lane.b32.xlu0 %v3341, 3
    %v3351 = vpop.permute.xlu0 %3350
    %3352 = vrot.lane.b32.xlu0 %v3342, 3
    %v3353 = vpop.permute.xlu0 %3352
    %3354 = vrot.lane.b32.xlu0 %v3343, 3
    %v3355 = vpop.permute.xlu0 %3354
    %v3356 = vsel %vm954, %v3349, %v3351
    %v3357 = vsel %vm954, %v3353, %v3355
    %v3361 = vsel %vm607, %v3335, 0
    %3363 = vmatprep.subr.mxu0 0.0
    %3364 = vmatpush1.msra.mxu0 %v3356
    %3365 = vmatprep.subr.mxu0 0.0
    %3366 = vmatpush1.msra.mxu0 %v3357
    %3367 = vmatprep.subr.mxu0 0.0
    %3368 = vmatpush1.msra.mxu0 0.0
    %3369 = vmatprep.subr.mxu0 0.0
    %3370 = vmatpush1.msra.mxu0 0.0
    %3371 = vmatprep.subr.mxu0 0.0
    %3372 = vmatpush1.msra.mxu0 0.0
    %3373 = vmatprep.subr.mxu0 0.0
    %3374 = vmatpush1.msra.mxu0 0.0
    %3375 = vmatprep.subr.mxu0 0.0
    %3376 = vmatpush1.msra.mxu0 0.0
    %3377 = vmatprep.subr.mxu0 0.0
    %3378 = vmatpush1.msra.mxu0 0.0
    %3379 = vmatprep.subr.mxu0 0.0
    %3380 = vmatpush1.msra.mxu0 0.0
    %3381 = vmatprep.subr.mxu0 0.0
    %3382 = vmatpush1.msra.mxu0 0.0
    %3383 = vmatprep.subr.mxu0 0.0
    %3384 = vmatpush1.msra.mxu0 0.0
    %3385 = vmatprep.subr.mxu0 0.0
    %3386 = vmatpush1.msra.mxu0 0.0
    %3387 = vmatprep.subr.mxu0 0.0
    %3388 = vmatpush1.msra.mxu0 0.0
    %3389 = vmatprep.subr.mxu0 0.0
    %3390 = vmatpush1.msra.mxu0 0.0
    %3391 = vmatprep.subr.mxu0 0.0
    %3392 = vmatpush1.msra.mxu0 0.0
    %3393 = vmatprep.subr.mxu0 0.0
    %3394 = vmatpush1.msra.mxu0 0.0
    %3395 = vmatprep.subr.mxu0 0.0
    %3396 = vmatpush1.msra.mxu0 0.0
    %3397 = vmatprep.subr.mxu0 0.0
    %3398 = vmatpush1.msra.mxu0 0.0
    %3399 = vmatprep.subr.mxu0 0.0
    %3400 = vmatpush1.msra.mxu0 0.0
    %3401 = vmatprep.subr.mxu0 0.0
    %3402 = vmatpush1.msra.mxu0 0.0
    %3403 = vmatprep.subr.mxu0 0.0
    %3404 = vmatpush1.msra.mxu0 0.0
    %3405 = vmatprep.subr.mxu0 0.0
    %3406 = vmatpush1.msra.mxu0 0.0
    %3407 = vmatprep.subr.mxu0 0.0
    %3408 = vmatpush1.msra.mxu0 0.0
    %3409 = vmatprep.subr.mxu0 0.0
    %3410 = vmatpush1.msra.mxu0 0.0
    %3411 = vmatprep.subr.mxu0 0.0
    %3412 = vmatpush1.msra.mxu0 0.0
    %3413 = vmatprep.subr.mxu0 0.0
    %3414 = vmatpush1.msra.mxu0 0.0
    %3415 = vmatprep.subr.mxu0 0.0
    %3416 = vmatpush1.msra.mxu0 0.0
    %3417 = vmatprep.subr.mxu0 0.0
    %3418 = vmatpush1.msra.mxu0 0.0
    %3419 = vmatprep.subr.mxu0 0.0
    %3420 = vmatpush1.msra.mxu0 0.0
    %3421 = vmatprep.subr.mxu0 0.0
    %3422 = vmatpush1.msra.mxu0 0.0
    %3423 = vmatprep.subr.mxu0 0.0
    %3424 = vmatpush1.msra.mxu0 0.0
    %3425 = vmatprep.subr.mxu0 0.0
    %3426 = vmatpush1.msra.mxu0 0.0
    %3427 = vmatprep.mubr.f32.mxu0 0.0
    %3428 = vmatmul.mubr.f32.gmra.mrb[0].mxu0 %v3361
    %v3429 = vpop.f32.mrb[0].mxu0
    %v3430 = vadd.f32 0.0, %v3429
    %v3431 = vpop.f32.mrb[0].mxu0
    %3432 = vdwg.mxu0
    %v3433 = vadd.f32 %v3334, %v3430
    %v3434 = vld [vmem:[#allocation3 + $0x190] sm:$0xff]
    %3436 = vrot.lane.b32.xlu0 %v3114, 127
    %v3437 = vpop.permute.xlu0 %3436
    %v3439 = vmul.f32 %v3134, %v3437
    %v3440 = vmul.f32 %v3135, %v3437
    %v3441 = vmul.f32 %v3136, %v3437
    %v3442 = vmul.f32 %v3137, %v3437
    %3447 = vrot.lane.b32.xlu0 %v3439, 1
    %v3448 = vpop.permute.xlu0 %3447
    %3449 = vrot.lane.b32.xlu0 %v3440, 1
    %v3450 = vpop.permute.xlu0 %3449
    %3451 = vrot.lane.b32.xlu0 %v3441, 1
    %v3452 = vpop.permute.xlu0 %3451
    %3453 = vrot.lane.b32.xlu0 %v3442, 1
    %v3454 = vpop.permute.xlu0 %3453
    %v3455 = vsel %vm1212, %v3448, %v3450
    %v3456 = vsel %vm1212, %v3452, %v3454
    %v3460 = vsel %vm607, %v3434, 0
    %3462 = vmatprep.subr.mxu0 0.0
    %3463 = vmatpush1.msra.mxu0 %v3455
    %3464 = vmatprep.subr.mxu0 0.0
    %3465 = vmatpush1.msra.mxu0 %v3456
    %3466 = vmatprep.subr.mxu0 0.0
    %3467 = vmatpush1.msra.mxu0 0.0
    %3468 = vmatprep.subr.mxu0 0.0
    %3469 = vmatpush1.msra.mxu0 0.0
    %3470 = vmatprep.subr.mxu0 0.0
    %3471 = vmatpush1.msra.mxu0 0.0
    %3472 = vmatprep.subr.mxu0 0.0
    %3473 = vmatpush1.msra.mxu0 0.0
    %3474 = vmatprep.subr.mxu0 0.0
    %3475 = vmatpush1.msra.mxu0 0.0
    %3476 = vmatprep.subr.mxu0 0.0
    %3477 = vmatpush1.msra.mxu0 0.0
    %3478 = vmatprep.subr.mxu0 0.0
    %3479 = vmatpush1.msra.mxu0 0.0
    %3480 = vmatprep.subr.mxu0 0.0
    %3481 = vmatpush1.msra.mxu0 0.0
    %3482 = vmatprep.subr.mxu0 0.0
    %3483 = vmatpush1.msra.mxu0 0.0
    %3484 = vmatprep.subr.mxu0 0.0
    %3485 = vmatpush1.msra.mxu0 0.0
    %3486 = vmatprep.subr.mxu0 0.0
    %3487 = vmatpush1.msra.mxu0 0.0
    %3488 = vmatprep.subr.mxu0 0.0
    %3489 = vmatpush1.msra.mxu0 0.0
    %3490 = vmatprep.subr.mxu0 0.0
    %3491 = vmatpush1.msra.mxu0 0.0
    %3492 = vmatprep.subr.mxu0 0.0
    %3493 = vmatpush1.msra.mxu0 0.0
    %3494 = vmatprep.subr.mxu0 0.0
    %3495 = vmatpush1.msra.mxu0 0.0
    %3496 = vmatprep.subr.mxu0 0.0
    %3497 = vmatpush1.msra.mxu0 0.0
    %3498 = vmatprep.subr.mxu0 0.0
    %3499 = vmatpush1.msra.mxu0 0.0
    %3500 = vmatprep.subr.mxu0 0.0
    %3501 = vmatpush1.msra.mxu0 0.0
    %3502 = vmatprep.subr.mxu0 0.0
    %3503 = vmatpush1.msra.mxu0 0.0
    %3504 = vmatprep.subr.mxu0 0.0
    %3505 = vmatpush1.msra.mxu0 0.0
    %3506 = vmatprep.subr.mxu0 0.0
    %3507 = vmatpush1.msra.mxu0 0.0
    %3508 = vmatprep.subr.mxu0 0.0
    %3509 = vmatpush1.msra.mxu0 0.0
    %3510 = vmatprep.subr.mxu0 0.0
    %3511 = vmatpush1.msra.mxu0 0.0
    %3512 = vmatprep.subr.mxu0 0.0
    %3513 = vmatpush1.msra.mxu0 0.0
    %3514 = vmatprep.subr.mxu0 0.0
    %3515 = vmatpush1.msra.mxu0 0.0
    %3516 = vmatprep.subr.mxu0 0.0
    %3517 = vmatpush1.msra.mxu0 0.0
    %3518 = vmatprep.subr.mxu0 0.0
    %3519 = vmatpush1.msra.mxu0 0.0
    %3520 = vmatprep.subr.mxu0 0.0
    %3521 = vmatpush1.msra.mxu0 0.0
    %3522 = vmatprep.subr.mxu0 0.0
    %3523 = vmatpush1.msra.mxu0 0.0
    %3524 = vmatprep.subr.mxu0 0.0
    %3525 = vmatpush1.msra.mxu0 0.0
    %3526 = vmatprep.mubr.f32.mxu0 0.0
    %3527 = vmatmul.mubr.f32.gmra.mrb[0].mxu0 %v3460
    %v3528 = vpop.f32.mrb[0].mxu0
    %v3529 = vadd.f32 0.0, %v3528
    %v3530 = vpop.f32.mrb[0].mxu0
    %3531 = vdwg.mxu0
    %v3532 = vadd.f32 %v3433, %v3529
    %v3533 = vld [vmem:[#allocation3 + $0x198] sm:$0xff]
    %v3535 = vsel %vm607, %v3533, 0
    %3537 = vmatprep.subr.mxu0 0.0
    %3538 = vmatpush1.msra.mxu0 %v3135
    %3539 = vmatprep.subr.mxu0 0.0
    %3540 = vmatpush1.msra.mxu0 %v3137
    %3541 = vmatprep.subr.mxu0 0.0
    %3542 = vmatpush1.msra.mxu0 0.0
    %3543 = vmatprep.subr.mxu0 0.0
    %3544 = vmatpush1.msra.mxu0 0.0
    %3545 = vmatprep.subr.mxu0 0.0
    %3546 = vmatpush1.msra.mxu0 0.0
    %3547 = vmatprep.subr.mxu0 0.0
    %3548 = vmatpush1.msra.mxu0 0.0
    %3549 = vmatprep.subr.mxu0 0.0
    %3550 = vmatpush1.msra.mxu0 0.0
    %3551 = vmatprep.subr.mxu0 0.0
    %3552 = vmatpush1.msra.mxu0 0.0
    %3553 = vmatprep.subr.mxu0 0.0
    %3554 = vmatpush1.msra.mxu0 0.0
    %3555 = vmatprep.subr.mxu0 0.0
    %3556 = vmatpush1.msra.mxu0 0.0
    %3557 = vmatprep.subr.mxu0 0.0
    %3558 = vmatpush1.msra.mxu0 0.0
    %3559 = vmatprep.subr.mxu0 0.0
    %3560 = vmatpush1.msra.mxu0 0.0
    %3561 = vmatprep.subr.mxu0 0.0
    %3562 = vmatpush1.msra.mxu0 0.0
    %3563 = vmatprep.subr.mxu0 0.0
    %3564 = vmatpush1.msra.mxu0 0.0
    %3565 = vmatprep.subr.mxu0 0.0
    %3566 = vmatpush1.msra.mxu0 0.0
    %3567 = vmatprep.subr.mxu0 0.0
    %3568 = vmatpush1.msra.mxu0 0.0
    %3569 = vmatprep.subr.mxu0 0.0
    %3570 = vmatpush1.msra.mxu0 0.0
    %3571 = vmatprep.subr.mxu0 0.0
    %3572 = vmatpush1.msra.mxu0 0.0
    %3573 = vmatprep.subr.mxu0 0.0
    %3574 = vmatpush1.msra.mxu0 0.0
    %3575 = vmatprep.subr.mxu0 0.0
    %3576 = vmatpush1.msra.mxu0 0.0
    %3577 = vmatprep.subr.mxu0 0.0
    %3578 = vmatpush1.msra.mxu0 0.0
    %3579 = vmatprep.subr.mxu0 0.0
    %3580 = vmatpush1.msra.mxu0 0.0
    %3581 = vmatprep.subr.mxu0 0.0
    %3582 = vmatpush1.msra.mxu0 0.0
    %3583 = vmatprep.subr.mxu0 0.0
    %3584 = vmatpush1.msra.mxu0 0.0
    %3585 = vmatprep.subr.mxu0 0.0
    %3586 = vmatpush1.msra.mxu0 0.0
    %3587 = vmatprep.subr.mxu0 0.0
    %3588 = vmatpush1.msra.mxu0 0.0
    %3589 = vmatprep.subr.mxu0 0.0
    %3590 = vmatpush1.msra.mxu0 0.0
    %3591 = vmatprep.subr.mxu0 0.0
    %3592 = vmatpush1.msra.mxu0 0.0
    %3593 = vmatprep.subr.mxu0 0.0
    %3594 = vmatpush1.msra.mxu0 0.0
    %3595 = vmatprep.subr.mxu0 0.0
    %3596 = vmatpush1.msra.mxu0 0.0
    %3597 = vmatprep.subr.mxu0 0.0
    %3598 = vmatpush1.msra.mxu0 0.0
    %3599 = vmatprep.subr.mxu0 0.0
    %3600 = vmatpush1.msra.mxu0 0.0
    %3601 = vmatprep.mubr.f32.mxu0 0.0
    %3602 = vmatmul.mubr.f32.gmra.mrb[0].mxu0 %v3535
    %v3603 = vpop.f32.mrb[0].mxu0
    %v3604 = vadd.f32 0.0, %v3603
    %v3605 = vpop.f32.mrb[0].mxu0
    %3606 = vdwg.mxu0
    %v3607 = vadd.f32 %v3532, %v3604
    %v3608 = vld [vmem:[#allocation3 + $0x1a0] sm:$0xff]
    %3610 = vrot.lane.b32.xlu0 %v3116, 1
    %v3611 = vpop.permute.xlu0 %3610
    %v3613 = vmul.f32 %v3135, %v3611
    %v3614 = vmul.f32 %v3137, %v3611
    %3617 = vrot.lane.b32.xlu0 %v3613, 127
    %v3618 = vpop.permute.xlu0 %3617
    %3619 = vrot.lane.b32.xlu0 %v3614, 127
    %v3620 = vpop.permute.xlu0 %3619
    %v3624 = vsel %vm607, %v3608, 0
    %3626 = vmatprep.subr.mxu0 0.0
    %3627 = vmatpush1.msra.mxu0 %v3618
    %3628 = vmatprep.subr.mxu0 0.0
    %3629 = vmatpush1.msra.mxu0 %v3620
    %3630 = vmatprep.subr.mxu0 0.0
    %3631 = vmatpush1.msra.mxu0 0.0
    %3632 = vmatprep.subr.mxu0 0.0
    %3633 = vmatpush1.msra.mxu0 0.0
    %3634 = vmatprep.subr.mxu0 0.0
    %3635 = vmatpush1.msra.mxu0 0.0
    %3636 = vmatprep.subr.mxu0 0.0
    %3637 = vmatpush1.msra.mxu0 0.0
    %3638 = vmatprep.subr.mxu0 0.0
    %3639 = vmatpush1.msra.mxu0 0.0
    %3640 = vmatprep.subr.mxu0 0.0
    %3641 = vmatpush1.msra.mxu0 0.0
    %3642 = vmatprep.subr.mxu0 0.0
    %3643 = vmatpush1.msra.mxu0 0.0
    %3644 = vmatprep.subr.mxu0 0.0
    %3645 = vmatpush1.msra.mxu0 0.0
    %3646 = vmatprep.subr.mxu0 0.0
    %3647 = vmatpush1.msra.mxu0 0.0
    %3648 = vmatprep.subr.mxu0 0.0
    %3649 = vmatpush1.msra.mxu0 0.0
    %3650 = vmatprep.subr.mxu0 0.0
    %3651 = vmatpush1.msra.mxu0 0.0
    %3652 = vmatprep.subr.mxu0 0.0
    %3653 = vmatpush1.msra.mxu0 0.0
    %3654 = vmatprep.subr.mxu0 0.0
    %3655 = vmatpush1.msra.mxu0 0.0
    %3656 = vmatprep.subr.mxu0 0.0
    %3657 = vmatpush1.msra.mxu0 0.0
    %3658 = vmatprep.subr.mxu0 0.0
    %3659 = vmatpush1.msra.mxu0 0.0
    %3660 = vmatprep.subr.mxu0 0.0
    %3661 = vmatpush1.msra.mxu0 0.0
    %3662 = vmatprep.subr.mxu0 0.0
    %3663 = vmatpush1.msra.mxu0 0.0
    %3664 = vmatprep.subr.mxu0 0.0
    %3665 = vmatpush1.msra.mxu0 0.0
    %3666 = vmatprep.subr.mxu0 0.0
    %3667 = vmatpush1.msra.mxu0 0.0
    %3668 = vmatprep.subr.mxu0 0.0
    %3669 = vmatpush1.msra.mxu0 0.0
    %3670 = vmatprep.subr.mxu0 0.0
    %3671 = vmatpush1.msra.mxu0 0.0
    %3672 = vmatprep.subr.mxu0 0.0
    %3673 = vmatpush1.msra.mxu0 0.0
    %3674 = vmatprep.subr.mxu0 0.0
    %3675 = vmatpush1.msra.mxu0 0.0
    %3676 = vmatprep.subr.mxu0 0.0
    %3677 = vmatpush1.msra.mxu0 0.0
    %3678 = vmatprep.subr.mxu0 0.0
    %3679 = vmatpush1.msra.mxu0 0.0
    %3680 = vmatprep.subr.mxu0 0.0
    %3681 = vmatpush1.msra.mxu0 0.0
    %3682 = vmatprep.subr.mxu0 0.0
    %3683 = vmatpush1.msra.mxu0 0.0
    %3684 = vmatprep.subr.mxu0 0.0
    %3685 = vmatpush1.msra.mxu0 0.0
    %3686 = vmatprep.subr.mxu0 0.0
    %3687 = vmatpush1.msra.mxu0 0.0
    %3688 = vmatprep.subr.mxu0 0.0
    %3689 = vmatpush1.msra.mxu0 0.0
    %3690 = vmatprep.mubr.f32.mxu0 0.0
    %3691 = vmatmul.mubr.f32.gmra.mrb[0].mxu0 %v3624
    %v3692 = vpop.f32.mrb[0].mxu0
    %v3693 = vadd.f32 0.0, %v3692
    %v3694 = vpop.f32.mrb[0].mxu0
    %3695 = vdwg.mxu0
    %v3696 = vadd.f32 %v3607, %v3693
    %v3697 = vld [vmem:[#allocation3 + $0x1a8] sm:$0xff]
    %3699 = vrot.lane.b32.xlu0 %v3119, 3
    %v3700 = vpop.permute.xlu0 %3699
    %v3702 = vmul.f32 %v3135, %v3700
    %v3703 = vmul.f32 %v3137, %v3700
    %3706 = vrot.lane.b32.xlu0 %v3702, 125
    %v3707 = vpop.permute.xlu0 %3706
    %3708 = vrot.lane.b32.xlu0 %v3703, 125
    %v3709 = vpop.permute.xlu0 %3708
    %v3713 = vsel %vm607, %v3697, 0
    %3715 = vmatprep.subr.mxu0 0.0
    %3716 = vmatpush1.msra.mxu0 %v3707
    %3717 = vmatprep.subr.mxu0 0.0
    %3718 = vmatpush1.msra.mxu0 %v3709
    %3719 = vmatprep.subr.mxu0 0.0
    %3720 = vmatpush1.msra.mxu0 0.0
    %3721 = vmatprep.subr.mxu0 0.0
    %3722 = vmatpush1.msra.mxu0 0.0
    %3723 = vmatprep.subr.mxu0 0.0
    %3724 = vmatpush1.msra.mxu0 0.0
    %3725 = vmatprep.subr.mxu0 0.0
    %3726 = vmatpush1.msra.mxu0 0.0
    %3727 = vmatprep.subr.mxu0 0.0
    %3728 = vmatpush1.msra.mxu0 0.0
    %3729 = vmatprep.subr.mxu0 0.0
    %3730 = vmatpush1.msra.mxu0 0.0
    %3731 = vmatprep.subr.mxu0 0.0
    %3732 = vmatpush1.msra.mxu0 0.0
    %3733 = vmatprep.subr.mxu0 0.0
    %3734 = vmatpush1.msra.mxu0 0.0
    %3735 = vmatprep.subr.mxu0 0.0
    %3736 = vmatpush1.msra.mxu0 0.0
    %3737 = vmatprep.subr.mxu0 0.0
    %3738 = vmatpush1.msra.mxu0 0.0
    %3739 = vmatprep.subr.mxu0 0.0
    %3740 = vmatpush1.msra.mxu0 0.0
    %3741 = vmatprep.subr.mxu0 0.0
    %3742 = vmatpush1.msra.mxu0 0.0
    %3743 = vmatprep.subr.mxu0 0.0
    %3744 = vmatpush1.msra.mxu0 0.0
    %3745 = vmatprep.subr.mxu0 0.0
    %3746 = vmatpush1.msra.mxu0 0.0
    %3747 = vmatprep.subr.mxu0 0.0
    %3748 = vmatpush1.msra.mxu0 0.0
    %3749 = vmatprep.subr.mxu0 0.0
    %3750 = vmatpush1.msra.mxu0 0.0
    %3751 = vmatprep.subr.mxu0 0.0
    %3752 = vmatpush1.msra.mxu0 0.0
    %3753 = vmatprep.subr.mxu0 0.0
    %3754 = vmatpush1.msra.mxu0 0.0
    %3755 = vmatprep.subr.mxu0 0.0
    %3756 = vmatpush1.msra.mxu0 0.0
    %3757 = vmatprep.subr.mxu0 0.0
    %3758 = vmatpush1.msra.mxu0 0.0
    %3759 = vmatprep.subr.mxu0 0.0
    %3760 = vmatpush1.msra.mxu0 0.0
    %3761 = vmatprep.subr.mxu0 0.0
    %3762 = vmatpush1.msra.mxu0 0.0
    %3763 = vmatprep.subr.mxu0 0.0
    %3764 = vmatpush1.msra.mxu0 0.0
    %3765 = vmatprep.subr.mxu0 0.0
    %3766 = vmatpush1.msra.mxu0 0.0
    %3767 = vmatprep.subr.mxu0 0.0
    %3768 = vmatpush1.msra.mxu0 0.0
    %3769 = vmatprep.subr.mxu0 0.0
    %3770 = vmatpush1.msra.mxu0 0.0
    %3771 = vmatprep.subr.mxu0 0.0
    %3772 = vmatpush1.msra.mxu0 0.0
    %3773 = vmatprep.subr.mxu0 0.0
    %3774 = vmatpush1.msra.mxu0 0.0
    %3775 = vmatprep.subr.mxu0 0.0
    %3776 = vmatpush1.msra.mxu0 0.0
    %3777 = vmatprep.subr.mxu0 0.0
    %3778 = vmatpush1.msra.mxu0 0.0
    %3779 = vmatprep.mubr.f32.mxu0 0.0
    %3780 = vmatmul.mubr.f32.gmra.mrb[0].mxu0 %v3713
    %v3781 = vpop.f32.mrb[0].mxu0
    %v3782 = vadd.f32 0.0, %v3781
    %v3783 = vpop.f32.mrb[0].mxu0
    %3784 = vdwg.mxu0
    %v3785 = vadd.f32 %v3696, %v3782
    %v3786 = vld [vmem:[#allocation3 + $0x1b0] sm:$0xff]
    %3788 = vrot.lane.b32.xlu0 %v3121, 4
    %v3789 = vpop.permute.xlu0 %3788
    %v3791 = vmul.f32 %v3135, %v3789
    %v3792 = vmul.f32 %v3137, %v3789
    %3795 = vrot.lane.b32.xlu0 %v3791, 124
    %v3796 = vpop.permute.xlu0 %3795
    %3797 = vrot.lane.b32.xlu0 %v3792, 124
    %v3798 = vpop.permute.xlu0 %3797
    %v3802 = vsel %vm607, %v3786, 0
    %3804 = vmatprep.subr.mxu0 0.0
    %3805 = vmatpush1.msra.mxu0 %v3796
    %3806 = vmatprep.subr.mxu0 0.0
    %3807 = vmatpush1.msra.mxu0 %v3798
    %3808 = vmatprep.subr.mxu0 0.0
    %3809 = vmatpush1.msra.mxu0 0.0
    %3810 = vmatprep.subr.mxu0 0.0
    %3811 = vmatpush1.msra.mxu0 0.0
    %3812 = vmatprep.subr.mxu0 0.0
    %3813 = vmatpush1.msra.mxu0 0.0
    %3814 = vmatprep.subr.mxu0 0.0
    %3815 = vmatpush1.msra.mxu0 0.0
    %3816 = vmatprep.subr.mxu0 0.0
    %3817 = vmatpush1.msra.mxu0 0.0
    %3818 = vmatprep.subr.mxu0 0.0
    %3819 = vmatpush1.msra.mxu0 0.0
    %3820 = vmatprep.subr.mxu0 0.0
    %3821 = vmatpush1.msra.mxu0 0.0
    %3822 = vmatprep.subr.mxu0 0.0
    %3823 = vmatpush1.msra.mxu0 0.0
    %3824 = vmatprep.subr.mxu0 0.0
    %3825 = vmatpush1.msra.mxu0 0.0
    %3826 = vmatprep.subr.mxu0 0.0
    %3827 = vmatpush1.msra.mxu0 0.0
    %3828 = vmatprep.subr.mxu0 0.0
    %3829 = vmatpush1.msra.mxu0 0.0
    %3830 = vmatprep.subr.mxu0 0.0
    %3831 = vmatpush1.msra.mxu0 0.0
    %3832 = vmatprep.subr.mxu0 0.0
    %3833 = vmatpush1.msra.mxu0 0.0
    %3834 = vmatprep.subr.mxu0 0.0
    %3835 = vmatpush1.msra.mxu0 0.0
    %3836 = vmatprep.subr.mxu0 0.0
    %3837 = vmatpush1.msra.mxu0 0.0
    %3838 = vmatprep.subr.mxu0 0.0
    %3839 = vmatpush1.msra.mxu0 0.0
    %3840 = vmatprep.subr.mxu0 0.0
    %3841 = vmatpush1.msra.mxu0 0.0
    %3842 = vmatprep.subr.mxu0 0.0
    %3843 = vmatpush1.msra.mxu0 0.0
    %3844 = vmatprep.subr.mxu0 0.0
    %3845 = vmatpush1.msra.mxu0 0.0
    %3846 = vmatprep.subr.mxu0 0.0
    %3847 = vmatpush1.msra.mxu0 0.0
    %3848 = vmatprep.subr.mxu0 0.0
    %3849 = vmatpush1.msra.mxu0 0.0
    %3850 = vmatprep.subr.mxu0 0.0
    %3851 = vmatpush1.msra.mxu0 0.0
    %3852 = vmatprep.subr.mxu0 0.0
    %3853 = vmatpush1.msra.mxu0 0.0
    %3854 = vmatprep.subr.mxu0 0.0
    %3855 = vmatpush1.msra.mxu0 0.0
    %3856 = vmatprep.subr.mxu0 0.0
    %3857 = vmatpush1.msra.mxu0 0.0
    %3858 = vmatprep.subr.mxu0 0.0
    %3859 = vmatpush1.msra.mxu0 0.0
    %3860 = vmatprep.subr.mxu0 0.0
    %3861 = vmatpush1.msra.mxu0 0.0
    %3862 = vmatprep.subr.mxu0 0.0
    %3863 = vmatpush1.msra.mxu0 0.0
    %3864 = vmatprep.subr.mxu0 0.0
    %3865 = vmatpush1.msra.mxu0 0.0
    %3866 = vmatprep.subr.mxu0 0.0
    %3867 = vmatpush1.msra.mxu0 0.0
    %3868 = vmatprep.mubr.f32.mxu0 0.0
    %3869 = vmatmul.mubr.f32.gmra.mrb[0].mxu0 %v3802
    %v3870 = vpop.f32.mrb[0].mxu0
    %v3871 = vadd.f32 0.0, %v3870
    %v3872 = vpop.f32.mrb[0].mxu0
    %3873 = vdwg.mxu0
    %v3874 = vadd.f32 %v3785, %v3871
    %v3875 = vld [vmem:[#allocation3 + $0x1b8] sm:$0xff]
    %3877 = vrot.lane.b32.xlu0 %v3124, 5
    %v3878 = vpop.permute.xlu0 %3877
    %v3880 = vmul.f32 %v3135, %v3878
    %v3881 = vmul.f32 %v3137, %v3878
    %3884 = vrot.lane.b32.xlu0 %v3880, 123
    %v3885 = vpop.permute.xlu0 %3884
    %3886 = vrot.lane.b32.xlu0 %v3881, 123
    %v3887 = vpop.permute.xlu0 %3886
    %v3891 = vsel %vm607, %v3875, 0
    %3893 = vmatprep.subr.mxu0 0.0
    %3894 = vmatpush1.msra.mxu0 %v3885
    %3895 = vmatprep.subr.mxu0 0.0
    %3896 = vmatpush1.msra.mxu0 %v3887
    %3897 = vmatprep.subr.mxu0 0.0
    %3898 = vmatpush1.msra.mxu0 0.0
    %3899 = vmatprep.subr.mxu0 0.0
    %3900 = vmatpush1.msra.mxu0 0.0
    %3901 = vmatprep.subr.mxu0 0.0
    %3902 = vmatpush1.msra.mxu0 0.0
    %3903 = vmatprep.subr.mxu0 0.0
    %3904 = vmatpush1.msra.mxu0 0.0
    %3905 = vmatprep.subr.mxu0 0.0
    %3906 = vmatpush1.msra.mxu0 0.0
    %3907 = vmatprep.subr.mxu0 0.0
    %3908 = vmatpush1.msra.mxu0 0.0
    %3909 = vmatprep.subr.mxu0 0.0
    %3910 = vmatpush1.msra.mxu0 0.0
    %3911 = vmatprep.subr.mxu0 0.0
    %3912 = vmatpush1.msra.mxu0 0.0
    %3913 = vmatprep.subr.mxu0 0.0
    %3914 = vmatpush1.msra.mxu0 0.0
    %3915 = vmatprep.subr.mxu0 0.0
    %3916 = vmatpush1.msra.mxu0 0.0
    %3917 = vmatprep.subr.mxu0 0.0
    %3918 = vmatpush1.msra.mxu0 0.0
    %3919 = vmatprep.subr.mxu0 0.0
    %3920 = vmatpush1.msra.mxu0 0.0
    %3921 = vmatprep.subr.mxu0 0.0
    %3922 = vmatpush1.msra.mxu0 0.0
    %3923 = vmatprep.subr.mxu0 0.0
    %3924 = vmatpush1.msra.mxu0 0.0
    %3925 = vmatprep.subr.mxu0 0.0
    %3926 = vmatpush1.msra.mxu0 0.0
    %3927 = vmatprep.subr.mxu0 0.0
    %3928 = vmatpush1.msra.mxu0 0.0
    %3929 = vmatprep.subr.mxu0 0.0
    %3930 = vmatpush1.msra.mxu0 0.0
    %3931 = vmatprep.subr.mxu0 0.0
    %3932 = vmatpush1.msra.mxu0 0.0
    %3933 = vmatprep.subr.mxu0 0.0
    %3934 = vmatpush1.msra.mxu0 0.0
    %3935 = vmatprep.subr.mxu0 0.0
    %3936 = vmatpush1.msra.mxu0 0.0
    %3937 = vmatprep.subr.mxu0 0.0
    %3938 = vmatpush1.msra.mxu0 0.0
    %3939 = vmatprep.subr.mxu0 0.0
    %3940 = vmatpush1.msra.mxu0 0.0
    %3941 = vmatprep.subr.mxu0 0.0
    %3942 = vmatpush1.msra.mxu0 0.0
    %3943 = vmatprep.subr.mxu0 0.0
    %3944 = vmatpush1.msra.mxu0 0.0
    %3945 = vmatprep.subr.mxu0 0.0
    %3946 = vmatpush1.msra.mxu0 0.0
    %3947 = vmatprep.subr.mxu0 0.0
    %3948 = vmatpush1.msra.mxu0 0.0
    %3949 = vmatprep.subr.mxu0 0.0
    %3950 = vmatpush1.msra.mxu0 0.0
    %3951 = vmatprep.subr.mxu0 0.0
    %3952 = vmatpush1.msra.mxu0 0.0
    %3953 = vmatprep.subr.mxu0 0.0
    %3954 = vmatpush1.msra.mxu0 0.0
    %3955 = vmatprep.subr.mxu0 0.0
    %3956 = vmatpush1.msra.mxu0 0.0
    %3957 = vmatprep.mubr.f32.mxu0 0.0
    %3958 = vmatmul.mubr.f32.gmra.mrb[0].mxu0 %v3891
    %v3959 = vpop.f32.mrb[0].mxu0
    %v3960 = vadd.f32 0.0, %v3959
    %v3961 = vpop.f32.mrb[0].mxu0
    %3962 = vdwg.mxu0
    %v3963 = vadd.f32 %v3874, %v3960
    %v3964 = vmax.f32 %v3963, 0.0
    %3965 = vst.msk [vmem:[#allocation2 + $0x8] sm:$0xff] %vm118, %v3964
    %v3966 = vld [vmem:[#allocation3 + $0x298] sm:$0x7]
    %3968 = vset.pattern.permute.xlu0 8
    %3969 = vperm.xlu0 %3968, %v3966
    %v3970 = vpop.permute.xlu0 %3969
    %v3972 = vadd.f32 %v3970, 0.0
    %v3973 = vld [vmem:[#allocation2] sm:$0xff]
    %v3974 = vld [vmem:[#allocation2 + $0x8] sm:$0xff]
    %v3975 = vmul.f32 %v3973, %v3140
    %v3976 = vmul.f32 %v3974, %v3140
    %3979 = vrot.lane.b32.xlu0 %v3975, 5
    %v3980 = vpop.permute.xlu0 %3979
    %3981 = vrot.lane.b32.xlu0 %v3976, 5
    %v3982 = vpop.permute.xlu0 %3981
    %v3983 = vsel %vm3158, %v3980, %v3982
    %v3985 = vsel %vm891, %v3966, 0
    %3987 = vmatprep.subr.mxu0 0.0
    %3988 = vmatpush1.msra.mxu0 %v3983
    %3989 = vmatprep.subr.mxu0 0.0
    %3990 = vmatpush1.msra.mxu0 0.0
    %3991 = vmatprep.subr.mxu0 0.0
    %3992 = vmatpush1.msra.mxu0 0.0
    %3993 = vmatprep.subr.mxu0 0.0
    %3994 = vmatpush1.msra.mxu0 0.0
    %3995 = vmatprep.subr.mxu0 0.0
    %3996 = vmatpush1.msra.mxu0 0.0
    %3997 = vmatprep.subr.mxu0 0.0
    %3998 = vmatpush1.msra.mxu0 0.0
    %3999 = vmatprep.subr.mxu0 0.0
    %4000 = vmatpush1.msra.mxu0 0.0
    %4001 = vmatprep.subr.mxu0 0.0
    %4002 = vmatpush1.msra.mxu0 0.0
    %4003 = vmatprep.subr.mxu0 0.0
    %4004 = vmatpush1.msra.mxu0 0.0
    %4005 = vmatprep.subr.mxu0 0.0
    %4006 = vmatpush1.msra.mxu0 0.0
    %4007 = vmatprep.subr.mxu0 0.0
    %4008 = vmatpush1.msra.mxu0 0.0
    %4009 = vmatprep.subr.mxu0 0.0
    %4010 = vmatpush1.msra.mxu0 0.0
    %4011 = vmatprep.subr.mxu0 0.0
    %4012 = vmatpush1.msra.mxu0 0.0
    %4013 = vmatprep.subr.mxu0 0.0
    %4014 = vmatpush1.msra.mxu0 0.0
    %4015 = vmatprep.subr.mxu0 0.0
    %4016 = vmatpush1.msra.mxu0 0.0
    %4017 = vmatprep.subr.mxu0 0.0
    %4018 = vmatpush1.msra.mxu0 0.0
    %4019 = vmatprep.subr.mxu0 0.0
    %4020 = vmatpush1.msra.mxu0 0.0
    %4021 = vmatprep.subr.mxu0 0.0
    %4022 = vmatpush1.msra.mxu0 0.0
    %4023 = vmatprep.subr.mxu0 0.0
    %4024 = vmatpush1.msra.mxu0 0.0
    %4025 = vmatprep.subr.mxu0 0.0
    %4026 = vmatpush1.msra.mxu0 0.0
    %4027 = vmatprep.subr.mxu0 0.0
    %4028 = vmatpush1.msra.mxu0 0.0
    %4029 = vmatprep.subr.mxu0 0.0
    %4030 = vmatpush1.msra.mxu0 0.0
    %4031 = vmatprep.subr.mxu0 0.0
    %4032 = vmatpush1.msra.mxu0 0.0
    %4033 = vmatprep.subr.mxu0 0.0
    %4034 = vmatpush1.msra.mxu0 0.0
    %4035 = vmatprep.subr.mxu0 0.0
    %4036 = vmatpush1.msra.mxu0 0.0
    %4037 = vmatprep.subr.mxu0 0.0
    %4038 = vmatpush1.msra.mxu0 0.0
    %4039 = vmatprep.subr.mxu0 0.0
    %4040 = vmatpush1.msra.mxu0 0.0
    %4041 = vmatprep.subr.mxu0 0.0
    %4042 = vmatpush1.msra.mxu0 0.0
    %4043 = vmatprep.subr.mxu0 0.0
    %4044 = vmatpush1.msra.mxu0 0.0
    %4045 = vmatprep.subr.mxu0 0.0
    %4046 = vmatpush1.msra.mxu0 0.0
    %4047 = vmatprep.subr.mxu0 0.0
    %4048 = vmatpush1.msra.mxu0 0.0
    %4049 = vmatprep.subr.mxu0 0.0
    %4050 = vmatpush1.msra.mxu0 0.0
    %4051 = vmatprep.mubr.f32.mxu0 0.0
    %4052 = vmatmul.mubr.f32.gmra.mrb[0].mxu0 %v3985
    %v4053 = vpop.f32.mrb[0].mxu0
    %v4054 = vadd.f32 0.0, %v4053
    %v4055 = vpop.f32.mrb[0].mxu0
    %4056 = vdwg.mxu0
    %v4057 = vadd.f32 %v3972, %v4054
    %v4058 = vld [vmem:[#allocation3 + $0x2a0] sm:$0x7]
    %v4059 = vmul.f32 %v3973, %v3239
    %v4060 = vmul.f32 %v3974, %v3239
    %4063 = vrot.lane.b32.xlu0 %v4059, 4
    %v4064 = vpop.permute.xlu0 %4063
    %4065 = vrot.lane.b32.xlu0 %v4060, 4
    %v4066 = vpop.permute.xlu0 %4065
    %v4067 = vsel %vm795, %v4064, %v4066
    %v4070 = vsel %vm891, %v4058, 0
    %4072 = vmatprep.subr.mxu0 0.0
    %4073 = vmatpush1.msra.mxu0 %v4067
    %4074 = vmatprep.subr.mxu0 0.0
    %4075 = vmatpush1.msra.mxu0 0.0
    %4076 = vmatprep.subr.mxu0 0.0
    %4077 = vmatpush1.msra.mxu0 0.0
    %4078 = vmatprep.subr.mxu0 0.0
    %4079 = vmatpush1.msra.mxu0 0.0
    %4080 = vmatprep.subr.mxu0 0.0
    %4081 = vmatpush1.msra.mxu0 0.0
    %4082 = vmatprep.subr.mxu0 0.0
    %4083 = vmatpush1.msra.mxu0 0.0
    %4084 = vmatprep.subr.mxu0 0.0
    %4085 = vmatpush1.msra.mxu0 0.0
    %4086 = vmatprep.subr.mxu0 0.0
    %4087 = vmatpush1.msra.mxu0 0.0
    %4088 = vmatprep.subr.mxu0 0.0
    %4089 = vmatpush1.msra.mxu0 0.0
    %4090 = vmatprep.subr.mxu0 0.0
    %4091 = vmatpush1.msra.mxu0 0.0
    %4092 = vmatprep.subr.mxu0 0.0
    %4093 = vmatpush1.msra.mxu0 0.0
    %4094 = vmatprep.subr.mxu0 0.0
    %4095 = vmatpush1.msra.mxu0 0.0
    %4096 = vmatprep.subr.mxu0 0.0
    %4097 = vmatpush1.msra.mxu0 0.0
    %4098 = vmatprep.subr.mxu0 0.0
    %4099 = vmatpush1.msra.mxu0 0.0
    %4100 = vmatprep.subr.mxu0 0.0
    %4101 = vmatpush1.msra.mxu0 0.0
    %4102 = vmatprep.subr.mxu0 0.0
    %4103 = vmatpush1.msra.mxu0 0.0
    %4104 = vmatprep.subr.mxu0 0.0
    %4105 = vmatpush1.msra.mxu0 0.0
    %4106 = vmatprep.subr.mxu0 0.0
    %4107 = vmatpush1.msra.mxu0 0.0
    %4108 = vmatprep.subr.mxu0 0.0
    %4109 = vmatpush1.msra.mxu0 0.0
    %4110 = vmatprep.subr.mxu0 0.0
    %4111 = vmatpush1.msra.mxu0 0.0
    %4112 = vmatprep.subr.mxu0 0.0
    %4113 = vmatpush1.msra.mxu0 0.0
    %4114 = vmatprep.subr.mxu0 0.0
    %4115 = vmatpush1.msra.mxu0 0.0
    %4116 = vmatprep.subr.mxu0 0.0
    %4117 = vmatpush1.msra.mxu0 0.0
    %4118 = vmatprep.subr.mxu0 0.0
    %4119 = vmatpush1.msra.mxu0 0.0
    %4120 = vmatprep.subr.mxu0 0.0
    %4121 = vmatpush1.msra.mxu0 0.0
    %4122 = vmatprep.subr.mxu0 0.0
    %4123 = vmatpush1.msra.mxu0 0.0
    %4124 = vmatprep.subr.mxu0 0.0
    %4125 = vmatpush1.msra.mxu0 0.0
    %4126 = vmatprep.subr.mxu0 0.0
    %4127 = vmatpush1.msra.mxu0 0.0
    %4128 = vmatprep.subr.mxu0 0.0
    %4129 = vmatpush1.msra.mxu0 0.0
    %4130 = vmatprep.subr.mxu0 0.0
    %4131 = vmatpush1.msra.mxu0 0.0
    %4132 = vmatprep.subr.mxu0 0.0
    %4133 = vmatpush1.msra.mxu0 0.0
    %4134 = vmatprep.subr.mxu0 0.0
    %4135 = vmatpush1.msra.mxu0 0.0
    %4136 = vmatprep.mubr.f32.mxu0 0.0
    %4137 = vmatmul.mubr.f32.gmra.mrb[0].mxu0 %v4070
    %v4138 = vpop.f32.mrb[0].mxu0
    %v4139 = vadd.f32 0.0, %v4138
    %v4140 = vpop.f32.mrb[0].mxu0
    %4141 = vdwg.mxu0
    %v4142 = vadd.f32 %v4057, %v4139
    %v4143 = vld [vmem:[#allocation3 + $0x2a8] sm:$0x7]
    %v4144 = vmul.f32 %v3973, %v3338
    %v4145 = vmul.f32 %v3974, %v3338
    %4148 = vrot.lane.b32.xlu0 %v4144, 3
    %v4149 = vpop.permute.xlu0 %4148
    %4150 = vrot.lane.b32.xlu0 %v4145, 3
    %v4151 = vpop.permute.xlu0 %4150
    %v4152 = vsel %vm954, %v4149, %v4151
    %v4155 = vsel %vm891, %v4143, 0
    %4157 = vmatprep.subr.mxu0 0.0
    %4158 = vmatpush1.msra.mxu0 %v4152
    %4159 = vmatprep.subr.mxu0 0.0
    %4160 = vmatpush1.msra.mxu0 0.0
    %4161 = vmatprep.subr.mxu0 0.0
    %4162 = vmatpush1.msra.mxu0 0.0
    %4163 = vmatprep.subr.mxu0 0.0
    %4164 = vmatpush1.msra.mxu0 0.0
    %4165 = vmatprep.subr.mxu0 0.0
    %4166 = vmatpush1.msra.mxu0 0.0
    %4167 = vmatprep.subr.mxu0 0.0
    %4168 = vmatpush1.msra.mxu0 0.0
    %4169 = vmatprep.subr.mxu0 0.0
    %4170 = vmatpush1.msra.mxu0 0.0
    %4171 = vmatprep.subr.mxu0 0.0
    %4172 = vmatpush1.msra.mxu0 0.0
    %4173 = vmatprep.subr.mxu0 0.0
    %4174 = vmatpush1.msra.mxu0 0.0
    %4175 = vmatprep.subr.mxu0 0.0
    %4176 = vmatpush1.msra.mxu0 0.0
    %4177 = vmatprep.subr.mxu0 0.0
    %4178 = vmatpush1.msra.mxu0 0.0
    %4179 = vmatprep.subr.mxu0 0.0
    %4180 = vmatpush1.msra.mxu0 0.0
    %4181 = vmatprep.subr.mxu0 0.0
    %4182 = vmatpush1.msra.mxu0 0.0
    %4183 = vmatprep.subr.mxu0 0.0
    %4184 = vmatpush1.msra.mxu0 0.0
    %4185 = vmatprep.subr.mxu0 0.0
    %4186 = vmatpush1.msra.mxu0 0.0
    %4187 = vmatprep.subr.mxu0 0.0
    %4188 = vmatpush1.msra.mxu0 0.0
    %4189 = vmatprep.subr.mxu0 0.0
    %4190 = vmatpush1.msra.mxu0 0.0
    %4191 = vmatprep.subr.mxu0 0.0
    %4192 = vmatpush1.msra.mxu0 0.0
    %4193 = vmatprep.subr.mxu0 0.0
    %4194 = vmatpush1.msra.mxu0 0.0
    %4195 = vmatprep.subr.mxu0 0.0
    %4196 = vmatpush1.msra.mxu0 0.0
    %4197 = vmatprep.subr.mxu0 0.0
    %4198 = vmatpush1.msra.mxu0 0.0
    %4199 = vmatprep.subr.mxu0 0.0
    %4200 = vmatpush1.msra.mxu0 0.0
    %4201 = vmatprep.subr.mxu0 0.0
    %4202 = vmatpush1.msra.mxu0 0.0
    %4203 = vmatprep.subr.mxu0 0.0
    %4204 = vmatpush1.msra.mxu0 0.0
    %4205 = vmatprep.subr.mxu0 0.0
    %4206 = vmatpush1.msra.mxu0 0.0
    %4207 = vmatprep.subr.mxu0 0.0
    %4208 = vmatpush1.msra.mxu0 0.0
    %4209 = vmatprep.subr.mxu0 0.0
    %4210 = vmatpush1.msra.mxu0 0.0
    %4211 = vmatprep.subr.mxu0 0.0
    %4212 = vmatpush1.msra.mxu0 0.0
    %4213 = vmatprep.subr.mxu0 0.0
    %4214 = vmatpush1.msra.mxu0 0.0
    %4215 = vmatprep.subr.mxu0 0.0
    %4216 = vmatpush1.msra.mxu0 0.0
    %4217 = vmatprep.subr.mxu0 0.0
    %4218 = vmatpush1.msra.mxu0 0.0
    %4219 = vmatprep.subr.mxu0 0.0
    %4220 = vmatpush1.msra.mxu0 0.0
    %4221 = vmatprep.mubr.f32.mxu0 0.0
    %4222 = vmatmul.mubr.f32.gmra.mrb[0].mxu0 %v4155
    %v4223 = vpop.f32.mrb[0].mxu0
    %v4224 = vadd.f32 0.0, %v4223
    %v4225 = vpop.f32.mrb[0].mxu0
    %4226 = vdwg.mxu0
    %v4227 = vadd.f32 %v4142, %v4224
    %v4228 = vld [vmem:[#allocation3 + $0x2b0] sm:$0x7]
    %v4229 = vmul.f32 %v3973, %v3437
    %v4230 = vmul.f32 %v3974, %v3437
    %4233 = vrot.lane.b32.xlu0 %v4229, 1
    %v4234 = vpop.permute.xlu0 %4233
    %4235 = vrot.lane.b32.xlu0 %v4230, 1
    %v4236 = vpop.permute.xlu0 %4235
    %v4237 = vsel %vm1212, %v4234, %v4236
    %v4240 = vsel %vm891, %v4228, 0
    %4242 = vmatprep.subr.mxu0 0.0
    %4243 = vmatpush1.msra.mxu0 %v4237
    %4244 = vmatprep.subr.mxu0 0.0
    %4245 = vmatpush1.msra.mxu0 0.0
    %4246 = vmatprep.subr.mxu0 0.0
    %4247 = vmatpush1.msra.mxu0 0.0
    %4248 = vmatprep.subr.mxu0 0.0
    %4249 = vmatpush1.msra.mxu0 0.0
    %4250 = vmatprep.subr.mxu0 0.0
    %4251 = vmatpush1.msra.mxu0 0.0
    %4252 = vmatprep.subr.mxu0 0.0
    %4253 = vmatpush1.msra.mxu0 0.0
    %4254 = vmatprep.subr.mxu0 0.0
    %4255 = vmatpush1.msra.mxu0 0.0
    %4256 = vmatprep.subr.mxu0 0.0
    %4257 = vmatpush1.msra.mxu0 0.0
    %4258 = vmatprep.subr.mxu0 0.0
    %4259 = vmatpush1.msra.mxu0 0.0
    %4260 = vmatprep.subr.mxu0 0.0
    %4261 = vmatpush1.msra.mxu0 0.0
    %4262 = vmatprep.subr.mxu0 0.0
    %4263 = vmatpush1.msra.mxu0 0.0
    %4264 = vmatprep.subr.mxu0 0.0
    %4265 = vmatpush1.msra.mxu0 0.0
    %4266 = vmatprep.subr.mxu0 0.0
    %4267 = vmatpush1.msra.mxu0 0.0
    %4268 = vmatprep.subr.mxu0 0.0
    %4269 = vmatpush1.msra.mxu0 0.0
    %4270 = vmatprep.subr.mxu0 0.0
    %4271 = vmatpush1.msra.mxu0 0.0
    %4272 = vmatprep.subr.mxu0 0.0
    %4273 = vmatpush1.msra.mxu0 0.0
    %4274 = vmatprep.subr.mxu0 0.0
    %4275 = vmatpush1.msra.mxu0 0.0
    %4276 = vmatprep.subr.mxu0 0.0
    %4277 = vmatpush1.msra.mxu0 0.0
    %4278 = vmatprep.subr.mxu0 0.0
    %4279 = vmatpush1.msra.mxu0 0.0
    %4280 = vmatprep.subr.mxu0 0.0
    %4281 = vmatpush1.msra.mxu0 0.0
    %4282 = vmatprep.subr.mxu0 0.0
    %4283 = vmatpush1.msra.mxu0 0.0
    %4284 = vmatprep.subr.mxu0 0.0
    %4285 = vmatpush1.msra.mxu0 0.0
    %4286 = vmatprep.subr.mxu0 0.0
    %4287 = vmatpush1.msra.mxu0 0.0
    %4288 = vmatprep.subr.mxu0 0.0
    %4289 = vmatpush1.msra.mxu0 0.0
    %4290 = vmatprep.subr.mxu0 0.0
    %4291 = vmatpush1.msra.mxu0 0.0
    %4292 = vmatprep.subr.mxu0 0.0
    %4293 = vmatpush1.msra.mxu0 0.0
    %4294 = vmatprep.subr.mxu0 0.0
    %4295 = vmatpush1.msra.mxu0 0.0
    %4296 = vmatprep.subr.mxu0 0.0
    %4297 = vmatpush1.msra.mxu0 0.0
    %4298 = vmatprep.subr.mxu0 0.0
    %4299 = vmatpush1.msra.mxu0 0.0
    %4300 = vmatprep.subr.mxu0 0.0
    %4301 = vmatpush1.msra.mxu0 0.0
    %4302 = vmatprep.subr.mxu0 0.0
    %4303 = vmatpush1.msra.mxu0 0.0
    %4304 = vmatprep.subr.mxu0 0.0
    %4305 = vmatpush1.msra.mxu0 0.0
    %4306 = vmatprep.mubr.f32.mxu0 0.0
    %4307 = vmatmul.mubr.f32.gmra.mrb[0].mxu0 %v4240
    %v4308 = vpop.f32.mrb[0].mxu0
    %v4309 = vadd.f32 0.0, %v4308
    %v4310 = vpop.f32.mrb[0].mxu0
    %4311 = vdwg.mxu0
    %v4312 = vadd.f32 %v4227, %v4309
    %v4313 = vld [vmem:[#allocation3 + $0x2b8] sm:$0x7]
    %v4315 = vsel %vm891, %v4313, 0
    %4317 = vmatprep.subr.mxu0 0.0
    %4318 = vmatpush1.msra.mxu0 %v3974
    %4319 = vmatprep.subr.mxu0 0.0
    %4320 = vmatpush1.msra.mxu0 0.0
    %4321 = vmatprep.subr.mxu0 0.0
    %4322 = vmatpush1.msra.mxu0 0.0
    %4323 = vmatprep.subr.mxu0 0.0
    %4324 = vmatpush1.msra.mxu0 0.0
    %4325 = vmatprep.subr.mxu0 0.0
    %4326 = vmatpush1.msra.mxu0 0.0
    %4327 = vmatprep.subr.mxu0 0.0
    %4328 = vmatpush1.msra.mxu0 0.0
    %4329 = vmatprep.subr.mxu0 0.0
    %4330 = vmatpush1.msra.mxu0 0.0
    %4331 = vmatprep.subr.mxu0 0.0
    %4332 = vmatpush1.msra.mxu0 0.0
    %4333 = vmatprep.subr.mxu0 0.0
    %4334 = vmatpush1.msra.mxu0 0.0
    %4335 = vmatprep.subr.mxu0 0.0
    %4336 = vmatpush1.msra.mxu0 0.0
    %4337 = vmatprep.subr.mxu0 0.0
    %4338 = vmatpush1.msra.mxu0 0.0
    %4339 = vmatprep.subr.mxu0 0.0
    %4340 = vmatpush1.msra.mxu0 0.0
    %4341 = vmatprep.subr.mxu0 0.0
    %4342 = vmatpush1.msra.mxu0 0.0
    %4343 = vmatprep.subr.mxu0 0.0
    %4344 = vmatpush1.msra.mxu0 0.0
    %4345 = vmatprep.subr.mxu0 0.0
    %4346 = vmatpush1.msra.mxu0 0.0
    %4347 = vmatprep.subr.mxu0 0.0
    %4348 = vmatpush1.msra.mxu0 0.0
    %4349 = vmatprep.subr.mxu0 0.0
    %4350 = vmatpush1.msra.mxu0 0.0
    %4351 = vmatprep.subr.mxu0 0.0
    %4352 = vmatpush1.msra.mxu0 0.0
    %4353 = vmatprep.subr.mxu0 0.0
    %4354 = vmatpush1.msra.mxu0 0.0
    %4355 = vmatprep.subr.mxu0 0.0
    %4356 = vmatpush1.msra.mxu0 0.0
    %4357 = vmatprep.subr.mxu0 0.0
    %4358 = vmatpush1.msra.mxu0 0.0
    %4359 = vmatprep.subr.mxu0 0.0
    %4360 = vmatpush1.msra.mxu0 0.0
    %4361 = vmatprep.subr.mxu0 0.0
    %4362 = vmatpush1.msra.mxu0 0.0
    %4363 = vmatprep.subr.mxu0 0.0
    %4364 = vmatpush1.msra.mxu0 0.0
    %4365 = vmatprep.subr.mxu0 0.0
    %4366 = vmatpush1.msra.mxu0 0.0
    %4367 = vmatprep.subr.mxu0 0.0
    %4368 = vmatpush1.msra.mxu0 0.0
    %4369 = vmatprep.subr.mxu0 0.0
    %4370 = vmatpush1.msra.mxu0 0.0
    %4371 = vmatprep.subr.mxu0 0.0
    %4372 = vmatpush1.msra.mxu0 0.0
    %4373 = vmatprep.subr.mxu0 0.0
    %4374 = vmatpush1.msra.mxu0 0.0
    %4375 = vmatprep.subr.mxu0 0.0
    %4376 = vmatpush1.msra.mxu0 0.0
    %4377 = vmatprep.subr.mxu0 0.0
    %4378 = vmatpush1.msra.mxu0 0.0
    %4379 = vmatprep.subr.mxu0 0.0
    %4380 = vmatpush1.msra.mxu0 0.0
    %4381 = vmatprep.mubr.f32.mxu0 0.0
    %4382 = vmatmul.mubr.f32.gmra.mrb[0].mxu0 %v4315
    %v4383 = vpop.f32.mrb[0].mxu0
    %v4384 = vadd.f32 0.0, %v4383
    %v4385 = vpop.f32.mrb[0].mxu0
    %4386 = vdwg.mxu0
    %v4387 = vadd.f32 %v4312, %v4384
    %v4388 = vld [vmem:[#allocation3 + $0x2c0] sm:$0x7]
    %v4389 = vmul.f32 %v3974, %v3611
    %4391 = vrot.lane.b32.xlu0 %v4389, 127
    %v4392 = vpop.permute.xlu0 %4391
    %v4395 = vsel %vm891, %v4388, 0
    %4397 = vmatprep.subr.mxu0 0.0
    %4398 = vmatpush1.msra.mxu0 %v4392
    %4399 = vmatprep.subr.mxu0 0.0
    %4400 = vmatpush1.msra.mxu0 0.0
    %4401 = vmatprep.subr.mxu0 0.0
    %4402 = vmatpush1.msra.mxu0 0.0
    %4403 = vmatprep.subr.mxu0 0.0
    %4404 = vmatpush1.msra.mxu0 0.0
    %4405 = vmatprep.subr.mxu0 0.0
    %4406 = vmatpush1.msra.mxu0 0.0
    %4407 = vmatprep.subr.mxu0 0.0
    %4408 = vmatpush1.msra.mxu0 0.0
    %4409 = vmatprep.subr.mxu0 0.0
    %4410 = vmatpush1.msra.mxu0 0.0
    %4411 = vmatprep.subr.mxu0 0.0
    %4412 = vmatpush1.msra.mxu0 0.0
    %4413 = vmatprep.subr.mxu0 0.0
    %4414 = vmatpush1.msra.mxu0 0.0
    %4415 = vmatprep.subr.mxu0 0.0
    %4416 = vmatpush1.msra.mxu0 0.0
    %4417 = vmatprep.subr.mxu0 0.0
    %4418 = vmatpush1.msra.mxu0 0.0
    %4419 = vmatprep.subr.mxu0 0.0
    %4420 = vmatpush1.msra.mxu0 0.0
    %4421 = vmatprep.subr.mxu0 0.0
    %4422 = vmatpush1.msra.mxu0 0.0
    %4423 = vmatprep.subr.mxu0 0.0
    %4424 = vmatpush1.msra.mxu0 0.0
    %4425 = vmatprep.subr.mxu0 0.0
    %4426 = vmatpush1.msra.mxu0 0.0
    %4427 = vmatprep.subr.mxu0 0.0
    %4428 = vmatpush1.msra.mxu0 0.0
    %4429 = vmatprep.subr.mxu0 0.0
    %4430 = vmatpush1.msra.mxu0 0.0
    %4431 = vmatprep.subr.mxu0 0.0
    %4432 = vmatpush1.msra.mxu0 0.0
    %4433 = vmatprep.subr.mxu0 0.0
    %4434 = vmatpush1.msra.mxu0 0.0
    %4435 = vmatprep.subr.mxu0 0.0
    %4436 = vmatpush1.msra.mxu0 0.0
    %4437 = vmatprep.subr.mxu0 0.0
    %4438 = vmatpush1.msra.mxu0 0.0
    %4439 = vmatprep.subr.mxu0 0.0
    %4440 = vmatpush1.msra.mxu0 0.0
    %4441 = vmatprep.subr.mxu0 0.0
    %4442 = vmatpush1.msra.mxu0 0.0
    %4443 = vmatprep.subr.mxu0 0.0
    %4444 = vmatpush1.msra.mxu0 0.0
    %4445 = vmatprep.subr.mxu0 0.0
    %4446 = vmatpush1.msra.mxu0 0.0
    %4447 = vmatprep.subr.mxu0 0.0
    %4448 = vmatpush1.msra.mxu0 0.0
    %4449 = vmatprep.subr.mxu0 0.0
    %4450 = vmatpush1.msra.mxu0 0.0
    %4451 = vmatprep.subr.mxu0 0.0
    %4452 = vmatpush1.msra.mxu0 0.0
    %4453 = vmatprep.subr.mxu0 0.0
    %4454 = vmatpush1.msra.mxu0 0.0
    %4455 = vmatprep.subr.mxu0 0.0
    %4456 = vmatpush1.msra.mxu0 0.0
    %4457 = vmatprep.subr.mxu0 0.0
    %4458 = vmatpush1.msra.mxu0 0.0
    %4459 = vmatprep.subr.mxu0 0.0
    %4460 = vmatpush1.msra.mxu0 0.0
    %4461 = vmatprep.mubr.f32.mxu0 0.0
    %4462 = vmatmul.mubr.f32.gmra.mrb[0].mxu0 %v4395
    %v4463 = vpop.f32.mrb[0].mxu0
    %v4464 = vadd.f32 0.0, %v4463
    %v4465 = vpop.f32.mrb[0].mxu0
    %4466 = vdwg.mxu0
    %v4467 = vadd.f32 %v4387, %v4464
    %v4468 = vld [vmem:[#allocation3 + $0x2c8] sm:$0x7]
    %v4469 = vmul.f32 %v3974, %v3700
    %4471 = vrot.lane.b32.xlu0 %v4469, 125
    %v4472 = vpop.permute.xlu0 %4471
    %v4475 = vsel %vm891, %v4468, 0
    %4477 = vmatprep.subr.mxu0 0.0
    %4478 = vmatpush1.msra.mxu0 %v4472
    %4479 = vmatprep.subr.mxu0 0.0
    %4480 = vmatpush1.msra.mxu0 0.0
    %4481 = vmatprep.subr.mxu0 0.0
    %4482 = vmatpush1.msra.mxu0 0.0
    %4483 = vmatprep.subr.mxu0 0.0
    %4484 = vmatpush1.msra.mxu0 0.0
    %4485 = vmatprep.subr.mxu0 0.0
    %4486 = vmatpush1.msra.mxu0 0.0
    %4487 = vmatprep.subr.mxu0 0.0
    %4488 = vmatpush1.msra.mxu0 0.0
    %4489 = vmatprep.subr.mxu0 0.0
    %4490 = vmatpush1.msra.mxu0 0.0
    %4491 = vmatprep.subr.mxu0 0.0
    %4492 = vmatpush1.msra.mxu0 0.0
    %4493 = vmatprep.subr.mxu0 0.0
    %4494 = vmatpush1.msra.mxu0 0.0
    %4495 = vmatprep.subr.mxu0 0.0
    %4496 = vmatpush1.msra.mxu0 0.0
    %4497 = vmatprep.subr.mxu0 0.0
    %4498 = vmatpush1.msra.mxu0 0.0
    %4499 = vmatprep.subr.mxu0 0.0
    %4500 = vmatpush1.msra.mxu0 0.0
    %4501 = vmatprep.subr.mxu0 0.0
    %4502 = vmatpush1.msra.mxu0 0.0
    %4503 = vmatprep.subr.mxu0 0.0
    %4504 = vmatpush1.msra.mxu0 0.0
    %4505 = vmatprep.subr.mxu0 0.0
    %4506 = vmatpush1.msra.mxu0 0.0
    %4507 = vmatprep.subr.mxu0 0.0
    %4508 = vmatpush1.msra.mxu0 0.0
    %4509 = vmatprep.subr.mxu0 0.0
    %4510 = vmatpush1.msra.mxu0 0.0
    %4511 = vmatprep.subr.mxu0 0.0
    %4512 = vmatpush1.msra.mxu0 0.0
    %4513 = vmatprep.subr.mxu0 0.0
    %4514 = vmatpush1.msra.mxu0 0.0
    %4515 = vmatprep.subr.mxu0 0.0
    %4516 = vmatpush1.msra.mxu0 0.0
    %4517 = vmatprep.subr.mxu0 0.0
    %4518 = vmatpush1.msra.mxu0 0.0
    %4519 = vmatprep.subr.mxu0 0.0
    %4520 = vmatpush1.msra.mxu0 0.0
    %4521 = vmatprep.subr.mxu0 0.0
    %4522 = vmatpush1.msra.mxu0 0.0
    %4523 = vmatprep.subr.mxu0 0.0
    %4524 = vmatpush1.msra.mxu0 0.0
    %4525 = vmatprep.subr.mxu0 0.0
    %4526 = vmatpush1.msra.mxu0 0.0
    %4527 = vmatprep.subr.mxu0 0.0
    %4528 = vmatpush1.msra.mxu0 0.0
    %4529 = vmatprep.subr.mxu0 0.0
    %4530 = vmatpush1.msra.mxu0 0.0
    %4531 = vmatprep.subr.mxu0 0.0
    %4532 = vmatpush1.msra.mxu0 0.0
    %4533 = vmatprep.subr.mxu0 0.0
    %4534 = vmatpush1.msra.mxu0 0.0
    %4535 = vmatprep.subr.mxu0 0.0
    %4536 = vmatpush1.msra.mxu0 0.0
    %4537 = vmatprep.subr.mxu0 0.0
    %4538 = vmatpush1.msra.mxu0 0.0
    %4539 = vmatprep.subr.mxu0 0.0
    %4540 = vmatpush1.msra.mxu0 0.0
    %4541 = vmatprep.mubr.f32.mxu0 0.0
    %4542 = vmatmul.mubr.f32.gmra.mrb[0].mxu0 %v4475
    %v4543 = vpop.f32.mrb[0].mxu0
    %v4544 = vadd.f32 0.0, %v4543
    %v4545 = vpop.f32.mrb[0].mxu0
    %4546 = vdwg.mxu0
    %v4547 = vadd.f32 %v4467, %v4544
    %v4548 = vld [vmem:[#allocation3 + $0x2d0] sm:$0x7]
    %v4549 = vmul.f32 %v3974, %v3789
    %4551 = vrot.lane.b32.xlu0 %v4549, 124
    %v4552 = vpop.permute.xlu0 %4551
    %v4555 = vsel %vm891, %v4548, 0
    %4557 = vmatprep.subr.mxu0 0.0
    %4558 = vmatpush1.msra.mxu0 %v4552
    %4559 = vmatprep.subr.mxu0 0.0
    %4560 = vmatpush1.msra.mxu0 0.0
    %4561 = vmatprep.subr.mxu0 0.0
    %4562 = vmatpush1.msra.mxu0 0.0
    %4563 = vmatprep.subr.mxu0 0.0
    %4564 = vmatpush1.msra.mxu0 0.0
    %4565 = vmatprep.subr.mxu0 0.0
    %4566 = vmatpush1.msra.mxu0 0.0
    %4567 = vmatprep.subr.mxu0 0.0
    %4568 = vmatpush1.msra.mxu0 0.0
    %4569 = vmatprep.subr.mxu0 0.0
    %4570 = vmatpush1.msra.mxu0 0.0
    %4571 = vmatprep.subr.mxu0 0.0
    %4572 = vmatpush1.msra.mxu0 0.0
    %4573 = vmatprep.subr.mxu0 0.0
    %4574 = vmatpush1.msra.mxu0 0.0
    %4575 = vmatprep.subr.mxu0 0.0
    %4576 = vmatpush1.msra.mxu0 0.0
    %4577 = vmatprep.subr.mxu0 0.0
    %4578 = vmatpush1.msra.mxu0 0.0
    %4579 = vmatprep.subr.mxu0 0.0
    %4580 = vmatpush1.msra.mxu0 0.0
    %4581 = vmatprep.subr.mxu0 0.0
    %4582 = vmatpush1.msra.mxu0 0.0
    %4583 = vmatprep.subr.mxu0 0.0
    %4584 = vmatpush1.msra.mxu0 0.0
    %4585 = vmatprep.subr.mxu0 0.0
    %4586 = vmatpush1.msra.mxu0 0.0
    %4587 = vmatprep.subr.mxu0 0.0
    %4588 = vmatpush1.msra.mxu0 0.0
    %4589 = vmatprep.subr.mxu0 0.0
    %4590 = vmatpush1.msra.mxu0 0.0
    %4591 = vmatprep.subr.mxu0 0.0
    %4592 = vmatpush1.msra.mxu0 0.0
    %4593 = vmatprep.subr.mxu0 0.0
    %4594 = vmatpush1.msra.mxu0 0.0
    %4595 = vmatprep.subr.mxu0 0.0
    %4596 = vmatpush1.msra.mxu0 0.0
    %4597 = vmatprep.subr.mxu0 0.0
    %4598 = vmatpush1.msra.mxu0 0.0
    %4599 = vmatprep.subr.mxu0 0.0
    %4600 = vmatpush1.msra.mxu0 0.0
    %4601 = vmatprep.subr.mxu0 0.0
    %4602 = vmatpush1.msra.mxu0 0.0
    %4603 = vmatprep.subr.mxu0 0.0
    %4604 = vmatpush1.msra.mxu0 0.0
    %4605 = vmatprep.subr.mxu0 0.0
    %4606 = vmatpush1.msra.mxu0 0.0
    %4607 = vmatprep.subr.mxu0 0.0
    %4608 = vmatpush1.msra.mxu0 0.0
    %4609 = vmatprep.subr.mxu0 0.0
    %4610 = vmatpush1.msra.mxu0 0.0
    %4611 = vmatprep.subr.mxu0 0.0
    %4612 = vmatpush1.msra.mxu0 0.0
    %4613 = vmatprep.subr.mxu0 0.0
    %4614 = vmatpush1.msra.mxu0 0.0
    %4615 = vmatprep.subr.mxu0 0.0
    %4616 = vmatpush1.msra.mxu0 0.0
    %4617 = vmatprep.subr.mxu0 0.0
    %4618 = vmatpush1.msra.mxu0 0.0
    %4619 = vmatprep.subr.mxu0 0.0
    %4620 = vmatpush1.msra.mxu0 0.0
    %4621 = vmatprep.mubr.f32.mxu0 0.0
    %4622 = vmatmul.mubr.f32.gmra.mrb[0].mxu0 %v4555
    %v4623 = vpop.f32.mrb[0].mxu0
    %v4624 = vadd.f32 0.0, %v4623
    %v4625 = vpop.f32.mrb[0].mxu0
    %4626 = vdwg.mxu0
    %v4627 = vadd.f32 %v4547, %v4624
    %v4628 = vld [vmem:[#allocation3 + $0x2d8] sm:$0x7]
    %v4629 = vmul.f32 %v3974, %v3878
    %4631 = vrot.lane.b32.xlu0 %v4629, 123
    %v4632 = vpop.permute.xlu0 %4631
    %v4635 = vsel %vm891, %v4628, 0
    %4637 = vmatprep.subr.mxu0 0.0
    %4638 = vmatpush1.msra.mxu0 %v4632
    %4639 = vmatprep.subr.mxu0 0.0
    %4640 = vmatpush1.msra.mxu0 0.0
    %4641 = vmatprep.subr.mxu0 0.0
    %4642 = vmatpush1.msra.mxu0 0.0
    %4643 = vmatprep.subr.mxu0 0.0
    %4644 = vmatpush1.msra.mxu0 0.0
    %4645 = vmatprep.subr.mxu0 0.0
    %4646 = vmatpush1.msra.mxu0 0.0
    %4647 = vmatprep.subr.mxu0 0.0
    %4648 = vmatpush1.msra.mxu0 0.0
    %4649 = vmatprep.subr.mxu0 0.0
    %4650 = vmatpush1.msra.mxu0 0.0
    %4651 = vmatprep.subr.mxu0 0.0
    %4652 = vmatpush1.msra.mxu0 0.0
    %4653 = vmatprep.subr.mxu0 0.0
    %4654 = vmatpush1.msra.mxu0 0.0
    %4655 = vmatprep.subr.mxu0 0.0
    %4656 = vmatpush1.msra.mxu0 0.0
    %4657 = vmatprep.subr.mxu0 0.0
    %4658 = vmatpush1.msra.mxu0 0.0
    %4659 = vmatprep.subr.mxu0 0.0
    %4660 = vmatpush1.msra.mxu0 0.0
    %4661 = vmatprep.subr.mxu0 0.0
    %4662 = vmatpush1.msra.mxu0 0.0
    %4663 = vmatprep.subr.mxu0 0.0
    %4664 = vmatpush1.msra.mxu0 0.0
    %4665 = vmatprep.subr.mxu0 0.0
    %4666 = vmatpush1.msra.mxu0 0.0
    %4667 = vmatprep.subr.mxu0 0.0
    %4668 = vmatpush1.msra.mxu0 0.0
    %4669 = vmatprep.subr.mxu0 0.0
    %4670 = vmatpush1.msra.mxu0 0.0
    %4671 = vmatprep.subr.mxu0 0.0
    %4672 = vmatpush1.msra.mxu0 0.0
    %4673 = vmatprep.subr.mxu0 0.0
    %4674 = vmatpush1.msra.mxu0 0.0
    %4675 = vmatprep.subr.mxu0 0.0
    %4676 = vmatpush1.msra.mxu0 0.0
    %4677 = vmatprep.subr.mxu0 0.0
    %4678 = vmatpush1.msra.mxu0 0.0
    %4679 = vmatprep.subr.mxu0 0.0
    %4680 = vmatpush1.msra.mxu0 0.0
    %4681 = vmatprep.subr.mxu0 0.0
    %4682 = vmatpush1.msra.mxu0 0.0
    %4683 = vmatprep.subr.mxu0 0.0
    %4684 = vmatpush1.msra.mxu0 0.0
    %4685 = vmatprep.subr.mxu0 0.0
    %4686 = vmatpush1.msra.mxu0 0.0
    %4687 = vmatprep.subr.mxu0 0.0
    %4688 = vmatpush1.msra.mxu0 0.0
    %4689 = vmatprep.subr.mxu0 0.0
    %4690 = vmatpush1.msra.mxu0 0.0
    %4691 = vmatprep.subr.mxu0 0.0
    %4692 = vmatpush1.msra.mxu0 0.0
    %4693 = vmatprep.subr.mxu0 0.0
    %4694 = vmatpush1.msra.mxu0 0.0
    %4695 = vmatprep.subr.mxu0 0.0
    %4696 = vmatpush1.msra.mxu0 0.0
    %4697 = vmatprep.subr.mxu0 0.0
    %4698 = vmatpush1.msra.mxu0 0.0
    %4699 = vmatprep.subr.mxu0 0.0
    %4700 = vmatpush1.msra.mxu0 0.0
    %4701 = vmatprep.mubr.f32.mxu0 0.0
    %4702 = vmatmul.mubr.f32.gmra.mrb[0].mxu0 %v4635
    %v4703 = vpop.f32.mrb[0].mxu0
    %v4704 = vadd.f32 0.0, %v4703
    %v4705 = vpop.f32.mrb[0].mxu0
    %4706 = vdwg.mxu0
    %v4707 = vadd.f32 %v4627, %v4704
    %v4708 = vadd.f32 %v2919, %v4707
    %v4709 = vld [vmem:[#allocation5 + $0x60] sm:$0xff]
    %v4710 = vld [vmem:[#allocation5 + $0x70] sm:$0xff]
    %v4712 = vsel %vm607, %v4708, 0
    %4714 = vmatprep.subr.mxu0 0.0
    %4715 = vmatpush1.msra.mxu0 %v4709
    %4716 = vmatprep.subr.mxu0 0.0
    %4717 = vmatpush1.msra.mxu0 %v4710
    %4718 = vmatprep.subr.mxu0 0.0
    %4719 = vmatpush1.msra.mxu0 0.0
    %4720 = vmatprep.subr.mxu0 0.0
    %4721 = vmatpush1.msra.mxu0 0.0
    %4722 = vmatprep.subr.mxu0 0.0
    %4723 = vmatpush1.msra.mxu0 0.0
    %4724 = vmatprep.subr.mxu0 0.0
    %4725 = vmatpush1.msra.mxu0 0.0
    %4726 = vmatprep.subr.mxu0 0.0
    %4727 = vmatpush1.msra.mxu0 0.0
    %4728 = vmatprep.subr.mxu0 0.0
    %4729 = vmatpush1.msra.mxu0 0.0
    %4730 = vmatprep.subr.mxu0 0.0
    %4731 = vmatpush1.msra.mxu0 0.0
    %4732 = vmatprep.subr.mxu0 0.0
    %4733 = vmatpush1.msra.mxu0 0.0
    %4734 = vmatprep.subr.mxu0 0.0
    %4735 = vmatpush1.msra.mxu0 0.0
    %4736 = vmatprep.subr.mxu0 0.0
    %4737 = vmatpush1.msra.mxu0 0.0
    %4738 = vmatprep.subr.mxu0 0.0
    %4739 = vmatpush1.msra.mxu0 0.0
    %4740 = vmatprep.subr.mxu0 0.0
    %4741 = vmatpush1.msra.mxu0 0.0
    %4742 = vmatprep.subr.mxu0 0.0
    %4743 = vmatpush1.msra.mxu0 0.0
    %4744 = vmatprep.subr.mxu0 0.0
    %4745 = vmatpush1.msra.mxu0 0.0
    %4746 = vmatprep.subr.mxu0 0.0
    %4747 = vmatpush1.msra.mxu0 0.0
    %4748 = vmatprep.subr.mxu0 0.0
    %4749 = vmatpush1.msra.mxu0 0.0
    %4750 = vmatprep.subr.mxu0 0.0
    %4751 = vmatpush1.msra.mxu0 0.0
    %4752 = vmatprep.subr.mxu0 0.0
    %4753 = vmatpush1.msra.mxu0 0.0
    %4754 = vmatprep.subr.mxu0 0.0
    %4755 = vmatpush1.msra.mxu0 0.0
    %4756 = vmatprep.subr.mxu0 0.0
    %4757 = vmatpush1.msra.mxu0 0.0
    %4758 = vmatprep.subr.mxu0 0.0
    %4759 = vmatpush1.msra.mxu0 0.0
    %4760 = vmatprep.subr.mxu0 0.0
    %4761 = vmatpush1.msra.mxu0 0.0
    %4762 = vmatprep.subr.mxu0 0.0
    %4763 = vmatpush1.msra.mxu0 0.0
    %4764 = vmatprep.subr.mxu0 0.0
    %4765 = vmatpush1.msra.mxu0 0.0
    %4766 = vmatprep.subr.mxu0 0.0
    %4767 = vmatpush1.msra.mxu0 0.0
    %4768 = vmatprep.subr.mxu0 0.0
    %4769 = vmatpush1.msra.mxu0 0.0
    %4770 = vmatprep.subr.mxu0 0.0
    %4771 = vmatpush1.msra.mxu0 0.0
    %4772 = vmatprep.subr.mxu0 0.0
    %4773 = vmatpush1.msra.mxu0 0.0
    %4774 = vmatprep.subr.mxu0 0.0
    %4775 = vmatpush1.msra.mxu0 0.0
    %4776 = vmatprep.subr.mxu0 0.0
    %4777 = vmatpush1.msra.mxu0 0.0
    %4778 = vmatprep.mubr.f32.mxu0 0.0
    %4779 = vmatmul.mubr.f32.gmra.mrb[0].mxu0 %v4712
    %v4780 = vpop.f32.mrb[0].mxu0
    %v4781 = vadd.f32 0.0, %v4780
    %v4782 = vpop.f32.mrb[0].mxu0
    %4783 = vdwg.mxu0
    %4784 = vrot.lane.b32.xlu0 %v4708, 112
    %v4785 = vpop.permute.xlu0 %4784
    %v4786 = vsel %vm607, %v4785, 0
    %4788 = vmatprep.subr.mxu0 0.0
    %4789 = vmatpush1.msra.mxu0 %v4709
    %4790 = vmatprep.subr.mxu0 0.0
    %4791 = vmatpush1.msra.mxu0 %v4710
    %4792 = vmatprep.subr.mxu0 0.0
    %4793 = vmatpush1.msra.mxu0 0.0
    %4794 = vmatprep.subr.mxu0 0.0
    %4795 = vmatpush1.msra.mxu0 0.0
    %4796 = vmatprep.subr.mxu0 0.0
    %4797 = vmatpush1.msra.mxu0 0.0
    %4798 = vmatprep.subr.mxu0 0.0
    %4799 = vmatpush1.msra.mxu0 0.0
    %4800 = vmatprep.subr.mxu0 0.0
    %4801 = vmatpush1.msra.mxu0 0.0
    %4802 = vmatprep.subr.mxu0 0.0
    %4803 = vmatpush1.msra.mxu0 0.0
    %4804 = vmatprep.subr.mxu0 0.0
    %4805 = vmatpush1.msra.mxu0 0.0
    %4806 = vmatprep.subr.mxu0 0.0
    %4807 = vmatpush1.msra.mxu0 0.0
    %4808 = vmatprep.subr.mxu0 0.0
    %4809 = vmatpush1.msra.mxu0 0.0
    %4810 = vmatprep.subr.mxu0 0.0
    %4811 = vmatpush1.msra.mxu0 0.0
    %4812 = vmatprep.subr.mxu0 0.0
    %4813 = vmatpush1.msra.mxu0 0.0
    %4814 = vmatprep.subr.mxu0 0.0
    %4815 = vmatpush1.msra.mxu0 0.0
    %4816 = vmatprep.subr.mxu0 0.0
    %4817 = vmatpush1.msra.mxu0 0.0
    %4818 = vmatprep.subr.mxu0 0.0
    %4819 = vmatpush1.msra.mxu0 0.0
    %4820 = vmatprep.subr.mxu0 0.0
    %4821 = vmatpush1.msra.mxu0 0.0
    %4822 = vmatprep.subr.mxu0 0.0
    %4823 = vmatpush1.msra.mxu0 0.0
    %4824 = vmatprep.subr.mxu0 0.0
    %4825 = vmatpush1.msra.mxu0 0.0
    %4826 = vmatprep.subr.mxu0 0.0
    %4827 = vmatpush1.msra.mxu0 0.0
    %4828 = vmatprep.subr.mxu0 0.0
    %4829 = vmatpush1.msra.mxu0 0.0
    %4830 = vmatprep.subr.mxu0 0.0
    %4831 = vmatpush1.msra.mxu0 0.0
    %4832 = vmatprep.subr.mxu0 0.0
    %4833 = vmatpush1.msra.mxu0 0.0
    %4834 = vmatprep.subr.mxu0 0.0
    %4835 = vmatpush1.msra.mxu0 0.0
    %4836 = vmatprep.subr.mxu0 0.0
    %4837 = vmatpush1.msra.mxu0 0.0
    %4838 = vmatprep.subr.mxu0 0.0
    %4839 = vmatpush1.msra.mxu0 0.0
    %4840 = vmatprep.subr.mxu0 0.0
    %4841 = vmatpush1.msra.mxu0 0.0
    %4842 = vmatprep.subr.mxu0 0.0
    %4843 = vmatpush1.msra.mxu0 0.0
    %4844 = vmatprep.subr.mxu0 0.0
    %4845 = vmatpush1.msra.mxu0 0.0
    %4846 = vmatprep.subr.mxu0 0.0
    %4847 = vmatpush1.msra.mxu0 0.0
    %4848 = vmatprep.subr.mxu0 0.0
    %4849 = vmatpush1.msra.mxu0 0.0
    %4850 = vmatprep.subr.mxu0 0.0
    %4851 = vmatpush1.msra.mxu0 0.0
    %4852 = vmatprep.mubr.f32.mxu0 0.0
    %4853 = vmatmul.mubr.f32.gmra.mrb[0].mxu0 %v4786
    %v4854 = vpop.f32.mrb[0].mxu0
    %v4855 = vadd.f32 0.0, %v4854
    %v4856 = vpop.f32.mrb[0].mxu0
    %4857 = vdwg.mxu0
    %4859 = vrot.lane.b32.xlu0 %v4855, 64
    %v4860 = vpop.permute.xlu0 %4859
    %v4862 = vsel %vm296, %v4781, %v4860
    %v4863 = vld [vmem:[#allocation5 + $0x40] sm:$0xff]
    %v4864 = vld [vmem:[#allocation5 + $0x50] sm:$0xff]
    %v4866 = vsel %vm607, %v3964, 0
    %4868 = vmatprep.subr.mxu0 0.0
    %4869 = vmatpush1.msra.mxu0 %v4863
    %4870 = vmatprep.subr.mxu0 0.0
    %4871 = vmatpush1.msra.mxu0 %v4864
    %4872 = vmatprep.subr.mxu0 0.0
    %4873 = vmatpush1.msra.mxu0 0.0
    %4874 = vmatprep.subr.mxu0 0.0
    %4875 = vmatpush1.msra.mxu0 0.0
    %4876 = vmatprep.subr.mxu0 0.0
    %4877 = vmatpush1.msra.mxu0 0.0
    %4878 = vmatprep.subr.mxu0 0.0
    %4879 = vmatpush1.msra.mxu0 0.0
    %4880 = vmatprep.subr.mxu0 0.0
    %4881 = vmatpush1.msra.mxu0 0.0
    %4882 = vmatprep.subr.mxu0 0.0
    %4883 = vmatpush1.msra.mxu0 0.0
    %4884 = vmatprep.subr.mxu0 0.0
    %4885 = vmatpush1.msra.mxu0 0.0
    %4886 = vmatprep.subr.mxu0 0.0
    %4887 = vmatpush1.msra.mxu0 0.0
    %4888 = vmatprep.subr.mxu0 0.0
    %4889 = vmatpush1.msra.mxu0 0.0
    %4890 = vmatprep.subr.mxu0 0.0
    %4891 = vmatpush1.msra.mxu0 0.0
    %4892 = vmatprep.subr.mxu0 0.0
    %4893 = vmatpush1.msra.mxu0 0.0
    %4894 = vmatprep.subr.mxu0 0.0
    %4895 = vmatpush1.msra.mxu0 0.0
    %4896 = vmatprep.subr.mxu0 0.0
    %4897 = vmatpush1.msra.mxu0 0.0
    %4898 = vmatprep.subr.mxu0 0.0
    %4899 = vmatpush1.msra.mxu0 0.0
    %4900 = vmatprep.subr.mxu0 0.0
    %4901 = vmatpush1.msra.mxu0 0.0
    %4902 = vmatprep.subr.mxu0 0.0
    %4903 = vmatpush1.msra.mxu0 0.0
    %4904 = vmatprep.subr.mxu0 0.0
    %4905 = vmatpush1.msra.mxu0 0.0
    %4906 = vmatprep.subr.mxu0 0.0
    %4907 = vmatpush1.msra.mxu0 0.0
    %4908 = vmatprep.subr.mxu0 0.0
    %4909 = vmatpush1.msra.mxu0 0.0
    %4910 = vmatprep.subr.mxu0 0.0
    %4911 = vmatpush1.msra.mxu0 0.0
    %4912 = vmatprep.subr.mxu0 0.0
    %4913 = vmatpush1.msra.mxu0 0.0
    %4914 = vmatprep.subr.mxu0 0.0
    %4915 = vmatpush1.msra.mxu0 0.0
    %4916 = vmatprep.subr.mxu0 0.0
    %4917 = vmatpush1.msra.mxu0 0.0
    %4918 = vmatprep.subr.mxu0 0.0
    %4919 = vmatpush1.msra.mxu0 0.0
    %4920 = vmatprep.subr.mxu0 0.0
    %4921 = vmatpush1.msra.mxu0 0.0
    %4922 = vmatprep.subr.mxu0 0.0
    %4923 = vmatpush1.msra.mxu0 0.0
    %4924 = vmatprep.subr.mxu0 0.0
    %4925 = vmatpush1.msra.mxu0 0.0
    %4926 = vmatprep.subr.mxu0 0.0
    %4927 = vmatpush1.msra.mxu0 0.0
    %4928 = vmatprep.subr.mxu0 0.0
    %4929 = vmatpush1.msra.mxu0 0.0
    %4930 = vmatprep.subr.mxu0 0.0
    %4931 = vmatpush1.msra.mxu0 0.0
    %4932 = vmatprep.mubr.f32.mxu0 0.0
    %4933 = vmatmul.mubr.f32.gmra.mrb[0].mxu0 %v4866
    %v4934 = vpop.f32.mrb[0].mxu0
    %v4935 = vadd.f32 0.0, %v4934
    %v4936 = vpop.f32.mrb[0].mxu0
    %4937 = vdwg.mxu0
    %4938 = vrot.lane.b32.xlu0 %v3964, 112
    %v4939 = vpop.permute.xlu0 %4938
    %v4940 = vsel %vm607, %v4939, 0
    %4942 = vmatprep.subr.mxu0 0.0
    %4943 = vmatpush1.msra.mxu0 %v4863
    %4944 = vmatprep.subr.mxu0 0.0
    %4945 = vmatpush1.msra.mxu0 %v4864
    %4946 = vmatprep.subr.mxu0 0.0
    %4947 = vmatpush1.msra.mxu0 0.0
    %4948 = vmatprep.subr.mxu0 0.0
    %4949 = vmatpush1.msra.mxu0 0.0
    %4950 = vmatprep.subr.mxu0 0.0
    %4951 = vmatpush1.msra.mxu0 0.0
    %4952 = vmatprep.subr.mxu0 0.0
    %4953 = vmatpush1.msra.mxu0 0.0
    %4954 = vmatprep.subr.mxu0 0.0
    %4955 = vmatpush1.msra.mxu0 0.0
    %4956 = vmatprep.subr.mxu0 0.0
    %4957 = vmatpush1.msra.mxu0 0.0
    %4958 = vmatprep.subr.mxu0 0.0
    %4959 = vmatpush1.msra.mxu0 0.0
    %4960 = vmatprep.subr.mxu0 0.0
    %4961 = vmatpush1.msra.mxu0 0.0
    %4962 = vmatprep.subr.mxu0 0.0
    %4963 = vmatpush1.msra.mxu0 0.0
    %4964 = vmatprep.subr.mxu0 0.0
    %4965 = vmatpush1.msra.mxu0 0.0
    %4966 = vmatprep.subr.mxu0 0.0
    %4967 = vmatpush1.msra.mxu0 0.0
    %4968 = vmatprep.subr.mxu0 0.0
    %4969 = vmatpush1.msra.mxu0 0.0
    %4970 = vmatprep.subr.mxu0 0.0
    %4971 = vmatpush1.msra.mxu0 0.0
    %4972 = vmatprep.subr.mxu0 0.0
    %4973 = vmatpush1.msra.mxu0 0.0
    %4974 = vmatprep.subr.mxu0 0.0
    %4975 = vmatpush1.msra.mxu0 0.0
    %4976 = vmatprep.subr.mxu0 0.0
    %4977 = vmatpush1.msra.mxu0 0.0
    %4978 = vmatprep.subr.mxu0 0.0
    %4979 = vmatpush1.msra.mxu0 0.0
    %4980 = vmatprep.subr.mxu0 0.0
    %4981 = vmatpush1.msra.mxu0 0.0
    %4982 = vmatprep.subr.mxu0 0.0
    %4983 = vmatpush1.msra.mxu0 0.0
    %4984 = vmatprep.subr.mxu0 0.0
    %4985 = vmatpush1.msra.mxu0 0.0
    %4986 = vmatprep.subr.mxu0 0.0
    %4987 = vmatpush1.msra.mxu0 0.0
    %4988 = vmatprep.subr.mxu0 0.0
    %4989 = vmatpush1.msra.mxu0 0.0
    %4990 = vmatprep.subr.mxu0 0.0
    %4991 = vmatpush1.msra.mxu0 0.0
    %4992 = vmatprep.subr.mxu0 0.0
    %4993 = vmatpush1.msra.mxu0 0.0
    %4994 = vmatprep.subr.mxu0 0.0
    %4995 = vmatpush1.msra.mxu0 0.0
    %4996 = vmatprep.subr.mxu0 0.0
    %4997 = vmatpush1.msra.mxu0 0.0
    %4998 = vmatprep.subr.mxu0 0.0
    %4999 = vmatpush1.msra.mxu0 0.0
    %5000 = vmatprep.subr.mxu0 0.0
    %5001 = vmatpush1.msra.mxu0 0.0
    %5002 = vmatprep.subr.mxu0 0.0
    %5003 = vmatpush1.msra.mxu0 0.0
    %5004 = vmatprep.subr.mxu0 0.0
    %5005 = vmatpush1.msra.mxu0 0.0
    %5006 = vmatprep.mubr.f32.mxu0 0.0
    %5007 = vmatmul.mubr.f32.gmra.mrb[0].mxu0 %v4940
    %v5008 = vpop.f32.mrb[0].mxu0
    %v5009 = vadd.f32 0.0, %v5008
    %v5010 = vpop.f32.mrb[0].mxu0
    %5011 = vdwg.mxu0
    %5013 = vrot.lane.b32.xlu0 %v5009, 64
    %v5014 = vpop.permute.xlu0 %5013
    %v5016 = vsel %vm296, %v4935, %v5014
    %v5017 = vand.u32 %v863, 7
    %v5018 = vshra.s32 %v863, 3
    %v5019 = vand.u32 %v5018, 7
    %vm5020 = vcmp.ge.s32.totalorder %v5017, 1
    %vm5021 = vcmp.le.s32.totalorder %v5017, 6
    %vm5022 = vcmp.ge.s32.totalorder %v5019, 1
    %vm5023 = vcmp.le.s32.totalorder %v5019, 6
    %vm5024 = vmand %vm5022, %vm5020
    %v5025 = vsel %vm5024, 1, 0
    %v5026 = vcvt.s32.f32 %v5025
    %v5027 = vsel %vm5022, 1, 0
    %v5028 = vcvt.s32.f32 %v5027
    %vm5029 = vmand %vm5022, %vm5021
    %v5030 = vsel %vm5029, 1, 0
    %v5031 = vcvt.s32.f32 %v5030
    %v5032 = vsel %vm5020, 1, 0
    %v5033 = vcvt.s32.f32 %v5032
    %v5034 = vsel %vm5021, 1, 0
    %v5035 = vcvt.s32.f32 %v5034
    %vm5036 = vmand %vm5023, %vm5020
    %v5037 = vsel %vm5036, 1, 0
    %v5038 = vcvt.s32.f32 %v5037
    %v5039 = vsel %vm5023, 1, 0
    %v5040 = vcvt.s32.f32 %v5039
    %vm5041 = vmand %vm5023, %vm5021
    %v5042 = vsel %vm5041, 1, 0
    %v5043 = vcvt.s32.f32 %v5042
    %5044 = vst [vmem:[#allocation2 + $0x8] sm:$0xff] %v5016
    %v5045 = vld [vmem:[#allocation3 + $0x1c0] sm:$0xff]
    %5047 = vset.pattern.permute.xlu0 8
    %5048 = vperm.xlu0 %5047, %v5045
    %v5049 = vpop.permute.xlu0 %5048
    %v5051 = vadd.f32 %v5049, 0.0
    %v5052 = vld [vmem:[#allocation2] sm:$0xff]
    %v5053 = vld [vmem:[#allocation2 + $0x8] sm:$0xff]
    %5055 = vrot.lane.b32.xlu0 %v5026, 119
    %v5056 = vpop.permute.xlu0 %5055
    %v5058 = vmul.f32 %v5052, %v5056
    %v5059 = vmul.f32 %v5053, %v5056
    %5062 = vrot.lane.b32.xlu0 %v5058, 9
    %v5063 = vpop.permute.xlu0 %5062
    %5064 = vrot.lane.b32.xlu0 %v5059, 9
    %v5065 = vpop.permute.xlu0 %5064
    %vm5066 = vcmask 72704
    %v5067 = vsel %vm5066, %v5063, %v5065
    %v5069 = vsel %vm891, %v5045, 0
    %5071 = vmatprep.subr.mxu0 0.0
    %5072 = vmatpush1.msra.mxu0 %v5067
    %5073 = vmatprep.subr.mxu0 0.0
    %5074 = vmatpush1.msra.mxu0 0.0
    %5075 = vmatprep.subr.mxu0 0.0
    %5076 = vmatpush1.msra.mxu0 0.0
    %5077 = vmatprep.subr.mxu0 0.0
    %5078 = vmatpush1.msra.mxu0 0.0
    %5079 = vmatprep.subr.mxu0 0.0
    %5080 = vmatpush1.msra.mxu0 0.0
    %5081 = vmatprep.subr.mxu0 0.0
    %5082 = vmatpush1.msra.mxu0 0.0
    %5083 = vmatprep.subr.mxu0 0.0
    %5084 = vmatpush1.msra.mxu0 0.0
    %5085 = vmatprep.subr.mxu0 0.0
    %5086 = vmatpush1.msra.mxu0 0.0
    %5087 = vmatprep.subr.mxu0 0.0
    %5088 = vmatpush1.msra.mxu0 0.0
    %5089 = vmatprep.subr.mxu0 0.0
    %5090 = vmatpush1.msra.mxu0 0.0
    %5091 = vmatprep.subr.mxu0 0.0
    %5092 = vmatpush1.msra.mxu0 0.0
    %5093 = vmatprep.subr.mxu0 0.0
    %5094 = vmatpush1.msra.mxu0 0.0
    %5095 = vmatprep.subr.mxu0 0.0
    %5096 = vmatpush1.msra.mxu0 0.0
    %5097 = vmatprep.subr.mxu0 0.0
    %5098 = vmatpush1.msra.mxu0 0.0
    %5099 = vmatprep.subr.mxu0 0.0
    %5100 = vmatpush1.msra.mxu0 0.0
    %5101 = vmatprep.subr.mxu0 0.0
    %5102 = vmatpush1.msra.mxu0 0.0
    %5103 = vmatprep.subr.mxu0 0.0
    %5104 = vmatpush1.msra.mxu0 0.0
    %5105 = vmatprep.subr.mxu0 0.0
    %5106 = vmatpush1.msra.mxu0 0.0
    %5107 = vmatprep.subr.mxu0 0.0
    %5108 = vmatpush1.msra.mxu0 0.0
    %5109 = vmatprep.subr.mxu0 0.0
    %5110 = vmatpush1.msra.mxu0 0.0
    %5111 = vmatprep.subr.mxu0 0.0
    %5112 = vmatpush1.msra.mxu0 0.0
    %5113 = vmatprep.subr.mxu0 0.0
    %5114 = vmatpush1.msra.mxu0 0.0
    %5115 = vmatprep.subr.mxu0 0.0
    %5116 = vmatpush1.msra.mxu0 0.0
    %5117 = vmatprep.subr.mxu0 0.0
    %5118 = vmatpush1.msra.mxu0 0.0
    %5119 = vmatprep.subr.mxu0 0.0
    %5120 = vmatpush1.msra.mxu0 0.0
    %5121 = vmatprep.subr.mxu0 0.0
    %5122 = vmatpush1.msra.mxu0 0.0
    %5123 = vmatprep.subr.mxu0 0.0
    %5124 = vmatpush1.msra.mxu0 0.0
    %5125 = vmatprep.subr.mxu0 0.0
    %5126 = vmatpush1.msra.mxu0 0.0
    %5127 = vmatprep.subr.mxu0 0.0
    %5128 = vmatpush1.msra.mxu0 0.0
    %5129 = vmatprep.subr.mxu0 0.0
    %5130 = vmatpush1.msra.mxu0 0.0
    %5131 = vmatprep.subr.mxu0 0.0
    %5132 = vmatpush1.msra.mxu0 0.0
    %5133 = vmatprep.subr.mxu0 0.0
    %5134 = vmatpush1.msra.mxu0 0.0
    %5135 = vmatprep.mubr.f32.mxu0 0.0
    %5136 = vmatmul.mubr.f32.gmra.mrb[0].mxu0 %v5069
    %v5137 = vpop.f32.mrb[0].mxu0
    %v5138 = vadd.f32 0.0, %v5137
    %v5139 = vpop.f32.mrb[0].mxu0
    %5140 = vdwg.mxu0
    %v5141 = vadd.f32 %v5051, %v5138
    %v5142 = vld [vmem:[#allocation3 + $0x1c8] sm:$0xff]
    %5144 = vrot.lane.b32.xlu0 %v5028, 120
    %v5145 = vpop.permute.xlu0 %5144
    %v5147 = vmul.f32 %v5052, %v5145
    %v5148 = vmul.f32 %v5053, %v5145
    %5151 = vrot.lane.b32.xlu0 %v5147, 8
    %v5152 = vpop.permute.xlu0 %5151
    %5153 = vrot.lane.b32.xlu0 %v5148, 8
    %v5154 = vpop.permute.xlu0 %5153
    %v5155 = vsel %vm891, %v5152, %v5154
    %v5158 = vsel %vm891, %v5142, 0
    %5160 = vmatprep.subr.mxu0 0.0
    %5161 = vmatpush1.msra.mxu0 %v5155
    %5162 = vmatprep.subr.mxu0 0.0
    %5163 = vmatpush1.msra.mxu0 0.0
    %5164 = vmatprep.subr.mxu0 0.0
    %5165 = vmatpush1.msra.mxu0 0.0
    %5166 = vmatprep.subr.mxu0 0.0
    %5167 = vmatpush1.msra.mxu0 0.0
    %5168 = vmatprep.subr.mxu0 0.0
    %5169 = vmatpush1.msra.mxu0 0.0
    %5170 = vmatprep.subr.mxu0 0.0
    %5171 = vmatpush1.msra.mxu0 0.0
    %5172 = vmatprep.subr.mxu0 0.0
    %5173 = vmatpush1.msra.mxu0 0.0
    %5174 = vmatprep.subr.mxu0 0.0
    %5175 = vmatpush1.msra.mxu0 0.0
    %5176 = vmatprep.subr.mxu0 0.0
    %5177 = vmatpush1.msra.mxu0 0.0
    %5178 = vmatprep.subr.mxu0 0.0
    %5179 = vmatpush1.msra.mxu0 0.0
    %5180 = vmatprep.subr.mxu0 0.0
    %5181 = vmatpush1.msra.mxu0 0.0
    %5182 = vmatprep.subr.mxu0 0.0
    %5183 = vmatpush1.msra.mxu0 0.0
    %5184 = vmatprep.subr.mxu0 0.0
    %5185 = vmatpush1.msra.mxu0 0.0
    %5186 = vmatprep.subr.mxu0 0.0
    %5187 = vmatpush1.msra.mxu0 0.0
    %5188 = vmatprep.subr.mxu0 0.0
    %5189 = vmatpush1.msra.mxu0 0.0
    %5190 = vmatprep.subr.mxu0 0.0
    %5191 = vmatpush1.msra.mxu0 0.0
    %5192 = vmatprep.subr.mxu0 0.0
    %5193 = vmatpush1.msra.mxu0 0.0
    %5194 = vmatprep.subr.mxu0 0.0
    %5195 = vmatpush1.msra.mxu0 0.0
    %5196 = vmatprep.subr.mxu0 0.0
    %5197 = vmatpush1.msra.mxu0 0.0
    %5198 = vmatprep.subr.mxu0 0.0
    %5199 = vmatpush1.msra.mxu0 0.0
    %5200 = vmatprep.subr.mxu0 0.0
    %5201 = vmatpush1.msra.mxu0 0.0
    %5202 = vmatprep.subr.mxu0 0.0
    %5203 = vmatpush1.msra.mxu0 0.0
    %5204 = vmatprep.subr.mxu0 0.0
    %5205 = vmatpush1.msra.mxu0 0.0
    %5206 = vmatprep.subr.mxu0 0.0
    %5207 = vmatpush1.msra.mxu0 0.0
    %5208 = vmatprep.subr.mxu0 0.0
    %5209 = vmatpush1.msra.mxu0 0.0
    %5210 = vmatprep.subr.mxu0 0.0
    %5211 = vmatpush1.msra.mxu0 0.0
    %5212 = vmatprep.subr.mxu0 0.0
    %5213 = vmatpush1.msra.mxu0 0.0
    %5214 = vmatprep.subr.mxu0 0.0
    %5215 = vmatpush1.msra.mxu0 0.0
    %5216 = vmatprep.subr.mxu0 0.0
    %5217 = vmatpush1.msra.mxu0 0.0
    %5218 = vmatprep.subr.mxu0 0.0
    %5219 = vmatpush1.msra.mxu0 0.0
    %5220 = vmatprep.subr.mxu0 0.0
    %5221 = vmatpush1.msra.mxu0 0.0
    %5222 = vmatprep.subr.mxu0 0.0
    %5223 = vmatpush1.msra.mxu0 0.0
    %5224 = vmatprep.mubr.f32.mxu0 0.0
    %5225 = vmatmul.mubr.f32.gmra.mrb[0].mxu0 %v5158
    %v5226 = vpop.f32.mrb[0].mxu0
    %v5227 = vadd.f32 0.0, %v5226
    %v5228 = vpop.f32.mrb[0].mxu0
    %5229 = vdwg.mxu0
    %v5230 = vadd.f32 %v5141, %v5227
    %v5231 = vld [vmem:[#allocation3 + $0x1d0] sm:$0xff]
    %5233 = vrot.lane.b32.xlu0 %v5031, 121
    %v5234 = vpop.permute.xlu0 %5233
    %v5236 = vmul.f32 %v5052, %v5234
    %v5237 = vmul.f32 %v5053, %v5234
    %5240 = vrot.lane.b32.xlu0 %v5236, 7
    %v5241 = vpop.permute.xlu0 %5240
    %5242 = vrot.lane.b32.xlu0 %v5237, 7
    %v5243 = vpop.permute.xlu0 %5242
    %vm5244 = vcmask 56320
    %v5245 = vsel %vm5244, %v5241, %v5243
    %v5248 = vsel %vm891, %v5231, 0
    %5250 = vmatprep.subr.mxu0 0.0
    %5251 = vmatpush1.msra.mxu0 %v5245
    %5252 = vmatprep.subr.mxu0 0.0
    %5253 = vmatpush1.msra.mxu0 0.0
    %5254 = vmatprep.subr.mxu0 0.0
    %5255 = vmatpush1.msra.mxu0 0.0
    %5256 = vmatprep.subr.mxu0 0.0
    %5257 = vmatpush1.msra.mxu0 0.0
    %5258 = vmatprep.subr.mxu0 0.0
    %5259 = vmatpush1.msra.mxu0 0.0
    %5260 = vmatprep.subr.mxu0 0.0
    %5261 = vmatpush1.msra.mxu0 0.0
    %5262 = vmatprep.subr.mxu0 0.0
    %5263 = vmatpush1.msra.mxu0 0.0
    %5264 = vmatprep.subr.mxu0 0.0
    %5265 = vmatpush1.msra.mxu0 0.0
    %5266 = vmatprep.subr.mxu0 0.0
    %5267 = vmatpush1.msra.mxu0 0.0
    %5268 = vmatprep.subr.mxu0 0.0
    %5269 = vmatpush1.msra.mxu0 0.0
    %5270 = vmatprep.subr.mxu0 0.0
    %5271 = vmatpush1.msra.mxu0 0.0
    %5272 = vmatprep.subr.mxu0 0.0
    %5273 = vmatpush1.msra.mxu0 0.0
    %5274 = vmatprep.subr.mxu0 0.0
    %5275 = vmatpush1.msra.mxu0 0.0
    %5276 = vmatprep.subr.mxu0 0.0
    %5277 = vmatpush1.msra.mxu0 0.0
    %5278 = vmatprep.subr.mxu0 0.0
    %5279 = vmatpush1.msra.mxu0 0.0
    %5280 = vmatprep.subr.mxu0 0.0
    %5281 = vmatpush1.msra.mxu0 0.0
    %5282 = vmatprep.subr.mxu0 0.0
    %5283 = vmatpush1.msra.mxu0 0.0
    %5284 = vmatprep.subr.mxu0 0.0
    %5285 = vmatpush1.msra.mxu0 0.0
    %5286 = vmatprep.subr.mxu0 0.0
    %5287 = vmatpush1.msra.mxu0 0.0
    %5288 = vmatprep.subr.mxu0 0.0
    %5289 = vmatpush1.msra.mxu0 0.0
    %5290 = vmatprep.subr.mxu0 0.0
    %5291 = vmatpush1.msra.mxu0 0.0
    %5292 = vmatprep.subr.mxu0 0.0
    %5293 = vmatpush1.msra.mxu0 0.0
    %5294 = vmatprep.subr.mxu0 0.0
    %5295 = vmatpush1.msra.mxu0 0.0
    %5296 = vmatprep.subr.mxu0 0.0
    %5297 = vmatpush1.msra.mxu0 0.0
    %5298 = vmatprep.subr.mxu0 0.0
    %5299 = vmatpush1.msra.mxu0 0.0
    %5300 = vmatprep.subr.mxu0 0.0
    %5301 = vmatpush1.msra.mxu0 0.0
    %5302 = vmatprep.subr.mxu0 0.0
    %5303 = vmatpush1.msra.mxu0 0.0
    %5304 = vmatprep.subr.mxu0 0.0
    %5305 = vmatpush1.msra.mxu0 0.0
    %5306 = vmatprep.subr.mxu0 0.0
    %5307 = vmatpush1.msra.mxu0 0.0
    %5308 = vmatprep.subr.mxu0 0.0
    %5309 = vmatpush1.msra.mxu0 0.0
    %5310 = vmatprep.subr.mxu0 0.0
    %5311 = vmatpush1.msra.mxu0 0.0
    %5312 = vmatprep.subr.mxu0 0.0
    %5313 = vmatpush1.msra.mxu0 0.0
    %5314 = vmatprep.mubr.f32.mxu0 0.0
    %5315 = vmatmul.mubr.f32.gmra.mrb[0].mxu0 %v5248
    %v5316 = vpop.f32.mrb[0].mxu0
    %v5317 = vadd.f32 0.0, %v5316
    %v5318 = vpop.f32.mrb[0].mxu0
    %5319 = vdwg.mxu0
    %v5320 = vadd.f32 %v5230, %v5317
    %v5321 = vld [vmem:[#allocation3 + $0x1d8] sm:$0xff]
    %5323 = vrot.lane.b32.xlu0 %v5033, 127
    %v5324 = vpop.permute.xlu0 %5323
    %v5326 = vmul.f32 %v5052, %v5324
    %v5327 = vmul.f32 %v5053, %v5324
    %5330 = vrot.lane.b32.xlu0 %v5326, 1
    %v5331 = vpop.permute.xlu0 %5330
    %5332 = vrot.lane.b32.xlu0 %v5327, 1
    %v5333 = vpop.permute.xlu0 %5332
    %v5334 = vsel %vm1212, %v5331, %v5333
    %v5337 = vsel %vm891, %v5321, 0
    %5339 = vmatprep.subr.mxu0 0.0
    %5340 = vmatpush1.msra.mxu0 %v5334
    %5341 = vmatprep.subr.mxu0 0.0
    %5342 = vmatpush1.msra.mxu0 0.0
    %5343 = vmatprep.subr.mxu0 0.0
    %5344 = vmatpush1.msra.mxu0 0.0
    %5345 = vmatprep.subr.mxu0 0.0
    %5346 = vmatpush1.msra.mxu0 0.0
    %5347 = vmatprep.subr.mxu0 0.0
    %5348 = vmatpush1.msra.mxu0 0.0
    %5349 = vmatprep.subr.mxu0 0.0
    %5350 = vmatpush1.msra.mxu0 0.0
    %5351 = vmatprep.subr.mxu0 0.0
    %5352 = vmatpush1.msra.mxu0 0.0
    %5353 = vmatprep.subr.mxu0 0.0
    %5354 = vmatpush1.msra.mxu0 0.0
    %5355 = vmatprep.subr.mxu0 0.0
    %5356 = vmatpush1.msra.mxu0 0.0
    %5357 = vmatprep.subr.mxu0 0.0
    %5358 = vmatpush1.msra.mxu0 0.0
    %5359 = vmatprep.subr.mxu0 0.0
    %5360 = vmatpush1.msra.mxu0 0.0
    %5361 = vmatprep.subr.mxu0 0.0
    %5362 = vmatpush1.msra.mxu0 0.0
    %5363 = vmatprep.subr.mxu0 0.0
    %5364 = vmatpush1.msra.mxu0 0.0
    %5365 = vmatprep.subr.mxu0 0.0
    %5366 = vmatpush1.msra.mxu0 0.0
    %5367 = vmatprep.subr.mxu0 0.0
    %5368 = vmatpush1.msra.mxu0 0.0
    %5369 = vmatprep.subr.mxu0 0.0
    %5370 = vmatpush1.msra.mxu0 0.0
    %5371 = vmatprep.subr.mxu0 0.0
    %5372 = vmatpush1.msra.mxu0 0.0
    %5373 = vmatprep.subr.mxu0 0.0
    %5374 = vmatpush1.msra.mxu0 0.0
    %5375 = vmatprep.subr.mxu0 0.0
    %5376 = vmatpush1.msra.mxu0 0.0
    %5377 = vmatprep.subr.mxu0 0.0
    %5378 = vmatpush1.msra.mxu0 0.0
    %5379 = vmatprep.subr.mxu0 0.0
    %5380 = vmatpush1.msra.mxu0 0.0
    %5381 = vmatprep.subr.mxu0 0.0
    %5382 = vmatpush1.msra.mxu0 0.0
    %5383 = vmatprep.subr.mxu0 0.0
    %5384 = vmatpush1.msra.mxu0 0.0
    %5385 = vmatprep.subr.mxu0 0.0
    %5386 = vmatpush1.msra.mxu0 0.0
    %5387 = vmatprep.subr.mxu0 0.0
    %5388 = vmatpush1.msra.mxu0 0.0
    %5389 = vmatprep.subr.mxu0 0.0
    %5390 = vmatpush1.msra.mxu0 0.0
    %5391 = vmatprep.subr.mxu0 0.0
    %5392 = vmatpush1.msra.mxu0 0.0
    %5393 = vmatprep.subr.mxu0 0.0
    %5394 = vmatpush1.msra.mxu0 0.0
    %5395 = vmatprep.subr.mxu0 0.0
    %5396 = vmatpush1.msra.mxu0 0.0
    %5397 = vmatprep.subr.mxu0 0.0
    %5398 = vmatpush1.msra.mxu0 0.0
    %5399 = vmatprep.subr.mxu0 0.0
    %5400 = vmatpush1.msra.mxu0 0.0
    %5401 = vmatprep.subr.mxu0 0.0
    %5402 = vmatpush1.msra.mxu0 0.0
    %5403 = vmatprep.mubr.f32.mxu0 0.0
    %5404 = vmatmul.mubr.f32.gmra.mrb[0].mxu0 %v5337
    %v5405 = vpop.f32.mrb[0].mxu0
    %v5406 = vadd.f32 0.0, %v5405
    %v5407 = vpop.f32.mrb[0].mxu0
    %5408 = vdwg.mxu0
    %v5409 = vadd.f32 %v5320, %v5406
    %v5410 = vld [vmem:[#allocation3 + $0x1e0] sm:$0xff]
    %v5412 = vsel %vm891, %v5410, 0
    %5414 = vmatprep.subr.mxu0 0.0
    %5415 = vmatpush1.msra.mxu0 %v5053
    %5416 = vmatprep.subr.mxu0 0.0
    %5417 = vmatpush1.msra.mxu0 0.0
    %5418 = vmatprep.subr.mxu0 0.0
    %5419 = vmatpush1.msra.mxu0 0.0
    %5420 = vmatprep.subr.mxu0 0.0
    %5421 = vmatpush1.msra.mxu0 0.0
    %5422 = vmatprep.subr.mxu0 0.0
    %5423 = vmatpush1.msra.mxu0 0.0
    %5424 = vmatprep.subr.mxu0 0.0
    %5425 = vmatpush1.msra.mxu0 0.0
    %5426 = vmatprep.subr.mxu0 0.0
    %5427 = vmatpush1.msra.mxu0 0.0
    %5428 = vmatprep.subr.mxu0 0.0
    %5429 = vmatpush1.msra.mxu0 0.0
    %5430 = vmatprep.subr.mxu0 0.0
    %5431 = vmatpush1.msra.mxu0 0.0
    %5432 = vmatprep.subr.mxu0 0.0
    %5433 = vmatpush1.msra.mxu0 0.0
    %5434 = vmatprep.subr.mxu0 0.0
    %5435 = vmatpush1.msra.mxu0 0.0
    %5436 = vmatprep.subr.mxu0 0.0
    %5437 = vmatpush1.msra.mxu0 0.0
    %5438 = vmatprep.subr.mxu0 0.0
    %5439 = vmatpush1.msra.mxu0 0.0
    %5440 = vmatprep.subr.mxu0 0.0
    %5441 = vmatpush1.msra.mxu0 0.0
    %5442 = vmatprep.subr.mxu0 0.0
    %5443 = vmatpush1.msra.mxu0 0.0
    %5444 = vmatprep.subr.mxu0 0.0
    %5445 = vmatpush1.msra.mxu0 0.0
    %5446 = vmatprep.subr.mxu0 0.0
    %5447 = vmatpush1.msra.mxu0 0.0
    %5448 = vmatprep.subr.mxu0 0.0
    %5449 = vmatpush1.msra.mxu0 0.0
    %5450 = vmatprep.subr.mxu0 0.0
    %5451 = vmatpush1.msra.mxu0 0.0
    %5452 = vmatprep.subr.mxu0 0.0
    %5453 = vmatpush1.msra.mxu0 0.0
    %5454 = vmatprep.subr.mxu0 0.0
    %5455 = vmatpush1.msra.mxu0 0.0
    %5456 = vmatprep.subr.mxu0 0.0
    %5457 = vmatpush1.msra.mxu0 0.0
    %5458 = vmatprep.subr.mxu0 0.0
    %5459 = vmatpush1.msra.mxu0 0.0
    %5460 = vmatprep.subr.mxu0 0.0
    %5461 = vmatpush1.msra.mxu0 0.0
    %5462 = vmatprep.subr.mxu0 0.0
    %5463 = vmatpush1.msra.mxu0 0.0
    %5464 = vmatprep.subr.mxu0 0.0
    %5465 = vmatpush1.msra.mxu0 0.0
    %5466 = vmatprep.subr.mxu0 0.0
    %5467 = vmatpush1.msra.mxu0 0.0
    %5468 = vmatprep.subr.mxu0 0.0
    %5469 = vmatpush1.msra.mxu0 0.0
    %5470 = vmatprep.subr.mxu0 0.0
    %5471 = vmatpush1.msra.mxu0 0.0
    %5472 = vmatprep.subr.mxu0 0.0
    %5473 = vmatpush1.msra.mxu0 0.0
    %5474 = vmatprep.subr.mxu0 0.0
    %5475 = vmatpush1.msra.mxu0 0.0
    %5476 = vmatprep.subr.mxu0 0.0
    %5477 = vmatpush1.msra.mxu0 0.0
    %5478 = vmatprep.mubr.f32.mxu0 0.0
    %5479 = vmatmul.mubr.f32.gmra.mrb[0].mxu0 %v5412
    %v5480 = vpop.f32.mrb[0].mxu0
    %v5481 = vadd.f32 0.0, %v5480
    %v5482 = vpop.f32.mrb[0].mxu0
    %5483 = vdwg.mxu0
    %v5484 = vadd.f32 %v5409, %v5481
    %v5485 = vld [vmem:[#allocation3 + $0x1e8] sm:$0xff]
    %v5486 = vld [vmem:[#allocation2 + $0x8] sm:$0xff]
    %v5487 = vld [vmem:[#allocation2 + $0x10] sm:$0xff]
    %5489 = vrot.lane.b32.xlu0 %v5035, 1
    %v5490 = vpop.permute.xlu0 %5489
    %v5492 = vmul.f32 %v5486, %v5490
    %v5493 = vmul.f32 %v5487, %v5490
    %5496 = vrot.lane.b32.xlu0 %v5492, 127
    %v5497 = vpop.permute.xlu0 %5496
    %5498 = vrot.lane.b32.xlu0 %v5493, 127
    %v5499 = vpop.permute.xlu0 %5498
    %vm5500 = vcmask 1039360
    %v5501 = vsel %vm5500, %v5497, %v5499
    %v5504 = vsel %vm891, %v5485, 0
    %5506 = vmatprep.subr.mxu0 0.0
    %5507 = vmatpush1.msra.mxu0 %v5501
    %5508 = vmatprep.subr.mxu0 0.0
    %5509 = vmatpush1.msra.mxu0 0.0
    %5510 = vmatprep.subr.mxu0 0.0
    %5511 = vmatpush1.msra.mxu0 0.0
    %5512 = vmatprep.subr.mxu0 0.0
    %5513 = vmatpush1.msra.mxu0 0.0
    %5514 = vmatprep.subr.mxu0 0.0
    %5515 = vmatpush1.msra.mxu0 0.0
    %5516 = vmatprep.subr.mxu0 0.0
    %5517 = vmatpush1.msra.mxu0 0.0
    %5518 = vmatprep.subr.mxu0 0.0
    %5519 = vmatpush1.msra.mxu0 0.0
    %5520 = vmatprep.subr.mxu0 0.0
    %5521 = vmatpush1.msra.mxu0 0.0
    %5522 = vmatprep.subr.mxu0 0.0
    %5523 = vmatpush1.msra.mxu0 0.0
    %5524 = vmatprep.subr.mxu0 0.0
    %5525 = vmatpush1.msra.mxu0 0.0
    %5526 = vmatprep.subr.mxu0 0.0
    %5527 = vmatpush1.msra.mxu0 0.0
    %5528 = vmatprep.subr.mxu0 0.0
    %5529 = vmatpush1.msra.mxu0 0.0
    %5530 = vmatprep.subr.mxu0 0.0
    %5531 = vmatpush1.msra.mxu0 0.0
    %5532 = vmatprep.subr.mxu0 0.0
    %5533 = vmatpush1.msra.mxu0 0.0
    %5534 = vmatprep.subr.mxu0 0.0
    %5535 = vmatpush1.msra.mxu0 0.0
    %5536 = vmatprep.subr.mxu0 0.0
    %5537 = vmatpush1.msra.mxu0 0.0
    %5538 = vmatprep.subr.mxu0 0.0
    %5539 = vmatpush1.msra.mxu0 0.0
    %5540 = vmatprep.subr.mxu0 0.0
    %5541 = vmatpush1.msra.mxu0 0.0
    %5542 = vmatprep.subr.mxu0 0.0
    %5543 = vmatpush1.msra.mxu0 0.0
    %5544 = vmatprep.subr.mxu0 0.0
    %5545 = vmatpush1.msra.mxu0 0.0
    %5546 = vmatprep.subr.mxu0 0.0
    %5547 = vmatpush1.msra.mxu0 0.0
    %5548 = vmatprep.subr.mxu0 0.0
    %5549 = vmatpush1.msra.mxu0 0.0
    %5550 = vmatprep.subr.mxu0 0.0
    %5551 = vmatpush1.msra.mxu0 0.0
    %5552 = vmatprep.subr.mxu0 0.0
    %5553 = vmatpush1.msra.mxu0 0.0
    %5554 = vmatprep.subr.mxu0 0.0
    %5555 = vmatpush1.msra.mxu0 0.0
    %5556 = vmatprep.subr.mxu0 0.0
    %5557 = vmatpush1.msra.mxu0 0.0
    %5558 = vmatprep.subr.mxu0 0.0
    %5559 = vmatpush1.msra.mxu0 0.0
    %5560 = vmatprep.subr.mxu0 0.0
    %5561 = vmatpush1.msra.mxu0 0.0
    %5562 = vmatprep.subr.mxu0 0.0
    %5563 = vmatpush1.msra.mxu0 0.0
    %5564 = vmatprep.subr.mxu0 0.0
    %5565 = vmatpush1.msra.mxu0 0.0
    %5566 = vmatprep.subr.mxu0 0.0
    %5567 = vmatpush1.msra.mxu0 0.0
    %5568 = vmatprep.subr.mxu0 0.0
    %5569 = vmatpush1.msra.mxu0 0.0
    %5570 = vmatprep.mubr.f32.mxu0 0.0
    %5571 = vmatmul.mubr.f32.gmra.mrb[0].mxu0 %v5504
    %v5572 = vpop.f32.mrb[0].mxu0
    %v5573 = vadd.f32 0.0, %v5572
    %v5574 = vpop.f32.mrb[0].mxu0
    %5575 = vdwg.mxu0
    %v5576 = vadd.f32 %v5484, %v5573
    %v5577 = vld [vmem:[#allocation3 + $0x1f0] sm:$0xff]
    %5579 = vrot.lane.b32.xlu0 %v5038, 7
    %v5580 = vpop.permute.xlu0 %5579
    %v5582 = vmul.f32 %v5486, %v5580
    %v5583 = vmul.f32 %v5487, %v5580
    %5586 = vrot.lane.b32.xlu0 %v5582, 121
    %v5587 = vpop.permute.xlu0 %5586
    %5588 = vrot.lane.b32.xlu0 %v5583, 121
    %v5589 = vpop.permute.xlu0 %5588
    %vm5590 = vcmask 990208
    %v5591 = vsel %vm5590, %v5587, %v5589
    %v5594 = vsel %vm891, %v5577, 0
    %5596 = vmatprep.subr.mxu0 0.0
    %5597 = vmatpush1.msra.mxu0 %v5591
    %5598 = vmatprep.subr.mxu0 0.0
    %5599 = vmatpush1.msra.mxu0 0.0
    %5600 = vmatprep.subr.mxu0 0.0
    %5601 = vmatpush1.msra.mxu0 0.0
    %5602 = vmatprep.subr.mxu0 0.0
    %5603 = vmatpush1.msra.mxu0 0.0
    %5604 = vmatprep.subr.mxu0 0.0
    %5605 = vmatpush1.msra.mxu0 0.0
    %5606 = vmatprep.subr.mxu0 0.0
    %5607 = vmatpush1.msra.mxu0 0.0
    %5608 = vmatprep.subr.mxu0 0.0
    %5609 = vmatpush1.msra.mxu0 0.0
    %5610 = vmatprep.subr.mxu0 0.0
    %5611 = vmatpush1.msra.mxu0 0.0
    %5612 = vmatprep.subr.mxu0 0.0
    %5613 = vmatpush1.msra.mxu0 0.0
    %5614 = vmatprep.subr.mxu0 0.0
    %5615 = vmatpush1.msra.mxu0 0.0
    %5616 = vmatprep.subr.mxu0 0.0
    %5617 = vmatpush1.msra.mxu0 0.0
    %5618 = vmatprep.subr.mxu0 0.0
    %5619 = vmatpush1.msra.mxu0 0.0
    %5620 = vmatprep.subr.mxu0 0.0
    %5621 = vmatpush1.msra.mxu0 0.0
    %5622 = vmatprep.subr.mxu0 0.0
    %5623 = vmatpush1.msra.mxu0 0.0
    %5624 = vmatprep.subr.mxu0 0.0
    %5625 = vmatpush1.msra.mxu0 0.0
    %5626 = vmatprep.subr.mxu0 0.0
    %5627 = vmatpush1.msra.mxu0 0.0
    %5628 = vmatprep.subr.mxu0 0.0
    %5629 = vmatpush1.msra.mxu0 0.0
    %5630 = vmatprep.subr.mxu0 0.0
    %5631 = vmatpush1.msra.mxu0 0.0
    %5632 = vmatprep.subr.mxu0 0.0
    %5633 = vmatpush1.msra.mxu0 0.0
    %5634 = vmatprep.subr.mxu0 0.0
    %5635 = vmatpush1.msra.mxu0 0.0
    %5636 = vmatprep.subr.mxu0 0.0
    %5637 = vmatpush1.msra.mxu0 0.0
    %5638 = vmatprep.subr.mxu0 0.0
    %5639 = vmatpush1.msra.mxu0 0.0
    %5640 = vmatprep.subr.mxu0 0.0
    %5641 = vmatpush1.msra.mxu0 0.0
    %5642 = vmatprep.subr.mxu0 0.0
    %5643 = vmatpush1.msra.mxu0 0.0
    %5644 = vmatprep.subr.mxu0 0.0
    %5645 = vmatpush1.msra.mxu0 0.0
    %5646 = vmatprep.subr.mxu0 0.0
    %5647 = vmatpush1.msra.mxu0 0.0
    %5648 = vmatprep.subr.mxu0 0.0
    %5649 = vmatpush1.msra.mxu0 0.0
    %5650 = vmatprep.subr.mxu0 0.0
    %5651 = vmatpush1.msra.mxu0 0.0
    %5652 = vmatprep.subr.mxu0 0.0
    %5653 = vmatpush1.msra.mxu0 0.0
    %5654 = vmatprep.subr.mxu0 0.0
    %5655 = vmatpush1.msra.mxu0 0.0
    %5656 = vmatprep.subr.mxu0 0.0
    %5657 = vmatpush1.msra.mxu0 0.0
    %5658 = vmatprep.subr.mxu0 0.0
    %5659 = vmatpush1.msra.mxu0 0.0
    %5660 = vmatprep.mubr.f32.mxu0 0.0
    %5661 = vmatmul.mubr.f32.gmra.mrb[0].mxu0 %v5594
    %v5662 = vpop.f32.mrb[0].mxu0
    %v5663 = vadd.f32 0.0, %v5662
    %v5664 = vpop.f32.mrb[0].mxu0
    %5665 = vdwg.mxu0
    %v5666 = vadd.f32 %v5576, %v5663
    %v5667 = vld [vmem:[#allocation3 + $0x1f8] sm:$0xff]
    %5669 = vrot.lane.b32.xlu0 %v5040, 8
    %v5670 = vpop.permute.xlu0 %5669
    %v5672 = vmul.f32 %v5486, %v5670
    %v5673 = vmul.f32 %v5487, %v5670
    %5676 = vrot.lane.b32.xlu0 %v5672, 120
    %v5677 = vpop.permute.xlu0 %5676
    %5678 = vrot.lane.b32.xlu0 %v5673, 120
    %v5679 = vpop.permute.xlu0 %5678
    %vm5680 = vcmask 982016
    %v5681 = vsel %vm5680, %v5677, %v5679
    %v5684 = vsel %vm891, %v5667, 0
    %5686 = vmatprep.subr.mxu0 0.0
    %5687 = vmatpush1.msra.mxu0 %v5681
    %5688 = vmatprep.subr.mxu0 0.0
    %5689 = vmatpush1.msra.mxu0 0.0
    %5690 = vmatprep.subr.mxu0 0.0
    %5691 = vmatpush1.msra.mxu0 0.0
    %5692 = vmatprep.subr.mxu0 0.0
    %5693 = vmatpush1.msra.mxu0 0.0
    %5694 = vmatprep.subr.mxu0 0.0
    %5695 = vmatpush1.msra.mxu0 0.0
    %5696 = vmatprep.subr.mxu0 0.0
    %5697 = vmatpush1.msra.mxu0 0.0
    %5698 = vmatprep.subr.mxu0 0.0
    %5699 = vmatpush1.msra.mxu0 0.0
    %5700 = vmatprep.subr.mxu0 0.0
    %5701 = vmatpush1.msra.mxu0 0.0
    %5702 = vmatprep.subr.mxu0 0.0
    %5703 = vmatpush1.msra.mxu0 0.0
    %5704 = vmatprep.subr.mxu0 0.0
    %5705 = vmatpush1.msra.mxu0 0.0
    %5706 = vmatprep.subr.mxu0 0.0
    %5707 = vmatpush1.msra.mxu0 0.0
    %5708 = vmatprep.subr.mxu0 0.0
    %5709 = vmatpush1.msra.mxu0 0.0
    %5710 = vmatprep.subr.mxu0 0.0
    %5711 = vmatpush1.msra.mxu0 0.0
    %5712 = vmatprep.subr.mxu0 0.0
    %5713 = vmatpush1.msra.mxu0 0.0
    %5714 = vmatprep.subr.mxu0 0.0
    %5715 = vmatpush1.msra.mxu0 0.0
    %5716 = vmatprep.subr.mxu0 0.0
    %5717 = vmatpush1.msra.mxu0 0.0
    %5718 = vmatprep.subr.mxu0 0.0
    %5719 = vmatpush1.msra.mxu0 0.0
    %5720 = vmatprep.subr.mxu0 0.0
    %5721 = vmatpush1.msra.mxu0 0.0
    %5722 = vmatprep.subr.mxu0 0.0
    %5723 = vmatpush1.msra.mxu0 0.0
    %5724 = vmatprep.subr.mxu0 0.0
    %5725 = vmatpush1.msra.mxu0 0.0
    %5726 = vmatprep.subr.mxu0 0.0
    %5727 = vmatpush1.msra.mxu0 0.0
    %5728 = vmatprep.subr.mxu0 0.0
    %5729 = vmatpush1.msra.mxu0 0.0
    %5730 = vmatprep.subr.mxu0 0.0
    %5731 = vmatpush1.msra.mxu0 0.0
    %5732 = vmatprep.subr.mxu0 0.0
    %5733 = vmatpush1.msra.mxu0 0.0
    %5734 = vmatprep.subr.mxu0 0.0
    %5735 = vmatpush1.msra.mxu0 0.0
    %5736 = vmatprep.subr.mxu0 0.0
    %5737 = vmatpush1.msra.mxu0 0.0
    %5738 = vmatprep.subr.mxu0 0.0
    %5739 = vmatpush1.msra.mxu0 0.0
    %5740 = vmatprep.subr.mxu0 0.0
    %5741 = vmatpush1.msra.mxu0 0.0
    %5742 = vmatprep.subr.mxu0 0.0
    %5743 = vmatpush1.msra.mxu0 0.0
    %5744 = vmatprep.subr.mxu0 0.0
    %5745 = vmatpush1.msra.mxu0 0.0
    %5746 = vmatprep.subr.mxu0 0.0
    %5747 = vmatpush1.msra.mxu0 0.0
    %5748 = vmatprep.subr.mxu0 0.0
    %5749 = vmatpush1.msra.mxu0 0.0
    %5750 = vmatprep.mubr.f32.mxu0 0.0
    %5751 = vmatmul.mubr.f32.gmra.mrb[0].mxu0 %v5684
    %v5752 = vpop.f32.mrb[0].mxu0
    %v5753 = vadd.f32 0.0, %v5752
    %v5754 = vpop.f32.mrb[0].mxu0
    %5755 = vdwg.mxu0
    %v5756 = vadd.f32 %v5666, %v5753
    %v5757 = vld [vmem:[#allocation3 + $0x200] sm:$0xff]
    %5759 = vrot.lane.b32.xlu0 %v5043, 9
    %v5760 = vpop.permute.xlu0 %5759
    %v5762 = vmul.f32 %v5486, %v5760
    %v5763 = vmul.f32 %v5487, %v5760
    %5766 = vrot.lane.b32.xlu0 %v5762, 119
    %v5767 = vpop.permute.xlu0 %5766
    %5768 = vrot.lane.b32.xlu0 %v5763, 119
    %v5769 = vpop.permute.xlu0 %5768
    %vm5770 = vcmask 973824
    %v5771 = vsel %vm5770, %v5767, %v5769
    %v5774 = vsel %vm891, %v5757, 0
    %5776 = vmatprep.subr.mxu0 0.0
    %5777 = vmatpush1.msra.mxu0 %v5771
    %5778 = vmatprep.subr.mxu0 0.0
    %5779 = vmatpush1.msra.mxu0 0.0
    %5780 = vmatprep.subr.mxu0 0.0
    %5781 = vmatpush1.msra.mxu0 0.0
    %5782 = vmatprep.subr.mxu0 0.0
    %5783 = vmatpush1.msra.mxu0 0.0
    %5784 = vmatprep.subr.mxu0 0.0
    %5785 = vmatpush1.msra.mxu0 0.0
    %5786 = vmatprep.subr.mxu0 0.0
    %5787 = vmatpush1.msra.mxu0 0.0
    %5788 = vmatprep.subr.mxu0 0.0
    %5789 = vmatpush1.msra.mxu0 0.0
    %5790 = vmatprep.subr.mxu0 0.0
    %5791 = vmatpush1.msra.mxu0 0.0
    %5792 = vmatprep.subr.mxu0 0.0
    %5793 = vmatpush1.msra.mxu0 0.0
    %5794 = vmatprep.subr.mxu0 0.0
    %5795 = vmatpush1.msra.mxu0 0.0
    %5796 = vmatprep.subr.mxu0 0.0
    %5797 = vmatpush1.msra.mxu0 0.0
    %5798 = vmatprep.subr.mxu0 0.0
    %5799 = vmatpush1.msra.mxu0 0.0
    %5800 = vmatprep.subr.mxu0 0.0
    %5801 = vmatpush1.msra.mxu0 0.0
    %5802 = vmatprep.subr.mxu0 0.0
    %5803 = vmatpush1.msra.mxu0 0.0
    %5804 = vmatprep.subr.mxu0 0.0
    %5805 = vmatpush1.msra.mxu0 0.0
    %5806 = vmatprep.subr.mxu0 0.0
    %5807 = vmatpush1.msra.mxu0 0.0
    %5808 = vmatprep.subr.mxu0 0.0
    %5809 = vmatpush1.msra.mxu0 0.0
    %5810 = vmatprep.subr.mxu0 0.0
    %5811 = vmatpush1.msra.mxu0 0.0
    %5812 = vmatprep.subr.mxu0 0.0
    %5813 = vmatpush1.msra.mxu0 0.0
    %5814 = vmatprep.subr.mxu0 0.0
    %5815 = vmatpush1.msra.mxu0 0.0
    %5816 = vmatprep.subr.mxu0 0.0
    %5817 = vmatpush1.msra.mxu0 0.0
    %5818 = vmatprep.subr.mxu0 0.0
    %5819 = vmatpush1.msra.mxu0 0.0
    %5820 = vmatprep.subr.mxu0 0.0
    %5821 = vmatpush1.msra.mxu0 0.0
    %5822 = vmatprep.subr.mxu0 0.0
    %5823 = vmatpush1.msra.mxu0 0.0
    %5824 = vmatprep.subr.mxu0 0.0
    %5825 = vmatpush1.msra.mxu0 0.0
    %5826 = vmatprep.subr.mxu0 0.0
    %5827 = vmatpush1.msra.mxu0 0.0
    %5828 = vmatprep.subr.mxu0 0.0
    %5829 = vmatpush1.msra.mxu0 0.0
    %5830 = vmatprep.subr.mxu0 0.0
    %5831 = vmatpush1.msra.mxu0 0.0
    %5832 = vmatprep.subr.mxu0 0.0
    %5833 = vmatpush1.msra.mxu0 0.0
    %5834 = vmatprep.subr.mxu0 0.0
    %5835 = vmatpush1.msra.mxu0 0.0
    %5836 = vmatprep.subr.mxu0 0.0
    %5837 = vmatpush1.msra.mxu0 0.0
    %5838 = vmatprep.subr.mxu0 0.0
    %5839 = vmatpush1.msra.mxu0 0.0
    %5840 = vmatprep.mubr.f32.mxu0 0.0
    %5841 = vmatmul.mubr.f32.gmra.mrb[0].mxu0 %v5774
    %v5842 = vpop.f32.mrb[0].mxu0
    %v5843 = vadd.f32 0.0, %v5842
    %v5844 = vpop.f32.mrb[0].mxu0
    %5845 = vdwg.mxu0
    %v5846 = vadd.f32 %v5756, %v5843
    %v5847 = vmax.f32 %v5846, 0.0
    %5848 = vst [vmem:[#allocation2 + $0x8] sm:$0xff] %v5847
    %v5849 = vld [vmem:[#allocation3 + $0x2e0] sm:$0x7]
    %5851 = vset.pattern.permute.xlu0 8
    %5852 = vperm.xlu0 %5851, %v5849
    %v5853 = vpop.permute.xlu0 %5852
    %v5855 = vadd.f32 %v5853, 0.0
    %v5856 = vld [vmem:[#allocation2] sm:$0xff]
    %v5857 = vld [vmem:[#allocation2 + $0x8] sm:$0xff]
    %v5858 = vmul.f32 %v5856, %v5056
    %v5859 = vmul.f32 %v5857, %v5056
    %5862 = vrot.lane.b32.xlu0 %v5858, 9
    %v5863 = vpop.permute.xlu0 %5862
    %5864 = vrot.lane.b32.xlu0 %v5859, 9
    %v5865 = vpop.permute.xlu0 %5864
    %v5866 = vsel %vm5066, %v5863, %v5865
    %v5868 = vsel %vm891, %v5849, 0
    %5870 = vmatprep.subr.mxu0 0.0
    %5871 = vmatpush1.msra.mxu0 %v5866
    %5872 = vmatprep.subr.mxu0 0.0
    %5873 = vmatpush1.msra.mxu0 0.0
    %5874 = vmatprep.subr.mxu0 0.0
    %5875 = vmatpush1.msra.mxu0 0.0
    %5876 = vmatprep.subr.mxu0 0.0
    %5877 = vmatpush1.msra.mxu0 0.0
    %5878 = vmatprep.subr.mxu0 0.0
    %5879 = vmatpush1.msra.mxu0 0.0
    %5880 = vmatprep.subr.mxu0 0.0
    %5881 = vmatpush1.msra.mxu0 0.0
    %5882 = vmatprep.subr.mxu0 0.0
    %5883 = vmatpush1.msra.mxu0 0.0
    %5884 = vmatprep.subr.mxu0 0.0
    %5885 = vmatpush1.msra.mxu0 0.0
    %5886 = vmatprep.subr.mxu0 0.0
    %5887 = vmatpush1.msra.mxu0 0.0
    %5888 = vmatprep.subr.mxu0 0.0
    %5889 = vmatpush1.msra.mxu0 0.0
    %5890 = vmatprep.subr.mxu0 0.0
    %5891 = vmatpush1.msra.mxu0 0.0
    %5892 = vmatprep.subr.mxu0 0.0
    %5893 = vmatpush1.msra.mxu0 0.0
    %5894 = vmatprep.subr.mxu0 0.0
    %5895 = vmatpush1.msra.mxu0 0.0
    %5896 = vmatprep.subr.mxu0 0.0
    %5897 = vmatpush1.msra.mxu0 0.0
    %5898 = vmatprep.subr.mxu0 0.0
    %5899 = vmatpush1.msra.mxu0 0.0
    %5900 = vmatprep.subr.mxu0 0.0
    %5901 = vmatpush1.msra.mxu0 0.0
    %5902 = vmatprep.subr.mxu0 0.0
    %5903 = vmatpush1.msra.mxu0 0.0
    %5904 = vmatprep.subr.mxu0 0.0
    %5905 = vmatpush1.msra.mxu0 0.0
    %5906 = vmatprep.subr.mxu0 0.0
    %5907 = vmatpush1.msra.mxu0 0.0
    %5908 = vmatprep.subr.mxu0 0.0
    %5909 = vmatpush1.msra.mxu0 0.0
    %5910 = vmatprep.subr.mxu0 0.0
    %5911 = vmatpush1.msra.mxu0 0.0
    %5912 = vmatprep.subr.mxu0 0.0
    %5913 = vmatpush1.msra.mxu0 0.0
    %5914 = vmatprep.subr.mxu0 0.0
    %5915 = vmatpush1.msra.mxu0 0.0
    %5916 = vmatprep.subr.mxu0 0.0
    %5917 = vmatpush1.msra.mxu0 0.0
    %5918 = vmatprep.subr.mxu0 0.0
    %5919 = vmatpush1.msra.mxu0 0.0
    %5920 = vmatprep.subr.mxu0 0.0
    %5921 = vmatpush1.msra.mxu0 0.0
    %5922 = vmatprep.subr.mxu0 0.0
    %5923 = vmatpush1.msra.mxu0 0.0
    %5924 = vmatprep.subr.mxu0 0.0
    %5925 = vmatpush1.msra.mxu0 0.0
    %5926 = vmatprep.subr.mxu0 0.0
    %5927 = vmatpush1.msra.mxu0 0.0
    %5928 = vmatprep.subr.mxu0 0.0
    %5929 = vmatpush1.msra.mxu0 0.0
    %5930 = vmatprep.subr.mxu0 0.0
    %5931 = vmatpush1.msra.mxu0 0.0
    %5932 = vmatprep.subr.mxu0 0.0
    %5933 = vmatpush1.msra.mxu0 0.0
    %5934 = vmatprep.mubr.f32.mxu0 0.0
    %5935 = vmatmul.mubr.f32.gmra.mrb[0].mxu0 %v5868
    %v5936 = vpop.f32.mrb[0].mxu0
    %v5937 = vadd.f32 0.0, %v5936
    %v5938 = vpop.f32.mrb[0].mxu0
    %5939 = vdwg.mxu0
    %v5940 = vadd.f32 %v5855, %v5937
    %v5941 = vld [vmem:[#allocation3 + $0x2e8] sm:$0x7]
    %v5942 = vmul.f32 %v5856, %v5145
    %v5943 = vmul.f32 %v5857, %v5145
    %5946 = vrot.lane.b32.xlu0 %v5942, 8
    %v5947 = vpop.permute.xlu0 %5946
    %5948 = vrot.lane.b32.xlu0 %v5943, 8
    %v5949 = vpop.permute.xlu0 %5948
    %v5950 = vsel %vm891, %v5947, %v5949
    %v5953 = vsel %vm891, %v5941, 0
    %5955 = vmatprep.subr.mxu0 0.0
    %5956 = vmatpush1.msra.mxu0 %v5950
    %5957 = vmatprep.subr.mxu0 0.0
    %5958 = vmatpush1.msra.mxu0 0.0
    %5959 = vmatprep.subr.mxu0 0.0
    %5960 = vmatpush1.msra.mxu0 0.0
    %5961 = vmatprep.subr.mxu0 0.0
    %5962 = vmatpush1.msra.mxu0 0.0
    %5963 = vmatprep.subr.mxu0 0.0
    %5964 = vmatpush1.msra.mxu0 0.0
    %5965 = vmatprep.subr.mxu0 0.0
    %5966 = vmatpush1.msra.mxu0 0.0
    %5967 = vmatprep.subr.mxu0 0.0
    %5968 = vmatpush1.msra.mxu0 0.0
    %5969 = vmatprep.subr.mxu0 0.0
    %5970 = vmatpush1.msra.mxu0 0.0
    %5971 = vmatprep.subr.mxu0 0.0
    %5972 = vmatpush1.msra.mxu0 0.0
    %5973 = vmatprep.subr.mxu0 0.0
    %5974 = vmatpush1.msra.mxu0 0.0
    %5975 = vmatprep.subr.mxu0 0.0
    %5976 = vmatpush1.msra.mxu0 0.0
    %5977 = vmatprep.subr.mxu0 0.0
    %5978 = vmatpush1.msra.mxu0 0.0
    %5979 = vmatprep.subr.mxu0 0.0
    %5980 = vmatpush1.msra.mxu0 0.0
    %5981 = vmatprep.subr.mxu0 0.0
    %5982 = vmatpush1.msra.mxu0 0.0
    %5983 = vmatprep.subr.mxu0 0.0
    %5984 = vmatpush1.msra.mxu0 0.0
    %5985 = vmatprep.subr.mxu0 0.0
    %5986 = vmatpush1.msra.mxu0 0.0
    %5987 = vmatprep.subr.mxu0 0.0
    %5988 = vmatpush1.msra.mxu0 0.0
    %5989 = vmatprep.subr.mxu0 0.0
    %5990 = vmatpush1.msra.mxu0 0.0
    %5991 = vmatprep.subr.mxu0 0.0
    %5992 = vmatpush1.msra.mxu0 0.0
    %5993 = vmatprep.subr.mxu0 0.0
    %5994 = vmatpush1.msra.mxu0 0.0
    %5995 = vmatprep.subr.mxu0 0.0
    %5996 = vmatpush1.msra.mxu0 0.0
    %5997 = vmatprep.subr.mxu0 0.0
    %5998 = vmatpush1.msra.mxu0 0.0
    %5999 = vmatprep.subr.mxu0 0.0
    %6000 = vmatpush1.msra.mxu0 0.0
    %6001 = vmatprep.subr.mxu0 0.0
    %6002 = vmatpush1.msra.mxu0 0.0
    %6003 = vmatprep.subr.mxu0 0.0
    %6004 = vmatpush1.msra.mxu0 0.0
    %6005 = vmatprep.subr.mxu0 0.0
    %6006 = vmatpush1.msra.mxu0 0.0
    %6007 = vmatprep.subr.mxu0 0.0
    %6008 = vmatpush1.msra.mxu0 0.0
    %6009 = vmatprep.subr.mxu0 0.0
    %6010 = vmatpush1.msra.mxu0 0.0
    %6011 = vmatprep.subr.mxu0 0.0
    %6012 = vmatpush1.msra.mxu0 0.0
    %6013 = vmatprep.subr.mxu0 0.0
    %6014 = vmatpush1.msra.mxu0 0.0
    %6015 = vmatprep.subr.mxu0 0.0
    %6016 = vmatpush1.msra.mxu0 0.0
    %6017 = vmatprep.subr.mxu0 0.0
    %6018 = vmatpush1.msra.mxu0 0.0
    %6019 = vmatprep.mubr.f32.mxu0 0.0
    %6020 = vmatmul.mubr.f32.gmra.mrb[0].mxu0 %v5953
    %v6021 = vpop.f32.mrb[0].mxu0
    %v6022 = vadd.f32 0.0, %v6021
    %v6023 = vpop.f32.mrb[0].mxu0
    %6024 = vdwg.mxu0
    %v6025 = vadd.f32 %v5940, %v6022
    %v6026 = vld [vmem:[#allocation3 + $0x2f0] sm:$0x7]
    %v6027 = vmul.f32 %v5856, %v5234
    %v6028 = vmul.f32 %v5857, %v5234
    %6031 = vrot.lane.b32.xlu0 %v6027, 7
    %v6032 = vpop.permute.xlu0 %6031
    %6033 = vrot.lane.b32.xlu0 %v6028, 7
    %v6034 = vpop.permute.xlu0 %6033
    %v6035 = vsel %vm5244, %v6032, %v6034
    %v6038 = vsel %vm891, %v6026, 0
    %6040 = vmatprep.subr.mxu0 0.0
    %6041 = vmatpush1.msra.mxu0 %v6035
    %6042 = vmatprep.subr.mxu0 0.0
    %6043 = vmatpush1.msra.mxu0 0.0
    %6044 = vmatprep.subr.mxu0 0.0
    %6045 = vmatpush1.msra.mxu0 0.0
    %6046 = vmatprep.subr.mxu0 0.0
    %6047 = vmatpush1.msra.mxu0 0.0
    %6048 = vmatprep.subr.mxu0 0.0
    %6049 = vmatpush1.msra.mxu0 0.0
    %6050 = vmatprep.subr.mxu0 0.0
    %6051 = vmatpush1.msra.mxu0 0.0
    %6052 = vmatprep.subr.mxu0 0.0
    %6053 = vmatpush1.msra.mxu0 0.0
    %6054 = vmatprep.subr.mxu0 0.0
    %6055 = vmatpush1.msra.mxu0 0.0
    %6056 = vmatprep.subr.mxu0 0.0
    %6057 = vmatpush1.msra.mxu0 0.0
    %6058 = vmatprep.subr.mxu0 0.0
    %6059 = vmatpush1.msra.mxu0 0.0
    %6060 = vmatprep.subr.mxu0 0.0
    %6061 = vmatpush1.msra.mxu0 0.0
    %6062 = vmatprep.subr.mxu0 0.0
    %6063 = vmatpush1.msra.mxu0 0.0
    %6064 = vmatprep.subr.mxu0 0.0
    %6065 = vmatpush1.msra.mxu0 0.0
    %6066 = vmatprep.subr.mxu0 0.0
    %6067 = vmatpush1.msra.mxu0 0.0
    %6068 = vmatprep.subr.mxu0 0.0
    %6069 = vmatpush1.msra.mxu0 0.0
    %6070 = vmatprep.subr.mxu0 0.0
    %6071 = vmatpush1.msra.mxu0 0.0
    %6072 = vmatprep.subr.mxu0 0.0
    %6073 = vmatpush1.msra.mxu0 0.0
    %6074 = vmatprep.subr.mxu0 0.0
    %6075 = vmatpush1.msra.mxu0 0.0
    %6076 = vmatprep.subr.mxu0 0.0
    %6077 = vmatpush1.msra.mxu0 0.0
    %6078 = vmatprep.subr.mxu0 0.0
    %6079 = vmatpush1.msra.mxu0 0.0
    %6080 = vmatprep.subr.mxu0 0.0
    %6081 = vmatpush1.msra.mxu0 0.0
    %6082 = vmatprep.subr.mxu0 0.0
    %6083 = vmatpush1.msra.mxu0 0.0
    %6084 = vmatprep.subr.mxu0 0.0
    %6085 = vmatpush1.msra.mxu0 0.0
    %6086 = vmatprep.subr.mxu0 0.0
    %6087 = vmatpush1.msra.mxu0 0.0
    %6088 = vmatprep.subr.mxu0 0.0
    %6089 = vmatpush1.msra.mxu0 0.0
    %6090 = vmatprep.subr.mxu0 0.0
    %6091 = vmatpush1.msra.mxu0 0.0
    %6092 = vmatprep.subr.mxu0 0.0
    %6093 = vmatpush1.msra.mxu0 0.0
    %6094 = vmatprep.subr.mxu0 0.0
    %6095 = vmatpush1.msra.mxu0 0.0
    %6096 = vmatprep.subr.mxu0 0.0
    %6097 = vmatpush1.msra.mxu0 0.0
    %6098 = vmatprep.subr.mxu0 0.0
    %6099 = vmatpush1.msra.mxu0 0.0
    %6100 = vmatprep.subr.mxu0 0.0
    %6101 = vmatpush1.msra.mxu0 0.0
    %6102 = vmatprep.subr.mxu0 0.0
    %6103 = vmatpush1.msra.mxu0 0.0
    %6104 = vmatprep.mubr.f32.mxu0 0.0
    %6105 = vmatmul.mubr.f32.gmra.mrb[0].mxu0 %v6038
    %v6106 = vpop.f32.mrb[0].mxu0
    %v6107 = vadd.f32 0.0, %v6106
    %v6108 = vpop.f32.mrb[0].mxu0
    %6109 = vdwg.mxu0
    %v6110 = vadd.f32 %v6025, %v6107
    %v6111 = vld [vmem:[#allocation3 + $0x2f8] sm:$0x7]
    %v6112 = vmul.f32 %v5856, %v5324
    %v6113 = vmul.f32 %v5857, %v5324
    %6116 = vrot.lane.b32.xlu0 %v6112, 1
    %v6117 = vpop.permute.xlu0 %6116
    %6118 = vrot.lane.b32.xlu0 %v6113, 1
    %v6119 = vpop.permute.xlu0 %6118
    %v6120 = vsel %vm1212, %v6117, %v6119
    %v6123 = vsel %vm891, %v6111, 0
    %6125 = vmatprep.subr.mxu0 0.0
    %6126 = vmatpush1.msra.mxu0 %v6120
    %6127 = vmatprep.subr.mxu0 0.0
    %6128 = vmatpush1.msra.mxu0 0.0
    %6129 = vmatprep.subr.mxu0 0.0
    %6130 = vmatpush1.msra.mxu0 0.0
    %6131 = vmatprep.subr.mxu0 0.0
    %6132 = vmatpush1.msra.mxu0 0.0
    %6133 = vmatprep.subr.mxu0 0.0
    %6134 = vmatpush1.msra.mxu0 0.0
    %6135 = vmatprep.subr.mxu0 0.0
    %6136 = vmatpush1.msra.mxu0 0.0
    %6137 = vmatprep.subr.mxu0 0.0
    %6138 = vmatpush1.msra.mxu0 0.0
    %6139 = vmatprep.subr.mxu0 0.0
    %6140 = vmatpush1.msra.mxu0 0.0
    %6141 = vmatprep.subr.mxu0 0.0
    %6142 = vmatpush1.msra.mxu0 0.0
    %6143 = vmatprep.subr.mxu0 0.0
    %6144 = vmatpush1.msra.mxu0 0.0
    %6145 = vmatprep.subr.mxu0 0.0
    %6146 = vmatpush1.msra.mxu0 0.0
    %6147 = vmatprep.subr.mxu0 0.0
    %6148 = vmatpush1.msra.mxu0 0.0
    %6149 = vmatprep.subr.mxu0 0.0
    %6150 = vmatpush1.msra.mxu0 0.0
    %6151 = vmatprep.subr.mxu0 0.0
    %6152 = vmatpush1.msra.mxu0 0.0
    %6153 = vmatprep.subr.mxu0 0.0
    %6154 = vmatpush1.msra.mxu0 0.0
    %6155 = vmatprep.subr.mxu0 0.0
    %6156 = vmatpush1.msra.mxu0 0.0
    %6157 = vmatprep.subr.mxu0 0.0
    %6158 = vmatpush1.msra.mxu0 0.0
    %6159 = vmatprep.subr.mxu0 0.0
    %6160 = vmatpush1.msra.mxu0 0.0
    %6161 = vmatprep.subr.mxu0 0.0
    %6162 = vmatpush1.msra.mxu0 0.0
    %6163 = vmatprep.subr.mxu0 0.0
    %6164 = vmatpush1.msra.mxu0 0.0
    %6165 = vmatprep.subr.mxu0 0.0
    %6166 = vmatpush1.msra.mxu0 0.0
    %6167 = vmatprep.subr.mxu0 0.0
    %6168 = vmatpush1.msra.mxu0 0.0
    %6169 = vmatprep.subr.mxu0 0.0
    %6170 = vmatpush1.msra.mxu0 0.0
    %6171 = vmatprep.subr.mxu0 0.0
    %6172 = vmatpush1.msra.mxu0 0.0
    %6173 = vmatprep.subr.mxu0 0.0
    %6174 = vmatpush1.msra.mxu0 0.0
    %6175 = vmatprep.subr.mxu0 0.0
    %6176 = vmatpush1.msra.mxu0 0.0
    %6177 = vmatprep.subr.mxu0 0.0
    %6178 = vmatpush1.msra.mxu0 0.0
    %6179 = vmatprep.subr.mxu0 0.0
    %6180 = vmatpush1.msra.mxu0 0.0
    %6181 = vmatprep.subr.mxu0 0.0
    %6182 = vmatpush1.msra.mxu0 0.0
    %6183 = vmatprep.subr.mxu0 0.0
    %6184 = vmatpush1.msra.mxu0 0.0
    %6185 = vmatprep.subr.mxu0 0.0
    %6186 = vmatpush1.msra.mxu0 0.0
    %6187 = vmatprep.subr.mxu0 0.0
    %6188 = vmatpush1.msra.mxu0 0.0
    %6189 = vmatprep.mubr.f32.mxu0 0.0
    %6190 = vmatmul.mubr.f32.gmra.mrb[0].mxu0 %v6123
    %v6191 = vpop.f32.mrb[0].mxu0
    %v6192 = vadd.f32 0.0, %v6191
    %v6193 = vpop.f32.mrb[0].mxu0
    %6194 = vdwg.mxu0
    %v6195 = vadd.f32 %v6110, %v6192
    %v6196 = vld [vmem:[#allocation3 + $0x300] sm:$0x7]
    %v6198 = vsel %vm891, %v6196, 0
    %6200 = vmatprep.subr.mxu0 0.0
    %6201 = vmatpush1.msra.mxu0 %v5857
    %6202 = vmatprep.subr.mxu0 0.0
    %6203 = vmatpush1.msra.mxu0 0.0
    %6204 = vmatprep.subr.mxu0 0.0
    %6205 = vmatpush1.msra.mxu0 0.0
    %6206 = vmatprep.subr.mxu0 0.0
    %6207 = vmatpush1.msra.mxu0 0.0
    %6208 = vmatprep.subr.mxu0 0.0
    %6209 = vmatpush1.msra.mxu0 0.0
    %6210 = vmatprep.subr.mxu0 0.0
    %6211 = vmatpush1.msra.mxu0 0.0
    %6212 = vmatprep.subr.mxu0 0.0
    %6213 = vmatpush1.msra.mxu0 0.0
    %6214 = vmatprep.subr.mxu0 0.0
    %6215 = vmatpush1.msra.mxu0 0.0
    %6216 = vmatprep.subr.mxu0 0.0
    %6217 = vmatpush1.msra.mxu0 0.0
    %6218 = vmatprep.subr.mxu0 0.0
    %6219 = vmatpush1.msra.mxu0 0.0
    %6220 = vmatprep.subr.mxu0 0.0
    %6221 = vmatpush1.msra.mxu0 0.0
    %6222 = vmatprep.subr.mxu0 0.0
    %6223 = vmatpush1.msra.mxu0 0.0
    %6224 = vmatprep.subr.mxu0 0.0
    %6225 = vmatpush1.msra.mxu0 0.0
    %6226 = vmatprep.subr.mxu0 0.0
    %6227 = vmatpush1.msra.mxu0 0.0
    %6228 = vmatprep.subr.mxu0 0.0
    %6229 = vmatpush1.msra.mxu0 0.0
    %6230 = vmatprep.subr.mxu0 0.0
    %6231 = vmatpush1.msra.mxu0 0.0
    %6232 = vmatprep.subr.mxu0 0.0
    %6233 = vmatpush1.msra.mxu0 0.0
    %6234 = vmatprep.subr.mxu0 0.0
    %6235 = vmatpush1.msra.mxu0 0.0
    %6236 = vmatprep.subr.mxu0 0.0
    %6237 = vmatpush1.msra.mxu0 0.0
    %6238 = vmatprep.subr.mxu0 0.0
    %6239 = vmatpush1.msra.mxu0 0.0
    %6240 = vmatprep.subr.mxu0 0.0
    %6241 = vmatpush1.msra.mxu0 0.0
    %6242 = vmatprep.subr.mxu0 0.0
    %6243 = vmatpush1.msra.mxu0 0.0
    %6244 = vmatprep.subr.mxu0 0.0
    %6245 = vmatpush1.msra.mxu0 0.0
    %6246 = vmatprep.subr.mxu0 0.0
    %6247 = vmatpush1.msra.mxu0 0.0
    %6248 = vmatprep.subr.mxu0 0.0
    %6249 = vmatpush1.msra.mxu0 0.0
    %6250 = vmatprep.subr.mxu0 0.0
    %6251 = vmatpush1.msra.mxu0 0.0
    %6252 = vmatprep.subr.mxu0 0.0
    %6253 = vmatpush1.msra.mxu0 0.0
    %6254 = vmatprep.subr.mxu0 0.0
    %6255 = vmatpush1.msra.mxu0 0.0
    %6256 = vmatprep.subr.mxu0 0.0
    %6257 = vmatpush1.msra.mxu0 0.0
    %6258 = vmatprep.subr.mxu0 0.0
    %6259 = vmatpush1.msra.mxu0 0.0
    %6260 = vmatprep.subr.mxu0 0.0
    %6261 = vmatpush1.msra.mxu0 0.0
    %6262 = vmatprep.subr.mxu0 0.0
    %6263 = vmatpush1.msra.mxu0 0.0
    %6264 = vmatprep.mubr.f32.mxu0 0.0
    %6265 = vmatmul.mubr.f32.gmra.mrb[0].mxu0 %v6198
    %v6266 = vpop.f32.mrb[0].mxu0
    %v6267 = vadd.f32 0.0, %v6266
    %v6268 = vpop.f32.mrb[0].mxu0
    %6269 = vdwg.mxu0
    %v6270 = vadd.f32 %v6195, %v6267
    %v6271 = vld [vmem:[#allocation3 + $0x308] sm:$0x7]
    %v6272 = vld [vmem:[#allocation2 + $0x8] sm:$0xff]
    %v6273 = vld [vmem:[#allocation2 + $0x10] sm:$0xff]
    %v6274 = vmul.f32 %v6272, %v5490
    %v6275 = vmul.f32 %v6273, %v5490
    %6278 = vrot.lane.b32.xlu0 %v6274, 127
    %v6279 = vpop.permute.xlu0 %6278
    %6280 = vrot.lane.b32.xlu0 %v6275, 127
    %v6281 = vpop.permute.xlu0 %6280
    %v6282 = vsel %vm5500, %v6279, %v6281
    %v6285 = vsel %vm891, %v6271, 0
    %6287 = vmatprep.subr.mxu0 0.0
    %6288 = vmatpush1.msra.mxu0 %v6282
    %6289 = vmatprep.subr.mxu0 0.0
    %6290 = vmatpush1.msra.mxu0 0.0
    %6291 = vmatprep.subr.mxu0 0.0
    %6292 = vmatpush1.msra.mxu0 0.0
    %6293 = vmatprep.subr.mxu0 0.0
    %6294 = vmatpush1.msra.mxu0 0.0
    %6295 = vmatprep.subr.mxu0 0.0
    %6296 = vmatpush1.msra.mxu0 0.0
    %6297 = vmatprep.subr.mxu0 0.0
    %6298 = vmatpush1.msra.mxu0 0.0
    %6299 = vmatprep.subr.mxu0 0.0
    %6300 = vmatpush1.msra.mxu0 0.0
    %6301 = vmatprep.subr.mxu0 0.0
    %6302 = vmatpush1.msra.mxu0 0.0
    %6303 = vmatprep.subr.mxu0 0.0
    %6304 = vmatpush1.msra.mxu0 0.0
    %6305 = vmatprep.subr.mxu0 0.0
    %6306 = vmatpush1.msra.mxu0 0.0
    %6307 = vmatprep.subr.mxu0 0.0
    %6308 = vmatpush1.msra.mxu0 0.0
    %6309 = vmatprep.subr.mxu0 0.0
    %6310 = vmatpush1.msra.mxu0 0.0
    %6311 = vmatprep.subr.mxu0 0.0
    %6312 = vmatpush1.msra.mxu0 0.0
    %6313 = vmatprep.subr.mxu0 0.0
    %6314 = vmatpush1.msra.mxu0 0.0
    %6315 = vmatprep.subr.mxu0 0.0
    %6316 = vmatpush1.msra.mxu0 0.0
    %6317 = vmatprep.subr.mxu0 0.0
    %6318 = vmatpush1.msra.mxu0 0.0
    %6319 = vmatprep.subr.mxu0 0.0
    %6320 = vmatpush1.msra.mxu0 0.0
    %6321 = vmatprep.subr.mxu0 0.0
    %6322 = vmatpush1.msra.mxu0 0.0
    %6323 = vmatprep.subr.mxu0 0.0
    %6324 = vmatpush1.msra.mxu0 0.0
    %6325 = vmatprep.subr.mxu0 0.0
    %6326 = vmatpush1.msra.mxu0 0.0
    %6327 = vmatprep.subr.mxu0 0.0
    %6328 = vmatpush1.msra.mxu0 0.0
    %6329 = vmatprep.subr.mxu0 0.0
    %6330 = vmatpush1.msra.mxu0 0.0
    %6331 = vmatprep.subr.mxu0 0.0
    %6332 = vmatpush1.msra.mxu0 0.0
    %6333 = vmatprep.subr.mxu0 0.0
    %6334 = vmatpush1.msra.mxu0 0.0
    %6335 = vmatprep.subr.mxu0 0.0
    %6336 = vmatpush1.msra.mxu0 0.0
    %6337 = vmatprep.subr.mxu0 0.0
    %6338 = vmatpush1.msra.mxu0 0.0
    %6339 = vmatprep.subr.mxu0 0.0
    %6340 = vmatpush1.msra.mxu0 0.0
    %6341 = vmatprep.subr.mxu0 0.0
    %6342 = vmatpush1.msra.mxu0 0.0
    %6343 = vmatprep.subr.mxu0 0.0
    %6344 = vmatpush1.msra.mxu0 0.0
    %6345 = vmatprep.subr.mxu0 0.0
    %6346 = vmatpush1.msra.mxu0 0.0
    %6347 = vmatprep.subr.mxu0 0.0
    %6348 = vmatpush1.msra.mxu0 0.0
    %6349 = vmatprep.subr.mxu0 0.0
    %6350 = vmatpush1.msra.mxu0 0.0
    %6351 = vmatprep.mubr.f32.mxu0 0.0
    %6352 = vmatmul.mubr.f32.gmra.mrb[0].mxu0 %v6285
    %v6353 = vpop.f32.mrb[0].mxu0
    %v6354 = vadd.f32 0.0, %v6353
    %v6355 = vpop.f32.mrb[0].mxu0
    %6356 = vdwg.mxu0
    %v6357 = vadd.f32 %v6270, %v6354
    %v6358 = vld [vmem:[#allocation3 + $0x310] sm:$0x7]
    %v6359 = vmul.f32 %v6272, %v5580
    %v6360 = vmul.f32 %v6273, %v5580
    %6363 = vrot.lane.b32.xlu0 %v6359, 121
    %v6364 = vpop.permute.xlu0 %6363
    %6365 = vrot.lane.b32.xlu0 %v6360, 121
    %v6366 = vpop.permute.xlu0 %6365
    %v6367 = vsel %vm5590, %v6364, %v6366
    %v6370 = vsel %vm891, %v6358, 0
    %6372 = vmatprep.subr.mxu0 0.0
    %6373 = vmatpush1.msra.mxu0 %v6367
    %6374 = vmatprep.subr.mxu0 0.0
    %6375 = vmatpush1.msra.mxu0 0.0
    %6376 = vmatprep.subr.mxu0 0.0
    %6377 = vmatpush1.msra.mxu0 0.0
    %6378 = vmatprep.subr.mxu0 0.0
    %6379 = vmatpush1.msra.mxu0 0.0
    %6380 = vmatprep.subr.mxu0 0.0
    %6381 = vmatpush1.msra.mxu0 0.0
    %6382 = vmatprep.subr.mxu0 0.0
    %6383 = vmatpush1.msra.mxu0 0.0
    %6384 = vmatprep.subr.mxu0 0.0
    %6385 = vmatpush1.msra.mxu0 0.0
    %6386 = vmatprep.subr.mxu0 0.0
    %6387 = vmatpush1.msra.mxu0 0.0
    %6388 = vmatprep.subr.mxu0 0.0
    %6389 = vmatpush1.msra.mxu0 0.0
    %6390 = vmatprep.subr.mxu0 0.0
    %6391 = vmatpush1.msra.mxu0 0.0
    %6392 = vmatprep.subr.mxu0 0.0
    %6393 = vmatpush1.msra.mxu0 0.0
    %6394 = vmatprep.subr.mxu0 0.0
    %6395 = vmatpush1.msra.mxu0 0.0
    %6396 = vmatprep.subr.mxu0 0.0
    %6397 = vmatpush1.msra.mxu0 0.0
    %6398 = vmatprep.subr.mxu0 0.0
    %6399 = vmatpush1.msra.mxu0 0.0
    %6400 = vmatprep.subr.mxu0 0.0
    %6401 = vmatpush1.msra.mxu0 0.0
    %6402 = vmatprep.subr.mxu0 0.0
    %6403 = vmatpush1.msra.mxu0 0.0
    %6404 = vmatprep.subr.mxu0 0.0
    %6405 = vmatpush1.msra.mxu0 0.0
    %6406 = vmatprep.subr.mxu0 0.0
    %6407 = vmatpush1.msra.mxu0 0.0
    %6408 = vmatprep.subr.mxu0 0.0
    %6409 = vmatpush1.msra.mxu0 0.0
    %6410 = vmatprep.subr.mxu0 0.0
    %6411 = vmatpush1.msra.mxu0 0.0
    %6412 = vmatprep.subr.mxu0 0.0
    %6413 = vmatpush1.msra.mxu0 0.0
    %6414 = vmatprep.subr.mxu0 0.0
    %6415 = vmatpush1.msra.mxu0 0.0
    %6416 = vmatprep.subr.mxu0 0.0
    %6417 = vmatpush1.msra.mxu0 0.0
    %6418 = vmatprep.subr.mxu0 0.0
    %6419 = vmatpush1.msra.mxu0 0.0
    %6420 = vmatprep.subr.mxu0 0.0
    %6421 = vmatpush1.msra.mxu0 0.0
    %6422 = vmatprep.subr.mxu0 0.0
    %6423 = vmatpush1.msra.mxu0 0.0
    %6424 = vmatprep.subr.mxu0 0.0
    %6425 = vmatpush1.msra.mxu0 0.0
    %6426 = vmatprep.subr.mxu0 0.0
    %6427 = vmatpush1.msra.mxu0 0.0
    %6428 = vmatprep.subr.mxu0 0.0
    %6429 = vmatpush1.msra.mxu0 0.0
    %6430 = vmatprep.subr.mxu0 0.0
    %6431 = vmatpush1.msra.mxu0 0.0
    %6432 = vmatprep.subr.mxu0 0.0
    %6433 = vmatpush1.msra.mxu0 0.0
    %6434 = vmatprep.subr.mxu0 0.0
    %6435 = vmatpush1.msra.mxu0 0.0
    %6436 = vmatprep.mubr.f32.mxu0 0.0
    %6437 = vmatmul.mubr.f32.gmra.mrb[0].mxu0 %v6370
    %v6438 = vpop.f32.mrb[0].mxu0
    %v6439 = vadd.f32 0.0, %v6438
    %v6440 = vpop.f32.mrb[0].mxu0
    %6441 = vdwg.mxu0
    %v6442 = vadd.f32 %v6357, %v6439
    %v6443 = vld [vmem:[#allocation3 + $0x318] sm:$0x7]
    %v6444 = vmul.f32 %v6272, %v5670
    %v6445 = vmul.f32 %v6273, %v5670
    %6448 = vrot.lane.b32.xlu0 %v6444, 120
    %v6449 = vpop.permute.xlu0 %6448
    %6450 = vrot.lane.b32.xlu0 %v6445, 120
    %v6451 = vpop.permute.xlu0 %6450
    %v6452 = vsel %vm5680, %v6449, %v6451
    %v6455 = vsel %vm891, %v6443, 0
    %6457 = vmatprep.subr.mxu0 0.0
    %6458 = vmatpush1.msra.mxu0 %v6452
    %6459 = vmatprep.subr.mxu0 0.0
    %6460 = vmatpush1.msra.mxu0 0.0
    %6461 = vmatprep.subr.mxu0 0.0
    %6462 = vmatpush1.msra.mxu0 0.0
    %6463 = vmatprep.subr.mxu0 0.0
    %6464 = vmatpush1.msra.mxu0 0.0
    %6465 = vmatprep.subr.mxu0 0.0
    %6466 = vmatpush1.msra.mxu0 0.0
    %6467 = vmatprep.subr.mxu0 0.0
    %6468 = vmatpush1.msra.mxu0 0.0
    %6469 = vmatprep.subr.mxu0 0.0
    %6470 = vmatpush1.msra.mxu0 0.0
    %6471 = vmatprep.subr.mxu0 0.0
    %6472 = vmatpush1.msra.mxu0 0.0
    %6473 = vmatprep.subr.mxu0 0.0
    %6474 = vmatpush1.msra.mxu0 0.0
    %6475 = vmatprep.subr.mxu0 0.0
    %6476 = vmatpush1.msra.mxu0 0.0
    %6477 = vmatprep.subr.mxu0 0.0
    %6478 = vmatpush1.msra.mxu0 0.0
    %6479 = vmatprep.subr.mxu0 0.0
    %6480 = vmatpush1.msra.mxu0 0.0
    %6481 = vmatprep.subr.mxu0 0.0
    %6482 = vmatpush1.msra.mxu0 0.0
    %6483 = vmatprep.subr.mxu0 0.0
    %6484 = vmatpush1.msra.mxu0 0.0
    %6485 = vmatprep.subr.mxu0 0.0
    %6486 = vmatpush1.msra.mxu0 0.0
    %6487 = vmatprep.subr.mxu0 0.0
    %6488 = vmatpush1.msra.mxu0 0.0
    %6489 = vmatprep.subr.mxu0 0.0
    %6490 = vmatpush1.msra.mxu0 0.0
    %6491 = vmatprep.subr.mxu0 0.0
    %6492 = vmatpush1.msra.mxu0 0.0
    %6493 = vmatprep.subr.mxu0 0.0
    %6494 = vmatpush1.msra.mxu0 0.0
    %6495 = vmatprep.subr.mxu0 0.0
    %6496 = vmatpush1.msra.mxu0 0.0
    %6497 = vmatprep.subr.mxu0 0.0
    %6498 = vmatpush1.msra.mxu0 0.0
    %6499 = vmatprep.subr.mxu0 0.0
    %6500 = vmatpush1.msra.mxu0 0.0
    %6501 = vmatprep.subr.mxu0 0.0
    %6502 = vmatpush1.msra.mxu0 0.0
    %6503 = vmatprep.subr.mxu0 0.0
    %6504 = vmatpush1.msra.mxu0 0.0
    %6505 = vmatprep.subr.mxu0 0.0
    %6506 = vmatpush1.msra.mxu0 0.0
    %6507 = vmatprep.subr.mxu0 0.0
    %6508 = vmatpush1.msra.mxu0 0.0
    %6509 = vmatprep.subr.mxu0 0.0
    %6510 = vmatpush1.msra.mxu0 0.0
    %6511 = vmatprep.subr.mxu0 0.0
    %6512 = vmatpush1.msra.mxu0 0.0
    %6513 = vmatprep.subr.mxu0 0.0
    %6514 = vmatpush1.msra.mxu0 0.0
    %6515 = vmatprep.subr.mxu0 0.0
    %6516 = vmatpush1.msra.mxu0 0.0
    %6517 = vmatprep.subr.mxu0 0.0
    %6518 = vmatpush1.msra.mxu0 0.0
    %6519 = vmatprep.subr.mxu0 0.0
    %6520 = vmatpush1.msra.mxu0 0.0
    %6521 = vmatprep.mubr.f32.mxu0 0.0
    %6522 = vmatmul.mubr.f32.gmra.mrb[0].mxu0 %v6455
    %v6523 = vpop.f32.mrb[0].mxu0
    %v6524 = vadd.f32 0.0, %v6523
    %v6525 = vpop.f32.mrb[0].mxu0
    %6526 = vdwg.mxu0
    %v6527 = vadd.f32 %v6442, %v6524
    %v6528 = vld [vmem:[#allocation3 + $0x320] sm:$0x7]
    %v6529 = vmul.f32 %v6272, %v5760
    %v6530 = vmul.f32 %v6273, %v5760
    %6533 = vrot.lane.b32.xlu0 %v6529, 119
    %v6534 = vpop.permute.xlu0 %6533
    %6535 = vrot.lane.b32.xlu0 %v6530, 119
    %v6536 = vpop.permute.xlu0 %6535
    %v6537 = vsel %vm5770, %v6534, %v6536
    %v6540 = vsel %vm891, %v6528, 0
    %6542 = vmatprep.subr.mxu0 0.0
    %6543 = vmatpush1.msra.mxu0 %v6537
    %6544 = vmatprep.subr.mxu0 0.0
    %6545 = vmatpush1.msra.mxu0 0.0
    %6546 = vmatprep.subr.mxu0 0.0
    %6547 = vmatpush1.msra.mxu0 0.0
    %6548 = vmatprep.subr.mxu0 0.0
    %6549 = vmatpush1.msra.mxu0 0.0
    %6550 = vmatprep.subr.mxu0 0.0
    %6551 = vmatpush1.msra.mxu0 0.0
    %6552 = vmatprep.subr.mxu0 0.0
    %6553 = vmatpush1.msra.mxu0 0.0
    %6554 = vmatprep.subr.mxu0 0.0
    %6555 = vmatpush1.msra.mxu0 0.0
    %6556 = vmatprep.subr.mxu0 0.0
    %6557 = vmatpush1.msra.mxu0 0.0
    %6558 = vmatprep.subr.mxu0 0.0
    %6559 = vmatpush1.msra.mxu0 0.0
    %6560 = vmatprep.subr.mxu0 0.0
    %6561 = vmatpush1.msra.mxu0 0.0
    %6562 = vmatprep.subr.mxu0 0.0
    %6563 = vmatpush1.msra.mxu0 0.0
    %6564 = vmatprep.subr.mxu0 0.0
    %6565 = vmatpush1.msra.mxu0 0.0
    %6566 = vmatprep.subr.mxu0 0.0
    %6567 = vmatpush1.msra.mxu0 0.0
    %6568 = vmatprep.subr.mxu0 0.0
    %6569 = vmatpush1.msra.mxu0 0.0
    %6570 = vmatprep.subr.mxu0 0.0
    %6571 = vmatpush1.msra.mxu0 0.0
    %6572 = vmatprep.subr.mxu0 0.0
    %6573 = vmatpush1.msra.mxu0 0.0
    %6574 = vmatprep.subr.mxu0 0.0
    %6575 = vmatpush1.msra.mxu0 0.0
    %6576 = vmatprep.subr.mxu0 0.0
    %6577 = vmatpush1.msra.mxu0 0.0
    %6578 = vmatprep.subr.mxu0 0.0
    %6579 = vmatpush1.msra.mxu0 0.0
    %6580 = vmatprep.subr.mxu0 0.0
    %6581 = vmatpush1.msra.mxu0 0.0
    %6582 = vmatprep.subr.mxu0 0.0
    %6583 = vmatpush1.msra.mxu0 0.0
    %6584 = vmatprep.subr.mxu0 0.0
    %6585 = vmatpush1.msra.mxu0 0.0
    %6586 = vmatprep.subr.mxu0 0.0
    %6587 = vmatpush1.msra.mxu0 0.0
    %6588 = vmatprep.subr.mxu0 0.0
    %6589 = vmatpush1.msra.mxu0 0.0
    %6590 = vmatprep.subr.mxu0 0.0
    %6591 = vmatpush1.msra.mxu0 0.0
    %6592 = vmatprep.subr.mxu0 0.0
    %6593 = vmatpush1.msra.mxu0 0.0
    %6594 = vmatprep.subr.mxu0 0.0
    %6595 = vmatpush1.msra.mxu0 0.0
    %6596 = vmatprep.subr.mxu0 0.0
    %6597 = vmatpush1.msra.mxu0 0.0
    %6598 = vmatprep.subr.mxu0 0.0
    %6599 = vmatpush1.msra.mxu0 0.0
    %6600 = vmatprep.subr.mxu0 0.0
    %6601 = vmatpush1.msra.mxu0 0.0
    %6602 = vmatprep.subr.mxu0 0.0
    %6603 = vmatpush1.msra.mxu0 0.0
    %6604 = vmatprep.subr.mxu0 0.0
    %6605 = vmatpush1.msra.mxu0 0.0
    %6606 = vmatprep.mubr.f32.mxu0 0.0
    %6607 = vmatmul.mubr.f32.gmra.mrb[0].mxu0 %v6540
    %v6608 = vpop.f32.mrb[0].mxu0
    %v6609 = vadd.f32 0.0, %v6608
    %v6610 = vpop.f32.mrb[0].mxu0
    %6611 = vdwg.mxu0
    %v6612 = vadd.f32 %v6527, %v6609
    %v6613 = vadd.f32 %v4862, %v6612
    %v6614 = vld [vmem:[#allocation5 + $0x100] sm:$0xff]
    %v6615 = vld [vmem:[#allocation5 + $0x108] sm:$0xff]
    %v6616 = vld [vmem:[#allocation5 + $0x110] sm:$0xff]
    %v6617 = vld [vmem:[#allocation5 + $0x118] sm:$0xff]
    %v6618 = vld [vmem:[#allocation5 + $0x120] sm:$0xff]
    %v6619 = vld [vmem:[#allocation5 + $0x128] sm:$0xff]
    %v6620 = vld [vmem:[#allocation5 + $0x130] sm:$0xff]
    %v6621 = vld [vmem:[#allocation5 + $0x138] sm:$0xff]
    %v6622 = vld [vmem:[#allocation5 + $0x140] sm:$0xff]
    %v6623 = vld [vmem:[#allocation5 + $0x148] sm:$0xff]
    %v6624 = vld [vmem:[#allocation5 + $0x150] sm:$0xff]
    %v6625 = vld [vmem:[#allocation5 + $0x158] sm:$0xff]
    %v6626 = vld [vmem:[#allocation5 + $0x160] sm:$0xff]
    %v6627 = vld [vmem:[#allocation5 + $0x168] sm:$0xff]
    %v6628 = vld [vmem:[#allocation5 + $0x170] sm:$0xff]
    %v6629 = vld [vmem:[#allocation5 + $0x178] sm:$0xff]
    %v6631 = vsel %vm296, %v6613, 0
    %6633 = vmatprep.subr.mxu0 %v6615
    %6634 = vmatpush1.msra.mxu0 %v6614
    %6635 = vmatprep.subr.mxu0 %v6617
    %6636 = vmatpush1.msra.mxu0 %v6616
    %6637 = vmatprep.subr.mxu0 %v6619
    %6638 = vmatpush1.msra.mxu0 %v6618
    %6639 = vmatprep.subr.mxu0 %v6621
    %6640 = vmatpush1.msra.mxu0 %v6620
    %6641 = vmatprep.subr.mxu0 %v6623
    %6642 = vmatpush1.msra.mxu0 %v6622
    %6643 = vmatprep.subr.mxu0 %v6625
    %6644 = vmatpush1.msra.mxu0 %v6624
    %6645 = vmatprep.subr.mxu0 %v6627
    %6646 = vmatpush1.msra.mxu0 %v6626
    %6647 = vmatprep.subr.mxu0 %v6629
    %6648 = vmatpush1.msra.mxu0 %v6628
    %6649 = vmatprep.subr.mxu0 0.0
    %6650 = vmatpush1.msra.mxu0 0.0
    %6651 = vmatprep.subr.mxu0 0.0
    %6652 = vmatpush1.msra.mxu0 0.0
    %6653 = vmatprep.subr.mxu0 0.0
    %6654 = vmatpush1.msra.mxu0 0.0
    %6655 = vmatprep.subr.mxu0 0.0
    %6656 = vmatpush1.msra.mxu0 0.0
    %6657 = vmatprep.subr.mxu0 0.0
    %6658 = vmatpush1.msra.mxu0 0.0
    %6659 = vmatprep.subr.mxu0 0.0
    %6660 = vmatpush1.msra.mxu0 0.0
    %6661 = vmatprep.subr.mxu0 0.0
    %6662 = vmatpush1.msra.mxu0 0.0
    %6663 = vmatprep.subr.mxu0 0.0
    %6664 = vmatpush1.msra.mxu0 0.0
    %6665 = vmatprep.subr.mxu0 0.0
    %6666 = vmatpush1.msra.mxu0 0.0
    %6667 = vmatprep.subr.mxu0 0.0
    %6668 = vmatpush1.msra.mxu0 0.0
    %6669 = vmatprep.subr.mxu0 0.0
    %6670 = vmatpush1.msra.mxu0 0.0
    %6671 = vmatprep.subr.mxu0 0.0
    %6672 = vmatpush1.msra.mxu0 0.0
    %6673 = vmatprep.subr.mxu0 0.0
    %6674 = vmatpush1.msra.mxu0 0.0
    %6675 = vmatprep.subr.mxu0 0.0
    %6676 = vmatpush1.msra.mxu0 0.0
    %6677 = vmatprep.subr.mxu0 0.0
    %6678 = vmatpush1.msra.mxu0 0.0
    %6679 = vmatprep.subr.mxu0 0.0
    %6680 = vmatpush1.msra.mxu0 0.0
    %6681 = vmatprep.subr.mxu0 0.0
    %6682 = vmatpush1.msra.mxu0 0.0
    %6683 = vmatprep.subr.mxu0 0.0
    %6684 = vmatpush1.msra.mxu0 0.0
    %6685 = vmatprep.subr.mxu0 0.0
    %6686 = vmatpush1.msra.mxu0 0.0
    %6687 = vmatprep.subr.mxu0 0.0
    %6688 = vmatpush1.msra.mxu0 0.0
    %6689 = vmatprep.subr.mxu0 0.0
    %6690 = vmatpush1.msra.mxu0 0.0
    %6691 = vmatprep.subr.mxu0 0.0
    %6692 = vmatpush1.msra.mxu0 0.0
    %6693 = vmatprep.subr.mxu0 0.0
    %6694 = vmatpush1.msra.mxu0 0.0
    %6695 = vmatprep.subr.mxu0 0.0
    %6696 = vmatpush1.msra.mxu0 0.0
    %6697 = vmatprep.mubr.f32.mxu0 0.0
    %6698 = vmatmul.mubr.f32.gmra.mrb[0].mxu0 %v6631
    %v6699 = vpop.f32.mrb[0].mxu0
    %v6700 = vadd.f32 0.0, %v6699
    %v6701 = vpop.f32.mrb[0].mxu0
    %v6702 = vadd.f32 0.0, %v6701
    %6703 = vdwg.mxu0
    %6704 = vrot.lane.b32.xlu0 %v6613, 64
    %v6705 = vpop.permute.xlu0 %6704
    %v6706 = vsel %vm296, %v6705, 0
    %6708 = vmatprep.subr.mxu0 %v6615
    %6709 = vmatpush1.msra.mxu0 %v6614
    %6710 = vmatprep.subr.mxu0 %v6617
    %6711 = vmatpush1.msra.mxu0 %v6616
    %6712 = vmatprep.subr.mxu0 %v6619
    %6713 = vmatpush1.msra.mxu0 %v6618
    %6714 = vmatprep.subr.mxu0 %v6621
    %6715 = vmatpush1.msra.mxu0 %v6620
    %6716 = vmatprep.subr.mxu0 %v6623
    %6717 = vmatpush1.msra.mxu0 %v6622
    %6718 = vmatprep.subr.mxu0 %v6625
    %6719 = vmatpush1.msra.mxu0 %v6624
    %6720 = vmatprep.subr.mxu0 %v6627
    %6721 = vmatpush1.msra.mxu0 %v6626
    %6722 = vmatprep.subr.mxu0 %v6629
    %6723 = vmatpush1.msra.mxu0 %v6628
    %6724 = vmatprep.subr.mxu0 0.0
    %6725 = vmatpush1.msra.mxu0 0.0
    %6726 = vmatprep.subr.mxu0 0.0
    %6727 = vmatpush1.msra.mxu0 0.0
    %6728 = vmatprep.subr.mxu0 0.0
    %6729 = vmatpush1.msra.mxu0 0.0
    %6730 = vmatprep.subr.mxu0 0.0
    %6731 = vmatpush1.msra.mxu0 0.0
    %6732 = vmatprep.subr.mxu0 0.0
    %6733 = vmatpush1.msra.mxu0 0.0
    %6734 = vmatprep.subr.mxu0 0.0
    %6735 = vmatpush1.msra.mxu0 0.0
    %6736 = vmatprep.subr.mxu0 0.0
    %6737 = vmatpush1.msra.mxu0 0.0
    %6738 = vmatprep.subr.mxu0 0.0
    %6739 = vmatpush1.msra.mxu0 0.0
    %6740 = vmatprep.subr.mxu0 0.0
    %6741 = vmatpush1.msra.mxu0 0.0
    %6742 = vmatprep.subr.mxu0 0.0
    %6743 = vmatpush1.msra.mxu0 0.0
    %6744 = vmatprep.subr.mxu0 0.0
    %6745 = vmatpush1.msra.mxu0 0.0
    %6746 = vmatprep.subr.mxu0 0.0
    %6747 = vmatpush1.msra.mxu0 0.0
    %6748 = vmatprep.subr.mxu0 0.0
    %6749 = vmatpush1.msra.mxu0 0.0
    %6750 = vmatprep.subr.mxu0 0.0
    %6751 = vmatpush1.msra.mxu0 0.0
    %6752 = vmatprep.subr.mxu0 0.0
    %6753 = vmatpush1.msra.mxu0 0.0
    %6754 = vmatprep.subr.mxu0 0.0
    %6755 = vmatpush1.msra.mxu0 0.0
    %6756 = vmatprep.subr.mxu0 0.0
    %6757 = vmatpush1.msra.mxu0 0.0
    %6758 = vmatprep.subr.mxu0 0.0
    %6759 = vmatpush1.msra.mxu0 0.0
    %6760 = vmatprep.subr.mxu0 0.0
    %6761 = vmatpush1.msra.mxu0 0.0
    %6762 = vmatprep.subr.mxu0 0.0
    %6763 = vmatpush1.msra.mxu0 0.0
    %6764 = vmatprep.subr.mxu0 0.0
    %6765 = vmatpush1.msra.mxu0 0.0
    %6766 = vmatprep.subr.mxu0 0.0
    %6767 = vmatpush1.msra.mxu0 0.0
    %6768 = vmatprep.subr.mxu0 0.0
    %6769 = vmatpush1.msra.mxu0 0.0
    %6770 = vmatprep.subr.mxu0 0.0
    %6771 = vmatpush1.msra.mxu0 0.0
    %6772 = vmatprep.mubr.f32.mxu0 0.0
    %6773 = vmatmul.mubr.f32.gmra.mrb[0].mxu0 %v6706
    %v6774 = vpop.f32.mrb[0].mxu0
    %v6775 = vadd.f32 0.0, %v6774
    %v6776 = vpop.f32.mrb[0].mxu0
    %v6777 = vadd.f32 0.0, %v6776
    %6778 = vdwg.mxu0
    %v6779 = vld [vmem:[#allocation5 + $0x80] sm:$0xff]
    %v6780 = vld [vmem:[#allocation5 + $0x88] sm:$0xff]
    %v6781 = vld [vmem:[#allocation5 + $0x90] sm:$0xff]
    %v6782 = vld [vmem:[#allocation5 + $0x98] sm:$0xff]
    %v6783 = vld [vmem:[#allocation5 + $0xa0] sm:$0xff]
    %v6784 = vld [vmem:[#allocation5 + $0xa8] sm:$0xff]
    %v6785 = vld [vmem:[#allocation5 + $0xb0] sm:$0xff]
    %v6786 = vld [vmem:[#allocation5 + $0xb8] sm:$0xff]
    %v6787 = vld [vmem:[#allocation5 + $0xc0] sm:$0xff]
    %v6788 = vld [vmem:[#allocation5 + $0xc8] sm:$0xff]
    %v6789 = vld [vmem:[#allocation5 + $0xd0] sm:$0xff]
    %v6790 = vld [vmem:[#allocation5 + $0xd8] sm:$0xff]
    %v6791 = vld [vmem:[#allocation5 + $0xe0] sm:$0xff]
    %v6792 = vld [vmem:[#allocation5 + $0xe8] sm:$0xff]
    %v6793 = vld [vmem:[#allocation5 + $0xf0] sm:$0xff]
    %v6794 = vld [vmem:[#allocation5 + $0xf8] sm:$0xff]
    %v6796 = vsel %vm296, %v5847, 0
    %6798 = vmatprep.subr.mxu0 %v6780
    %6799 = vmatpush1.msra.mxu0 %v6779
    %6800 = vmatprep.subr.mxu0 %v6782
    %6801 = vmatpush1.msra.mxu0 %v6781
    %6802 = vmatprep.subr.mxu0 %v6784
    %6803 = vmatpush1.msra.mxu0 %v6783
    %6804 = vmatprep.subr.mxu0 %v6786
    %6805 = vmatpush1.msra.mxu0 %v6785
    %6806 = vmatprep.subr.mxu0 %v6788
    %6807 = vmatpush1.msra.mxu0 %v6787
    %6808 = vmatprep.subr.mxu0 %v6790
    %6809 = vmatpush1.msra.mxu0 %v6789
    %6810 = vmatprep.subr.mxu0 %v6792
    %6811 = vmatpush1.msra.mxu0 %v6791
    %6812 = vmatprep.subr.mxu0 %v6794
    %6813 = vmatpush1.msra.mxu0 %v6793
    %6814 = vmatprep.subr.mxu0 0.0
    %6815 = vmatpush1.msra.mxu0 0.0
    %6816 = vmatprep.subr.mxu0 0.0
    %6817 = vmatpush1.msra.mxu0 0.0
    %6818 = vmatprep.subr.mxu0 0.0
    %6819 = vmatpush1.msra.mxu0 0.0
    %6820 = vmatprep.subr.mxu0 0.0
    %6821 = vmatpush1.msra.mxu0 0.0
    %6822 = vmatprep.subr.mxu0 0.0
    %6823 = vmatpush1.msra.mxu0 0.0
    %6824 = vmatprep.subr.mxu0 0.0
    %6825 = vmatpush1.msra.mxu0 0.0
    %6826 = vmatprep.subr.mxu0 0.0
    %6827 = vmatpush1.msra.mxu0 0.0
    %6828 = vmatprep.subr.mxu0 0.0
    %6829 = vmatpush1.msra.mxu0 0.0
    %6830 = vmatprep.subr.mxu0 0.0
    %6831 = vmatpush1.msra.mxu0 0.0
    %6832 = vmatprep.subr.mxu0 0.0
    %6833 = vmatpush1.msra.mxu0 0.0
    %6834 = vmatprep.subr.mxu0 0.0
    %6835 = vmatpush1.msra.mxu0 0.0
    %6836 = vmatprep.subr.mxu0 0.0
    %6837 = vmatpush1.msra.mxu0 0.0
    %6838 = vmatprep.subr.mxu0 0.0
    %6839 = vmatpush1.msra.mxu0 0.0
    %6840 = vmatprep.subr.mxu0 0.0
    %6841 = vmatpush1.msra.mxu0 0.0
    %6842 = vmatprep.subr.mxu0 0.0
    %6843 = vmatpush1.msra.mxu0 0.0
    %6844 = vmatprep.subr.mxu0 0.0
    %6845 = vmatpush1.msra.mxu0 0.0
    %6846 = vmatprep.subr.mxu0 0.0
    %6847 = vmatpush1.msra.mxu0 0.0
    %6848 = vmatprep.subr.mxu0 0.0
    %6849 = vmatpush1.msra.mxu0 0.0
    %6850 = vmatprep.subr.mxu0 0.0
    %6851 = vmatpush1.msra.mxu0 0.0
    %6852 = vmatprep.subr.mxu0 0.0
    %6853 = vmatpush1.msra.mxu0 0.0
    %6854 = vmatprep.subr.mxu0 0.0
    %6855 = vmatpush1.msra.mxu0 0.0
    %6856 = vmatprep.subr.mxu0 0.0
    %6857 = vmatpush1.msra.mxu0 0.0
    %6858 = vmatprep.subr.mxu0 0.0
    %6859 = vmatpush1.msra.mxu0 0.0
    %6860 = vmatprep.subr.mxu0 0.0
    %6861 = vmatpush1.msra.mxu0 0.0
    %6862 = vmatprep.mubr.f32.mxu0 0.0
    %6863 = vmatmul.mubr.f32.gmra.mrb[0].mxu0 %v6796
    %v6864 = vpop.f32.mrb[0].mxu0
    %v6865 = vadd.f32 0.0, %v6864
    %v6866 = vpop.f32.mrb[0].mxu0
    %v6867 = vadd.f32 0.0, %v6866
    %6868 = vdwg.mxu0
    %6869 = vrot.lane.b32.xlu0 %v5847, 64
    %v6870 = vpop.permute.xlu0 %6869
    %v6871 = vsel %vm296, %v6870, 0
    %6873 = vmatprep.subr.mxu0 %v6780
    %6874 = vmatpush1.msra.mxu0 %v6779
    %6875 = vmatprep.subr.mxu0 %v6782
    %6876 = vmatpush1.msra.mxu0 %v6781
    %6877 = vmatprep.subr.mxu0 %v6784
    %6878 = vmatpush1.msra.mxu0 %v6783
    %6879 = vmatprep.subr.mxu0 %v6786
    %6880 = vmatpush1.msra.mxu0 %v6785
    %6881 = vmatprep.subr.mxu0 %v6788
    %6882 = vmatpush1.msra.mxu0 %v6787
    %6883 = vmatprep.subr.mxu0 %v6790
    %6884 = vmatpush1.msra.mxu0 %v6789
    %6885 = vmatprep.subr.mxu0 %v6792
    %6886 = vmatpush1.msra.mxu0 %v6791
    %6887 = vmatprep.subr.mxu0 %v6794
    %6888 = vmatpush1.msra.mxu0 %v6793
    %6889 = vmatprep.subr.mxu0 0.0
    %6890 = vmatpush1.msra.mxu0 0.0
    %6891 = vmatprep.subr.mxu0 0.0
    %6892 = vmatpush1.msra.mxu0 0.0
    %6893 = vmatprep.subr.mxu0 0.0
    %6894 = vmatpush1.msra.mxu0 0.0
    %6895 = vmatprep.subr.mxu0 0.0
    %6896 = vmatpush1.msra.mxu0 0.0
    %6897 = vmatprep.subr.mxu0 0.0
    %6898 = vmatpush1.msra.mxu0 0.0
    %6899 = vmatprep.subr.mxu0 0.0
    %6900 = vmatpush1.msra.mxu0 0.0
    %6901 = vmatprep.subr.mxu0 0.0
    %6902 = vmatpush1.msra.mxu0 0.0
    %6903 = vmatprep.subr.mxu0 0.0
    %6904 = vmatpush1.msra.mxu0 0.0
    %6905 = vmatprep.subr.mxu0 0.0
    %6906 = vmatpush1.msra.mxu0 0.0
    %6907 = vmatprep.subr.mxu0 0.0
    %6908 = vmatpush1.msra.mxu0 0.0
    %6909 = vmatprep.subr.mxu0 0.0
    %6910 = vmatpush1.msra.mxu0 0.0
    %6911 = vmatprep.subr.mxu0 0.0
    %6912 = vmatpush1.msra.mxu0 0.0
    %6913 = vmatprep.subr.mxu0 0.0
    %6914 = vmatpush1.msra.mxu0 0.0
    %6915 = vmatprep.subr.mxu0 0.0
    %6916 = vmatpush1.msra.mxu0 0.0
    %6917 = vmatprep.subr.mxu0 0.0
    %6918 = vmatpush1.msra.mxu0 0.0
    %6919 = vmatprep.subr.mxu0 0.0
    %6920 = vmatpush1.msra.mxu0 0.0
    %6921 = vmatprep.subr.mxu0 0.0
    %6922 = vmatpush1.msra.mxu0 0.0
    %6923 = vmatprep.subr.mxu0 0.0
    %6924 = vmatpush1.msra.mxu0 0.0
    %6925 = vmatprep.subr.mxu0 0.0
    %6926 = vmatpush1.msra.mxu0 0.0
    %6927 = vmatprep.subr.mxu0 0.0
    %6928 = vmatpush1.msra.mxu0 0.0
    %6929 = vmatprep.subr.mxu0 0.0
    %6930 = vmatpush1.msra.mxu0 0.0
    %6931 = vmatprep.subr.mxu0 0.0
    %6932 = vmatpush1.msra.mxu0 0.0
    %6933 = vmatprep.subr.mxu0 0.0
    %6934 = vmatpush1.msra.mxu0 0.0
    %6935 = vmatprep.subr.mxu0 0.0
    %6936 = vmatpush1.msra.mxu0 0.0
    %6937 = vmatprep.mubr.f32.mxu0 0.0
    %6938 = vmatmul.mubr.f32.gmra.mrb[0].mxu0 %v6871
    %v6939 = vpop.f32.mrb[0].mxu0
    %v6940 = vadd.f32 0.0, %v6939
    %v6941 = vpop.f32.mrb[0].mxu0
    %v6942 = vadd.f32 0.0, %v6941
    %6943 = vdwg.mxu0
    %v6944 = vadd.s32 %v863, 128
    %v6945 = vadd.s32 %v863, 256
    %v6946 = vadd.s32 %v863, 384
    %v6947 = vand.u32 %v863, 15
    %v6948 = vand.u32 %v6944, 15
    %v6949 = vand.u32 %v6945, 15
    %v6950 = vand.u32 %v6946, 15
    %v6951 = vshra.s32 %v863, 4
    %v6952 = vshra.s32 %v6944, 4
    %v6953 = vshra.s32 %v6945, 4
    %v6954 = vshra.s32 %v6946, 4
    %v6955 = vand.u32 %v6951, 15
    %v6956 = vand.u32 %v6952, 15
    %v6957 = vand.u32 %v6953, 15
    %v6958 = vand.u32 %v6954, 15
    %vm6959 = vcmp.ge.s32.totalorder %v6947, 1
    %vm6960 = vcmp.ge.s32.totalorder %v6948, 1
    %vm6961 = vcmp.ge.s32.totalorder %v6949, 1
    %vm6962 = vcmp.ge.s32.totalorder %v6950, 1
    %vm6963 = vcmp.le.s32.totalorder %v6947, 14
    %vm6964 = vcmp.le.s32.totalorder %v6948, 14
    %vm6965 = vcmp.le.s32.totalorder %v6949, 14
    %vm6966 = vcmp.le.s32.totalorder %v6950, 14
    %vm6967 = vcmp.ge.s32.totalorder %v6955, 1
    %vm6968 = vcmp.ge.s32.totalorder %v6956, 1
    %vm6969 = vcmp.ge.s32.totalorder %v6957, 1
    %vm6970 = vcmp.ge.s32.totalorder %v6958, 1
    %vm6971 = vcmp.le.s32.totalorder %v6955, 14
    %vm6972 = vcmp.le.s32.totalorder %v6956, 14
    %vm6973 = vcmp.le.s32.totalorder %v6957, 14
    %vm6974 = vcmp.le.s32.totalorder %v6958, 14
    %vm6975 = vmand %vm6967, %vm6959
    %vm6976 = vmand %vm6968, %vm6960
    %vm6977 = vmand %vm6969, %vm6961
    %vm6978 = vmand %vm6970, %vm6962
    %v6979 = vsel %vm6975, 1, 0
    %v6980 = vsel %vm6976, 1, 0
    %v6981 = vsel %vm6977, 1, 0
    %v6982 = vsel %vm6978, 1, 0
    %v6983 = vcvt.s32.f32 %v6979
    %v6984 = vcvt.s32.f32 %v6980
    %v6985 = vcvt.s32.f32 %v6981
    %v6986 = vcvt.s32.f32 %v6982
    %v6987 = vsel %vm6967, 1, 0
    %v6988 = vsel %vm6968, 1, 0
    %v6989 = vsel %vm6969, 1, 0
    %v6990 = vsel %vm6970, 1, 0
    %v6991 = vcvt.s32.f32 %v6987
    %v6992 = vcvt.s32.f32 %v6988
    %v6993 = vcvt.s32.f32 %v6989
    %v6994 = vcvt.s32.f32 %v6990
    %vm6995 = vmand %vm6967, %vm6963
    %vm6996 = vmand %vm6968, %vm6964
    %vm6997 = vmand %vm6969, %vm6965
    %vm6998 = vmand %vm6970, %vm6966
    %v6999 = vsel %vm6995, 1, 0
    %v7000 = vsel %vm6996, 1, 0
    %v7001 = vsel %vm6997, 1, 0
    %v7002 = vsel %vm6998, 1, 0
    %v7003 = vcvt.s32.f32 %v6999
    %v7004 = vcvt.s32.f32 %v7000
    %v7005 = vcvt.s32.f32 %v7001
    %v7006 = vcvt.s32.f32 %v7002
    %v7007 = vsel %vm6959, 1, 0
    %v7008 = vsel %vm6960, 1, 0
    %v7009 = vsel %vm6961, 1, 0
    %v7010 = vsel %vm6962, 1, 0
    %v7011 = vcvt.s32.f32 %v7007
    %v7012 = vcvt.s32.f32 %v7008
    %v7013 = vcvt.s32.f32 %v7009
    %v7014 = vcvt.s32.f32 %v7010
    %v7015 = vsel %vm6963, 1, 0
    %v7016 = vsel %vm6964, 1, 0
    %v7017 = vsel %vm6965, 1, 0
    %v7018 = vsel %vm6966, 1, 0
    %v7019 = vcvt.s32.f32 %v7015
    %v7020 = vcvt.s32.f32 %v7016
    %v7021 = vcvt.s32.f32 %v7017
    %v7022 = vcvt.s32.f32 %v7018
    %vm7023 = vmand %vm6971, %vm6959
    %vm7024 = vmand %vm6972, %vm6960
    %vm7025 = vmand %vm6973, %vm6961
    %vm7026 = vmand %vm6974, %vm6962
    %v7027 = vsel %vm7023, 1, 0
    %v7028 = vsel %vm7024, 1, 0
    %v7029 = vsel %vm7025, 1, 0
    %v7030 = vsel %vm7026, 1, 0
    %v7031 = vcvt.s32.f32 %v7027
    %v7032 = vcvt.s32.f32 %v7028
    %v7033 = vcvt.s32.f32 %v7029
    %v7034 = vcvt.s32.f32 %v7030
    %v7035 = vsel %vm6971, 1, 0
    %v7036 = vsel %vm6972, 1, 0
    %v7037 = vsel %vm6973, 1, 0
    %v7038 = vsel %vm6974, 1, 0
    %v7039 = vcvt.s32.f32 %v7035
    %v7040 = vcvt.s32.f32 %v7036
    %v7041 = vcvt.s32.f32 %v7037
    %v7042 = vcvt.s32.f32 %v7038
    %vm7043 = vmand %vm6971, %vm6963
    %vm7044 = vmand %vm6972, %vm6964
    %vm7045 = vmand %vm6973, %vm6965
    %vm7046 = vmand %vm6974, %vm6966
    %v7047 = vsel %vm7043, 1, 0
    %v7048 = vsel %vm7044, 1, 0
    %v7049 = vsel %vm7045, 1, 0
    %v7050 = vsel %vm7046, 1, 0
    %v7051 = vcvt.s32.f32 %v7047
    %v7052 = vcvt.s32.f32 %v7048
    %v7053 = vcvt.s32.f32 %v7049
    %v7054 = vcvt.s32.f32 %v7050
    %7055 = vst [vmem:[#allocation2 + $0x8] sm:$0xff] %v6865
    %7056 = vst [vmem:[#allocation2 + $0x10] sm:$0xff] %v6867
    %7057 = vst [vmem:[#allocation2 + $0x18] sm:$0xff] %v6940
    %7058 = vst [vmem:[#allocation2 + $0x20] sm:$0xff] %v6942
    %v7059 = vld [vmem:[#allocation3 + $0x208] sm:$0xff]
    %7061 = vset.pattern.permute.xlu0 8
    %7062 = vperm.xlu0 %7061, %v7059
    %v7063 = vpop.permute.xlu0 %7062
    %v7065 = vadd.f32 %v7063, 0.0
    %v7066 = vld [vmem:[#allocation2] sm:$0xff]
    %v7067 = vld [vmem:[#allocation2 + $0x8] sm:$0xff]
    %v7068 = vld [vmem:[#allocation2 + $0x10] sm:$0xff]
    %v7069 = vld [vmem:[#allocation2 + $0x18] sm:$0xff]
    %v7070 = vld [vmem:[#allocation2 + $0x20] sm:$0xff]
    %7075 = vrot.lane.b32.xlu0 %v6983, 111
    %v7076 = vpop.permute.xlu0 %7075
    %7077 = vrot.lane.b32.xlu0 %v6984, 111
    %v7078 = vpop.permute.xlu0 %7077
    %7079 = vrot.lane.b32.xlu0 %v6985, 111
    %v7080 = vpop.permute.xlu0 %7079
    %7081 = vrot.lane.b32.xlu0 %v6986, 111
    %v7082 = vpop.permute.xlu0 %7081
    %vm7083 = vcmask 908288
    %v7084 = vsel %vm7083, %v7076, %v7078
    %v7085 = vsel %vm7083, %v7078, %v7080
    %v7086 = vsel %vm7083, %v7080, %v7082
    %v7092 = vmul.f32 %v7066, %v7076
    %v7093 = vmul.f32 %v7067, %v7084
    %v7094 = vmul.f32 %v7068, %v7085
    %v7095 = vmul.f32 %v7069, %v7086
    %v7096 = vmul.f32 %v7070, %v7082
    %7102 = vrot.lane.b32.xlu0 %v7092, 17
    %v7103 = vpop.permute.xlu0 %7102
    %7104 = vrot.lane.b32.xlu0 %v7093, 17
    %v7105 = vpop.permute.xlu0 %7104
    %7106 = vrot.lane.b32.xlu0 %v7094, 17
    %v7107 = vpop.permute.xlu0 %7106
    %7108 = vrot.lane.b32.xlu0 %v7095, 17
    %v7109 = vpop.permute.xlu0 %7108
    %7110 = vrot.lane.b32.xlu0 %v7096, 17
    %v7111 = vpop.permute.xlu0 %7110
    %vm7112 = vcmask 138240
    %v7113 = vsel %vm7112, %v7103, %v7105
    %v7114 = vsel %vm7112, %v7105, %v7107
    %v7115 = vsel %vm7112, %v7107, %v7109
    %v7116 = vsel %vm7112, %v7109, %v7111
    %v7121 = vsel %vm891, %v7059, 0
    %7123 = vmatprep.subr.mxu0 %v7114
    %7124 = vmatpush1.msra.mxu0 %v7113
    %7125 = vmatprep.subr.mxu0 0.0
    %7126 = vmatpush1.msra.mxu0 0.0
    %7127 = vmatprep.subr.mxu0 0.0
    %7128 = vmatpush1.msra.mxu0 0.0
    %7129 = vmatprep.subr.mxu0 0.0
    %7130 = vmatpush1.msra.mxu0 0.0
    %7131 = vmatprep.subr.mxu0 0.0
    %7132 = vmatpush1.msra.mxu0 0.0
    %7133 = vmatprep.subr.mxu0 0.0
    %7134 = vmatpush1.msra.mxu0 0.0
    %7135 = vmatprep.subr.mxu0 0.0
    %7136 = vmatpush1.msra.mxu0 0.0
    %7137 = vmatprep.subr.mxu0 0.0
    %7138 = vmatpush1.msra.mxu0 0.0
    %7139 = vmatprep.subr.mxu0 0.0
    %7140 = vmatpush1.msra.mxu0 0.0
    %7141 = vmatprep.subr.mxu0 0.0
    %7142 = vmatpush1.msra.mxu0 0.0
    %7143 = vmatprep.subr.mxu0 0.0
    %7144 = vmatpush1.msra.mxu0 0.0
    %7145 = vmatprep.subr.mxu0 0.0
    %7146 = vmatpush1.msra.mxu0 0.0
    %7147 = vmatprep.subr.mxu0 0.0
    %7148 = vmatpush1.msra.mxu0 0.0
    %7149 = vmatprep.subr.mxu0 0.0
    %7150 = vmatpush1.msra.mxu0 0.0
    %7151 = vmatprep.subr.mxu0 0.0
    %7152 = vmatpush1.msra.mxu0 0.0
    %7153 = vmatprep.subr.mxu0 0.0
    %7154 = vmatpush1.msra.mxu0 0.0
    %7155 = vmatprep.subr.mxu0 0.0
    %7156 = vmatpush1.msra.mxu0 0.0
    %7157 = vmatprep.subr.mxu0 0.0
    %7158 = vmatpush1.msra.mxu0 0.0
    %7159 = vmatprep.subr.mxu0 0.0
    %7160 = vmatpush1.msra.mxu0 0.0
    %7161 = vmatprep.subr.mxu0 0.0
    %7162 = vmatpush1.msra.mxu0 0.0
    %7163 = vmatprep.subr.mxu0 0.0
    %7164 = vmatpush1.msra.mxu0 0.0
    %7165 = vmatprep.subr.mxu0 0.0
    %7166 = vmatpush1.msra.mxu0 0.0
    %7167 = vmatprep.subr.mxu0 0.0
    %7168 = vmatpush1.msra.mxu0 0.0
    %7169 = vmatprep.subr.mxu0 0.0
    %7170 = vmatpush1.msra.mxu0 0.0
    %7171 = vmatprep.subr.mxu0 0.0
    %7172 = vmatpush1.msra.mxu0 0.0
    %7173 = vmatprep.subr.mxu0 0.0
    %7174 = vmatpush1.msra.mxu0 0.0
    %7175 = vmatprep.subr.mxu0 0.0
    %7176 = vmatpush1.msra.mxu0 0.0
    %7177 = vmatprep.subr.mxu0 0.0
    %7178 = vmatpush1.msra.mxu0 0.0
    %7179 = vmatprep.subr.mxu0 0.0
    %7180 = vmatpush1.msra.mxu0 0.0
    %7181 = vmatprep.subr.mxu0 0.0
    %7182 = vmatpush1.msra.mxu0 0.0
    %7183 = vmatprep.subr.mxu0 0.0
    %7184 = vmatpush1.msra.mxu0 0.0
    %7185 = vmatprep.subr.mxu0 0.0
    %7186 = vmatpush1.msra.mxu0 0.0
    %7187 = vmatprep.mubr.f32.mxu0 0.0
    %7188 = vmatmul.mubr.f32.gmra.mrb[0].mxu0 %v7121
    %v7189 = vpop.f32.mrb[0].mxu0
    %v7190 = vadd.f32 0.0, %v7189
    %v7191 = vpop.f32.mrb[0].mxu0
    %v7192 = vadd.f32 0.0, %v7191
    %7193 = vdwg.mxu0
    %7194 = vmatprep.subr.mxu0 %v7116
    %7195 = vmatpush1.msra.mxu0 %v7115
    %7196 = vmatprep.subr.mxu0 0.0
    %7197 = vmatpush1.msra.mxu0 0.0
    %7198 = vmatprep.subr.mxu0 0.0
    %7199 = vmatpush1.msra.mxu0 0.0
    %7200 = vmatprep.subr.mxu0 0.0
    %7201 = vmatpush1.msra.mxu0 0.0
    %7202 = vmatprep.subr.mxu0 0.0
    %7203 = vmatpush1.msra.mxu0 0.0
    %7204 = vmatprep.subr.mxu0 0.0
    %7205 = vmatpush1.msra.mxu0 0.0
    %7206 = vmatprep.subr.mxu0 0.0
    %7207 = vmatpush1.msra.mxu0 0.0
    %7208 = vmatprep.subr.mxu0 0.0
    %7209 = vmatpush1.msra.mxu0 0.0
    %7210 = vmatprep.subr.mxu0 0.0
    %7211 = vmatpush1.msra.mxu0 0.0
    %7212 = vmatprep.subr.mxu0 0.0
    %7213 = vmatpush1.msra.mxu0 0.0
    %7214 = vmatprep.subr.mxu0 0.0
    %7215 = vmatpush1.msra.mxu0 0.0
    %7216 = vmatprep.subr.mxu0 0.0
    %7217 = vmatpush1.msra.mxu0 0.0
    %7218 = vmatprep.subr.mxu0 0.0
    %7219 = vmatpush1.msra.mxu0 0.0
    %7220 = vmatprep.subr.mxu0 0.0
    %7221 = vmatpush1.msra.mxu0 0.0
    %7222 = vmatprep.subr.mxu0 0.0
    %7223 = vmatpush1.msra.mxu0 0.0
    %7224 = vmatprep.subr.mxu0 0.0
    %7225 = vmatpush1.msra.mxu0 0.0
    %7226 = vmatprep.subr.mxu0 0.0
    %7227 = vmatpush1.msra.mxu0 0.0
    %7228 = vmatprep.subr.mxu0 0.0
    %7229 = vmatpush1.msra.mxu0 0.0
    %7230 = vmatprep.subr.mxu0 0.0
    %7231 = vmatpush1.msra.mxu0 0.0
    %7232 = vmatprep.subr.mxu0 0.0
    %7233 = vmatpush1.msra.mxu0 0.0
    %7234 = vmatprep.subr.mxu0 0.0
    %7235 = vmatpush1.msra.mxu0 0.0
    %7236 = vmatprep.subr.mxu0 0.0
    %7237 = vmatpush1.msra.mxu0 0.0
    %7238 = vmatprep.subr.mxu0 0.0
    %7239 = vmatpush1.msra.mxu0 0.0
    %7240 = vmatprep.subr.mxu0 0.0
    %7241 = vmatpush1.msra.mxu0 0.0
    %7242 = vmatprep.subr.mxu0 0.0
    %7243 = vmatpush1.msra.mxu0 0.0
    %7244 = vmatprep.subr.mxu0 0.0
    %7245 = vmatpush1.msra.mxu0 0.0
    %7246 = vmatprep.subr.mxu0 0.0
    %7247 = vmatpush1.msra.mxu0 0.0
    %7248 = vmatprep.subr.mxu0 0.0
    %7249 = vmatpush1.msra.mxu0 0.0
    %7250 = vmatprep.subr.mxu0 0.0
    %7251 = vmatpush1.msra.mxu0 0.0
    %7252 = vmatprep.subr.mxu0 0.0
    %7253 = vmatpush1.msra.mxu0 0.0
    %7254 = vmatprep.subr.mxu0 0.0
    %7255 = vmatpush1.msra.mxu0 0.0
    %7256 = vmatprep.subr.mxu0 0.0
    %7257 = vmatpush1.msra.mxu0 0.0
    %7258 = vmatprep.mubr.f32.mxu0 0.0
    %7259 = vmatmul.mubr.f32.gmra.mrb[0].mxu0 %v7121
    %v7260 = vpop.f32.mrb[0].mxu0
    %v7261 = vadd.f32 0.0, %v7260
    %v7262 = vpop.f32.mrb[0].mxu0
    %v7263 = vadd.f32 0.0, %v7262
    %7264 = vdwg.mxu0
    %v7265 = vadd.f32 %v7065, %v7190
    %v7266 = vadd.f32 %v7065, %v7192
    %v7267 = vadd.f32 %v7065, %v7261
    %v7268 = vadd.f32 %v7065, %v7263
    %v7269 = vld [vmem:[#allocation3 + $0x210] sm:$0xff]
    %7274 = vrot.lane.b32.xlu0 %v6991, 112
    %v7275 = vpop.permute.xlu0 %7274
    %7276 = vrot.lane.b32.xlu0 %v6992, 112
    %v7277 = vpop.permute.xlu0 %7276
    %7278 = vrot.lane.b32.xlu0 %v6993, 112
    %v7279 = vpop.permute.xlu0 %7278
    %7280 = vrot.lane.b32.xlu0 %v6994, 112
    %v7281 = vpop.permute.xlu0 %7280
    %vm7282 = vcmask 916480
    %v7283 = vsel %vm7282, %v7275, %v7277
    %v7284 = vsel %vm7282, %v7277, %v7279
    %v7285 = vsel %vm7282, %v7279, %v7281
    %v7291 = vmul.f32 %v7066, %v7275
    %v7292 = vmul.f32 %v7067, %v7283
    %v7293 = vmul.f32 %v7068, %v7284
    %v7294 = vmul.f32 %v7069, %v7285
    %v7295 = vmul.f32 %v7070, %v7281
    %7301 = vrot.lane.b32.xlu0 %v7291, 16
    %v7302 = vpop.permute.xlu0 %7301
    %7303 = vrot.lane.b32.xlu0 %v7292, 16
    %v7304 = vpop.permute.xlu0 %7303
    %7305 = vrot.lane.b32.xlu0 %v7293, 16
    %v7306 = vpop.permute.xlu0 %7305
    %7307 = vrot.lane.b32.xlu0 %v7294, 16
    %v7308 = vpop.permute.xlu0 %7307
    %7309 = vrot.lane.b32.xlu0 %v7295, 16
    %v7310 = vpop.permute.xlu0 %7309
    %v7311 = vsel %vm607, %v7302, %v7304
    %v7312 = vsel %vm607, %v7304, %v7306
    %v7313 = vsel %vm607, %v7306, %v7308
    %v7314 = vsel %vm607, %v7308, %v7310
    %v7320 = vsel %vm891, %v7269, 0
    %7322 = vmatprep.subr.mxu0 %v7312
    %7323 = vmatpush1.msra.mxu0 %v7311
    %7324 = vmatprep.subr.mxu0 0.0
    %7325 = vmatpush1.msra.mxu0 0.0
    %7326 = vmatprep.subr.mxu0 0.0
    %7327 = vmatpush1.msra.mxu0 0.0
    %7328 = vmatprep.subr.mxu0 0.0
    %7329 = vmatpush1.msra.mxu0 0.0
    %7330 = vmatprep.subr.mxu0 0.0
    %7331 = vmatpush1.msra.mxu0 0.0
    %7332 = vmatprep.subr.mxu0 0.0
    %7333 = vmatpush1.msra.mxu0 0.0
    %7334 = vmatprep.subr.mxu0 0.0
    %7335 = vmatpush1.msra.mxu0 0.0
    %7336 = vmatprep.subr.mxu0 0.0
    %7337 = vmatpush1.msra.mxu0 0.0
    %7338 = vmatprep.subr.mxu0 0.0
    %7339 = vmatpush1.msra.mxu0 0.0
    %7340 = vmatprep.subr.mxu0 0.0
    %7341 = vmatpush1.msra.mxu0 0.0
    %7342 = vmatprep.subr.mxu0 0.0
    %7343 = vmatpush1.msra.mxu0 0.0
    %7344 = vmatprep.subr.mxu0 0.0
    %7345 = vmatpush1.msra.mxu0 0.0
    %7346 = vmatprep.subr.mxu0 0.0
    %7347 = vmatpush1.msra.mxu0 0.0
    %7348 = vmatprep.subr.mxu0 0.0
    %7349 = vmatpush1.msra.mxu0 0.0
    %7350 = vmatprep.subr.mxu0 0.0
    %7351 = vmatpush1.msra.mxu0 0.0
    %7352 = vmatprep.subr.mxu0 0.0
    %7353 = vmatpush1.msra.mxu0 0.0
    %7354 = vmatprep.subr.mxu0 0.0
    %7355 = vmatpush1.msra.mxu0 0.0
    %7356 = vmatprep.subr.mxu0 0.0
    %7357 = vmatpush1.msra.mxu0 0.0
    %7358 = vmatprep.subr.mxu0 0.0
    %7359 = vmatpush1.msra.mxu0 0.0
    %7360 = vmatprep.subr.mxu0 0.0
    %7361 = vmatpush1.msra.mxu0 0.0
    %7362 = vmatprep.subr.mxu0 0.0
    %7363 = vmatpush1.msra.mxu0 0.0
    %7364 = vmatprep.subr.mxu0 0.0
    %7365 = vmatpush1.msra.mxu0 0.0
    %7366 = vmatprep.subr.mxu0 0.0
    %7367 = vmatpush1.msra.mxu0 0.0
    %7368 = vmatprep.subr.mxu0 0.0
    %7369 = vmatpush1.msra.mxu0 0.0
    %7370 = vmatprep.subr.mxu0 0.0
    %7371 = vmatpush1.msra.mxu0 0.0
    %7372 = vmatprep.subr.mxu0 0.0
    %7373 = vmatpush1.msra.mxu0 0.0
    %7374 = vmatprep.subr.mxu0 0.0
    %7375 = vmatpush1.msra.mxu0 0.0
    %7376 = vmatprep.subr.mxu0 0.0
    %7377 = vmatpush1.msra.mxu0 0.0
    %7378 = vmatprep.subr.mxu0 0.0
    %7379 = vmatpush1.msra.mxu0 0.0
    %7380 = vmatprep.subr.mxu0 0.0
    %7381 = vmatpush1.msra.mxu0 0.0
    %7382 = vmatprep.subr.mxu0 0.0
    %7383 = vmatpush1.msra.mxu0 0.0
    %7384 = vmatprep.subr.mxu0 0.0
    %7385 = vmatpush1.msra.mxu0 0.0
    %7386 = vmatprep.mubr.f32.mxu0 0.0
    %7387 = vmatmul.mubr.f32.gmra.mrb[0].mxu0 %v7320
    %v7388 = vpop.f32.mrb[0].mxu0
    %v7389 = vadd.f32 0.0, %v7388
    %v7390 = vpop.f32.mrb[0].mxu0
    %v7391 = vadd.f32 0.0, %v7390
    %7392 = vdwg.mxu0
    %7393 = vmatprep.subr.mxu0 %v7314
    %7394 = vmatpush1.msra.mxu0 %v7313
    %7395 = vmatprep.subr.mxu0 0.0
    %7396 = vmatpush1.msra.mxu0 0.0
    %7397 = vmatprep.subr.mxu0 0.0
    %7398 = vmatpush1.msra.mxu0 0.0
    %7399 = vmatprep.subr.mxu0 0.0
    %7400 = vmatpush1.msra.mxu0 0.0
    %7401 = vmatprep.subr.mxu0 0.0
    %7402 = vmatpush1.msra.mxu0 0.0
    %7403 = vmatprep.subr.mxu0 0.0
    %7404 = vmatpush1.msra.mxu0 0.0
    %7405 = vmatprep.subr.mxu0 0.0
    %7406 = vmatpush1.msra.mxu0 0.0
    %7407 = vmatprep.subr.mxu0 0.0
    %7408 = vmatpush1.msra.mxu0 0.0
    %7409 = vmatprep.subr.mxu0 0.0
    %7410 = vmatpush1.msra.mxu0 0.0
    %7411 = vmatprep.subr.mxu0 0.0
    %7412 = vmatpush1.msra.mxu0 0.0
    %7413 = vmatprep.subr.mxu0 0.0
    %7414 = vmatpush1.msra.mxu0 0.0
    %7415 = vmatprep.subr.mxu0 0.0
    %7416 = vmatpush1.msra.mxu0 0.0
    %7417 = vmatprep.subr.mxu0 0.0
    %7418 = vmatpush1.msra.mxu0 0.0
    %7419 = vmatprep.subr.mxu0 0.0
    %7420 = vmatpush1.msra.mxu0 0.0
    %7421 = vmatprep.subr.mxu0 0.0
    %7422 = vmatpush1.msra.mxu0 0.0
    %7423 = vmatprep.subr.mxu0 0.0
    %7424 = vmatpush1.msra.mxu0 0.0
    %7425 = vmatprep.subr.mxu0 0.0
    %7426 = vmatpush1.msra.mxu0 0.0
    %7427 = vmatprep.subr.mxu0 0.0
    %7428 = vmatpush1.msra.mxu0 0.0
    %7429 = vmatprep.subr.mxu0 0.0
    %7430 = vmatpush1.msra.mxu0 0.0
    %7431 = vmatprep.subr.mxu0 0.0
    %7432 = vmatpush1.msra.mxu0 0.0
    %7433 = vmatprep.subr.mxu0 0.0
    %7434 = vmatpush1.msra.mxu0 0.0
    %7435 = vmatprep.subr.mxu0 0.0
    %7436 = vmatpush1.msra.mxu0 0.0
    %7437 = vmatprep.subr.mxu0 0.0
    %7438 = vmatpush1.msra.mxu0 0.0
    %7439 = vmatprep.subr.mxu0 0.0
    %7440 = vmatpush1.msra.mxu0 0.0
    %7441 = vmatprep.subr.mxu0 0.0
    %7442 = vmatpush1.msra.mxu0 0.0
    %7443 = vmatprep.subr.mxu0 0.0
    %7444 = vmatpush1.msra.mxu0 0.0
    %7445 = vmatprep.subr.mxu0 0.0
    %7446 = vmatpush1.msra.mxu0 0.0
    %7447 = vmatprep.subr.mxu0 0.0
    %7448 = vmatpush1.msra.mxu0 0.0
    %7449 = vmatprep.subr.mxu0 0.0
    %7450 = vmatpush1.msra.mxu0 0.0
    %7451 = vmatprep.subr.mxu0 0.0
    %7452 = vmatpush1.msra.mxu0 0.0
    %7453 = vmatprep.subr.mxu0 0.0
    %7454 = vmatpush1.msra.mxu0 0.0
    %7455 = vmatprep.subr.mxu0 0.0
    %7456 = vmatpush1.msra.mxu0 0.0
    %7457 = vmatprep.mubr.f32.mxu0 0.0
    %7458 = vmatmul.mubr.f32.gmra.mrb[0].mxu0 %v7320
    %v7459 = vpop.f32.mrb[0].mxu0
    %v7460 = vadd.f32 0.0, %v7459
    %v7461 = vpop.f32.mrb[0].mxu0
    %v7462 = vadd.f32 0.0, %v7461
    %7463 = vdwg.mxu0
    %v7464 = vadd.f32 %v7265, %v7389
    %v7465 = vadd.f32 %v7266, %v7391
    %v7466 = vadd.f32 %v7267, %v7460
    %v7467 = vadd.f32 %v7268, %v7462
    %v7468 = vld [vmem:[#allocation3 + $0x218] sm:$0xff]
    %7473 = vrot.lane.b32.xlu0 %v7003, 113
    %v7474 = vpop.permute.xlu0 %7473
    %7475 = vrot.lane.b32.xlu0 %v7004, 113
    %v7476 = vpop.permute.xlu0 %7475
    %7477 = vrot.lane.b32.xlu0 %v7005, 113
    %v7478 = vpop.permute.xlu0 %7477
    %7479 = vrot.lane.b32.xlu0 %v7006, 113
    %v7480 = vpop.permute.xlu0 %7479
    %vm7481 = vcmask 924672
    %v7482 = vsel %vm7481, %v7474, %v7476
    %v7483 = vsel %vm7481, %v7476, %v7478
    %v7484 = vsel %vm7481, %v7478, %v7480
    %v7490 = vmul.f32 %v7066, %v7474
    %v7491 = vmul.f32 %v7067, %v7482
    %v7492 = vmul.f32 %v7068, %v7483
    %v7493 = vmul.f32 %v7069, %v7484
    %v7494 = vmul.f32 %v7070, %v7480
    %7500 = vrot.lane.b32.xlu0 %v7490, 15
    %v7501 = vpop.permute.xlu0 %7500
    %7502 = vrot.lane.b32.xlu0 %v7491, 15
    %v7503 = vpop.permute.xlu0 %7502
    %7504 = vrot.lane.b32.xlu0 %v7492, 15
    %v7505 = vpop.permute.xlu0 %7504
    %7506 = vrot.lane.b32.xlu0 %v7493, 15
    %v7507 = vpop.permute.xlu0 %7506
    %7508 = vrot.lane.b32.xlu0 %v7494, 15
    %v7509 = vpop.permute.xlu0 %7508
    %vm7510 = vcmask 121856
    %v7511 = vsel %vm7510, %v7501, %v7503
    %v7512 = vsel %vm7510, %v7503, %v7505
    %v7513 = vsel %vm7510, %v7505, %v7507
    %v7514 = vsel %vm7510, %v7507, %v7509
    %v7520 = vsel %vm891, %v7468, 0
    %7522 = vmatprep.subr.mxu0 %v7512
    %7523 = vmatpush1.msra.mxu0 %v7511
    %7524 = vmatprep.subr.mxu0 0.0
    %7525 = vmatpush1.msra.mxu0 0.0
    %7526 = vmatprep.subr.mxu0 0.0
    %7527 = vmatpush1.msra.mxu0 0.0
    %7528 = vmatprep.subr.mxu0 0.0
    %7529 = vmatpush1.msra.mxu0 0.0
    %7530 = vmatprep.subr.mxu0 0.0
    %7531 = vmatpush1.msra.mxu0 0.0
    %7532 = vmatprep.subr.mxu0 0.0
    %7533 = vmatpush1.msra.mxu0 0.0
    %7534 = vmatprep.subr.mxu0 0.0
    %7535 = vmatpush1.msra.mxu0 0.0
    %7536 = vmatprep.subr.mxu0 0.0
    %7537 = vmatpush1.msra.mxu0 0.0
    %7538 = vmatprep.subr.mxu0 0.0
    %7539 = vmatpush1.msra.mxu0 0.0
    %7540 = vmatprep.subr.mxu0 0.0
    %7541 = vmatpush1.msra.mxu0 0.0
    %7542 = vmatprep.subr.mxu0 0.0
    %7543 = vmatpush1.msra.mxu0 0.0
    %7544 = vmatprep.subr.mxu0 0.0
    %7545 = vmatpush1.msra.mxu0 0.0
    %7546 = vmatprep.subr.mxu0 0.0
    %7547 = vmatpush1.msra.mxu0 0.0
    %7548 = vmatprep.subr.mxu0 0.0
    %7549 = vmatpush1.msra.mxu0 0.0
    %7550 = vmatprep.subr.mxu0 0.0
    %7551 = vmatpush1.msra.mxu0 0.0
    %7552 = vmatprep.subr.mxu0 0.0
    %7553 = vmatpush1.msra.mxu0 0.0
    %7554 = vmatprep.subr.mxu0 0.0
    %7555 = vmatpush1.msra.mxu0 0.0
    %7556 = vmatprep.subr.mxu0 0.0
    %7557 = vmatpush1.msra.mxu0 0.0
    %7558 = vmatprep.subr.mxu0 0.0
    %7559 = vmatpush1.msra.mxu0 0.0
    %7560 = vmatprep.subr.mxu0 0.0
    %7561 = vmatpush1.msra.mxu0 0.0
    %7562 = vmatprep.subr.mxu0 0.0
    %7563 = vmatpush1.msra.mxu0 0.0
    %7564 = vmatprep.subr.mxu0 0.0
    %7565 = vmatpush1.msra.mxu0 0.0
    %7566 = vmatprep.subr.mxu0 0.0
    %7567 = vmatpush1.msra.mxu0 0.0
    %7568 = vmatprep.subr.mxu0 0.0
    %7569 = vmatpush1.msra.mxu0 0.0
    %7570 = vmatprep.subr.mxu0 0.0
    %7571 = vmatpush1.msra.mxu0 0.0
    %7572 = vmatprep.subr.mxu0 0.0
    %7573 = vmatpush1.msra.mxu0 0.0
    %7574 = vmatprep.subr.mxu0 0.0
    %7575 = vmatpush1.msra.mxu0 0.0
    %7576 = vmatprep.subr.mxu0 0.0
    %7577 = vmatpush1.msra.mxu0 0.0
    %7578 = vmatprep.subr.mxu0 0.0
    %7579 = vmatpush1.msra.mxu0 0.0
    %7580 = vmatprep.subr.mxu0 0.0
    %7581 = vmatpush1.msra.mxu0 0.0
    %7582 = vmatprep.subr.mxu0 0.0
    %7583 = vmatpush1.msra.mxu0 0.0
    %7584 = vmatprep.subr.mxu0 0.0
    %7585 = vmatpush1.msra.mxu0 0.0
    %7586 = vmatprep.mubr.f32.mxu0 0.0
    %7587 = vmatmul.mubr.f32.gmra.mrb[0].mxu0 %v7520
    %v7588 = vpop.f32.mrb[0].mxu0
    %v7589 = vadd.f32 0.0, %v7588
    %v7590 = vpop.f32.mrb[0].mxu0
    %v7591 = vadd.f32 0.0, %v7590
    %7592 = vdwg.mxu0
    %7593 = vmatprep.subr.mxu0 %v7514
    %7594 = vmatpush1.msra.mxu0 %v7513
    %7595 = vmatprep.subr.mxu0 0.0
    %7596 = vmatpush1.msra.mxu0 0.0
    %7597 = vmatprep.subr.mxu0 0.0
    %7598 = vmatpush1.msra.mxu0 0.0
    %7599 = vmatprep.subr.mxu0 0.0
    %7600 = vmatpush1.msra.mxu0 0.0
    %7601 = vmatprep.subr.mxu0 0.0
    %7602 = vmatpush1.msra.mxu0 0.0
    %7603 = vmatprep.subr.mxu0 0.0
    %7604 = vmatpush1.msra.mxu0 0.0
    %7605 = vmatprep.subr.mxu0 0.0
    %7606 = vmatpush1.msra.mxu0 0.0
    %7607 = vmatprep.subr.mxu0 0.0
    %7608 = vmatpush1.msra.mxu0 0.0
    %7609 = vmatprep.subr.mxu0 0.0
    %7610 = vmatpush1.msra.mxu0 0.0
    %7611 = vmatprep.subr.mxu0 0.0
    %7612 = vmatpush1.msra.mxu0 0.0
    %7613 = vmatprep.subr.mxu0 0.0
    %7614 = vmatpush1.msra.mxu0 0.0
    %7615 = vmatprep.subr.mxu0 0.0
    %7616 = vmatpush1.msra.mxu0 0.0
    %7617 = vmatprep.subr.mxu0 0.0
    %7618 = vmatpush1.msra.mxu0 0.0
    %7619 = vmatprep.subr.mxu0 0.0
    %7620 = vmatpush1.msra.mxu0 0.0
    %7621 = vmatprep.subr.mxu0 0.0
    %7622 = vmatpush1.msra.mxu0 0.0
    %7623 = vmatprep.subr.mxu0 0.0
    %7624 = vmatpush1.msra.mxu0 0.0
    %7625 = vmatprep.subr.mxu0 0.0
    %7626 = vmatpush1.msra.mxu0 0.0
    %7627 = vmatprep.subr.mxu0 0.0
    %7628 = vmatpush1.msra.mxu0 0.0
    %7629 = vmatprep.subr.mxu0 0.0
    %7630 = vmatpush1.msra.mxu0 0.0
    %7631 = vmatprep.subr.mxu0 0.0
    %7632 = vmatpush1.msra.mxu0 0.0
    %7633 = vmatprep.subr.mxu0 0.0
    %7634 = vmatpush1.msra.mxu0 0.0
    %7635 = vmatprep.subr.mxu0 0.0
    %7636 = vmatpush1.msra.mxu0 0.0
    %7637 = vmatprep.subr.mxu0 0.0
    %7638 = vmatpush1.msra.mxu0 0.0
    %7639 = vmatprep.subr.mxu0 0.0
    %7640 = vmatpush1.msra.mxu0 0.0
    %7641 = vmatprep.subr.mxu0 0.0
    %7642 = vmatpush1.msra.mxu0 0.0
    %7643 = vmatprep.subr.mxu0 0.0
    %7644 = vmatpush1.msra.mxu0 0.0
    %7645 = vmatprep.subr.mxu0 0.0
    %7646 = vmatpush1.msra.mxu0 0.0
    %7647 = vmatprep.subr.mxu0 0.0
    %7648 = vmatpush1.msra.mxu0 0.0
    %7649 = vmatprep.subr.mxu0 0.0
    %7650 = vmatpush1.msra.mxu0 0.0
    %7651 = vmatprep.subr.mxu0 0.0
    %7652 = vmatpush1.msra.mxu0 0.0
    %7653 = vmatprep.subr.mxu0 0.0
    %7654 = vmatpush1.msra.mxu0 0.0
    %7655 = vmatprep.subr.mxu0 0.0
    %7656 = vmatpush1.msra.mxu0 0.0
    %7657 = vmatprep.mubr.f32.mxu0 0.0
    %7658 = vmatmul.mubr.f32.gmra.mrb[0].mxu0 %v7520
    %v7659 = vpop.f32.mrb[0].mxu0
    %v7660 = vadd.f32 0.0, %v7659
    %v7661 = vpop.f32.mrb[0].mxu0
    %v7662 = vadd.f32 0.0, %v7661
    %7663 = vdwg.mxu0
    %v7664 = vadd.f32 %v7464, %v7589
    %v7665 = vadd.f32 %v7465, %v7591
    %v7666 = vadd.f32 %v7466, %v7660
    %v7667 = vadd.f32 %v7467, %v7662
    %v7668 = vld [vmem:[#allocation3 + $0x220] sm:$0xff]
    %7673 = vrot.lane.b32.xlu0 %v7011, 127
    %v7674 = vpop.permute.xlu0 %7673
    %7675 = vrot.lane.b32.xlu0 %v7012, 127
    %v7676 = vpop.permute.xlu0 %7675
    %7677 = vrot.lane.b32.xlu0 %v7013, 127
    %v7678 = vpop.permute.xlu0 %7677
    %7679 = vrot.lane.b32.xlu0 %v7014, 127
    %v7680 = vpop.permute.xlu0 %7679
    %v7681 = vsel %vm5500, %v7674, %v7676
    %v7682 = vsel %vm5500, %v7676, %v7678
    %v7683 = vsel %vm5500, %v7678, %v7680
    %v7689 = vmul.f32 %v7066, %v7674
    %v7690 = vmul.f32 %v7067, %v7681
    %v7691 = vmul.f32 %v7068, %v7682
    %v7692 = vmul.f32 %v7069, %v7683
    %v7693 = vmul.f32 %v7070, %v7680
    %7699 = vrot.lane.b32.xlu0 %v7689, 1
    %v7700 = vpop.permute.xlu0 %7699
    %7701 = vrot.lane.b32.xlu0 %v7690, 1
    %v7702 = vpop.permute.xlu0 %7701
    %7703 = vrot.lane.b32.xlu0 %v7691, 1
    %v7704 = vpop.permute.xlu0 %7703
    %7705 = vrot.lane.b32.xlu0 %v7692, 1
    %v7706 = vpop.permute.xlu0 %7705
    %7707 = vrot.lane.b32.xlu0 %v7693, 1
    %v7708 = vpop.permute.xlu0 %7707
    %v7709 = vsel %vm1212, %v7700, %v7702
    %v7710 = vsel %vm1212, %v7702, %v7704
    %v7711 = vsel %vm1212, %v7704, %v7706
    %v7712 = vsel %vm1212, %v7706, %v7708
    %v7718 = vsel %vm891, %v7668, 0
    %7720 = vmatprep.subr.mxu0 %v7710
    %7721 = vmatpush1.msra.mxu0 %v7709
    %7722 = vmatprep.subr.mxu0 0.0
    %7723 = vmatpush1.msra.mxu0 0.0
    %7724 = vmatprep.subr.mxu0 0.0
    %7725 = vmatpush1.msra.mxu0 0.0
    %7726 = vmatprep.subr.mxu0 0.0
    %7727 = vmatpush1.msra.mxu0 0.0
    %7728 = vmatprep.subr.mxu0 0.0
    %7729 = vmatpush1.msra.mxu0 0.0
    %7730 = vmatprep.subr.mxu0 0.0
    %7731 = vmatpush1.msra.mxu0 0.0
    %7732 = vmatprep.subr.mxu0 0.0
    %7733 = vmatpush1.msra.mxu0 0.0
    %7734 = vmatprep.subr.mxu0 0.0
    %7735 = vmatpush1.msra.mxu0 0.0
    %7736 = vmatprep.subr.mxu0 0.0
    %7737 = vmatpush1.msra.mxu0 0.0
    %7738 = vmatprep.subr.mxu0 0.0
    %7739 = vmatpush1.msra.mxu0 0.0
    %7740 = vmatprep.subr.mxu0 0.0
    %7741 = vmatpush1.msra.mxu0 0.0
    %7742 = vmatprep.subr.mxu0 0.0
    %7743 = vmatpush1.msra.mxu0 0.0
    %7744 = vmatprep.subr.mxu0 0.0
    %7745 = vmatpush1.msra.mxu0 0.0
    %7746 = vmatprep.subr.mxu0 0.0
    %7747 = vmatpush1.msra.mxu0 0.0
    %7748 = vmatprep.subr.mxu0 0.0
    %7749 = vmatpush1.msra.mxu0 0.0
    %7750 = vmatprep.subr.mxu0 0.0
    %7751 = vmatpush1.msra.mxu0 0.0
    %7752 = vmatprep.subr.mxu0 0.0
    %7753 = vmatpush1.msra.mxu0 0.0
    %7754 = vmatprep.subr.mxu0 0.0
    %7755 = vmatpush1.msra.mxu0 0.0
    %7756 = vmatprep.subr.mxu0 0.0
    %7757 = vmatpush1.msra.mxu0 0.0
    %7758 = vmatprep.subr.mxu0 0.0
    %7759 = vmatpush1.msra.mxu0 0.0
    %7760 = vmatprep.subr.mxu0 0.0
    %7761 = vmatpush1.msra.mxu0 0.0
    %7762 = vmatprep.subr.mxu0 0.0
    %7763 = vmatpush1.msra.mxu0 0.0
    %7764 = vmatprep.subr.mxu0 0.0
    %7765 = vmatpush1.msra.mxu0 0.0
    %7766 = vmatprep.subr.mxu0 0.0
    %7767 = vmatpush1.msra.mxu0 0.0
    %7768 = vmatprep.subr.mxu0 0.0
    %7769 = vmatpush1.msra.mxu0 0.0
    %7770 = vmatprep.subr.mxu0 0.0
    %7771 = vmatpush1.msra.mxu0 0.0
    %7772 = vmatprep.subr.mxu0 0.0
    %7773 = vmatpush1.msra.mxu0 0.0
    %7774 = vmatprep.subr.mxu0 0.0
    %7775 = vmatpush1.msra.mxu0 0.0
    %7776 = vmatprep.subr.mxu0 0.0
    %7777 = vmatpush1.msra.mxu0 0.0
    %7778 = vmatprep.subr.mxu0 0.0
    %7779 = vmatpush1.msra.mxu0 0.0
    %7780 = vmatprep.subr.mxu0 0.0
    %7781 = vmatpush1.msra.mxu0 0.0
    %7782 = vmatprep.subr.mxu0 0.0
    %7783 = vmatpush1.msra.mxu0 0.0
    %7784 = vmatprep.mubr.f32.mxu0 0.0
    %7785 = vmatmul.mubr.f32.gmra.mrb[0].mxu0 %v7718
    %v7786 = vpop.f32.mrb[0].mxu0
    %v7787 = vadd.f32 0.0, %v7786
    %v7788 = vpop.f32.mrb[0].mxu0
    %v7789 = vadd.f32 0.0, %v7788
    %7790 = vdwg.mxu0
    %7791 = vmatprep.subr.mxu0 %v7712
    %7792 = vmatpush1.msra.mxu0 %v7711
    %7793 = vmatprep.subr.mxu0 0.0
    %7794 = vmatpush1.msra.mxu0 0.0
    %7795 = vmatprep.subr.mxu0 0.0
    %7796 = vmatpush1.msra.mxu0 0.0
    %7797 = vmatprep.subr.mxu0 0.0
    %7798 = vmatpush1.msra.mxu0 0.0
    %7799 = vmatprep.subr.mxu0 0.0
    %7800 = vmatpush1.msra.mxu0 0.0
    %7801 = vmatprep.subr.mxu0 0.0
    %7802 = vmatpush1.msra.mxu0 0.0
    %7803 = vmatprep.subr.mxu0 0.0
    %7804 = vmatpush1.msra.mxu0 0.0
    %7805 = vmatprep.subr.mxu0 0.0
    %7806 = vmatpush1.msra.mxu0 0.0
    %7807 = vmatprep.subr.mxu0 0.0
    %7808 = vmatpush1.msra.mxu0 0.0
    %7809 = vmatprep.subr.mxu0 0.0
    %7810 = vmatpush1.msra.mxu0 0.0
    %7811 = vmatprep.subr.mxu0 0.0
    %7812 = vmatpush1.msra.mxu0 0.0
    %7813 = vmatprep.subr.mxu0 0.0
    %7814 = vmatpush1.msra.mxu0 0.0
    %7815 = vmatprep.subr.mxu0 0.0
    %7816 = vmatpush1.msra.mxu0 0.0
    %7817 = vmatprep.subr.mxu0 0.0
    %7818 = vmatpush1.msra.mxu0 0.0
    %7819 = vmatprep.subr.mxu0 0.0
    %7820 = vmatpush1.msra.mxu0 0.0
    %7821 = vmatprep.subr.mxu0 0.0
    %7822 = vmatpush1.msra.mxu0 0.0
    %7823 = vmatprep.subr.mxu0 0.0
    %7824 = vmatpush1.msra.mxu0 0.0
    %7825 = vmatprep.subr.mxu0 0.0
    %7826 = vmatpush1.msra.mxu0 0.0
    %7827 = vmatprep.subr.mxu0 0.0
    %7828 = vmatpush1.msra.mxu0 0.0
    %7829 = vmatprep.subr.mxu0 0.0
    %7830 = vmatpush1.msra.mxu0 0.0
    %7831 = vmatprep.subr.mxu0 0.0
    %7832 = vmatpush1.msra.mxu0 0.0
    %7833 = vmatprep.subr.mxu0 0.0
    %7834 = vmatpush1.msra.mxu0 0.0
    %7835 = vmatprep.subr.mxu0 0.0
    %7836 = vmatpush1.msra.mxu0 0.0
    %7837 = vmatprep.subr.mxu0 0.0
    %7838 = vmatpush1.msra.mxu0 0.0
    %7839 = vmatprep.subr.mxu0 0.0
    %7840 = vmatpush1.msra.mxu0 0.0
    %7841 = vmatprep.subr.mxu0 0.0
    %7842 = vmatpush1.msra.mxu0 0.0
    %7843 = vmatprep.subr.mxu0 0.0
    %7844 = vmatpush1.msra.mxu0 0.0
    %7845 = vmatprep.subr.mxu0 0.0
    %7846 = vmatpush1.msra.mxu0 0.0
    %7847 = vmatprep.subr.mxu0 0.0
    %7848 = vmatpush1.msra.mxu0 0.0
    %7849 = vmatprep.subr.mxu0 0.0
    %7850 = vmatpush1.msra.mxu0 0.0
    %7851 = vmatprep.subr.mxu0 0.0
    %7852 = vmatpush1.msra.mxu0 0.0
    %7853 = vmatprep.subr.mxu0 0.0
    %7854 = vmatpush1.msra.mxu0 0.0
    %7855 = vmatprep.mubr.f32.mxu0 0.0
    %7856 = vmatmul.mubr.f32.gmra.mrb[0].mxu0 %v7718
    %v7857 = vpop.f32.mrb[0].mxu0
    %v7858 = vadd.f32 0.0, %v7857
    %v7859 = vpop.f32.mrb[0].mxu0
    %v7860 = vadd.f32 0.0, %v7859
    %7861 = vdwg.mxu0
    %v7862 = vadd.f32 %v7664, %v7787
    %v7863 = vadd.f32 %v7665, %v7789
    %v7864 = vadd.f32 %v7666, %v7858
    %v7865 = vadd.f32 %v7667, %v7860
    %v7866 = vld [vmem:[#allocation3 + $0x228] sm:$0xff]
    %v7868 = vsel %vm891, %v7866, 0
    %7870 = vmatprep.subr.mxu0 %v7068
    %7871 = vmatpush1.msra.mxu0 %v7067
    %7872 = vmatprep.subr.mxu0 0.0
    %7873 = vmatpush1.msra.mxu0 0.0
    %7874 = vmatprep.subr.mxu0 0.0
    %7875 = vmatpush1.msra.mxu0 0.0
    %7876 = vmatprep.subr.mxu0 0.0
    %7877 = vmatpush1.msra.mxu0 0.0
    %7878 = vmatprep.subr.mxu0 0.0
    %7879 = vmatpush1.msra.mxu0 0.0
    %7880 = vmatprep.subr.mxu0 0.0
    %7881 = vmatpush1.msra.mxu0 0.0
    %7882 = vmatprep.subr.mxu0 0.0
    %7883 = vmatpush1.msra.mxu0 0.0
    %7884 = vmatprep.subr.mxu0 0.0
    %7885 = vmatpush1.msra.mxu0 0.0
    %7886 = vmatprep.subr.mxu0 0.0
    %7887 = vmatpush1.msra.mxu0 0.0
    %7888 = vmatprep.subr.mxu0 0.0
    %7889 = vmatpush1.msra.mxu0 0.0
    %7890 = vmatprep.subr.mxu0 0.0
    %7891 = vmatpush1.msra.mxu0 0.0
    %7892 = vmatprep.subr.mxu0 0.0
    %7893 = vmatpush1.msra.mxu0 0.0
    %7894 = vmatprep.subr.mxu0 0.0
    %7895 = vmatpush1.msra.mxu0 0.0
    %7896 = vmatprep.subr.mxu0 0.0
    %7897 = vmatpush1.msra.mxu0 0.0
    %7898 = vmatprep.subr.mxu0 0.0
    %7899 = vmatpush1.msra.mxu0 0.0
    %7900 = vmatprep.subr.mxu0 0.0
    %7901 = vmatpush1.msra.mxu0 0.0
    %7902 = vmatprep.subr.mxu0 0.0
    %7903 = vmatpush1.msra.mxu0 0.0
    %7904 = vmatprep.subr.mxu0 0.0
    %7905 = vmatpush1.msra.mxu0 0.0
    %7906 = vmatprep.subr.mxu0 0.0
    %7907 = vmatpush1.msra.mxu0 0.0
    %7908 = vmatprep.subr.mxu0 0.0
    %7909 = vmatpush1.msra.mxu0 0.0
    %7910 = vmatprep.subr.mxu0 0.0
    %7911 = vmatpush1.msra.mxu0 0.0
    %7912 = vmatprep.subr.mxu0 0.0
    %7913 = vmatpush1.msra.mxu0 0.0
    %7914 = vmatprep.subr.mxu0 0.0
    %7915 = vmatpush1.msra.mxu0 0.0
    %7916 = vmatprep.subr.mxu0 0.0
    %7917 = vmatpush1.msra.mxu0 0.0
    %7918 = vmatprep.subr.mxu0 0.0
    %7919 = vmatpush1.msra.mxu0 0.0
    %7920 = vmatprep.subr.mxu0 0.0
    %7921 = vmatpush1.msra.mxu0 0.0
    %7922 = vmatprep.subr.mxu0 0.0
    %7923 = vmatpush1.msra.mxu0 0.0
    %7924 = vmatprep.subr.mxu0 0.0
    %7925 = vmatpush1.msra.mxu0 0.0
    %7926 = vmatprep.subr.mxu0 0.0
    %7927 = vmatpush1.msra.mxu0 0.0
    %7928 = vmatprep.subr.mxu0 0.0
    %7929 = vmatpush1.msra.mxu0 0.0
    %7930 = vmatprep.subr.mxu0 0.0
    %7931 = vmatpush1.msra.mxu0 0.0
    %7932 = vmatprep.subr.mxu0 0.0
    %7933 = vmatpush1.msra.mxu0 0.0
    %7934 = vmatprep.mubr.f32.mxu0 0.0
    %7935 = vmatmul.mubr.f32.gmra.mrb[0].mxu0 %v7868
    %v7936 = vpop.f32.mrb[0].mxu0
    %v7937 = vadd.f32 0.0, %v7936
    %v7938 = vpop.f32.mrb[0].mxu0
    %v7939 = vadd.f32 0.0, %v7938
    %7940 = vdwg.mxu0
    %7941 = vmatprep.subr.mxu0 %v7070
    %7942 = vmatpush1.msra.mxu0 %v7069
    %7943 = vmatprep.subr.mxu0 0.0
    %7944 = vmatpush1.msra.mxu0 0.0
    %7945 = vmatprep.subr.mxu0 0.0
    %7946 = vmatpush1.msra.mxu0 0.0
    %7947 = vmatprep.subr.mxu0 0.0
    %7948 = vmatpush1.msra.mxu0 0.0
    %7949 = vmatprep.subr.mxu0 0.0
    %7950 = vmatpush1.msra.mxu0 0.0
    %7951 = vmatprep.subr.mxu0 0.0
    %7952 = vmatpush1.msra.mxu0 0.0
    %7953 = vmatprep.subr.mxu0 0.0
    %7954 = vmatpush1.msra.mxu0 0.0
    %7955 = vmatprep.subr.mxu0 0.0
    %7956 = vmatpush1.msra.mxu0 0.0
    %7957 = vmatprep.subr.mxu0 0.0
    %7958 = vmatpush1.msra.mxu0 0.0
    %7959 = vmatprep.subr.mxu0 0.0
    %7960 = vmatpush1.msra.mxu0 0.0
    %7961 = vmatprep.subr.mxu0 0.0
    %7962 = vmatpush1.msra.mxu0 0.0
    %7963 = vmatprep.subr.mxu0 0.0
    %7964 = vmatpush1.msra.mxu0 0.0
    %7965 = vmatprep.subr.mxu0 0.0
    %7966 = vmatpush1.msra.mxu0 0.0
    %7967 = vmatprep.subr.mxu0 0.0
    %7968 = vmatpush1.msra.mxu0 0.0
    %7969 = vmatprep.subr.mxu0 0.0
    %7970 = vmatpush1.msra.mxu0 0.0
    %7971 = vmatprep.subr.mxu0 0.0
    %7972 = vmatpush1.msra.mxu0 0.0
    %7973 = vmatprep.subr.mxu0 0.0
    %7974 = vmatpush1.msra.mxu0 0.0
    %7975 = vmatprep.subr.mxu0 0.0
    %7976 = vmatpush1.msra.mxu0 0.0
    %7977 = vmatprep.subr.mxu0 0.0
    %7978 = vmatpush1.msra.mxu0 0.0
    %7979 = vmatprep.subr.mxu0 0.0
    %7980 = vmatpush1.msra.mxu0 0.0
    %7981 = vmatprep.subr.mxu0 0.0
    %7982 = vmatpush1.msra.mxu0 0.0
    %7983 = vmatprep.subr.mxu0 0.0
    %7984 = vmatpush1.msra.mxu0 0.0
    %7985 = vmatprep.subr.mxu0 0.0
    %7986 = vmatpush1.msra.mxu0 0.0
    %7987 = vmatprep.subr.mxu0 0.0
    %7988 = vmatpush1.msra.mxu0 0.0
    %7989 = vmatprep.subr.mxu0 0.0
    %7990 = vmatpush1.msra.mxu0 0.0
    %7991 = vmatprep.subr.mxu0 0.0
    %7992 = vmatpush1.msra.mxu0 0.0
    %7993 = vmatprep.subr.mxu0 0.0
    %7994 = vmatpush1.msra.mxu0 0.0
    %7995 = vmatprep.subr.mxu0 0.0
    %7996 = vmatpush1.msra.mxu0 0.0
    %7997 = vmatprep.subr.mxu0 0.0
    %7998 = vmatpush1.msra.mxu0 0.0
    %7999 = vmatprep.subr.mxu0 0.0
    %8000 = vmatpush1.msra.mxu0 0.0
    %8001 = vmatprep.subr.mxu0 0.0
    %8002 = vmatpush1.msra.mxu0 0.0
    %8003 = vmatprep.subr.mxu0 0.0
    %8004 = vmatpush1.msra.mxu0 0.0
    %8005 = vmatprep.mubr.f32.mxu0 0.0
    %8006 = vmatmul.mubr.f32.gmra.mrb[0].mxu0 %v7868
    %v8007 = vpop.f32.mrb[0].mxu0
    %v8008 = vadd.f32 0.0, %v8007
    %v8009 = vpop.f32.mrb[0].mxu0
    %v8010 = vadd.f32 0.0, %v8009
    %8011 = vdwg.mxu0
    %v8012 = vadd.f32 %v7862, %v7937
    %v8013 = vadd.f32 %v7863, %v7939
    %v8014 = vadd.f32 %v7864, %v8008
    %v8015 = vadd.f32 %v7865, %v8010
    %v8016 = vld [vmem:[#allocation3 + $0x230] sm:$0xff]
    %v8017 = vld [vmem:[#allocation2 + $0x8] sm:$0xff]
    %v8018 = vld [vmem:[#allocation2 + $0x10] sm:$0xff]
    %v8019 = vld [vmem:[#allocation2 + $0x18] sm:$0xff]
    %v8020 = vld [vmem:[#allocation2 + $0x20] sm:$0xff]
    %v8021 = vld [vmem:[#allocation2 + $0x28] sm:$0xff]
    %8026 = vrot.lane.b32.xlu0 %v7019, 1
    %v8027 = vpop.permute.xlu0 %8026
    %8028 = vrot.lane.b32.xlu0 %v7020, 1
    %v8029 = vpop.permute.xlu0 %8028
    %8030 = vrot.lane.b32.xlu0 %v7021, 1
    %v8031 = vpop.permute.xlu0 %8030
    %8032 = vrot.lane.b32.xlu0 %v7022, 1
    %v8033 = vpop.permute.xlu0 %8032
    %v8034 = vsel %vm1212, %v8027, %v8029
    %v8035 = vsel %vm1212, %v8029, %v8031
    %v8036 = vsel %vm1212, %v8031, %v8033
    %v8042 = vmul.f32 %v8017, %v8027
    %v8043 = vmul.f32 %v8018, %v8034
    %v8044 = vmul.f32 %v8019, %v8035
    %v8045 = vmul.f32 %v8020, %v8036
    %v8046 = vmul.f32 %v8021, %v8033
    %8052 = vrot.lane.b32.xlu0 %v8042, 127
    %v8053 = vpop.permute.xlu0 %8052
    %8054 = vrot.lane.b32.xlu0 %v8043, 127
    %v8055 = vpop.permute.xlu0 %8054
    %8056 = vrot.lane.b32.xlu0 %v8044, 127
    %v8057 = vpop.permute.xlu0 %8056
    %8058 = vrot.lane.b32.xlu0 %v8045, 127
    %v8059 = vpop.permute.xlu0 %8058
    %8060 = vrot.lane.b32.xlu0 %v8046, 127
    %v8061 = vpop.permute.xlu0 %8060
    %v8062 = vsel %vm5500, %v8053, %v8055
    %v8063 = vsel %vm5500, %v8055, %v8057
    %v8064 = vsel %vm5500, %v8057, %v8059
    %v8065 = vsel %vm5500, %v8059, %v8061
    %v8071 = vsel %vm891, %v8016, 0
    %8073 = vmatprep.subr.mxu0 %v8063
    %8074 = vmatpush1.msra.mxu0 %v8062
    %8075 = vmatprep.subr.mxu0 0.0
    %8076 = vmatpush1.msra.mxu0 0.0
    %8077 = vmatprep.subr.mxu0 0.0
    %8078 = vmatpush1.msra.mxu0 0.0
    %8079 = vmatprep.subr.mxu0 0.0
    %8080 = vmatpush1.msra.mxu0 0.0
    %8081 = vmatprep.subr.mxu0 0.0
    %8082 = vmatpush1.msra.mxu0 0.0
    %8083 = vmatprep.subr.mxu0 0.0
    %8084 = vmatpush1.msra.mxu0 0.0
    %8085 = vmatprep.subr.mxu0 0.0
    %8086 = vmatpush1.msra.mxu0 0.0
    %8087 = vmatprep.subr.mxu0 0.0
    %8088 = vmatpush1.msra.mxu0 0.0
    %8089 = vmatprep.subr.mxu0 0.0
    %8090 = vmatpush1.msra.mxu0 0.0
    %8091 = vmatprep.subr.mxu0 0.0
    %8092 = vmatpush1.msra.mxu0 0.0
    %8093 = vmatprep.subr.mxu0 0.0
    %8094 = vmatpush1.msra.mxu0 0.0
    %8095 = vmatprep.subr.mxu0 0.0
    %8096 = vmatpush1.msra.mxu0 0.0
    %8097 = vmatprep.subr.mxu0 0.0
    %8098 = vmatpush1.msra.mxu0 0.0
    %8099 = vmatprep.subr.mxu0 0.0
    %8100 = vmatpush1.msra.mxu0 0.0
    %8101 = vmatprep.subr.mxu0 0.0
    %8102 = vmatpush1.msra.mxu0 0.0
    %8103 = vmatprep.subr.mxu0 0.0
    %8104 = vmatpush1.msra.mxu0 0.0
    %8105 = vmatprep.subr.mxu0 0.0
    %8106 = vmatpush1.msra.mxu0 0.0
    %8107 = vmatprep.subr.mxu0 0.0
    %8108 = vmatpush1.msra.mxu0 0.0
    %8109 = vmatprep.subr.mxu0 0.0
    %8110 = vmatpush1.msra.mxu0 0.0
    %8111 = vmatprep.subr.mxu0 0.0
    %8112 = vmatpush1.msra.mxu0 0.0
    %8113 = vmatprep.subr.mxu0 0.0
    %8114 = vmatpush1.msra.mxu0 0.0
    %8115 = vmatprep.subr.mxu0 0.0
    %8116 = vmatpush1.msra.mxu0 0.0
    %8117 = vmatprep.subr.mxu0 0.0
    %8118 = vmatpush1.msra.mxu0 0.0
    %8119 = vmatprep.subr.mxu0 0.0
    %8120 = vmatpush1.msra.mxu0 0.0
    %8121 = vmatprep.subr.mxu0 0.0
    %8122 = vmatpush1.msra.mxu0 0.0
    %8123 = vmatprep.subr.mxu0 0.0
    %8124 = vmatpush1.msra.mxu0 0.0
    %8125 = vmatprep.subr.mxu0 0.0
    %8126 = vmatpush1.msra.mxu0 0.0
    %8127 = vmatprep.subr.mxu0 0.0
    %8128 = vmatpush1.msra.mxu0 0.0
    %8129 = vmatprep.subr.mxu0 0.0
    %8130 = vmatpush1.msra.mxu0 0.0
    %8131 = vmatprep.subr.mxu0 0.0
    %8132 = vmatpush1.msra.mxu0 0.0
    %8133 = vmatprep.subr.mxu0 0.0
    %8134 = vmatpush1.msra.mxu0 0.0
    %8135 = vmatprep.subr.mxu0 0.0
    %8136 = vmatpush1.msra.mxu0 0.0
    %8137 = vmatprep.mubr.f32.mxu0 0.0
    %8138 = vmatmul.mubr.f32.gmra.mrb[0].mxu0 %v8071
    %v8139 = vpop.f32.mrb[0].mxu0
    %v8140 = vadd.f32 0.0, %v8139
    %v8141 = vpop.f32.mrb[0].mxu0
    %v8142 = vadd.f32 0.0, %v8141
    %8143 = vdwg.mxu0
    %8144 = vmatprep.subr.mxu0 %v8065
    %8145 = vmatpush1.msra.mxu0 %v8064
    %8146 = vmatprep.subr.mxu0 0.0
    %8147 = vmatpush1.msra.mxu0 0.0
    %8148 = vmatprep.subr.mxu0 0.0
    %8149 = vmatpush1.msra.mxu0 0.0
    %8150 = vmatprep.subr.mxu0 0.0
    %8151 = vmatpush1.msra.mxu0 0.0
    %8152 = vmatprep.subr.mxu0 0.0
    %8153 = vmatpush1.msra.mxu0 0.0
    %8154 = vmatprep.subr.mxu0 0.0
    %8155 = vmatpush1.msra.mxu0 0.0
    %8156 = vmatprep.subr.mxu0 0.0
    %8157 = vmatpush1.msra.mxu0 0.0
    %8158 = vmatprep.subr.mxu0 0.0
    %8159 = vmatpush1.msra.mxu0 0.0
    %8160 = vmatprep.subr.mxu0 0.0
    %8161 = vmatpush1.msra.mxu0 0.0
    %8162 = vmatprep.subr.mxu0 0.0
    %8163 = vmatpush1.msra.mxu0 0.0
    %8164 = vmatprep.subr.mxu0 0.0
    %8165 = vmatpush1.msra.mxu0 0.0
    %8166 = vmatprep.subr.mxu0 0.0
    %8167 = vmatpush1.msra.mxu0 0.0
    %8168 = vmatprep.subr.mxu0 0.0
    %8169 = vmatpush1.msra.mxu0 0.0
    %8170 = vmatprep.subr.mxu0 0.0
    %8171 = vmatpush1.msra.mxu0 0.0
    %8172 = vmatprep.subr.mxu0 0.0
    %8173 = vmatpush1.msra.mxu0 0.0
    %8174 = vmatprep.subr.mxu0 0.0
    %8175 = vmatpush1.msra.mxu0 0.0
    %8176 = vmatprep.subr.mxu0 0.0
    %8177 = vmatpush1.msra.mxu0 0.0
    %8178 = vmatprep.subr.mxu0 0.0
    %8179 = vmatpush1.msra.mxu0 0.0
    %8180 = vmatprep.subr.mxu0 0.0
    %8181 = vmatpush1.msra.mxu0 0.0
    %8182 = vmatprep.subr.mxu0 0.0
    %8183 = vmatpush1.msra.mxu0 0.0
    %8184 = vmatprep.subr.mxu0 0.0
    %8185 = vmatpush1.msra.mxu0 0.0
    %8186 = vmatprep.subr.mxu0 0.0
    %8187 = vmatpush1.msra.mxu0 0.0
    %8188 = vmatprep.subr.mxu0 0.0
    %8189 = vmatpush1.msra.mxu0 0.0
    %8190 = vmatprep.subr.mxu0 0.0
    %8191 = vmatpush1.msra.mxu0 0.0
    %8192 = vmatprep.subr.mxu0 0.0
    %8193 = vmatpush1.msra.mxu0 0.0
    %8194 = vmatprep.subr.mxu0 0.0
    %8195 = vmatpush1.msra.mxu0 0.0
    %8196 = vmatprep.subr.mxu0 0.0
    %8197 = vmatpush1.msra.mxu0 0.0
    %8198 = vmatprep.subr.mxu0 0.0
    %8199 = vmatpush1.msra.mxu0 0.0
    %8200 = vmatprep.subr.mxu0 0.0
    %8201 = vmatpush1.msra.mxu0 0.0
    %8202 = vmatprep.subr.mxu0 0.0
    %8203 = vmatpush1.msra.mxu0 0.0
    %8204 = vmatprep.subr.mxu0 0.0
    %8205 = vmatpush1.msra.mxu0 0.0
    %8206 = vmatprep.subr.mxu0 0.0
    %8207 = vmatpush1.msra.mxu0 0.0
    %8208 = vmatprep.mubr.f32.mxu0 0.0
    %8209 = vmatmul.mubr.f32.gmra.mrb[0].mxu0 %v8071
    %v8210 = vpop.f32.mrb[0].mxu0
    %v8211 = vadd.f32 0.0, %v8210
    %v8212 = vpop.f32.mrb[0].mxu0
    %v8213 = vadd.f32 0.0, %v8212
    %8214 = vdwg.mxu0
    %v8215 = vadd.f32 %v8012, %v8140
    %v8216 = vadd.f32 %v8013, %v8142
    %v8217 = vadd.f32 %v8014, %v8211
    %v8218 = vadd.f32 %v8015, %v8213
    %v8219 = vld [vmem:[#allocation3 + $0x238] sm:$0xff]
    %8224 = vrot.lane.b32.xlu0 %v7031, 15
    %v8225 = vpop.permute.xlu0 %8224
    %8226 = vrot.lane.b32.xlu0 %v7032, 15
    %v8227 = vpop.permute.xlu0 %8226
    %8228 = vrot.lane.b32.xlu0 %v7033, 15
    %v8229 = vpop.permute.xlu0 %8228
    %8230 = vrot.lane.b32.xlu0 %v7034, 15
    %v8231 = vpop.permute.xlu0 %8230
    %v8232 = vsel %vm7510, %v8225, %v8227
    %v8233 = vsel %vm7510, %v8227, %v8229
    %v8234 = vsel %vm7510, %v8229, %v8231
    %v8240 = vmul.f32 %v8017, %v8225
    %v8241 = vmul.f32 %v8018, %v8232
    %v8242 = vmul.f32 %v8019, %v8233
    %v8243 = vmul.f32 %v8020, %v8234
    %v8244 = vmul.f32 %v8021, %v8231
    %8250 = vrot.lane.b32.xlu0 %v8240, 113
    %v8251 = vpop.permute.xlu0 %8250
    %8252 = vrot.lane.b32.xlu0 %v8241, 113
    %v8253 = vpop.permute.xlu0 %8252
    %8254 = vrot.lane.b32.xlu0 %v8242, 113
    %v8255 = vpop.permute.xlu0 %8254
    %8256 = vrot.lane.b32.xlu0 %v8243, 113
    %v8257 = vpop.permute.xlu0 %8256
    %8258 = vrot.lane.b32.xlu0 %v8244, 113
    %v8259 = vpop.permute.xlu0 %8258
    %v8260 = vsel %vm7481, %v8251, %v8253
    %v8261 = vsel %vm7481, %v8253, %v8255
    %v8262 = vsel %vm7481, %v8255, %v8257
    %v8263 = vsel %vm7481, %v8257, %v8259
    %v8269 = vsel %vm891, %v8219, 0
    %8271 = vmatprep.subr.mxu0 %v8261
    %8272 = vmatpush1.msra.mxu0 %v8260
    %8273 = vmatprep.subr.mxu0 0.0
    %8274 = vmatpush1.msra.mxu0 0.0
    %8275 = vmatprep.subr.mxu0 0.0
    %8276 = vmatpush1.msra.mxu0 0.0
    %8277 = vmatprep.subr.mxu0 0.0
    %8278 = vmatpush1.msra.mxu0 0.0
    %8279 = vmatprep.subr.mxu0 0.0
    %8280 = vmatpush1.msra.mxu0 0.0
    %8281 = vmatprep.subr.mxu0 0.0
    %8282 = vmatpush1.msra.mxu0 0.0
    %8283 = vmatprep.subr.mxu0 0.0
    %8284 = vmatpush1.msra.mxu0 0.0
    %8285 = vmatprep.subr.mxu0 0.0
    %8286 = vmatpush1.msra.mxu0 0.0
    %8287 = vmatprep.subr.mxu0 0.0
    %8288 = vmatpush1.msra.mxu0 0.0
    %8289 = vmatprep.subr.mxu0 0.0
    %8290 = vmatpush1.msra.mxu0 0.0
    %8291 = vmatprep.subr.mxu0 0.0
    %8292 = vmatpush1.msra.mxu0 0.0
    %8293 = vmatprep.subr.mxu0 0.0
    %8294 = vmatpush1.msra.mxu0 0.0
    %8295 = vmatprep.subr.mxu0 0.0
    %8296 = vmatpush1.msra.mxu0 0.0
    %8297 = vmatprep.subr.mxu0 0.0
    %8298 = vmatpush1.msra.mxu0 0.0
    %8299 = vmatprep.subr.mxu0 0.0
    %8300 = vmatpush1.msra.mxu0 0.0
    %8301 = vmatprep.subr.mxu0 0.0
    %8302 = vmatpush1.msra.mxu0 0.0
    %8303 = vmatprep.subr.mxu0 0.0
    %8304 = vmatpush1.msra.mxu0 0.0
    %8305 = vmatprep.subr.mxu0 0.0
    %8306 = vmatpush1.msra.mxu0 0.0
    %8307 = vmatprep.subr.mxu0 0.0
    %8308 = vmatpush1.msra.mxu0 0.0
    %8309 = vmatprep.subr.mxu0 0.0
    %8310 = vmatpush1.msra.mxu0 0.0
    %8311 = vmatprep.subr.mxu0 0.0
    %8312 = vmatpush1.msra.mxu0 0.0
    %8313 = vmatprep.subr.mxu0 0.0
    %8314 = vmatpush1.msra.mxu0 0.0
    %8315 = vmatprep.subr.mxu0 0.0
    %8316 = vmatpush1.msra.mxu0 0.0
    %8317 = vmatprep.subr.mxu0 0.0
    %8318 = vmatpush1.msra.mxu0 0.0
    %8319 = vmatprep.subr.mxu0 0.0
    %8320 = vmatpush1.msra.mxu0 0.0
    %8321 = vmatprep.subr.mxu0 0.0
    %8322 = vmatpush1.msra.mxu0 0.0
    %8323 = vmatprep.subr.mxu0 0.0
    %8324 = vmatpush1.msra.mxu0 0.0
    %8325 = vmatprep.subr.mxu0 0.0
    %8326 = vmatpush1.msra.mxu0 0.0
    %8327 = vmatprep.subr.mxu0 0.0
    %8328 = vmatpush1.msra.mxu0 0.0
    %8329 = vmatprep.subr.mxu0 0.0
    %8330 = vmatpush1.msra.mxu0 0.0
    %8331 = vmatprep.subr.mxu0 0.0
    %8332 = vmatpush1.msra.mxu0 0.0
    %8333 = vmatprep.subr.mxu0 0.0
    %8334 = vmatpush1.msra.mxu0 0.0
    %8335 = vmatprep.mubr.f32.mxu0 0.0
    %8336 = vmatmul.mubr.f32.gmra.mrb[0].mxu0 %v8269
    %v8337 = vpop.f32.mrb[0].mxu0
    %v8338 = vadd.f32 0.0, %v8337
    %v8339 = vpop.f32.mrb[0].mxu0
    %v8340 = vadd.f32 0.0, %v8339
    %8341 = vdwg.mxu0
    %8342 = vmatprep.subr.mxu0 %v8263
    %8343 = vmatpush1.msra.mxu0 %v8262
    %8344 = vmatprep.subr.mxu0 0.0
    %8345 = vmatpush1.msra.mxu0 0.0
    %8346 = vmatprep.subr.mxu0 0.0
    %8347 = vmatpush1.msra.mxu0 0.0
    %8348 = vmatprep.subr.mxu0 0.0
    %8349 = vmatpush1.msra.mxu0 0.0
    %8350 = vmatprep.subr.mxu0 0.0
    %8351 = vmatpush1.msra.mxu0 0.0
    %8352 = vmatprep.subr.mxu0 0.0
    %8353 = vmatpush1.msra.mxu0 0.0
    %8354 = vmatprep.subr.mxu0 0.0
    %8355 = vmatpush1.msra.mxu0 0.0
    %8356 = vmatprep.subr.mxu0 0.0
    %8357 = vmatpush1.msra.mxu0 0.0
    %8358 = vmatprep.subr.mxu0 0.0
    %8359 = vmatpush1.msra.mxu0 0.0
    %8360 = vmatprep.subr.mxu0 0.0
    %8361 = vmatpush1.msra.mxu0 0.0
    %8362 = vmatprep.subr.mxu0 0.0
    %8363 = vmatpush1.msra.mxu0 0.0
    %8364 = vmatprep.subr.mxu0 0.0
    %8365 = vmatpush1.msra.mxu0 0.0
    %8366 = vmatprep.subr.mxu0 0.0
    %8367 = vmatpush1.msra.mxu0 0.0
    %8368 = vmatprep.subr.mxu0 0.0
    %8369 = vmatpush1.msra.mxu0 0.0
    %8370 = vmatprep.subr.mxu0 0.0
    %8371 = vmatpush1.msra.mxu0 0.0
    %8372 = vmatprep.subr.mxu0 0.0
    %8373 = vmatpush1.msra.mxu0 0.0
    %8374 = vmatprep.subr.mxu0 0.0
    %8375 = vmatpush1.msra.mxu0 0.0
    %8376 = vmatprep.subr.mxu0 0.0
    %8377 = vmatpush1.msra.mxu0 0.0
    %8378 = vmatprep.subr.mxu0 0.0
    %8379 = vmatpush1.msra.mxu0 0.0
    %8380 = vmatprep.subr.mxu0 0.0
    %8381 = vmatpush1.msra.mxu0 0.0
    %8382 = vmatprep.subr.mxu0 0.0
    %8383 = vmatpush1.msra.mxu0 0.0
    %8384 = vmatprep.subr.mxu0 0.0
    %8385 = vmatpush1.msra.mxu0 0.0
    %8386 = vmatprep.subr.mxu0 0.0
    %8387 = vmatpush1.msra.mxu0 0.0
    %8388 = vmatprep.subr.mxu0 0.0
    %8389 = vmatpush1.msra.mxu0 0.0
    %8390 = vmatprep.subr.mxu0 0.0
    %8391 = vmatpush1.msra.mxu0 0.0
    %8392 = vmatprep.subr.mxu0 0.0
    %8393 = vmatpush1.msra.mxu0 0.0
    %8394 = vmatprep.subr.mxu0 0.0
    %8395 = vmatpush1.msra.mxu0 0.0
    %8396 = vmatprep.subr.mxu0 0.0
    %8397 = vmatpush1.msra.mxu0 0.0
    %8398 = vmatprep.subr.mxu0 0.0
    %8399 = vmatpush1.msra.mxu0 0.0
    %8400 = vmatprep.subr.mxu0 0.0
    %8401 = vmatpush1.msra.mxu0 0.0
    %8402 = vmatprep.subr.mxu0 0.0
    %8403 = vmatpush1.msra.mxu0 0.0
    %8404 = vmatprep.subr.mxu0 0.0
    %8405 = vmatpush1.msra.mxu0 0.0
    %8406 = vmatprep.mubr.f32.mxu0 0.0
    %8407 = vmatmul.mubr.f32.gmra.mrb[0].mxu0 %v8269
    %v8408 = vpop.f32.mrb[0].mxu0
    %v8409 = vadd.f32 0.0, %v8408
    %v8410 = vpop.f32.mrb[0].mxu0
    %v8411 = vadd.f32 0.0, %v8410
    %8412 = vdwg.mxu0
    %v8413 = vadd.f32 %v8215, %v8338
    %v8414 = vadd.f32 %v8216, %v8340
    %v8415 = vadd.f32 %v8217, %v8409
    %v8416 = vadd.f32 %v8218, %v8411
    %v8417 = vld [vmem:[#allocation3 + $0x240] sm:$0xff]
    %8422 = vrot.lane.b32.xlu0 %v7039, 16
    %v8423 = vpop.permute.xlu0 %8422
    %8424 = vrot.lane.b32.xlu0 %v7040, 16
    %v8425 = vpop.permute.xlu0 %8424
    %8426 = vrot.lane.b32.xlu0 %v7041, 16
    %v8427 = vpop.permute.xlu0 %8426
    %8428 = vrot.lane.b32.xlu0 %v7042, 16
    %v8429 = vpop.permute.xlu0 %8428
    %v8430 = vsel %vm607, %v8423, %v8425
    %v8431 = vsel %vm607, %v8425, %v8427
    %v8432 = vsel %vm607, %v8427, %v8429
    %v8438 = vmul.f32 %v8017, %v8423
    %v8439 = vmul.f32 %v8018, %v8430
    %v8440 = vmul.f32 %v8019, %v8431
    %v8441 = vmul.f32 %v8020, %v8432
    %v8442 = vmul.f32 %v8021, %v8429
    %8448 = vrot.lane.b32.xlu0 %v8438, 112
    %v8449 = vpop.permute.xlu0 %8448
    %8450 = vrot.lane.b32.xlu0 %v8439, 112
    %v8451 = vpop.permute.xlu0 %8450
    %8452 = vrot.lane.b32.xlu0 %v8440, 112
    %v8453 = vpop.permute.xlu0 %8452
    %8454 = vrot.lane.b32.xlu0 %v8441, 112
    %v8455 = vpop.permute.xlu0 %8454
    %8456 = vrot.lane.b32.xlu0 %v8442, 112
    %v8457 = vpop.permute.xlu0 %8456
    %v8458 = vsel %vm7282, %v8449, %v8451
    %v8459 = vsel %vm7282, %v8451, %v8453
    %v8460 = vsel %vm7282, %v8453, %v8455
    %v8461 = vsel %vm7282, %v8455, %v8457
    %v8467 = vsel %vm891, %v8417, 0
    %8469 = vmatprep.subr.mxu0 %v8459
    %8470 = vmatpush1.msra.mxu0 %v8458
    %8471 = vmatprep.subr.mxu0 0.0
    %8472 = vmatpush1.msra.mxu0 0.0
    %8473 = vmatprep.subr.mxu0 0.0
    %8474 = vmatpush1.msra.mxu0 0.0
    %8475 = vmatprep.subr.mxu0 0.0
    %8476 = vmatpush1.msra.mxu0 0.0
    %8477 = vmatprep.subr.mxu0 0.0
    %8478 = vmatpush1.msra.mxu0 0.0
    %8479 = vmatprep.subr.mxu0 0.0
    %8480 = vmatpush1.msra.mxu0 0.0
    %8481 = vmatprep.subr.mxu0 0.0
    %8482 = vmatpush1.msra.mxu0 0.0
    %8483 = vmatprep.subr.mxu0 0.0
    %8484 = vmatpush1.msra.mxu0 0.0
    %8485 = vmatprep.subr.mxu0 0.0
    %8486 = vmatpush1.msra.mxu0 0.0
    %8487 = vmatprep.subr.mxu0 0.0
    %8488 = vmatpush1.msra.mxu0 0.0
    %8489 = vmatprep.subr.mxu0 0.0
    %8490 = vmatpush1.msra.mxu0 0.0
    %8491 = vmatprep.subr.mxu0 0.0
    %8492 = vmatpush1.msra.mxu0 0.0
    %8493 = vmatprep.subr.mxu0 0.0
    %8494 = vmatpush1.msra.mxu0 0.0
    %8495 = vmatprep.subr.mxu0 0.0
    %8496 = vmatpush1.msra.mxu0 0.0
    %8497 = vmatprep.subr.mxu0 0.0
    %8498 = vmatpush1.msra.mxu0 0.0
    %8499 = vmatprep.subr.mxu0 0.0
    %8500 = vmatpush1.msra.mxu0 0.0
    %8501 = vmatprep.subr.mxu0 0.0
    %8502 = vmatpush1.msra.mxu0 0.0
    %8503 = vmatprep.subr.mxu0 0.0
    %8504 = vmatpush1.msra.mxu0 0.0
    %8505 = vmatprep.subr.mxu0 0.0
    %8506 = vmatpush1.msra.mxu0 0.0
    %8507 = vmatprep.subr.mxu0 0.0
    %8508 = vmatpush1.msra.mxu0 0.0
    %8509 = vmatprep.subr.mxu0 0.0
    %8510 = vmatpush1.msra.mxu0 0.0
    %8511 = vmatprep.subr.mxu0 0.0
    %8512 = vmatpush1.msra.mxu0 0.0
    %8513 = vmatprep.subr.mxu0 0.0
    %8514 = vmatpush1.msra.mxu0 0.0
    %8515 = vmatprep.subr.mxu0 0.0
    %8516 = vmatpush1.msra.mxu0 0.0
    %8517 = vmatprep.subr.mxu0 0.0
    %8518 = vmatpush1.msra.mxu0 0.0
    %8519 = vmatprep.subr.mxu0 0.0
    %8520 = vmatpush1.msra.mxu0 0.0
    %8521 = vmatprep.subr.mxu0 0.0
    %8522 = vmatpush1.msra.mxu0 0.0
    %8523 = vmatprep.subr.mxu0 0.0
    %8524 = vmatpush1.msra.mxu0 0.0
    %8525 = vmatprep.subr.mxu0 0.0
    %8526 = vmatpush1.msra.mxu0 0.0
    %8527 = vmatprep.subr.mxu0 0.0
    %8528 = vmatpush1.msra.mxu0 0.0
    %8529 = vmatprep.subr.mxu0 0.0
    %8530 = vmatpush1.msra.mxu0 0.0
    %8531 = vmatprep.subr.mxu0 0.0
    %8532 = vmatpush1.msra.mxu0 0.0
    %8533 = vmatprep.mubr.f32.mxu0 0.0
    %8534 = vmatmul.mubr.f32.gmra.mrb[0].mxu0 %v8467
    %v8535 = vpop.f32.mrb[0].mxu0
    %v8536 = vadd.f32 0.0, %v8535
    %v8537 = vpop.f32.mrb[0].mxu0
    %v8538 = vadd.f32 0.0, %v8537
    %8539 = vdwg.mxu0
    %8540 = vmatprep.subr.mxu0 %v8461
    %8541 = vmatpush1.msra.mxu0 %v8460
    %8542 = vmatprep.subr.mxu0 0.0
    %8543 = vmatpush1.msra.mxu0 0.0
    %8544 = vmatprep.subr.mxu0 0.0
    %8545 = vmatpush1.msra.mxu0 0.0
    %8546 = vmatprep.subr.mxu0 0.0
    %8547 = vmatpush1.msra.mxu0 0.0
    %8548 = vmatprep.subr.mxu0 0.0
    %8549 = vmatpush1.msra.mxu0 0.0
    %8550 = vmatprep.subr.mxu0 0.0
    %8551 = vmatpush1.msra.mxu0 0.0
    %8552 = vmatprep.subr.mxu0 0.0
    %8553 = vmatpush1.msra.mxu0 0.0
    %8554 = vmatprep.subr.mxu0 0.0
    %8555 = vmatpush1.msra.mxu0 0.0
    %8556 = vmatprep.subr.mxu0 0.0
    %8557 = vmatpush1.msra.mxu0 0.0
    %8558 = vmatprep.subr.mxu0 0.0
    %8559 = vmatpush1.msra.mxu0 0.0
    %8560 = vmatprep.subr.mxu0 0.0
    %8561 = vmatpush1.msra.mxu0 0.0
    %8562 = vmatprep.subr.mxu0 0.0
    %8563 = vmatpush1.msra.mxu0 0.0
    %8564 = vmatprep.subr.mxu0 0.0
    %8565 = vmatpush1.msra.mxu0 0.0
    %8566 = vmatprep.subr.mxu0 0.0
    %8567 = vmatpush1.msra.mxu0 0.0
    %8568 = vmatprep.subr.mxu0 0.0
    %8569 = vmatpush1.msra.mxu0 0.0
    %8570 = vmatprep.subr.mxu0 0.0
    %8571 = vmatpush1.msra.mxu0 0.0
    %8572 = vmatprep.subr.mxu0 0.0
    %8573 = vmatpush1.msra.mxu0 0.0
    %8574 = vmatprep.subr.mxu0 0.0
    %8575 = vmatpush1.msra.mxu0 0.0
    %8576 = vmatprep.subr.mxu0 0.0
    %8577 = vmatpush1.msra.mxu0 0.0
    %8578 = vmatprep.subr.mxu0 0.0
    %8579 = vmatpush1.msra.mxu0 0.0
    %8580 = vmatprep.subr.mxu0 0.0
    %8581 = vmatpush1.msra.mxu0 0.0
    %8582 = vmatprep.subr.mxu0 0.0
    %8583 = vmatpush1.msra.mxu0 0.0
    %8584 = vmatprep.subr.mxu0 0.0
    %8585 = vmatpush1.msra.mxu0 0.0
    %8586 = vmatprep.subr.mxu0 0.0
    %8587 = vmatpush1.msra.mxu0 0.0
    %8588 = vmatprep.subr.mxu0 0.0
    %8589 = vmatpush1.msra.mxu0 0.0
    %8590 = vmatprep.subr.mxu0 0.0
    %8591 = vmatpush1.msra.mxu0 0.0
    %8592 = vmatprep.subr.mxu0 0.0
    %8593 = vmatpush1.msra.mxu0 0.0
    %8594 = vmatprep.subr.mxu0 0.0
    %8595 = vmatpush1.msra.mxu0 0.0
    %8596 = vmatprep.subr.mxu0 0.0
    %8597 = vmatpush1.msra.mxu0 0.0
    %8598 = vmatprep.subr.mxu0 0.0
    %8599 = vmatpush1.msra.mxu0 0.0
    %8600 = vmatprep.subr.mxu0 0.0
    %8601 = vmatpush1.msra.mxu0 0.0
    %8602 = vmatprep.subr.mxu0 0.0
    %8603 = vmatpush1.msra.mxu0 0.0
    %8604 = vmatprep.mubr.f32.mxu0 0.0
    %8605 = vmatmul.mubr.f32.gmra.mrb[0].mxu0 %v8467
    %v8606 = vpop.f32.mrb[0].mxu0
    %v8607 = vadd.f32 0.0, %v8606
    %v8608 = vpop.f32.mrb[0].mxu0
    %v8609 = vadd.f32 0.0, %v8608
    %8610 = vdwg.mxu0
    %v8611 = vadd.f32 %v8413, %v8536
    %v8612 = vadd.f32 %v8414, %v8538
    %v8613 = vadd.f32 %v8415, %v8607
    %v8614 = vadd.f32 %v8416, %v8609
    %v8615 = vld [vmem:[#allocation3 + $0x248] sm:$0xff]
    %8620 = vrot.lane.b32.xlu0 %v7051, 17
    %v8621 = vpop.permute.xlu0 %8620
    %8622 = vrot.lane.b32.xlu0 %v7052, 17
    %v8623 = vpop.permute.xlu0 %8622
    %8624 = vrot.lane.b32.xlu0 %v7053, 17
    %v8625 = vpop.permute.xlu0 %8624
    %8626 = vrot.lane.b32.xlu0 %v7054, 17
    %v8627 = vpop.permute.xlu0 %8626
    %v8628 = vsel %vm7112, %v8621, %v8623
    %v8629 = vsel %vm7112, %v8623, %v8625
    %v8630 = vsel %vm7112, %v8625, %v8627
    %v8636 = vmul.f32 %v8017, %v8621
    %v8637 = vmul.f32 %v8018, %v8628
    %v8638 = vmul.f32 %v8019, %v8629
    %v8639 = vmul.f32 %v8020, %v8630
    %v8640 = vmul.f32 %v8021, %v8627
    %8646 = vrot.lane.b32.xlu0 %v8636, 111
    %v8647 = vpop.permute.xlu0 %8646
    %8648 = vrot.lane.b32.xlu0 %v8637, 111
    %v8649 = vpop.permute.xlu0 %8648
    %8650 = vrot.lane.b32.xlu0 %v8638, 111
    %v8651 = vpop.permute.xlu0 %8650
    %8652 = vrot.lane.b32.xlu0 %v8639, 111
    %v8653 = vpop.permute.xlu0 %8652
    %8654 = vrot.lane.b32.xlu0 %v8640, 111
    %v8655 = vpop.permute.xlu0 %8654
    %v8656 = vsel %vm7083, %v8647, %v8649
    %v8657 = vsel %vm7083, %v8649, %v8651
    %v8658 = vsel %vm7083, %v8651, %v8653
    %v8659 = vsel %vm7083, %v8653, %v8655
    %v8665 = vsel %vm891, %v8615, 0
    %8667 = vmatprep.subr.mxu0 %v8657
    %8668 = vmatpush1.msra.mxu0 %v8656
    %8669 = vmatprep.subr.mxu0 0.0
    %8670 = vmatpush1.msra.mxu0 0.0
    %8671 = vmatprep.subr.mxu0 0.0
    %8672 = vmatpush1.msra.mxu0 0.0
    %8673 = vmatprep.subr.mxu0 0.0
    %8674 = vmatpush1.msra.mxu0 0.0
    %8675 = vmatprep.subr.mxu0 0.0
    %8676 = vmatpush1.msra.mxu0 0.0
    %8677 = vmatprep.subr.mxu0 0.0
    %8678 = vmatpush1.msra.mxu0 0.0
    %8679 = vmatprep.subr.mxu0 0.0
    %8680 = vmatpush1.msra.mxu0 0.0
    %8681 = vmatprep.subr.mxu0 0.0
    %8682 = vmatpush1.msra.mxu0 0.0
    %8683 = vmatprep.subr.mxu0 0.0
    %8684 = vmatpush1.msra.mxu0 0.0
    %8685 = vmatprep.subr.mxu0 0.0
    %8686 = vmatpush1.msra.mxu0 0.0
    %8687 = vmatprep.subr.mxu0 0.0
    %8688 = vmatpush1.msra.mxu0 0.0
    %8689 = vmatprep.subr.mxu0 0.0
    %8690 = vmatpush1.msra.mxu0 0.0
    %8691 = vmatprep.subr.mxu0 0.0
    %8692 = vmatpush1.msra.mxu0 0.0
    %8693 = vmatprep.subr.mxu0 0.0
    %8694 = vmatpush1.msra.mxu0 0.0
    %8695 = vmatprep.subr.mxu0 0.0
    %8696 = vmatpush1.msra.mxu0 0.0
    %8697 = vmatprep.subr.mxu0 0.0
    %8698 = vmatpush1.msra.mxu0 0.0
    %8699 = vmatprep.subr.mxu0 0.0
    %8700 = vmatpush1.msra.mxu0 0.0
    %8701 = vmatprep.subr.mxu0 0.0
    %8702 = vmatpush1.msra.mxu0 0.0
    %8703 = vmatprep.subr.mxu0 0.0
    %8704 = vmatpush1.msra.mxu0 0.0
    %8705 = vmatprep.subr.mxu0 0.0
    %8706 = vmatpush1.msra.mxu0 0.0
    %8707 = vmatprep.subr.mxu0 0.0
    %8708 = vmatpush1.msra.mxu0 0.0
    %8709 = vmatprep.subr.mxu0 0.0
    %8710 = vmatpush1.msra.mxu0 0.0
    %8711 = vmatprep.subr.mxu0 0.0
    %8712 = vmatpush1.msra.mxu0 0.0
    %8713 = vmatprep.subr.mxu0 0.0
    %8714 = vmatpush1.msra.mxu0 0.0
    %8715 = vmatprep.subr.mxu0 0.0
    %8716 = vmatpush1.msra.mxu0 0.0
    %8717 = vmatprep.subr.mxu0 0.0
    %8718 = vmatpush1.msra.mxu0 0.0
    %8719 = vmatprep.subr.mxu0 0.0
    %8720 = vmatpush1.msra.mxu0 0.0
    %8721 = vmatprep.subr.mxu0 0.0
    %8722 = vmatpush1.msra.mxu0 0.0
    %8723 = vmatprep.subr.mxu0 0.0
    %8724 = vmatpush1.msra.mxu0 0.0
    %8725 = vmatprep.subr.mxu0 0.0
    %8726 = vmatpush1.msra.mxu0 0.0
    %8727 = vmatprep.subr.mxu0 0.0
    %8728 = vmatpush1.msra.mxu0 0.0
    %8729 = vmatprep.subr.mxu0 0.0
    %8730 = vmatpush1.msra.mxu0 0.0
    %8731 = vmatprep.mubr.f32.mxu0 0.0
    %8732 = vmatmul.mubr.f32.gmra.mrb[0].mxu0 %v8665
    %v8733 = vpop.f32.mrb[0].mxu0
    %v8734 = vadd.f32 0.0, %v8733
    %v8735 = vpop.f32.mrb[0].mxu0
    %v8736 = vadd.f32 0.0, %v8735
    %8737 = vdwg.mxu0
    %8738 = vmatprep.subr.mxu0 %v8659
    %8739 = vmatpush1.msra.mxu0 %v8658
    %8740 = vmatprep.subr.mxu0 0.0
    %8741 = vmatpush1.msra.mxu0 0.0
    %8742 = vmatprep.subr.mxu0 0.0
    %8743 = vmatpush1.msra.mxu0 0.0
    %8744 = vmatprep.subr.mxu0 0.0
    %8745 = vmatpush1.msra.mxu0 0.0
    %8746 = vmatprep.subr.mxu0 0.0
    %8747 = vmatpush1.msra.mxu0 0.0
    %8748 = vmatprep.subr.mxu0 0.0
    %8749 = vmatpush1.msra.mxu0 0.0
    %8750 = vmatprep.subr.mxu0 0.0
    %8751 = vmatpush1.msra.mxu0 0.0
    %8752 = vmatprep.subr.mxu0 0.0
    %8753 = vmatpush1.msra.mxu0 0.0
    %8754 = vmatprep.subr.mxu0 0.0
    %8755 = vmatpush1.msra.mxu0 0.0
    %8756 = vmatprep.subr.mxu0 0.0
    %8757 = vmatpush1.msra.mxu0 0.0
    %8758 = vmatprep.subr.mxu0 0.0
    %8759 = vmatpush1.msra.mxu0 0.0
    %8760 = vmatprep.subr.mxu0 0.0
    %8761 = vmatpush1.msra.mxu0 0.0
    %8762 = vmatprep.subr.mxu0 0.0
    %8763 = vmatpush1.msra.mxu0 0.0
    %8764 = vmatprep.subr.mxu0 0.0
    %8765 = vmatpush1.msra.mxu0 0.0
    %8766 = vmatprep.subr.mxu0 0.0
    %8767 = vmatpush1.msra.mxu0 0.0
    %8768 = vmatprep.subr.mxu0 0.0
    %8769 = vmatpush1.msra.mxu0 0.0
    %8770 = vmatprep.subr.mxu0 0.0
    %8771 = vmatpush1.msra.mxu0 0.0
    %8772 = vmatprep.subr.mxu0 0.0
    %8773 = vmatpush1.msra.mxu0 0.0
    %8774 = vmatprep.subr.mxu0 0.0
    %8775 = vmatpush1.msra.mxu0 0.0
    %8776 = vmatprep.subr.mxu0 0.0
    %8777 = vmatpush1.msra.mxu0 0.0
    %8778 = vmatprep.subr.mxu0 0.0
    %8779 = vmatpush1.msra.mxu0 0.0
    %8780 = vmatprep.subr.mxu0 0.0
    %8781 = vmatpush1.msra.mxu0 0.0
    %8782 = vmatprep.subr.mxu0 0.0
    %8783 = vmatpush1.msra.mxu0 0.0
    %8784 = vmatprep.subr.mxu0 0.0
    %8785 = vmatpush1.msra.mxu0 0.0
    %8786 = vmatprep.subr.mxu0 0.0
    %8787 = vmatpush1.msra.mxu0 0.0
    %8788 = vmatprep.subr.mxu0 0.0
    %8789 = vmatpush1.msra.mxu0 0.0
    %8790 = vmatprep.subr.mxu0 0.0
    %8791 = vmatpush1.msra.mxu0 0.0
    %8792 = vmatprep.subr.mxu0 0.0
    %8793 = vmatpush1.msra.mxu0 0.0
    %8794 = vmatprep.subr.mxu0 0.0
    %8795 = vmatpush1.msra.mxu0 0.0
    %8796 = vmatprep.subr.mxu0 0.0
    %8797 = vmatpush1.msra.mxu0 0.0
    %8798 = vmatprep.subr.mxu0 0.0
    %8799 = vmatpush1.msra.mxu0 0.0
    %8800 = vmatprep.subr.mxu0 0.0
    %8801 = vmatpush1.msra.mxu0 0.0
    %8802 = vmatprep.mubr.f32.mxu0 0.0
    %8803 = vmatmul.mubr.f32.gmra.mrb[0].mxu0 %v8665
    %v8804 = vpop.f32.mrb[0].mxu0
    %v8805 = vadd.f32 0.0, %v8804
    %v8806 = vpop.f32.mrb[0].mxu0
    %v8807 = vadd.f32 0.0, %v8806
    %8808 = vdwg.mxu0
    %v8809 = vadd.f32 %v8611, %v8734
    %v8810 = vadd.f32 %v8612, %v8736
    %v8811 = vadd.f32 %v8613, %v8805
    %v8812 = vadd.f32 %v8614, %v8807
    %v8813 = vmax.f32 %v8809, 0.0
    %v8814 = vmax.f32 %v8810, 0.0
    %v8815 = vmax.f32 %v8811, 0.0
    %v8816 = vmax.f32 %v8812, 0.0
    %8817 = vst [vmem:[#allocation2 + $0x8] sm:$0xff] %v8813
    %8818 = vst [vmem:[#allocation2 + $0x10] sm:$0xff] %v8814
    %8819 = vst [vmem:[#allocation2 + $0x18] sm:$0xff] %v8815
    %8820 = vst [vmem:[#allocation2 + $0x20] sm:$0xff] %v8816
    %v8821 = vld [vmem:[#allocation3 + $0x328] sm:$0x7]
    %8823 = vset.pattern.permute.xlu0 8
    %8824 = vperm.xlu0 %8823, %v8821
    %v8825 = vpop.permute.xlu0 %8824
    %v8827 = vadd.f32 %v8825, 0.0
    %v8828 = vld [vmem:[#allocation2] sm:$0xff]
    %v8829 = vld [vmem:[#allocation2 + $0x8] sm:$0xff]
    %v8830 = vld [vmem:[#allocation2 + $0x10] sm:$0xff]
    %v8831 = vld [vmem:[#allocation2 + $0x18] sm:$0xff]
    %v8832 = vld [vmem:[#allocation2 + $0x20] sm:$0xff]
    %v8833 = vmul.f32 %v8828, %v7076
    %v8834 = vmul.f32 %v8829, %v7084
    %v8835 = vmul.f32 %v8830, %v7085
    %v8836 = vmul.f32 %v8831, %v7086
    %v8837 = vmul.f32 %v8832, %v7082
    %8843 = vrot.lane.b32.xlu0 %v8833, 17
    %v8844 = vpop.permute.xlu0 %8843
    %8845 = vrot.lane.b32.xlu0 %v8834, 17
    %v8846 = vpop.permute.xlu0 %8845
    %8847 = vrot.lane.b32.xlu0 %v8835, 17
    %v8848 = vpop.permute.xlu0 %8847
    %8849 = vrot.lane.b32.xlu0 %v8836, 17
    %v8850 = vpop.permute.xlu0 %8849
    %8851 = vrot.lane.b32.xlu0 %v8837, 17
    %v8852 = vpop.permute.xlu0 %8851
    %v8853 = vsel %vm7112, %v8844, %v8846
    %v8854 = vsel %vm7112, %v8846, %v8848
    %v8855 = vsel %vm7112, %v8848, %v8850
    %v8856 = vsel %vm7112, %v8850, %v8852
    %v8861 = vsel %vm891, %v8821, 0
    %8863 = vmatprep.subr.mxu0 %v8854
    %8864 = vmatpush1.msra.mxu0 %v8853
    %8865 = vmatprep.subr.mxu0 0.0
    %8866 = vmatpush1.msra.mxu0 0.0
    %8867 = vmatprep.subr.mxu0 0.0
    %8868 = vmatpush1.msra.mxu0 0.0
    %8869 = vmatprep.subr.mxu0 0.0
    %8870 = vmatpush1.msra.mxu0 0.0
    %8871 = vmatprep.subr.mxu0 0.0
    %8872 = vmatpush1.msra.mxu0 0.0
    %8873 = vmatprep.subr.mxu0 0.0
    %8874 = vmatpush1.msra.mxu0 0.0
    %8875 = vmatprep.subr.mxu0 0.0
    %8876 = vmatpush1.msra.mxu0 0.0
    %8877 = vmatprep.subr.mxu0 0.0
    %8878 = vmatpush1.msra.mxu0 0.0
    %8879 = vmatprep.subr.mxu0 0.0
    %8880 = vmatpush1.msra.mxu0 0.0
    %8881 = vmatprep.subr.mxu0 0.0
    %8882 = vmatpush1.msra.mxu0 0.0
    %8883 = vmatprep.subr.mxu0 0.0
    %8884 = vmatpush1.msra.mxu0 0.0
    %8885 = vmatprep.subr.mxu0 0.0
    %8886 = vmatpush1.msra.mxu0 0.0
    %8887 = vmatprep.subr.mxu0 0.0
    %8888 = vmatpush1.msra.mxu0 0.0
    %8889 = vmatprep.subr.mxu0 0.0
    %8890 = vmatpush1.msra.mxu0 0.0
    %8891 = vmatprep.subr.mxu0 0.0
    %8892 = vmatpush1.msra.mxu0 0.0
    %8893 = vmatprep.subr.mxu0 0.0
    %8894 = vmatpush1.msra.mxu0 0.0
    %8895 = vmatprep.subr.mxu0 0.0
    %8896 = vmatpush1.msra.mxu0 0.0
    %8897 = vmatprep.subr.mxu0 0.0
    %8898 = vmatpush1.msra.mxu0 0.0
    %8899 = vmatprep.subr.mxu0 0.0
    %8900 = vmatpush1.msra.mxu0 0.0
    %8901 = vmatprep.subr.mxu0 0.0
    %8902 = vmatpush1.msra.mxu0 0.0
    %8903 = vmatprep.subr.mxu0 0.0
    %8904 = vmatpush1.msra.mxu0 0.0
    %8905 = vmatprep.subr.mxu0 0.0
    %8906 = vmatpush1.msra.mxu0 0.0
    %8907 = vmatprep.subr.mxu0 0.0
    %8908 = vmatpush1.msra.mxu0 0.0
    %8909 = vmatprep.subr.mxu0 0.0
    %8910 = vmatpush1.msra.mxu0 0.0
    %8911 = vmatprep.subr.mxu0 0.0
    %8912 = vmatpush1.msra.mxu0 0.0
    %8913 = vmatprep.subr.mxu0 0.0
    %8914 = vmatpush1.msra.mxu0 0.0
    %8915 = vmatprep.subr.mxu0 0.0
    %8916 = vmatpush1.msra.mxu0 0.0
    %8917 = vmatprep.subr.mxu0 0.0
    %8918 = vmatpush1.msra.mxu0 0.0
    %8919 = vmatprep.subr.mxu0 0.0
    %8920 = vmatpush1.msra.mxu0 0.0
    %8921 = vmatprep.subr.mxu0 0.0
    %8922 = vmatpush1.msra.mxu0 0.0
    %8923 = vmatprep.subr.mxu0 0.0
    %8924 = vmatpush1.msra.mxu0 0.0
    %8925 = vmatprep.subr.mxu0 0.0
    %8926 = vmatpush1.msra.mxu0 0.0
    %8927 = vmatprep.mubr.f32.mxu0 0.0
    %8928 = vmatmul.mubr.f32.gmra.mrb[0].mxu0 %v8861
    %v8929 = vpop.f32.mrb[0].mxu0
    %v8930 = vadd.f32 0.0, %v8929
    %v8931 = vpop.f32.mrb[0].mxu0
    %v8932 = vadd.f32 0.0, %v8931
    %8933 = vdwg.mxu0
    %8934 = vmatprep.subr.mxu0 %v8856
    %8935 = vmatpush1.msra.mxu0 %v8855
    %8936 = vmatprep.subr.mxu0 0.0
    %8937 = vmatpush1.msra.mxu0 0.0
    %8938 = vmatprep.subr.mxu0 0.0
    %8939 = vmatpush1.msra.mxu0 0.0
    %8940 = vmatprep.subr.mxu0 0.0
    %8941 = vmatpush1.msra.mxu0 0.0
    %8942 = vmatprep.subr.mxu0 0.0
    %8943 = vmatpush1.msra.mxu0 0.0
    %8944 = vmatprep.subr.mxu0 0.0
    %8945 = vmatpush1.msra.mxu0 0.0
    %8946 = vmatprep.subr.mxu0 0.0
    %8947 = vmatpush1.msra.mxu0 0.0
    %8948 = vmatprep.subr.mxu0 0.0
    %8949 = vmatpush1.msra.mxu0 0.0
    %8950 = vmatprep.subr.mxu0 0.0
    %8951 = vmatpush1.msra.mxu0 0.0
    %8952 = vmatprep.subr.mxu0 0.0
    %8953 = vmatpush1.msra.mxu0 0.0
    %8954 = vmatprep.subr.mxu0 0.0
    %8955 = vmatpush1.msra.mxu0 0.0
    %8956 = vmatprep.subr.mxu0 0.0
    %8957 = vmatpush1.msra.mxu0 0.0
    %8958 = vmatprep.subr.mxu0 0.0
    %8959 = vmatpush1.msra.mxu0 0.0
    %8960 = vmatprep.subr.mxu0 0.0
    %8961 = vmatpush1.msra.mxu0 0.0
    %8962 = vmatprep.subr.mxu0 0.0
    %8963 = vmatpush1.msra.mxu0 0.0
    %8964 = vmatprep.subr.mxu0 0.0
    %8965 = vmatpush1.msra.mxu0 0.0
    %8966 = vmatprep.subr.mxu0 0.0
    %8967 = vmatpush1.msra.mxu0 0.0
    %8968 = vmatprep.subr.mxu0 0.0
    %8969 = vmatpush1.msra.mxu0 0.0
    %8970 = vmatprep.subr.mxu0 0.0
    %8971 = vmatpush1.msra.mxu0 0.0
    %8972 = vmatprep.subr.mxu0 0.0
    %8973 = vmatpush1.msra.mxu0 0.0
    %8974 = vmatprep.subr.mxu0 0.0
    %8975 = vmatpush1.msra.mxu0 0.0
    %8976 = vmatprep.subr.mxu0 0.0
    %8977 = vmatpush1.msra.mxu0 0.0
    %8978 = vmatprep.subr.mxu0 0.0
    %8979 = vmatpush1.msra.mxu0 0.0
    %8980 = vmatprep.subr.mxu0 0.0
    %8981 = vmatpush1.msra.mxu0 0.0
    %8982 = vmatprep.subr.mxu0 0.0
    %8983 = vmatpush1.msra.mxu0 0.0
    %8984 = vmatprep.subr.mxu0 0.0
    %8985 = vmatpush1.msra.mxu0 0.0
    %8986 = vmatprep.subr.mxu0 0.0
    %8987 = vmatpush1.msra.mxu0 0.0
    %8988 = vmatprep.subr.mxu0 0.0
    %8989 = vmatpush1.msra.mxu0 0.0
    %8990 = vmatprep.subr.mxu0 0.0
    %8991 = vmatpush1.msra.mxu0 0.0
    %8992 = vmatprep.subr.mxu0 0.0
    %8993 = vmatpush1.msra.mxu0 0.0
    %8994 = vmatprep.subr.mxu0 0.0
    %8995 = vmatpush1.msra.mxu0 0.0
    %8996 = vmatprep.subr.mxu0 0.0
    %8997 = vmatpush1.msra.mxu0 0.0
    %8998 = vmatprep.mubr.f32.mxu0 0.0
    %8999 = vmatmul.mubr.f32.gmra.mrb[0].mxu0 %v8861
    %v9000 = vpop.f32.mrb[0].mxu0
    %v9001 = vadd.f32 0.0, %v9000
    %v9002 = vpop.f32.mrb[0].mxu0
    %v9003 = vadd.f32 0.0, %v9002
    %9004 = vdwg.mxu0
    %v9005 = vadd.f32 %v8827, %v8930
    %v9006 = vadd.f32 %v8827, %v8932
    %v9007 = vadd.f32 %v8827, %v9001
    %v9008 = vadd.f32 %v8827, %v9003
    %v9009 = vld [vmem:[#allocation3 + $0x330] sm:$0x7]
    %v9010 = vmul.f32 %v8828, %v7275
    %v9011 = vmul.f32 %v8829, %v7283
    %v9012 = vmul.f32 %v8830, %v7284
    %v9013 = vmul.f32 %v8831, %v7285
    %v9014 = vmul.f32 %v8832, %v7281
    %9020 = vrot.lane.b32.xlu0 %v9010, 16
    %v9021 = vpop.permute.xlu0 %9020
    %9022 = vrot.lane.b32.xlu0 %v9011, 16
    %v9023 = vpop.permute.xlu0 %9022
    %9024 = vrot.lane.b32.xlu0 %v9012, 16
    %v9025 = vpop.permute.xlu0 %9024
    %9026 = vrot.lane.b32.xlu0 %v9013, 16
    %v9027 = vpop.permute.xlu0 %9026
    %9028 = vrot.lane.b32.xlu0 %v9014, 16
    %v9029 = vpop.permute.xlu0 %9028
    %v9030 = vsel %vm607, %v9021, %v9023
    %v9031 = vsel %vm607, %v9023, %v9025
    %v9032 = vsel %vm607, %v9025, %v9027
    %v9033 = vsel %vm607, %v9027, %v9029
    %v9039 = vsel %vm891, %v9009, 0
    %9041 = vmatprep.subr.mxu0 %v9031
    %9042 = vmatpush1.msra.mxu0 %v9030
    %9043 = vmatprep.subr.mxu0 0.0
    %9044 = vmatpush1.msra.mxu0 0.0
    %9045 = vmatprep.subr.mxu0 0.0
    %9046 = vmatpush1.msra.mxu0 0.0
    %9047 = vmatprep.subr.mxu0 0.0
    %9048 = vmatpush1.msra.mxu0 0.0
    %9049 = vmatprep.subr.mxu0 0.0
    %9050 = vmatpush1.msra.mxu0 0.0
    %9051 = vmatprep.subr.mxu0 0.0
    %9052 = vmatpush1.msra.mxu0 0.0
    %9053 = vmatprep.subr.mxu0 0.0
    %9054 = vmatpush1.msra.mxu0 0.0
    %9055 = vmatprep.subr.mxu0 0.0
    %9056 = vmatpush1.msra.mxu0 0.0
    %9057 = vmatprep.subr.mxu0 0.0
    %9058 = vmatpush1.msra.mxu0 0.0
    %9059 = vmatprep.subr.mxu0 0.0
    %9060 = vmatpush1.msra.mxu0 0.0
    %9061 = vmatprep.subr.mxu0 0.0
    %9062 = vmatpush1.msra.mxu0 0.0
    %9063 = vmatprep.subr.mxu0 0.0
    %9064 = vmatpush1.msra.mxu0 0.0
    %9065 = vmatprep.subr.mxu0 0.0
    %9066 = vmatpush1.msra.mxu0 0.0
    %9067 = vmatprep.subr.mxu0 0.0
    %9068 = vmatpush1.msra.mxu0 0.0
    %9069 = vmatprep.subr.mxu0 0.0
    %9070 = vmatpush1.msra.mxu0 0.0
    %9071 = vmatprep.subr.mxu0 0.0
    %9072 = vmatpush1.msra.mxu0 0.0
    %9073 = vmatprep.subr.mxu0 0.0
    %9074 = vmatpush1.msra.mxu0 0.0
    %9075 = vmatprep.subr.mxu0 0.0
    %9076 = vmatpush1.msra.mxu0 0.0
    %9077 = vmatprep.subr.mxu0 0.0
    %9078 = vmatpush1.msra.mxu0 0.0
    %9079 = vmatprep.subr.mxu0 0.0
    %9080 = vmatpush1.msra.mxu0 0.0
    %9081 = vmatprep.subr.mxu0 0.0
    %9082 = vmatpush1.msra.mxu0 0.0
    %9083 = vmatprep.subr.mxu0 0.0
    %9084 = vmatpush1.msra.mxu0 0.0
    %9085 = vmatprep.subr.mxu0 0.0
    %9086 = vmatpush1.msra.mxu0 0.0
    %9087 = vmatprep.subr.mxu0 0.0
    %9088 = vmatpush1.msra.mxu0 0.0
    %9089 = vmatprep.subr.mxu0 0.0
    %9090 = vmatpush1.msra.mxu0 0.0
    %9091 = vmatprep.subr.mxu0 0.0
    %9092 = vmatpush1.msra.mxu0 0.0
    %9093 = vmatprep.subr.mxu0 0.0
    %9094 = vmatpush1.msra.mxu0 0.0
    %9095 = vmatprep.subr.mxu0 0.0
    %9096 = vmatpush1.msra.mxu0 0.0
    %9097 = vmatprep.subr.mxu0 0.0
    %9098 = vmatpush1.msra.mxu0 0.0
    %9099 = vmatprep.subr.mxu0 0.0
    %9100 = vmatpush1.msra.mxu0 0.0
    %9101 = vmatprep.subr.mxu0 0.0
    %9102 = vmatpush1.msra.mxu0 0.0
    %9103 = vmatprep.subr.mxu0 0.0
    %9104 = vmatpush1.msra.mxu0 0.0
    %9105 = vmatprep.mubr.f32.mxu0 0.0
    %9106 = vmatmul.mubr.f32.gmra.mrb[0].mxu0 %v9039
    %v9107 = vpop.f32.mrb[0].mxu0
    %v9108 = vadd.f32 0.0, %v9107
    %v9109 = vpop.f32.mrb[0].mxu0
    %v9110 = vadd.f32 0.0, %v9109
    %9111 = vdwg.mxu0
    %9112 = vmatprep.subr.mxu0 %v9033
    %9113 = vmatpush1.msra.mxu0 %v9032
    %9114 = vmatprep.subr.mxu0 0.0
    %9115 = vmatpush1.msra.mxu0 0.0
    %9116 = vmatprep.subr.mxu0 0.0
    %9117 = vmatpush1.msra.mxu0 0.0
    %9118 = vmatprep.subr.mxu0 0.0
    %9119 = vmatpush1.msra.mxu0 0.0
    %9120 = vmatprep.subr.mxu0 0.0
    %9121 = vmatpush1.msra.mxu0 0.0
    %9122 = vmatprep.subr.mxu0 0.0
    %9123 = vmatpush1.msra.mxu0 0.0
    %9124 = vmatprep.subr.mxu0 0.0
    %9125 = vmatpush1.msra.mxu0 0.0
    %9126 = vmatprep.subr.mxu0 0.0
    %9127 = vmatpush1.msra.mxu0 0.0
    %9128 = vmatprep.subr.mxu0 0.0
    %9129 = vmatpush1.msra.mxu0 0.0
    %9130 = vmatprep.subr.mxu0 0.0
    %9131 = vmatpush1.msra.mxu0 0.0
    %9132 = vmatprep.subr.mxu0 0.0
    %9133 = vmatpush1.msra.mxu0 0.0
    %9134 = vmatprep.subr.mxu0 0.0
    %9135 = vmatpush1.msra.mxu0 0.0
    %9136 = vmatprep.subr.mxu0 0.0
    %9137 = vmatpush1.msra.mxu0 0.0
    %9138 = vmatprep.subr.mxu0 0.0
    %9139 = vmatpush1.msra.mxu0 0.0
    %9140 = vmatprep.subr.mxu0 0.0
    %9141 = vmatpush1.msra.mxu0 0.0
    %9142 = vmatprep.subr.mxu0 0.0
    %9143 = vmatpush1.msra.mxu0 0.0
    %9144 = vmatprep.subr.mxu0 0.0
    %9145 = vmatpush1.msra.mxu0 0.0
    %9146 = vmatprep.subr.mxu0 0.0
    %9147 = vmatpush1.msra.mxu0 0.0
    %9148 = vmatprep.subr.mxu0 0.0
    %9149 = vmatpush1.msra.mxu0 0.0
    %9150 = vmatprep.subr.mxu0 0.0
    %9151 = vmatpush1.msra.mxu0 0.0
    %9152 = vmatprep.subr.mxu0 0.0
    %9153 = vmatpush1.msra.mxu0 0.0
    %9154 = vmatprep.subr.mxu0 0.0
    %9155 = vmatpush1.msra.mxu0 0.0
    %9156 = vmatprep.subr.mxu0 0.0
    %9157 = vmatpush1.msra.mxu0 0.0
    %9158 = vmatprep.subr.mxu0 0.0
    %9159 = vmatpush1.msra.mxu0 0.0
    %9160 = vmatprep.subr.mxu0 0.0
    %9161 = vmatpush1.msra.mxu0 0.0
    %9162 = vmatprep.subr.mxu0 0.0
    %9163 = vmatpush1.msra.mxu0 0.0
    %9164 = vmatprep.subr.mxu0 0.0
    %9165 = vmatpush1.msra.mxu0 0.0
    %9166 = vmatprep.subr.mxu0 0.0
    %9167 = vmatpush1.msra.mxu0 0.0
    %9168 = vmatprep.subr.mxu0 0.0
    %9169 = vmatpush1.msra.mxu0 0.0
    %9170 = vmatprep.subr.mxu0 0.0
    %9171 = vmatpush1.msra.mxu0 0.0
    %9172 = vmatprep.subr.mxu0 0.0
    %9173 = vmatpush1.msra.mxu0 0.0
    %9174 = vmatprep.subr.mxu0 0.0
    %9175 = vmatpush1.msra.mxu0 0.0
    %9176 = vmatprep.mubr.f32.mxu0 0.0
    %9177 = vmatmul.mubr.f32.gmra.mrb[0].mxu0 %v9039
    %v9178 = vpop.f32.mrb[0].mxu0
    %v9179 = vadd.f32 0.0, %v9178
    %v9180 = vpop.f32.mrb[0].mxu0
    %v9181 = vadd.f32 0.0, %v9180
    %9182 = vdwg.mxu0
    %v9183 = vadd.f32 %v9005, %v9108
    %v9184 = vadd.f32 %v9006, %v9110
    %v9185 = vadd.f32 %v9007, %v9179
    %v9186 = vadd.f32 %v9008, %v9181
    %v9187 = vld [vmem:[#allocation3 + $0x338] sm:$0x7]
    %v9188 = vmul.f32 %v8828, %v7474
    %v9189 = vmul.f32 %v8829, %v7482
    %v9190 = vmul.f32 %v8830, %v7483
    %v9191 = vmul.f32 %v8831, %v7484
    %v9192 = vmul.f32 %v8832, %v7480
    %9198 = vrot.lane.b32.xlu0 %v9188, 15
    %v9199 = vpop.permute.xlu0 %9198
    %9200 = vrot.lane.b32.xlu0 %v9189, 15
    %v9201 = vpop.permute.xlu0 %9200
    %9202 = vrot.lane.b32.xlu0 %v9190, 15
    %v9203 = vpop.permute.xlu0 %9202
    %9204 = vrot.lane.b32.xlu0 %v9191, 15
    %v9205 = vpop.permute.xlu0 %9204
    %9206 = vrot.lane.b32.xlu0 %v9192, 15
    %v9207 = vpop.permute.xlu0 %9206
    %v9208 = vsel %vm7510, %v9199, %v9201
    %v9209 = vsel %vm7510, %v9201, %v9203
    %v9210 = vsel %vm7510, %v9203, %v9205
    %v9211 = vsel %vm7510, %v9205, %v9207
    %v9217 = vsel %vm891, %v9187, 0
    %9219 = vmatprep.subr.mxu0 %v9209
    %9220 = vmatpush1.msra.mxu0 %v9208
    %9221 = vmatprep.subr.mxu0 0.0
    %9222 = vmatpush1.msra.mxu0 0.0
    %9223 = vmatprep.subr.mxu0 0.0
    %9224 = vmatpush1.msra.mxu0 0.0
    %9225 = vmatprep.subr.mxu0 0.0
    %9226 = vmatpush1.msra.mxu0 0.0
    %9227 = vmatprep.subr.mxu0 0.0
    %9228 = vmatpush1.msra.mxu0 0.0
    %9229 = vmatprep.subr.mxu0 0.0
    %9230 = vmatpush1.msra.mxu0 0.0
    %9231 = vmatprep.subr.mxu0 0.0
    %9232 = vmatpush1.msra.mxu0 0.0
    %9233 = vmatprep.subr.mxu0 0.0
    %9234 = vmatpush1.msra.mxu0 0.0
    %9235 = vmatprep.subr.mxu0 0.0
    %9236 = vmatpush1.msra.mxu0 0.0
    %9237 = vmatprep.subr.mxu0 0.0
    %9238 = vmatpush1.msra.mxu0 0.0
    %9239 = vmatprep.subr.mxu0 0.0
    %9240 = vmatpush1.msra.mxu0 0.0
    %9241 = vmatprep.subr.mxu0 0.0
    %9242 = vmatpush1.msra.mxu0 0.0
    %9243 = vmatprep.subr.mxu0 0.0
    %9244 = vmatpush1.msra.mxu0 0.0
    %9245 = vmatprep.subr.mxu0 0.0
    %9246 = vmatpush1.msra.mxu0 0.0
    %9247 = vmatprep.subr.mxu0 0.0
    %9248 = vmatpush1.msra.mxu0 0.0
    %9249 = vmatprep.subr.mxu0 0.0
    %9250 = vmatpush1.msra.mxu0 0.0
    %9251 = vmatprep.subr.mxu0 0.0
    %9252 = vmatpush1.msra.mxu0 0.0
    %9253 = vmatprep.subr.mxu0 0.0
    %9254 = vmatpush1.msra.mxu0 0.0
    %9255 = vmatprep.subr.mxu0 0.0
    %9256 = vmatpush1.msra.mxu0 0.0
    %9257 = vmatprep.subr.mxu0 0.0
    %9258 = vmatpush1.msra.mxu0 0.0
    %9259 = vmatprep.subr.mxu0 0.0
    %9260 = vmatpush1.msra.mxu0 0.0
    %9261 = vmatprep.subr.mxu0 0.0
    %9262 = vmatpush1.msra.mxu0 0.0
    %9263 = vmatprep.subr.mxu0 0.0
    %9264 = vmatpush1.msra.mxu0 0.0
    %9265 = vmatprep.subr.mxu0 0.0
    %9266 = vmatpush1.msra.mxu0 0.0
    %9267 = vmatprep.subr.mxu0 0.0
    %9268 = vmatpush1.msra.mxu0 0.0
    %9269 = vmatprep.subr.mxu0 0.0
    %9270 = vmatpush1.msra.mxu0 0.0
    %9271 = vmatprep.subr.mxu0 0.0
    %9272 = vmatpush1.msra.mxu0 0.0
    %9273 = vmatprep.subr.mxu0 0.0
    %9274 = vmatpush1.msra.mxu0 0.0
    %9275 = vmatprep.subr.mxu0 0.0
    %9276 = vmatpush1.msra.mxu0 0.0
    %9277 = vmatprep.subr.mxu0 0.0
    %9278 = vmatpush1.msra.mxu0 0.0
    %9279 = vmatprep.subr.mxu0 0.0
    %9280 = vmatpush1.msra.mxu0 0.0
    %9281 = vmatprep.subr.mxu0 0.0
    %9282 = vmatpush1.msra.mxu0 0.0
    %9283 = vmatprep.mubr.f32.mxu0 0.0
    %9284 = vmatmul.mubr.f32.gmra.mrb[0].mxu0 %v9217
    %v9285 = vpop.f32.mrb[0].mxu0
    %v9286 = vadd.f32 0.0, %v9285
    %v9287 = vpop.f32.mrb[0].mxu0
    %v9288 = vadd.f32 0.0, %v9287
    %9289 = vdwg.mxu0
    %9290 = vmatprep.subr.mxu0 %v9211
    %9291 = vmatpush1.msra.mxu0 %v9210
    %9292 = vmatprep.subr.mxu0 0.0
    %9293 = vmatpush1.msra.mxu0 0.0
    %9294 = vmatprep.subr.mxu0 0.0
    %9295 = vmatpush1.msra.mxu0 0.0
    %9296 = vmatprep.subr.mxu0 0.0
    %9297 = vmatpush1.msra.mxu0 0.0
    %9298 = vmatprep.subr.mxu0 0.0
    %9299 = vmatpush1.msra.mxu0 0.0
    %9300 = vmatprep.subr.mxu0 0.0
    %9301 = vmatpush1.msra.mxu0 0.0
    %9302 = vmatprep.subr.mxu0 0.0
    %9303 = vmatpush1.msra.mxu0 0.0
    %9304 = vmatprep.subr.mxu0 0.0
    %9305 = vmatpush1.msra.mxu0 0.0
    %9306 = vmatprep.subr.mxu0 0.0
    %9307 = vmatpush1.msra.mxu0 0.0
    %9308 = vmatprep.subr.mxu0 0.0
    %9309 = vmatpush1.msra.mxu0 0.0
    %9310 = vmatprep.subr.mxu0 0.0
    %9311 = vmatpush1.msra.mxu0 0.0
    %9312 = vmatprep.subr.mxu0 0.0
    %9313 = vmatpush1.msra.mxu0 0.0
    %9314 = vmatprep.subr.mxu0 0.0
    %9315 = vmatpush1.msra.mxu0 0.0
    %9316 = vmatprep.subr.mxu0 0.0
    %9317 = vmatpush1.msra.mxu0 0.0
    %9318 = vmatprep.subr.mxu0 0.0
    %9319 = vmatpush1.msra.mxu0 0.0
    %9320 = vmatprep.subr.mxu0 0.0
    %9321 = vmatpush1.msra.mxu0 0.0
    %9322 = vmatprep.subr.mxu0 0.0
    %9323 = vmatpush1.msra.mxu0 0.0
    %9324 = vmatprep.subr.mxu0 0.0
    %9325 = vmatpush1.msra.mxu0 0.0
    %9326 = vmatprep.subr.mxu0 0.0
    %9327 = vmatpush1.msra.mxu0 0.0
    %9328 = vmatprep.subr.mxu0 0.0
    %9329 = vmatpush1.msra.mxu0 0.0
    %9330 = vmatprep.subr.mxu0 0.0
    %9331 = vmatpush1.msra.mxu0 0.0
    %9332 = vmatprep.subr.mxu0 0.0
    %9333 = vmatpush1.msra.mxu0 0.0
    %9334 = vmatprep.subr.mxu0 0.0
    %9335 = vmatpush1.msra.mxu0 0.0
    %9336 = vmatprep.subr.mxu0 0.0
    %9337 = vmatpush1.msra.mxu0 0.0
    %9338 = vmatprep.subr.mxu0 0.0
    %9339 = vmatpush1.msra.mxu0 0.0
    %9340 = vmatprep.subr.mxu0 0.0
    %9341 = vmatpush1.msra.mxu0 0.0
    %9342 = vmatprep.subr.mxu0 0.0
    %9343 = vmatpush1.msra.mxu0 0.0
    %9344 = vmatprep.subr.mxu0 0.0
    %9345 = vmatpush1.msra.mxu0 0.0
    %9346 = vmatprep.subr.mxu0 0.0
    %9347 = vmatpush1.msra.mxu0 0.0
    %9348 = vmatprep.subr.mxu0 0.0
    %9349 = vmatpush1.msra.mxu0 0.0
    %9350 = vmatprep.subr.mxu0 0.0
    %9351 = vmatpush1.msra.mxu0 0.0
    %9352 = vmatprep.subr.mxu0 0.0
    %9353 = vmatpush1.msra.mxu0 0.0
    %9354 = vmatprep.mubr.f32.mxu0 0.0
    %9355 = vmatmul.mubr.f32.gmra.mrb[0].mxu0 %v9217
    %v9356 = vpop.f32.mrb[0].mxu0
    %v9357 = vadd.f32 0.0, %v9356
    %v9358 = vpop.f32.mrb[0].mxu0
    %v9359 = vadd.f32 0.0, %v9358
    %9360 = vdwg.mxu0
    %v9361 = vadd.f32 %v9183, %v9286
    %v9362 = vadd.f32 %v9184, %v9288
    %v9363 = vadd.f32 %v9185, %v9357
    %v9364 = vadd.f32 %v9186, %v9359
    %v9365 = vld [vmem:[#allocation3 + $0x340] sm:$0x7]
    %v9366 = vmul.f32 %v8828, %v7674
    %v9367 = vmul.f32 %v8829, %v7681
    %v9368 = vmul.f32 %v8830, %v7682
    %v9369 = vmul.f32 %v8831, %v7683
    %v9370 = vmul.f32 %v8832, %v7680
    %9376 = vrot.lane.b32.xlu0 %v9366, 1
    %v9377 = vpop.permute.xlu0 %9376
    %9378 = vrot.lane.b32.xlu0 %v9367, 1
    %v9379 = vpop.permute.xlu0 %9378
    %9380 = vrot.lane.b32.xlu0 %v9368, 1
    %v9381 = vpop.permute.xlu0 %9380
    %9382 = vrot.lane.b32.xlu0 %v9369, 1
    %v9383 = vpop.permute.xlu0 %9382
    %9384 = vrot.lane.b32.xlu0 %v9370, 1
    %v9385 = vpop.permute.xlu0 %9384
    %v9386 = vsel %vm1212, %v9377, %v9379
    %v9387 = vsel %vm1212, %v9379, %v9381
    %v9388 = vsel %vm1212, %v9381, %v9383
    %v9389 = vsel %vm1212, %v9383, %v9385
    %v9395 = vsel %vm891, %v9365, 0
    %9397 = vmatprep.subr.mxu0 %v9387
    %9398 = vmatpush1.msra.mxu0 %v9386
    %9399 = vmatprep.subr.mxu0 0.0
    %9400 = vmatpush1.msra.mxu0 0.0
    %9401 = vmatprep.subr.mxu0 0.0
    %9402 = vmatpush1.msra.mxu0 0.0
    %9403 = vmatprep.subr.mxu0 0.0
    %9404 = vmatpush1.msra.mxu0 0.0
    %9405 = vmatprep.subr.mxu0 0.0
    %9406 = vmatpush1.msra.mxu0 0.0
    %9407 = vmatprep.subr.mxu0 0.0
    %9408 = vmatpush1.msra.mxu0 0.0
    %9409 = vmatprep.subr.mxu0 0.0
    %9410 = vmatpush1.msra.mxu0 0.0
    %9411 = vmatprep.subr.mxu0 0.0
    %9412 = vmatpush1.msra.mxu0 0.0
    %9413 = vmatprep.subr.mxu0 0.0
    %9414 = vmatpush1.msra.mxu0 0.0
    %9415 = vmatprep.subr.mxu0 0.0
    %9416 = vmatpush1.msra.mxu0 0.0
    %9417 = vmatprep.subr.mxu0 0.0
    %9418 = vmatpush1.msra.mxu0 0.0
    %9419 = vmatprep.subr.mxu0 0.0
    %9420 = vmatpush1.msra.mxu0 0.0
    %9421 = vmatprep.subr.mxu0 0.0
    %9422 = vmatpush1.msra.mxu0 0.0
    %9423 = vmatprep.subr.mxu0 0.0
    %9424 = vmatpush1.msra.mxu0 0.0
    %9425 = vmatprep.subr.mxu0 0.0
    %9426 = vmatpush1.msra.mxu0 0.0
    %9427 = vmatprep.subr.mxu0 0.0
    %9428 = vmatpush1.msra.mxu0 0.0
    %9429 = vmatprep.subr.mxu0 0.0
    %9430 = vmatpush1.msra.mxu0 0.0
    %9431 = vmatprep.subr.mxu0 0.0
    %9432 = vmatpush1.msra.mxu0 0.0
    %9433 = vmatprep.subr.mxu0 0.0
    %9434 = vmatpush1.msra.mxu0 0.0
    %9435 = vmatprep.subr.mxu0 0.0
    %9436 = vmatpush1.msra.mxu0 0.0
    %9437 = vmatprep.subr.mxu0 0.0
    %9438 = vmatpush1.msra.mxu0 0.0
    %9439 = vmatprep.subr.mxu0 0.0
    %9440 = vmatpush1.msra.mxu0 0.0
    %9441 = vmatprep.subr.mxu0 0.0
    %9442 = vmatpush1.msra.mxu0 0.0
    %9443 = vmatprep.subr.mxu0 0.0
    %9444 = vmatpush1.msra.mxu0 0.0
    %9445 = vmatprep.subr.mxu0 0.0
    %9446 = vmatpush1.msra.mxu0 0.0
    %9447 = vmatprep.subr.mxu0 0.0
    %9448 = vmatpush1.msra.mxu0 0.0
    %9449 = vmatprep.subr.mxu0 0.0
    %9450 = vmatpush1.msra.mxu0 0.0
    %9451 = vmatprep.subr.mxu0 0.0
    %9452 = vmatpush1.msra.mxu0 0.0
    %9453 = vmatprep.subr.mxu0 0.0
    %9454 = vmatpush1.msra.mxu0 0.0
    %9455 = vmatprep.subr.mxu0 0.0
    %9456 = vmatpush1.msra.mxu0 0.0
    %9457 = vmatprep.subr.mxu0 0.0
    %9458 = vmatpush1.msra.mxu0 0.0
    %9459 = vmatprep.subr.mxu0 0.0
    %9460 = vmatpush1.msra.mxu0 0.0
    %9461 = vmatprep.mubr.f32.mxu0 0.0
    %9462 = vmatmul.mubr.f32.gmra.mrb[0].mxu0 %v9395
    %v9463 = vpop.f32.mrb[0].mxu0
    %v9464 = vadd.f32 0.0, %v9463
    %v9465 = vpop.f32.mrb[0].mxu0
    %v9466 = vadd.f32 0.0, %v9465
    %9467 = vdwg.mxu0
    %9468 = vmatprep.subr.mxu0 %v9389
    %9469 = vmatpush1.msra.mxu0 %v9388
    %9470 = vmatprep.subr.mxu0 0.0
    %9471 = vmatpush1.msra.mxu0 0.0
    %9472 = vmatprep.subr.mxu0 0.0
    %9473 = vmatpush1.msra.mxu0 0.0
    %9474 = vmatprep.subr.mxu0 0.0
    %9475 = vmatpush1.msra.mxu0 0.0
    %9476 = vmatprep.subr.mxu0 0.0
    %9477 = vmatpush1.msra.mxu0 0.0
    %9478 = vmatprep.subr.mxu0 0.0
    %9479 = vmatpush1.msra.mxu0 0.0
    %9480 = vmatprep.subr.mxu0 0.0
    %9481 = vmatpush1.msra.mxu0 0.0
    %9482 = vmatprep.subr.mxu0 0.0
    %9483 = vmatpush1.msra.mxu0 0.0
    %9484 = vmatprep.subr.mxu0 0.0
    %9485 = vmatpush1.msra.mxu0 0.0
    %9486 = vmatprep.subr.mxu0 0.0
    %9487 = vmatpush1.msra.mxu0 0.0
    %9488 = vmatprep.subr.mxu0 0.0
    %9489 = vmatpush1.msra.mxu0 0.0
    %9490 = vmatprep.subr.mxu0 0.0
    %9491 = vmatpush1.msra.mxu0 0.0
    %9492 = vmatprep.subr.mxu0 0.0
    %9493 = vmatpush1.msra.mxu0 0.0
    %9494 = vmatprep.subr.mxu0 0.0
    %9495 = vmatpush1.msra.mxu0 0.0
    %9496 = vmatprep.subr.mxu0 0.0
    %9497 = vmatpush1.msra.mxu0 0.0
    %9498 = vmatprep.subr.mxu0 0.0
    %9499 = vmatpush1.msra.mxu0 0.0
    %9500 = vmatprep.subr.mxu0 0.0
    %9501 = vmatpush1.msra.mxu0 0.0
    %9502 = vmatprep.subr.mxu0 0.0
    %9503 = vmatpush1.msra.mxu0 0.0
    %9504 = vmatprep.subr.mxu0 0.0
    %9505 = vmatpush1.msra.mxu0 0.0
    %9506 = vmatprep.subr.mxu0 0.0
    %9507 = vmatpush1.msra.mxu0 0.0
    %9508 = vmatprep.subr.mxu0 0.0
    %9509 = vmatpush1.msra.mxu0 0.0
    %9510 = vmatprep.subr.mxu0 0.0
    %9511 = vmatpush1.msra.mxu0 0.0
    %9512 = vmatprep.subr.mxu0 0.0
    %9513 = vmatpush1.msra.mxu0 0.0
    %9514 = vmatprep.subr.mxu0 0.0
    %9515 = vmatpush1.msra.mxu0 0.0
    %9516 = vmatprep.subr.mxu0 0.0
    %9517 = vmatpush1.msra.mxu0 0.0
    %9518 = vmatprep.subr.mxu0 0.0
    %9519 = vmatpush1.msra.mxu0 0.0
    %9520 = vmatprep.subr.mxu0 0.0
    %9521 = vmatpush1.msra.mxu0 0.0
    %9522 = vmatprep.subr.mxu0 0.0
    %9523 = vmatpush1.msra.mxu0 0.0
    %9524 = vmatprep.subr.mxu0 0.0
    %9525 = vmatpush1.msra.mxu0 0.0
    %9526 = vmatprep.subr.mxu0 0.0
    %9527 = vmatpush1.msra.mxu0 0.0
    %9528 = vmatprep.subr.mxu0 0.0
    %9529 = vmatpush1.msra.mxu0 0.0
    %9530 = vmatprep.subr.mxu0 0.0
    %9531 = vmatpush1.msra.mxu0 0.0
    %9532 = vmatprep.mubr.f32.mxu0 0.0
    %9533 = vmatmul.mubr.f32.gmra.mrb[0].mxu0 %v9395
    %v9534 = vpop.f32.mrb[0].mxu0
    %v9535 = vadd.f32 0.0, %v9534
    %v9536 = vpop.f32.mrb[0].mxu0
    %v9537 = vadd.f32 0.0, %v9536
    %9538 = vdwg.mxu0
    %v9539 = vadd.f32 %v9361, %v9464
    %v9540 = vadd.f32 %v9362, %v9466
    %v9541 = vadd.f32 %v9363, %v9535
    %v9542 = vadd.f32 %v9364, %v9537
    %v9543 = vld [vmem:[#allocation3 + $0x348] sm:$0x7]
    %v9545 = vsel %vm891, %v9543, 0
    %9547 = vmatprep.subr.mxu0 %v8830
    %9548 = vmatpush1.msra.mxu0 %v8829
    %9549 = vmatprep.subr.mxu0 0.0
    %9550 = vmatpush1.msra.mxu0 0.0
    %9551 = vmatprep.subr.mxu0 0.0
    %9552 = vmatpush1.msra.mxu0 0.0
    %9553 = vmatprep.subr.mxu0 0.0
    %9554 = vmatpush1.msra.mxu0 0.0
    %9555 = vmatprep.subr.mxu0 0.0
    %9556 = vmatpush1.msra.mxu0 0.0
    %9557 = vmatprep.subr.mxu0 0.0
    %9558 = vmatpush1.msra.mxu0 0.0
    %9559 = vmatprep.subr.mxu0 0.0
    %9560 = vmatpush1.msra.mxu0 0.0
    %9561 = vmatprep.subr.mxu0 0.0
    %9562 = vmatpush1.msra.mxu0 0.0
    %9563 = vmatprep.subr.mxu0 0.0
    %9564 = vmatpush1.msra.mxu0 0.0
    %9565 = vmatprep.subr.mxu0 0.0
    %9566 = vmatpush1.msra.mxu0 0.0
    %9567 = vmatprep.subr.mxu0 0.0
    %9568 = vmatpush1.msra.mxu0 0.0
    %9569 = vmatprep.subr.mxu0 0.0
    %9570 = vmatpush1.msra.mxu0 0.0
    %9571 = vmatprep.subr.mxu0 0.0
    %9572 = vmatpush1.msra.mxu0 0.0
    %9573 = vmatprep.subr.mxu0 0.0
    %9574 = vmatpush1.msra.mxu0 0.0
    %9575 = vmatprep.subr.mxu0 0.0
    %9576 = vmatpush1.msra.mxu0 0.0
    %9577 = vmatprep.subr.mxu0 0.0
    %9578 = vmatpush1.msra.mxu0 0.0
    %9579 = vmatprep.subr.mxu0 0.0
    %9580 = vmatpush1.msra.mxu0 0.0
    %9581 = vmatprep.subr.mxu0 0.0
    %9582 = vmatpush1.msra.mxu0 0.0
    %9583 = vmatprep.subr.mxu0 0.0
    %9584 = vmatpush1.msra.mxu0 0.0
    %9585 = vmatprep.subr.mxu0 0.0
    %9586 = vmatpush1.msra.mxu0 0.0
    %9587 = vmatprep.subr.mxu0 0.0
    %9588 = vmatpush1.msra.mxu0 0.0
    %9589 = vmatprep.subr.mxu0 0.0
    %9590 = vmatpush1.msra.mxu0 0.0
    %9591 = vmatprep.subr.mxu0 0.0
    %9592 = vmatpush1.msra.mxu0 0.0
    %9593 = vmatprep.subr.mxu0 0.0
    %9594 = vmatpush1.msra.mxu0 0.0
    %9595 = vmatprep.subr.mxu0 0.0
    %9596 = vmatpush1.msra.mxu0 0.0
    %9597 = vmatprep.subr.mxu0 0.0
    %9598 = vmatpush1.msra.mxu0 0.0
    %9599 = vmatprep.subr.mxu0 0.0
    %9600 = vmatpush1.msra.mxu0 0.0
    %9601 = vmatprep.subr.mxu0 0.0
    %9602 = vmatpush1.msra.mxu0 0.0
    %9603 = vmatprep.subr.mxu0 0.0
    %9604 = vmatpush1.msra.mxu0 0.0
    %9605 = vmatprep.subr.mxu0 0.0
    %9606 = vmatpush1.msra.mxu0 0.0
    %9607 = vmatprep.subr.mxu0 0.0
    %9608 = vmatpush1.msra.mxu0 0.0
    %9609 = vmatprep.subr.mxu0 0.0
    %9610 = vmatpush1.msra.mxu0 0.0
    %9611 = vmatprep.mubr.f32.mxu0 0.0
    %9612 = vmatmul.mubr.f32.gmra.mrb[0].mxu0 %v9545
    %v9613 = vpop.f32.mrb[0].mxu0
    %v9614 = vadd.f32 0.0, %v9613
    %v9615 = vpop.f32.mrb[0].mxu0
    %v9616 = vadd.f32 0.0, %v9615
    %9617 = vdwg.mxu0
    %9618 = vmatprep.subr.mxu0 %v8832
    %9619 = vmatpush1.msra.mxu0 %v8831
    %9620 = vmatprep.subr.mxu0 0.0
    %9621 = vmatpush1.msra.mxu0 0.0
    %9622 = vmatprep.subr.mxu0 0.0
    %9623 = vmatpush1.msra.mxu0 0.0
    %9624 = vmatprep.subr.mxu0 0.0
    %9625 = vmatpush1.msra.mxu0 0.0
    %9626 = vmatprep.subr.mxu0 0.0
    %9627 = vmatpush1.msra.mxu0 0.0
    %9628 = vmatprep.subr.mxu0 0.0
    %9629 = vmatpush1.msra.mxu0 0.0
    %9630 = vmatprep.subr.mxu0 0.0
    %9631 = vmatpush1.msra.mxu0 0.0
    %9632 = vmatprep.subr.mxu0 0.0
    %9633 = vmatpush1.msra.mxu0 0.0
    %9634 = vmatprep.subr.mxu0 0.0
    %9635 = vmatpush1.msra.mxu0 0.0
    %9636 = vmatprep.subr.mxu0 0.0
    %9637 = vmatpush1.msra.mxu0 0.0
    %9638 = vmatprep.subr.mxu0 0.0
    %9639 = vmatpush1.msra.mxu0 0.0
    %9640 = vmatprep.subr.mxu0 0.0
    %9641 = vmatpush1.msra.mxu0 0.0
    %9642 = vmatprep.subr.mxu0 0.0
    %9643 = vmatpush1.msra.mxu0 0.0
    %9644 = vmatprep.subr.mxu0 0.0
    %9645 = vmatpush1.msra.mxu0 0.0
    %9646 = vmatprep.subr.mxu0 0.0
    %9647 = vmatpush1.msra.mxu0 0.0
    %9648 = vmatprep.subr.mxu0 0.0
    %9649 = vmatpush1.msra.mxu0 0.0
    %9650 = vmatprep.subr.mxu0 0.0
    %9651 = vmatpush1.msra.mxu0 0.0
    %9652 = vmatprep.subr.mxu0 0.0
    %9653 = vmatpush1.msra.mxu0 0.0
    %9654 = vmatprep.subr.mxu0 0.0
    %9655 = vmatpush1.msra.mxu0 0.0
    %9656 = vmatprep.subr.mxu0 0.0
    %9657 = vmatpush1.msra.mxu0 0.0
    %9658 = vmatprep.subr.mxu0 0.0
    %9659 = vmatpush1.msra.mxu0 0.0
    %9660 = vmatprep.subr.mxu0 0.0
    %9661 = vmatpush1.msra.mxu0 0.0
    %9662 = vmatprep.subr.mxu0 0.0
    %9663 = vmatpush1.msra.mxu0 0.0
    %9664 = vmatprep.subr.mxu0 0.0
    %9665 = vmatpush1.msra.mxu0 0.0
    %9666 = vmatprep.subr.mxu0 0.0
    %9667 = vmatpush1.msra.mxu0 0.0
    %9668 = vmatprep.subr.mxu0 0.0
    %9669 = vmatpush1.msra.mxu0 0.0
    %9670 = vmatprep.subr.mxu0 0.0
    %9671 = vmatpush1.msra.mxu0 0.0
    %9672 = vmatprep.subr.mxu0 0.0
    %9673 = vmatpush1.msra.mxu0 0.0
    %9674 = vmatprep.subr.mxu0 0.0
    %9675 = vmatpush1.msra.mxu0 0.0
    %9676 = vmatprep.subr.mxu0 0.0
    %9677 = vmatpush1.msra.mxu0 0.0
    %9678 = vmatprep.subr.mxu0 0.0
    %9679 = vmatpush1.msra.mxu0 0.0
    %9680 = vmatprep.subr.mxu0 0.0
    %9681 = vmatpush1.msra.mxu0 0.0
    %9682 = vmatprep.mubr.f32.mxu0 0.0
    %9683 = vmatmul.mubr.f32.gmra.mrb[0].mxu0 %v9545
    %v9684 = vpop.f32.mrb[0].mxu0
    %v9685 = vadd.f32 0.0, %v9684
    %v9686 = vpop.f32.mrb[0].mxu0
    %v9687 = vadd.f32 0.0, %v9686
    %9688 = vdwg.mxu0
    %v9689 = vadd.f32 %v9539, %v9614
    %v9690 = vadd.f32 %v9540, %v9616
    %v9691 = vadd.f32 %v9541, %v9685
    %v9692 = vadd.f32 %v9542, %v9687
    %v9693 = vld [vmem:[#allocation3 + $0x350] sm:$0x7]
    %v9694 = vld [vmem:[#allocation2 + $0x8] sm:$0xff]
    %v9695 = vld [vmem:[#allocation2 + $0x10] sm:$0xff]
    %v9696 = vld [vmem:[#allocation2 + $0x18] sm:$0xff]
    %v9697 = vld [vmem:[#allocation2 + $0x20] sm:$0xff]
    %v9698 = vld [vmem:[#allocation2 + $0x28] sm:$0xff]
    %v9699 = vmul.f32 %v9694, %v8027
    %v9700 = vmul.f32 %v9695, %v8034
    %v9701 = vmul.f32 %v9696, %v8035
    %v9702 = vmul.f32 %v9697, %v8036
    %v9703 = vmul.f32 %v9698, %v8033
    %9709 = vrot.lane.b32.xlu0 %v9699, 127
    %v9710 = vpop.permute.xlu0 %9709
    %9711 = vrot.lane.b32.xlu0 %v9700, 127
    %v9712 = vpop.permute.xlu0 %9711
    %9713 = vrot.lane.b32.xlu0 %v9701, 127
    %v9714 = vpop.permute.xlu0 %9713
    %9715 = vrot.lane.b32.xlu0 %v9702, 127
    %v9716 = vpop.permute.xlu0 %9715
    %9717 = vrot.lane.b32.xlu0 %v9703, 127
    %v9718 = vpop.permute.xlu0 %9717
    %v9719 = vsel %vm5500, %v9710, %v9712
    %v9720 = vsel %vm5500, %v9712, %v9714
    %v9721 = vsel %vm5500, %v9714, %v9716
    %v9722 = vsel %vm5500, %v9716, %v9718
    %v9728 = vsel %vm891, %v9693, 0
    %9730 = vmatprep.subr.mxu0 %v9720
    %9731 = vmatpush1.msra.mxu0 %v9719
    %9732 = vmatprep.subr.mxu0 0.0
    %9733 = vmatpush1.msra.mxu0 0.0
    %9734 = vmatprep.subr.mxu0 0.0
    %9735 = vmatpush1.msra.mxu0 0.0
    %9736 = vmatprep.subr.mxu0 0.0
    %9737 = vmatpush1.msra.mxu0 0.0
    %9738 = vmatprep.subr.mxu0 0.0
    %9739 = vmatpush1.msra.mxu0 0.0
    %9740 = vmatprep.subr.mxu0 0.0
    %9741 = vmatpush1.msra.mxu0 0.0
    %9742 = vmatprep.subr.mxu0 0.0
    %9743 = vmatpush1.msra.mxu0 0.0
    %9744 = vmatprep.subr.mxu0 0.0
    %9745 = vmatpush1.msra.mxu0 0.0
    %9746 = vmatprep.subr.mxu0 0.0
    %9747 = vmatpush1.msra.mxu0 0.0
    %9748 = vmatprep.subr.mxu0 0.0
    %9749 = vmatpush1.msra.mxu0 0.0
    %9750 = vmatprep.subr.mxu0 0.0
    %9751 = vmatpush1.msra.mxu0 0.0
    %9752 = vmatprep.subr.mxu0 0.0
    %9753 = vmatpush1.msra.mxu0 0.0
    %9754 = vmatprep.subr.mxu0 0.0
    %9755 = vmatpush1.msra.mxu0 0.0
    %9756 = vmatprep.subr.mxu0 0.0
    %9757 = vmatpush1.msra.mxu0 0.0
    %9758 = vmatprep.subr.mxu0 0.0
    %9759 = vmatpush1.msra.mxu0 0.0
    %9760 = vmatprep.subr.mxu0 0.0
    %9761 = vmatpush1.msra.mxu0 0.0
    %9762 = vmatprep.subr.mxu0 0.0
    %9763 = vmatpush1.msra.mxu0 0.0
    %9764 = vmatprep.subr.mxu0 0.0
    %9765 = vmatpush1.msra.mxu0 0.0
    %9766 = vmatprep.subr.mxu0 0.0
    %9767 = vmatpush1.msra.mxu0 0.0
    %9768 = vmatprep.subr.mxu0 0.0
    %9769 = vmatpush1.msra.mxu0 0.0
    %9770 = vmatprep.subr.mxu0 0.0
    %9771 = vmatpush1.msra.mxu0 0.0
    %9772 = vmatprep.subr.mxu0 0.0
    %9773 = vmatpush1.msra.mxu0 0.0
    %9774 = vmatprep.subr.mxu0 0.0
    %9775 = vmatpush1.msra.mxu0 0.0
    %9776 = vmatprep.subr.mxu0 0.0
    %9777 = vmatpush1.msra.mxu0 0.0
    %9778 = vmatprep.subr.mxu0 0.0
    %9779 = vmatpush1.msra.mxu0 0.0
    %9780 = vmatprep.subr.mxu0 0.0
    %9781 = vmatpush1.msra.mxu0 0.0
    %9782 = vmatprep.subr.mxu0 0.0
    %9783 = vmatpush1.msra.mxu0 0.0
    %9784 = vmatprep.subr.mxu0 0.0
    %9785 = vmatpush1.msra.mxu0 0.0
    %9786 = vmatprep.subr.mxu0 0.0
    %9787 = vmatpush1.msra.mxu0 0.0
    %9788 = vmatprep.subr.mxu0 0.0
    %9789 = vmatpush1.msra.mxu0 0.0
    %9790 = vmatprep.subr.mxu0 0.0
    %9791 = vmatpush1.msra.mxu0 0.0
    %9792 = vmatprep.subr.mxu0 0.0
    %9793 = vmatpush1.msra.mxu0 0.0
    %9794 = vmatprep.mubr.f32.mxu0 0.0
    %9795 = vmatmul.mubr.f32.gmra.mrb[0].mxu0 %v9728
    %v9796 = vpop.f32.mrb[0].mxu0
    %v9797 = vadd.f32 0.0, %v9796
    %v9798 = vpop.f32.mrb[0].mxu0
    %v9799 = vadd.f32 0.0, %v9798
    %9800 = vdwg.mxu0
    %9801 = vmatprep.subr.mxu0 %v9722
    %9802 = vmatpush1.msra.mxu0 %v9721
    %9803 = vmatprep.subr.mxu0 0.0
    %9804 = vmatpush1.msra.mxu0 0.0
    %9805 = vmatprep.subr.mxu0 0.0
    %9806 = vmatpush1.msra.mxu0 0.0
    %9807 = vmatprep.subr.mxu0 0.0
    %9808 = vmatpush1.msra.mxu0 0.0
    %9809 = vmatprep.subr.mxu0 0.0
    %9810 = vmatpush1.msra.mxu0 0.0
    %9811 = vmatprep.subr.mxu0 0.0
    %9812 = vmatpush1.msra.mxu0 0.0
    %9813 = vmatprep.subr.mxu0 0.0
    %9814 = vmatpush1.msra.mxu0 0.0
    %9815 = vmatprep.subr.mxu0 0.0
    %9816 = vmatpush1.msra.mxu0 0.0
    %9817 = vmatprep.subr.mxu0 0.0
    %9818 = vmatpush1.msra.mxu0 0.0
    %9819 = vmatprep.subr.mxu0 0.0
    %9820 = vmatpush1.msra.mxu0 0.0
    %9821 = vmatprep.subr.mxu0 0.0
    %9822 = vmatpush1.msra.mxu0 0.0
    %9823 = vmatprep.subr.mxu0 0.0
    %9824 = vmatpush1.msra.mxu0 0.0
    %9825 = vmatprep.subr.mxu0 0.0
    %9826 = vmatpush1.msra.mxu0 0.0
    %9827 = vmatprep.subr.mxu0 0.0
    %9828 = vmatpush1.msra.mxu0 0.0
    %9829 = vmatprep.subr.mxu0 0.0
    %9830 = vmatpush1.msra.mxu0 0.0
    %9831 = vmatprep.subr.mxu0 0.0
    %9832 = vmatpush1.msra.mxu0 0.0
    %9833 = vmatprep.subr.mxu0 0.0
    %9834 = vmatpush1.msra.mxu0 0.0
    %9835 = vmatprep.subr.mxu0 0.0
    %9836 = vmatpush1.msra.mxu0 0.0
    %9837 = vmatprep.subr.mxu0 0.0
    %9838 = vmatpush1.msra.mxu0 0.0
    %9839 = vmatprep.subr.mxu0 0.0
    %9840 = vmatpush1.msra.mxu0 0.0
    %9841 = vmatprep.subr.mxu0 0.0
    %9842 = vmatpush1.msra.mxu0 0.0
    %9843 = vmatprep.subr.mxu0 0.0
    %9844 = vmatpush1.msra.mxu0 0.0
    %9845 = vmatprep.subr.mxu0 0.0
    %9846 = vmatpush1.msra.mxu0 0.0
    %9847 = vmatprep.subr.mxu0 0.0
    %9848 = vmatpush1.msra.mxu0 0.0
    %9849 = vmatprep.subr.mxu0 0.0
    %9850 = vmatpush1.msra.mxu0 0.0
    %9851 = vmatprep.subr.mxu0 0.0
    %9852 = vmatpush1.msra.mxu0 0.0
    %9853 = vmatprep.subr.mxu0 0.0
    %9854 = vmatpush1.msra.mxu0 0.0
    %9855 = vmatprep.subr.mxu0 0.0
    %9856 = vmatpush1.msra.mxu0 0.0
    %9857 = vmatprep.subr.mxu0 0.0
    %9858 = vmatpush1.msra.mxu0 0.0
    %9859 = vmatprep.subr.mxu0 0.0
    %9860 = vmatpush1.msra.mxu0 0.0
    %9861 = vmatprep.subr.mxu0 0.0
    %9862 = vmatpush1.msra.mxu0 0.0
    %9863 = vmatprep.subr.mxu0 0.0
    %9864 = vmatpush1.msra.mxu0 0.0
    %9865 = vmatprep.mubr.f32.mxu0 0.0
    %9866 = vmatmul.mubr.f32.gmra.mrb[0].mxu0 %v9728
    %v9867 = vpop.f32.mrb[0].mxu0
    %v9868 = vadd.f32 0.0, %v9867
    %v9869 = vpop.f32.mrb[0].mxu0
    %v9870 = vadd.f32 0.0, %v9869
    %9871 = vdwg.mxu0
    %v9872 = vadd.f32 %v9689, %v9797
    %v9873 = vadd.f32 %v9690, %v9799
    %v9874 = vadd.f32 %v9691, %v9868
    %v9875 = vadd.f32 %v9692, %v9870
    %v9876 = vld [vmem:[#allocation3 + $0x358] sm:$0x7]
    %v9877 = vmul.f32 %v9694, %v8225
    %v9878 = vmul.f32 %v9695, %v8232
    %v9879 = vmul.f32 %v9696, %v8233
    %v9880 = vmul.f32 %v9697, %v8234
    %v9881 = vmul.f32 %v9698, %v8231
    %9887 = vrot.lane.b32.xlu0 %v9877, 113
    %v9888 = vpop.permute.xlu0 %9887
    %9889 = vrot.lane.b32.xlu0 %v9878, 113
    %v9890 = vpop.permute.xlu0 %9889
    %9891 = vrot.lane.b32.xlu0 %v9879, 113
    %v9892 = vpop.permute.xlu0 %9891
    %9893 = vrot.lane.b32.xlu0 %v9880, 113
    %v9894 = vpop.permute.xlu0 %9893
    %9895 = vrot.lane.b32.xlu0 %v9881, 113
    %v9896 = vpop.permute.xlu0 %9895
    %v9897 = vsel %vm7481, %v9888, %v9890
    %v9898 = vsel %vm7481, %v9890, %v9892
    %v9899 = vsel %vm7481, %v9892, %v9894
    %v9900 = vsel %vm7481, %v9894, %v9896
    %v9906 = vsel %vm891, %v9876, 0
    %9908 = vmatprep.subr.mxu0 %v9898
    %9909 = vmatpush1.msra.mxu0 %v9897
    %9910 = vmatprep.subr.mxu0 0.0
    %9911 = vmatpush1.msra.mxu0 0.0
    %9912 = vmatprep.subr.mxu0 0.0
    %9913 = vmatpush1.msra.mxu0 0.0
    %9914 = vmatprep.subr.mxu0 0.0
    %9915 = vmatpush1.msra.mxu0 0.0
    %9916 = vmatprep.subr.mxu0 0.0
    %9917 = vmatpush1.msra.mxu0 0.0
    %9918 = vmatprep.subr.mxu0 0.0
    %9919 = vmatpush1.msra.mxu0 0.0
    %9920 = vmatprep.subr.mxu0 0.0
    %9921 = vmatpush1.msra.mxu0 0.0
    %9922 = vmatprep.subr.mxu0 0.0
    %9923 = vmatpush1.msra.mxu0 0.0
    %9924 = vmatprep.subr.mxu0 0.0
    %9925 = vmatpush1.msra.mxu0 0.0
    %9926 = vmatprep.subr.mxu0 0.0
    %9927 = vmatpush1.msra.mxu0 0.0
    %9928 = vmatprep.subr.mxu0 0.0
    %9929 = vmatpush1.msra.mxu0 0.0
    %9930 = vmatprep.subr.mxu0 0.0
    %9931 = vmatpush1.msra.mxu0 0.0
    %9932 = vmatprep.subr.mxu0 0.0
    %9933 = vmatpush1.msra.mxu0 0.0
    %9934 = vmatprep.subr.mxu0 0.0
    %9935 = vmatpush1.msra.mxu0 0.0
    %9936 = vmatprep.subr.mxu0 0.0
    %9937 = vmatpush1.msra.mxu0 0.0
    %9938 = vmatprep.subr.mxu0 0.0
    %9939 = vmatpush1.msra.mxu0 0.0
    %9940 = vmatprep.subr.mxu0 0.0
    %9941 = vmatpush1.msra.mxu0 0.0
    %9942 = vmatprep.subr.mxu0 0.0
    %9943 = vmatpush1.msra.mxu0 0.0
    %9944 = vmatprep.subr.mxu0 0.0
    %9945 = vmatpush1.msra.mxu0 0.0
    %9946 = vmatprep.subr.mxu0 0.0
    %9947 = vmatpush1.msra.mxu0 0.0
    %9948 = vmatprep.subr.mxu0 0.0
    %9949 = vmatpush1.msra.mxu0 0.0
    %9950 = vmatprep.subr.mxu0 0.0
    %9951 = vmatpush1.msra.mxu0 0.0
    %9952 = vmatprep.subr.mxu0 0.0
    %9953 = vmatpush1.msra.mxu0 0.0
    %9954 = vmatprep.subr.mxu0 0.0
    %9955 = vmatpush1.msra.mxu0 0.0
    %9956 = vmatprep.subr.mxu0 0.0
    %9957 = vmatpush1.msra.mxu0 0.0
    %9958 = vmatprep.subr.mxu0 0.0
    %9959 = vmatpush1.msra.mxu0 0.0
    %9960 = vmatprep.subr.mxu0 0.0
    %9961 = vmatpush1.msra.mxu0 0.0
    %9962 = vmatprep.subr.mxu0 0.0
    %9963 = vmatpush1.msra.mxu0 0.0
    %9964 = vmatprep.subr.mxu0 0.0
    %9965 = vmatpush1.msra.mxu0 0.0
    %9966 = vmatprep.subr.mxu0 0.0
    %9967 = vmatpush1.msra.mxu0 0.0
    %9968 = vmatprep.subr.mxu0 0.0
    %9969 = vmatpush1.msra.mxu0 0.0
    %9970 = vmatprep.subr.mxu0 0.0
    %9971 = vmatpush1.msra.mxu0 0.0
    %9972 = vmatprep.mubr.f32.mxu0 0.0
    %9973 = vmatmul.mubr.f32.gmra.mrb[0].mxu0 %v9906
    %v9974 = vpop.f32.mrb[0].mxu0
    %v9975 = vadd.f32 0.0, %v9974
    %v9976 = vpop.f32.mrb[0].mxu0
    %v9977 = vadd.f32 0.0, %v9976
    %9978 = vdwg.mxu0
    %9979 = vmatprep.subr.mxu0 %v9900
    %9980 = vmatpush1.msra.mxu0 %v9899
    %9981 = vmatprep.subr.mxu0 0.0
    %9982 = vmatpush1.msra.mxu0 0.0
    %9983 = vmatprep.subr.mxu0 0.0
    %9984 = vmatpush1.msra.mxu0 0.0
    %9985 = vmatprep.subr.mxu0 0.0
    %9986 = vmatpush1.msra.mxu0 0.0
    %9987 = vmatprep.subr.mxu0 0.0
    %9988 = vmatpush1.msra.mxu0 0.0
    %9989 = vmatprep.subr.mxu0 0.0
    %9990 = vmatpush1.msra.mxu0 0.0
    %9991 = vmatprep.subr.mxu0 0.0
    %9992 = vmatpush1.msra.mxu0 0.0
    %9993 = vmatprep.subr.mxu0 0.0
    %9994 = vmatpush1.msra.mxu0 0.0
    %9995 = vmatprep.subr.mxu0 0.0
    %9996 = vmatpush1.msra.mxu0 0.0
    %9997 = vmatprep.subr.mxu0 0.0
    %9998 = vmatpush1.msra.mxu0 0.0
    %9999 = vmatprep.subr.mxu0 0.0
    %10000 = vmatpush1.msra.mxu0 0.0
    %10001 = vmatprep.subr.mxu0 0.0
    %10002 = vmatpush1.msra.mxu0 0.0
    %10003 = vmatprep.subr.mxu0 0.0
    %10004 = vmatpush1.msra.mxu0 0.0
    %10005 = vmatprep.subr.mxu0 0.0
    %10006 = vmatpush1.msra.mxu0 0.0
    %10007 = vmatprep.subr.mxu0 0.0
    %10008 = vmatpush1.msra.mxu0 0.0
    %10009 = vmatprep.subr.mxu0 0.0
    %10010 = vmatpush1.msra.mxu0 0.0
    %10011 = vmatprep.subr.mxu0 0.0
    %10012 = vmatpush1.msra.mxu0 0.0
    %10013 = vmatprep.subr.mxu0 0.0
    %10014 = vmatpush1.msra.mxu0 0.0
    %10015 = vmatprep.subr.mxu0 0.0
    %10016 = vmatpush1.msra.mxu0 0.0
    %10017 = vmatprep.subr.mxu0 0.0
    %10018 = vmatpush1.msra.mxu0 0.0
    %10019 = vmatprep.subr.mxu0 0.0
    %10020 = vmatpush1.msra.mxu0 0.0
    %10021 = vmatprep.subr.mxu0 0.0
    %10022 = vmatpush1.msra.mxu0 0.0
    %10023 = vmatprep.subr.mxu0 0.0
    %10024 = vmatpush1.msra.mxu0 0.0
    %10025 = vmatprep.subr.mxu0 0.0
    %10026 = vmatpush1.msra.mxu0 0.0
    %10027 = vmatprep.subr.mxu0 0.0
    %10028 = vmatpush1.msra.mxu0 0.0
    %10029 = vmatprep.subr.mxu0 0.0
    %10030 = vmatpush1.msra.mxu0 0.0
    %10031 = vmatprep.subr.mxu0 0.0
    %10032 = vmatpush1.msra.mxu0 0.0
    %10033 = vmatprep.subr.mxu0 0.0
    %10034 = vmatpush1.msra.mxu0 0.0
    %10035 = vmatprep.subr.mxu0 0.0
    %10036 = vmatpush1.msra.mxu0 0.0
    %10037 = vmatprep.subr.mxu0 0.0
    %10038 = vmatpush1.msra.mxu0 0.0
    %10039 = vmatprep.subr.mxu0 0.0
    %10040 = vmatpush1.msra.mxu0 0.0
    %10041 = vmatprep.subr.mxu0 0.0
    %10042 = vmatpush1.msra.mxu0 0.0
    %10043 = vmatprep.mubr.f32.mxu0 0.0
    %10044 = vmatmul.mubr.f32.gmra.mrb[0].mxu0 %v9906
    %v10045 = vpop.f32.mrb[0].mxu0
    %v10046 = vadd.f32 0.0, %v10045
    %v10047 = vpop.f32.mrb[0].mxu0
    %v10048 = vadd.f32 0.0, %v10047
    %10049 = vdwg.mxu0
    %v10050 = vadd.f32 %v9872, %v9975
    %v10051 = vadd.f32 %v9873, %v9977
    %v10052 = vadd.f32 %v9874, %v10046
    %v10053 = vadd.f32 %v9875, %v10048
    %v10054 = vld [vmem:[#allocation3 + $0x360] sm:$0x7]
    %v10055 = vmul.f32 %v9694, %v8423
    %v10056 = vmul.f32 %v9695, %v8430
    %v10057 = vmul.f32 %v9696, %v8431
    %v10058 = vmul.f32 %v9697, %v8432
    %v10059 = vmul.f32 %v9698, %v8429
    %10065 = vrot.lane.b32.xlu0 %v10055, 112
    %v10066 = vpop.permute.xlu0 %10065
    %10067 = vrot.lane.b32.xlu0 %v10056, 112
    %v10068 = vpop.permute.xlu0 %10067
    %10069 = vrot.lane.b32.xlu0 %v10057, 112
    %v10070 = vpop.permute.xlu0 %10069
    %10071 = vrot.lane.b32.xlu0 %v10058, 112
    %v10072 = vpop.permute.xlu0 %10071
    %10073 = vrot.lane.b32.xlu0 %v10059, 112
    %v10074 = vpop.permute.xlu0 %10073
    %v10075 = vsel %vm7282, %v10066, %v10068
    %v10076 = vsel %vm7282, %v10068, %v10070
    %v10077 = vsel %vm7282, %v10070, %v10072
    %v10078 = vsel %vm7282, %v10072, %v10074
    %v10084 = vsel %vm891, %v10054, 0
    %10086 = vmatprep.subr.mxu0 %v10076
    %10087 = vmatpush1.msra.mxu0 %v10075
    %10088 = vmatprep.subr.mxu0 0.0
    %10089 = vmatpush1.msra.mxu0 0.0
    %10090 = vmatprep.subr.mxu0 0.0
    %10091 = vmatpush1.msra.mxu0 0.0
    %10092 = vmatprep.subr.mxu0 0.0
    %10093 = vmatpush1.msra.mxu0 0.0
    %10094 = vmatprep.subr.mxu0 0.0
    %10095 = vmatpush1.msra.mxu0 0.0
    %10096 = vmatprep.subr.mxu0 0.0
    %10097 = vmatpush1.msra.mxu0 0.0
    %10098 = vmatprep.subr.mxu0 0.0
    %10099 = vmatpush1.msra.mxu0 0.0
    %10100 = vmatprep.subr.mxu0 0.0
    %10101 = vmatpush1.msra.mxu0 0.0
    %10102 = vmatprep.subr.mxu0 0.0
    %10103 = vmatpush1.msra.mxu0 0.0
    %10104 = vmatprep.subr.mxu0 0.0
    %10105 = vmatpush1.msra.mxu0 0.0
    %10106 = vmatprep.subr.mxu0 0.0
    %10107 = vmatpush1.msra.mxu0 0.0
    %10108 = vmatprep.subr.mxu0 0.0
    %10109 = vmatpush1.msra.mxu0 0.0
    %10110 = vmatprep.subr.mxu0 0.0
    %10111 = vmatpush1.msra.mxu0 0.0
    %10112 = vmatprep.subr.mxu0 0.0
    %10113 = vmatpush1.msra.mxu0 0.0
    %10114 = vmatprep.subr.mxu0 0.0
    %10115 = vmatpush1.msra.mxu0 0.0
    %10116 = vmatprep.subr.mxu0 0.0
    %10117 = vmatpush1.msra.mxu0 0.0
    %10118 = vmatprep.subr.mxu0 0.0
    %10119 = vmatpush1.msra.mxu0 0.0
    %10120 = vmatprep.subr.mxu0 0.0
    %10121 = vmatpush1.msra.mxu0 0.0
    %10122 = vmatprep.subr.mxu0 0.0
    %10123 = vmatpush1.msra.mxu0 0.0
    %10124 = vmatprep.subr.mxu0 0.0
    %10125 = vmatpush1.msra.mxu0 0.0
    %10126 = vmatprep.subr.mxu0 0.0
    %10127 = vmatpush1.msra.mxu0 0.0
    %10128 = vmatprep.subr.mxu0 0.0
    %10129 = vmatpush1.msra.mxu0 0.0
    %10130 = vmatprep.subr.mxu0 0.0
    %10131 = vmatpush1.msra.mxu0 0.0
    %10132 = vmatprep.subr.mxu0 0.0
    %10133 = vmatpush1.msra.mxu0 0.0
    %10134 = vmatprep.subr.mxu0 0.0
    %10135 = vmatpush1.msra.mxu0 0.0
    %10136 = vmatprep.subr.mxu0 0.0
    %10137 = vmatpush1.msra.mxu0 0.0
    %10138 = vmatprep.subr.mxu0 0.0
    %10139 = vmatpush1.msra.mxu0 0.0
    %10140 = vmatprep.subr.mxu0 0.0
    %10141 = vmatpush1.msra.mxu0 0.0
    %10142 = vmatprep.subr.mxu0 0.0
    %10143 = vmatpush1.msra.mxu0 0.0
    %10144 = vmatprep.subr.mxu0 0.0
    %10145 = vmatpush1.msra.mxu0 0.0
    %10146 = vmatprep.subr.mxu0 0.0
    %10147 = vmatpush1.msra.mxu0 0.0
    %10148 = vmatprep.subr.mxu0 0.0
    %10149 = vmatpush1.msra.mxu0 0.0
    %10150 = vmatprep.mubr.f32.mxu0 0.0
    %10151 = vmatmul.mubr.f32.gmra.mrb[0].mxu0 %v10084
    %v10152 = vpop.f32.mrb[0].mxu0
    %v10153 = vadd.f32 0.0, %v10152
    %v10154 = vpop.f32.mrb[0].mxu0
    %v10155 = vadd.f32 0.0, %v10154
    %10156 = vdwg.mxu0
    %10157 = vmatprep.subr.mxu0 %v10078
    %10158 = vmatpush1.msra.mxu0 %v10077
    %10159 = vmatprep.subr.mxu0 0.0
    %10160 = vmatpush1.msra.mxu0 0.0
    %10161 = vmatprep.subr.mxu0 0.0
    %10162 = vmatpush1.msra.mxu0 0.0
    %10163 = vmatprep.subr.mxu0 0.0
    %10164 = vmatpush1.msra.mxu0 0.0
    %10165 = vmatprep.subr.mxu0 0.0
    %10166 = vmatpush1.msra.mxu0 0.0
    %10167 = vmatprep.subr.mxu0 0.0
    %10168 = vmatpush1.msra.mxu0 0.0
    %10169 = vmatprep.subr.mxu0 0.0
    %10170 = vmatpush1.msra.mxu0 0.0
    %10171 = vmatprep.subr.mxu0 0.0
    %10172 = vmatpush1.msra.mxu0 0.0
    %10173 = vmatprep.subr.mxu0 0.0
    %10174 = vmatpush1.msra.mxu0 0.0
    %10175 = vmatprep.subr.mxu0 0.0
    %10176 = vmatpush1.msra.mxu0 0.0
    %10177 = vmatprep.subr.mxu0 0.0
    %10178 = vmatpush1.msra.mxu0 0.0
    %10179 = vmatprep.subr.mxu0 0.0
    %10180 = vmatpush1.msra.mxu0 0.0
    %10181 = vmatprep.subr.mxu0 0.0
    %10182 = vmatpush1.msra.mxu0 0.0
    %10183 = vmatprep.subr.mxu0 0.0
    %10184 = vmatpush1.msra.mxu0 0.0
    %10185 = vmatprep.subr.mxu0 0.0
    %10186 = vmatpush1.msra.mxu0 0.0
    %10187 = vmatprep.subr.mxu0 0.0
    %10188 = vmatpush1.msra.mxu0 0.0
    %10189 = vmatprep.subr.mxu0 0.0
    %10190 = vmatpush1.msra.mxu0 0.0
    %10191 = vmatprep.subr.mxu0 0.0
    %10192 = vmatpush1.msra.mxu0 0.0
    %10193 = vmatprep.subr.mxu0 0.0
    %10194 = vmatpush1.msra.mxu0 0.0
    %10195 = vmatprep.subr.mxu0 0.0
    %10196 = vmatpush1.msra.mxu0 0.0
    %10197 = vmatprep.subr.mxu0 0.0
    %10198 = vmatpush1.msra.mxu0 0.0
    %10199 = vmatprep.subr.mxu0 0.0
    %10200 = vmatpush1.msra.mxu0 0.0
    %10201 = vmatprep.subr.mxu0 0.0
    %10202 = vmatpush1.msra.mxu0 0.0
    %10203 = vmatprep.subr.mxu0 0.0
    %10204 = vmatpush1.msra.mxu0 0.0
    %10205 = vmatprep.subr.mxu0 0.0
    %10206 = vmatpush1.msra.mxu0 0.0
    %10207 = vmatprep.subr.mxu0 0.0
    %10208 = vmatpush1.msra.mxu0 0.0
    %10209 = vmatprep.subr.mxu0 0.0
    %10210 = vmatpush1.msra.mxu0 0.0
    %10211 = vmatprep.subr.mxu0 0.0
    %10212 = vmatpush1.msra.mxu0 0.0
    %10213 = vmatprep.subr.mxu0 0.0
    %10214 = vmatpush1.msra.mxu0 0.0
    %10215 = vmatprep.subr.mxu0 0.0
    %10216 = vmatpush1.msra.mxu0 0.0
    %10217 = vmatprep.subr.mxu0 0.0
    %10218 = vmatpush1.msra.mxu0 0.0
    %10219 = vmatprep.subr.mxu0 0.0
    %10220 = vmatpush1.msra.mxu0 0.0
    %10221 = vmatprep.mubr.f32.mxu0 0.0
    %10222 = vmatmul.mubr.f32.gmra.mrb[0].mxu0 %v10084
    %v10223 = vpop.f32.mrb[0].mxu0
    %v10224 = vadd.f32 0.0, %v10223
    %v10225 = vpop.f32.mrb[0].mxu0
    %v10226 = vadd.f32 0.0, %v10225
    %10227 = vdwg.mxu0
    %v10228 = vadd.f32 %v10050, %v10153
    %v10229 = vadd.f32 %v10051, %v10155
    %v10230 = vadd.f32 %v10052, %v10224
    %v10231 = vadd.f32 %v10053, %v10226
    %v10232 = vld [vmem:[#allocation3 + $0x368] sm:$0x7]
    %v10233 = vmul.f32 %v9694, %v8621
    %v10234 = vmul.f32 %v9695, %v8628
    %v10235 = vmul.f32 %v9696, %v8629
    %v10236 = vmul.f32 %v9697, %v8630
    %v10237 = vmul.f32 %v9698, %v8627
    %10243 = vrot.lane.b32.xlu0 %v10233, 111
    %v10244 = vpop.permute.xlu0 %10243
    %10245 = vrot.lane.b32.xlu0 %v10234, 111
    %v10246 = vpop.permute.xlu0 %10245
    %10247 = vrot.lane.b32.xlu0 %v10235, 111
    %v10248 = vpop.permute.xlu0 %10247
    %10249 = vrot.lane.b32.xlu0 %v10236, 111
    %v10250 = vpop.permute.xlu0 %10249
    %10251 = vrot.lane.b32.xlu0 %v10237, 111
    %v10252 = vpop.permute.xlu0 %10251
    %v10253 = vsel %vm7083, %v10244, %v10246
    %v10254 = vsel %vm7083, %v10246, %v10248
    %v10255 = vsel %vm7083, %v10248, %v10250
    %v10256 = vsel %vm7083, %v10250, %v10252
    %v10262 = vsel %vm891, %v10232, 0
    %10264 = vmatprep.subr.mxu0 %v10254
    %10265 = vmatpush1.msra.mxu0 %v10253
    %10266 = vmatprep.subr.mxu0 0.0
    %10267 = vmatpush1.msra.mxu0 0.0
    %10268 = vmatprep.subr.mxu0 0.0
    %10269 = vmatpush1.msra.mxu0 0.0
    %10270 = vmatprep.subr.mxu0 0.0
    %10271 = vmatpush1.msra.mxu0 0.0
    %10272 = vmatprep.subr.mxu0 0.0
    %10273 = vmatpush1.msra.mxu0 0.0
    %10274 = vmatprep.subr.mxu0 0.0
    %10275 = vmatpush1.msra.mxu0 0.0
    %10276 = vmatprep.subr.mxu0 0.0
    %10277 = vmatpush1.msra.mxu0 0.0
    %10278 = vmatprep.subr.mxu0 0.0
    %10279 = vmatpush1.msra.mxu0 0.0
    %10280 = vmatprep.subr.mxu0 0.0
    %10281 = vmatpush1.msra.mxu0 0.0
    %10282 = vmatprep.subr.mxu0 0.0
    %10283 = vmatpush1.msra.mxu0 0.0
    %10284 = vmatprep.subr.mxu0 0.0
    %10285 = vmatpush1.msra.mxu0 0.0
    %10286 = vmatprep.subr.mxu0 0.0
    %10287 = vmatpush1.msra.mxu0 0.0
    %10288 = vmatprep.subr.mxu0 0.0
    %10289 = vmatpush1.msra.mxu0 0.0
    %10290 = vmatprep.subr.mxu0 0.0
    %10291 = vmatpush1.msra.mxu0 0.0
    %10292 = vmatprep.subr.mxu0 0.0
    %10293 = vmatpush1.msra.mxu0 0.0
    %10294 = vmatprep.subr.mxu0 0.0
    %10295 = vmatpush1.msra.mxu0 0.0
    %10296 = vmatprep.subr.mxu0 0.0
    %10297 = vmatpush1.msra.mxu0 0.0
    %10298 = vmatprep.subr.mxu0 0.0
    %10299 = vmatpush1.msra.mxu0 0.0
    %10300 = vmatprep.subr.mxu0 0.0
    %10301 = vmatpush1.msra.mxu0 0.0
    %10302 = vmatprep.subr.mxu0 0.0
    %10303 = vmatpush1.msra.mxu0 0.0
    %10304 = vmatprep.subr.mxu0 0.0
    %10305 = vmatpush1.msra.mxu0 0.0
    %10306 = vmatprep.subr.mxu0 0.0
    %10307 = vmatpush1.msra.mxu0 0.0
    %10308 = vmatprep.subr.mxu0 0.0
    %10309 = vmatpush1.msra.mxu0 0.0
    %10310 = vmatprep.subr.mxu0 0.0
    %10311 = vmatpush1.msra.mxu0 0.0
    %10312 = vmatprep.subr.mxu0 0.0
    %10313 = vmatpush1.msra.mxu0 0.0
    %10314 = vmatprep.subr.mxu0 0.0
    %10315 = vmatpush1.msra.mxu0 0.0
    %10316 = vmatprep.subr.mxu0 0.0
    %10317 = vmatpush1.msra.mxu0 0.0
    %10318 = vmatprep.subr.mxu0 0.0
    %10319 = vmatpush1.msra.mxu0 0.0
    %10320 = vmatprep.subr.mxu0 0.0
    %10321 = vmatpush1.msra.mxu0 0.0
    %10322 = vmatprep.subr.mxu0 0.0
    %10323 = vmatpush1.msra.mxu0 0.0
    %10324 = vmatprep.subr.mxu0 0.0
    %10325 = vmatpush1.msra.mxu0 0.0
    %10326 = vmatprep.subr.mxu0 0.0
    %10327 = vmatpush1.msra.mxu0 0.0
    %10328 = vmatprep.mubr.f32.mxu0 0.0
    %10329 = vmatmul.mubr.f32.gmra.mrb[0].mxu0 %v10262
    %v10330 = vpop.f32.mrb[0].mxu0
    %v10331 = vadd.f32 0.0, %v10330
    %v10332 = vpop.f32.mrb[0].mxu0
    %v10333 = vadd.f32 0.0, %v10332
    %10334 = vdwg.mxu0
    %10335 = vmatprep.subr.mxu0 %v10256
    %10336 = vmatpush1.msra.mxu0 %v10255
    %10337 = vmatprep.subr.mxu0 0.0
    %10338 = vmatpush1.msra.mxu0 0.0
    %10339 = vmatprep.subr.mxu0 0.0
    %10340 = vmatpush1.msra.mxu0 0.0
    %10341 = vmatprep.subr.mxu0 0.0
    %10342 = vmatpush1.msra.mxu0 0.0
    %10343 = vmatprep.subr.mxu0 0.0
    %10344 = vmatpush1.msra.mxu0 0.0
    %10345 = vmatprep.subr.mxu0 0.0
    %10346 = vmatpush1.msra.mxu0 0.0
    %10347 = vmatprep.subr.mxu0 0.0
    %10348 = vmatpush1.msra.mxu0 0.0
    %10349 = vmatprep.subr.mxu0 0.0
    %10350 = vmatpush1.msra.mxu0 0.0
    %10351 = vmatprep.subr.mxu0 0.0
    %10352 = vmatpush1.msra.mxu0 0.0
    %10353 = vmatprep.subr.mxu0 0.0
    %10354 = vmatpush1.msra.mxu0 0.0
    %10355 = vmatprep.subr.mxu0 0.0
    %10356 = vmatpush1.msra.mxu0 0.0
    %10357 = vmatprep.subr.mxu0 0.0
    %10358 = vmatpush1.msra.mxu0 0.0
    %10359 = vmatprep.subr.mxu0 0.0
    %10360 = vmatpush1.msra.mxu0 0.0
    %10361 = vmatprep.subr.mxu0 0.0
    %10362 = vmatpush1.msra.mxu0 0.0
    %10363 = vmatprep.subr.mxu0 0.0
    %10364 = vmatpush1.msra.mxu0 0.0
    %10365 = vmatprep.subr.mxu0 0.0
    %10366 = vmatpush1.msra.mxu0 0.0
    %10367 = vmatprep.subr.mxu0 0.0
    %10368 = vmatpush1.msra.mxu0 0.0
    %10369 = vmatprep.subr.mxu0 0.0
    %10370 = vmatpush1.msra.mxu0 0.0
    %10371 = vmatprep.subr.mxu0 0.0
    %10372 = vmatpush1.msra.mxu0 0.0
    %10373 = vmatprep.subr.mxu0 0.0
    %10374 = vmatpush1.msra.mxu0 0.0
    %10375 = vmatprep.subr.mxu0 0.0
    %10376 = vmatpush1.msra.mxu0 0.0
    %10377 = vmatprep.subr.mxu0 0.0
    %10378 = vmatpush1.msra.mxu0 0.0
    %10379 = vmatprep.subr.mxu0 0.0
    %10380 = vmatpush1.msra.mxu0 0.0
    %10381 = vmatprep.subr.mxu0 0.0
    %10382 = vmatpush1.msra.mxu0 0.0
    %10383 = vmatprep.subr.mxu0 0.0
    %10384 = vmatpush1.msra.mxu0 0.0
    %10385 = vmatprep.subr.mxu0 0.0
    %10386 = vmatpush1.msra.mxu0 0.0
    %10387 = vmatprep.subr.mxu0 0.0
    %10388 = vmatpush1.msra.mxu0 0.0
    %10389 = vmatprep.subr.mxu0 0.0
    %10390 = vmatpush1.msra.mxu0 0.0
    %10391 = vmatprep.subr.mxu0 0.0
    %10392 = vmatpush1.msra.mxu0 0.0
    %10393 = vmatprep.subr.mxu0 0.0
    %10394 = vmatpush1.msra.mxu0 0.0
    %10395 = vmatprep.subr.mxu0 0.0
    %10396 = vmatpush1.msra.mxu0 0.0
    %10397 = vmatprep.subr.mxu0 0.0
    %10398 = vmatpush1.msra.mxu0 0.0
    %10399 = vmatprep.mubr.f32.mxu0 0.0
    %10400 = vmatmul.mubr.f32.gmra.mrb[0].mxu0 %v10262
    %v10401 = vpop.f32.mrb[0].mxu0
    %v10402 = vadd.f32 0.0, %v10401
    %v10403 = vpop.f32.mrb[0].mxu0
    %v10404 = vadd.f32 0.0, %v10403
    %10405 = vdwg.mxu0
    %v10406 = vadd.f32 %v10228, %v10331
    %v10407 = vadd.f32 %v10229, %v10333
    %v10408 = vadd.f32 %v10230, %v10402
    %v10409 = vadd.f32 %v10231, %v10404
    %v10410 = vadd.f32 %v6700, %v10406
    %v10411 = vadd.f32 %v6702, %v10407
    %v10412 = vadd.f32 %v6775, %v10408
    %v10413 = vadd.f32 %v6777, %v10409
    %v10414 = vsub.f32 0.0, %v10410
    %v10415 = vsub.f32 0.0, %v10411
    %v10416 = vsub.f32 0.0, %v10412
    %v10417 = vsub.f32 0.0, %v10413
    %v10418 = vmul.f32 %v10414, 1.442695
    %v10419 = vpow.pop %v10418
    %v10420 = vmul.f32 %v10415, 1.442695
    %v10421 = vpow.pop %v10420
    %v10422 = vmul.f32 %v10416, 1.442695
    %v10423 = vpow.pop %v10422
    %v10424 = vmul.f32 %v10417, 1.442695
    %v10425 = vpow.pop %v10424
    %v10426 = vadd.f32 %v10419, 1.0
    %v10427 = vadd.f32 %v10421, 1.0
    %v10428 = vadd.f32 %v10423, 1.0
    %v10429 = vadd.f32 %v10425, 1.0
    %v10430 = vrcp.pop %v10426
    %v10431 = vrcp.pop %v10427
    %v10432 = vrcp.pop %v10428
    %v10433 = vrcp.pop %v10429
    %10434 = vst [vmem:[%s3] sm:$0x7] %v10430
    %10435 = vst [vmem:[%s3 + $0x8] sm:$0x7] %v10431
    %v10438 = vrot.slane %v10432, 5
    %v10439 = vrot.slane %v10433, 5
    %10442 = vst [vmem:[%s3] sm:$0x38] %v10438
    %10443 = vst [vmem:[%s3 + $0x8] sm:$0x38] %v10439
    // Predicated region
    $region22: #{fwd.1} parent=1 // pred_check
      _
    $region23: #{fwd.1} parent=1 // pred_check_branch
      %10445 = sbr.rel (0) target = $region25
    $region24: #{fwd.1} parent=1 // pred_region
      _
    $region25: #{fwd.1} parent=1 // pred_fallthru
      _
    // Predicated region
    $region26: #{fwd.1} parent=1 // pred_check
      _
    $region27: #{fwd.1} parent=1 // pred_check_branch
      %10447 = sbr.rel (0) target = $region29
    $region28: #{fwd.1} parent=1 // pred_region
      _
    $region29: #{fwd.1} parent=1 // pred_fallthru
      _
    %10448 = vsyncpa [#allocation4], 1
    %10449 = vsyncpa [#allocation6], 1

</llo_original>
